<compile_context>
chip_gen: v7x
topology: tpu7x:2x2x1
jax: 0.10.0
libtpu: 0.0.40
codegen_flags: <defaults>
</compile_context>

<pallas_src>
import math

import jax
import jax.numpy as jnp
from jax.experimental import pallas as pl
from jax.experimental.pallas import tpu as pltpu

NHEAD = 8
LN_EPS = 1e-5


def _layer_norm(x, g, b):
    mu = jnp.mean(x, axis=-1, keepdims=True)
    xc = x - mu
    var = jnp.mean(xc * xc, axis=-1, keepdims=True)
    return xc * jax.lax.rsqrt(var + LN_EPS) * g + b


def _attn_core(q, k, v, bias, wo_t, bo, nblk, lq, lk):
    # q  [nblk*lq, H] f32 ; k, v [nblk*lk, H] f32 ; bias [nblk, 1, lk] additive f32
    # wo_t [H, H] bf16 (pre-transposed) ; bo [1, H] f32
    H = q.shape[-1]
    d = H // NHEAD
    scale = 1.0 / math.sqrt(d)

    qb = (q * scale).reshape(nblk, lq, H).astype(jnp.bfloat16)
    kb = k.reshape(nblk, lk, H).astype(jnp.bfloat16)
    vb = v.reshape(nblk, lk, H).astype(jnp.bfloat16)
    bias_b = jnp.broadcast_to(bias, (nblk, lq, lk))  # broadcast once, not per head

    # Head dim d = H/8 = 4 is far below a lane tile, so the head axis stays a
    # static 8-way loop; each iteration is batched over all NBLK sequences
    # (3-D dot_generals), so the loop count does not grow with block size.
    heads = []
    for h in range(NHEAD):
        lo, hi = h * d, (h + 1) * d
        s = jnp.einsum('bqd,bkd->bqk', qb[:, :, lo:hi], kb[:, :, lo:hi],
                       preferred_element_type=jnp.float32) + bias_b
        s = s - jnp.max(s, axis=-1, keepdims=True)
        p = jnp.exp(s)
        p = p * pl.reciprocal(jnp.sum(p, axis=-1, keepdims=True), approx=True)
        heads.append(jnp.einsum('bqk,bkd->bqd', p.astype(jnp.bfloat16), vb[:, :, lo:hi],
                                preferred_element_type=jnp.float32))   # [nblk, lq, d]

    # Lane-concat the per-head outputs, then ONE K=H output projection
    # (perf-review #4: replaces 8 K=4 matmuls per attention).
    attn = jnp.concatenate(heads, axis=-1).reshape(nblk * lq, H)
    return jnp.dot(attn.astype(jnp.bfloat16), wo_t,
                   preferred_element_type=jnp.float32) + bo


def decoder_layer_kernel(cs_ref, qa_ref, csm_ref, qam_ref,
                         wqkv_s_ref, bqkv_s_ref, wo_s_ref, bo_s_ref,
                         wq_c_ref, bq_c_ref, wkv_c_ref, bkv_c_ref, wo_c_ref, bo_c_ref,
                         w1_ref, b1_ref, w2_ref, b2_ref,
                         g1_ref, bn1_ref, g2_ref, bn2_ref, g3_ref, bn3_ref,
                         out_ref):
    nblk, cl, H = cs_ref.shape
    ql = qa_ref.shape[1]

    x = cs_ref[...].reshape(nblk * cl, H)       # [Mc, H] f32  (tgt, flattened rows)
    mem = qa_ref[...].reshape(nblk * ql, H)     # [Mq, H] f32  (memory)

    # additive key-padding biases, computed once (finite -> no NaN on fully-masked rows)
    neg = jnp.float32(-1e30)
    zero = jnp.float32(0.0)
    cs_bias = jnp.where(csm_ref[...] > 0.5, neg, zero)   # [nblk, 1, cl]
    qa_bias = jnp.where(qam_ref[...] > 0.5, neg, zero)   # [nblk, 1, ql]

    # --- self-attention block + norm1 (post-norm) ---
    qkv = jnp.dot(x.astype(jnp.bfloat16), wqkv_s_ref[...],
                  preferred_element_type=jnp.float32) + bqkv_s_ref[...]   # [Mc, 3H]
    sa = _attn_core(qkv[:, 0:H], qkv[:, H:2 * H], qkv[:, 2 * H:3 * H],
                    cs_bias, wo_s_ref[...], bo_s_ref[...], nblk, cl, cl)
    x = _layer_norm(x + sa, g1_ref[...], bn1_ref[...])

    # --- cross-attention block + norm2 ---
    q_c = jnp.dot(x.astype(jnp.bfloat16), wq_c_ref[...],
                  preferred_element_type=jnp.float32) + bq_c_ref[...]     # [Mc, H]
    kv_c = jnp.dot(mem.astype(jnp.bfloat16), wkv_c_ref[...],
                   preferred_element_type=jnp.float32) + bkv_c_ref[...]   # [Mq, 2H]
    ca = _attn_core(q_c, kv_c[:, 0:H], kv_c[:, H:2 * H],
                    qa_bias, wo_c_ref[...], bo_c_ref[...], nblk, cl, ql)
    x = _layer_norm(x + ca, g2_ref[...], bn2_ref[...])

    # --- feed-forward block (linear1 -> relu -> linear2) + norm3 ---
    h1 = jnp.maximum(
        jnp.dot(x.astype(jnp.bfloat16), w1_ref[...],
                preferred_element_type=jnp.float32) + b1_ref[...], 0.0)
    ff = jnp.dot(h1.astype(jnp.bfloat16), w2_ref[...],
                 preferred_element_type=jnp.float32) + b2_ref[...]
    x = _layer_norm(x + ff, g3_ref[...], bn3_ref[...])

    out_ref[...] = x.reshape(nblk, cl, H)       # free reshape (layout-compatible)


def init_params(key, H, FF):
    ks = jax.random.split(key, 16)
    s = 0.05
    bf16 = jnp.bfloat16

    def rnd(k, shape, dtype=jnp.float32):
        return (jax.random.normal(k, shape, jnp.float32) * s).astype(dtype)

    # Matmul weights are stored pre-transposed ([in, out]) and in bf16 (MXU operands);
    # biases / LayerNorm params stay f32.  To load real PyTorch weights:
    #   wqkv_s = self_attn.in_proj_weight.T                     (q|k|v order preserved)
    #   wq_c   = multihead_attn.in_proj_weight[:H].T
    #   wkv_c  = multihead_attn.in_proj_weight[H:].T
    #   wo_*   = *.out_proj.weight.T ; w1/w2 = linear1/linear2.weight.T
    return dict(
        wqkv_s=rnd(ks[0], (H, 3 * H), bf16), bqkv_s=rnd(ks[1], (1, 3 * H)),
        wo_s=rnd(ks[2], (H, H), bf16),       bo_s=rnd(ks[3], (1, H)),
        wq_c=rnd(ks[4], (H, H), bf16),       bq_c=rnd(ks[5], (1, H)),
        wkv_c=rnd(ks[6], (H, 2 * H), bf16),  bkv_c=rnd(ks[7], (1, 2 * H)),
        wo_c=rnd(ks[8], (H, H), bf16),       bo_c=rnd(ks[9], (1, H)),
        w1=rnd(ks[10], (H, FF), bf16),       b1=rnd(ks[11], (1, FF)),
        w2=rnd(ks[12], (FF, H), bf16),       b2=rnd(ks[13], (1, H)),
        g1=jnp.ones((1, H), jnp.float32), bn1=jnp.zeros((1, H), jnp.float32),
        g2=jnp.ones((1, H), jnp.float32), bn2=jnp.zeros((1, H), jnp.float32),
        g3=jnp.ones((1, H), jnp.float32), bn3=jnp.zeros((1, H), jnp.float32),
    )


WEIGHT_NAMES = ["wqkv_s", "bqkv_s", "wo_s", "bo_s",
                "wq_c", "bq_c", "wkv_c", "bkv_c", "wo_c", "bo_c",
                "w1", "b1", "w2", "b2",
                "g1", "bn1", "g2", "bn2", "g3", "bn3"]


def cs_decoder_layer(qa_expand, cs, qa_padding_mask_expand, cs_padding_mask, params,
                     nblk=None):
    B, CSN, QL, H = qa_expand.shape
    CL = cs.shape[2]
    N = B * CSN
    FF = params["w1"].shape[1]

    if nblk is None:
        # Perf-review #1/#2/#8: target ~1024 flattened rows (nblk*CL) per grid step,
        # VMEM-capped so the [M, FF] f32 FFN intermediate stays <= ~8 MiB, and
        # never collapse to a single grid step so the "parallel" axis can shard
        # across both v7x TensorCores.
        vmem_rows_cap = max(CL, (8 * 1024 * 1024) // (4 * FF))
        target_rows = min(1024, vmem_rows_cap)
        nblk = max(1, target_rows // CL)
        if N >= 2:
            nblk = min(nblk, pl.cdiv(N, 2))   # guarantees n_steps >= 2
        nblk = min(nblk, N)
    n_steps = pl.cdiv(N, nblk)
    Npad = n_steps * nblk

    # glue: same reshapes as the PyTorch module builds (N = B*cs_num flattening)
    qa3 = qa_expand.reshape(N, QL, H).astype(jnp.float32)
    cs3 = cs.reshape(N, CL, H).astype(jnp.float32)
    qam = qa_padding_mask_expand.reshape(N, 1, QL).astype(jnp.float32)
    csm = cs_padding_mask.reshape(N, 1, CL).astype(jnp.float32)

    if Npad != N:  # pad the sequence-block axis; padded rows are discarded below
        p = Npad - N
        qa3 = jnp.pad(qa3, ((0, p), (0, 0), (0, 0)))
        cs3 = jnp.pad(cs3, ((0, p), (0, 0), (0, 0)))
        qam = jnp.pad(qam, ((0, p), (0, 0), (0, 0)))   # 0.0 == "not padding" -> finite math
        csm = jnp.pad(csm, ((0, p), (0, 0), (0, 0)))

    weights = [params[k] for k in WEIGHT_NAMES]

    def full_spec(arr):
        nd = arr.ndim
        return pl.BlockSpec(arr.shape, lambda n, _nd=nd: (0,) * _nd)  # grid-invariant

    out = pl.pallas_call(
        decoder_layer_kernel,
        out_shape=jax.ShapeDtypeStruct((Npad, CL, H), jnp.float32),
        grid_spec=pltpu.PrefetchScalarGridSpec(
            num_scalar_prefetch=0,
            grid=(n_steps,),
            in_specs=[pl.BlockSpec((nblk, CL, H), lambda n: (n, 0, 0)),
                      pl.BlockSpec((nblk, QL, H), lambda n: (n, 0, 0)),
                      pl.BlockSpec((nblk, 1, CL), lambda n: (n, 0, 0)),
                      pl.BlockSpec((nblk, 1, QL), lambda n: (n, 0, 0))]
                     + [full_spec(w) for w in weights],
            out_specs=pl.BlockSpec((nblk, CL, H), lambda n: (n, 0, 0)),
        ),
        compiler_params=pltpu.CompilerParams(
            # independent sequence blocks -> shard grid across TCs (2x on v7x)
            dimension_semantics=("parallel",),
            # ~3x headroom over the ~12 MiB per-step footprint at M=1024, still
            # safely inside v7x's 64 MiB per-TC VMEM (128 MiB on v5e/v6e).
            vmem_limit_bytes=40 * 1024 * 1024,
        ),
    )(cs3, qa3, csm, qam, *weights)

    # decoder_output [Npad, cs_len, H] -> [B, cs_num, cs_len, H]
    return out[:N].reshape(B, CSN, CL, H)


if __name__ == "__main__":
    B, CSN, QL, CL, H, FF = 2, 2, 8, 8, 32, 2048  # hidden_size=32, nhead=8, default FF=2048

    key = jax.random.PRNGKey(0)
    kp, kq, kc = jax.random.split(key, 3)
    params = init_params(kp, H, FF)

    qa_expand = jax.random.normal(kq, (B, CSN, QL, H), jnp.float32)
    cs = jax.random.normal(kc, (B, CSN, CL, H), jnp.float32)
    # key-padding masks, True = padding (PyTorch convention)
    qa_padding_mask_expand = jnp.zeros((B, CSN, QL), jnp.bool_).at[:, :, QL - 2:].set(True)
    cs_padding_mask = jnp.zeros((B, CSN, CL), jnp.bool_).at[:, :, CL - 1:].set(True)

    out = cs_decoder_layer(qa_expand, cs, qa_padding_mask_expand, cs_padding_mask, params)
    out = jax.block_until_ready(out)

    assert out.shape == (B, CSN, CL, H)
    assert bool(jnp.all(jnp.isfinite(out)))
    print("KERNEL_OK")
</pallas_src>

<mosaic_0001>
module attributes {stable_mosaic.version = 11 : i64} {
  func.func @decoder_layer_kernel(%arg0: i32, %arg1: memref<2x8x32xf32, #tpu.memory_space<vmem>>, %arg2: memref<2x8x32xf32, #tpu.memory_space<vmem>>, %arg3: memref<2x1x8xf32, #tpu.memory_space<vmem>>, %arg4: memref<2x1x8xf32, #tpu.memory_space<vmem>>, %arg5: memref<32x96xbf16, #tpu.memory_space<vmem>>, %arg6: memref<1x96xf32, #tpu.memory_space<vmem>>, %arg7: memref<32x32xbf16, #tpu.memory_space<vmem>>, %arg8: memref<1x32xf32, #tpu.memory_space<vmem>>, %arg9: memref<32x32xbf16, #tpu.memory_space<vmem>>, %arg10: memref<1x32xf32, #tpu.memory_space<vmem>>, %arg11: memref<32x64xbf16, #tpu.memory_space<vmem>>, %arg12: memref<1x64xf32, #tpu.memory_space<vmem>>, %arg13: memref<32x32xbf16, #tpu.memory_space<vmem>>, %arg14: memref<1x32xf32, #tpu.memory_space<vmem>>, %arg15: memref<32x2048xbf16, #tpu.memory_space<vmem>>, %arg16: memref<1x2048xf32, #tpu.memory_space<vmem>>, %arg17: memref<2048x32xbf16, #tpu.memory_space<vmem>>, %arg18: memref<1x32xf32, #tpu.memory_space<vmem>>, %arg19: memref<1x32xf32, #tpu.memory_space<vmem>>, %arg20: memref<1x32xf32, #tpu.memory_space<vmem>>, %arg21: memref<1x32xf32, #tpu.memory_space<vmem>>, %arg22: memref<1x32xf32, #tpu.memory_space<vmem>>, %arg23: memref<1x32xf32, #tpu.memory_space<vmem>>, %arg24: memref<1x32xf32, #tpu.memory_space<vmem>>, %arg25: memref<2x8x32xf32, #tpu.memory_space<vmem>>) attributes {dimension_semantics = [#tpu.dimension_semantics<parallel>], iteration_bounds = array<i64: 2>, scalar_prefetch = 0 : i64, scratch_operands = 0 : i64, tpu.core_type = #tpu.core_type<tc>, window_params = [{transform_indices = @transform_0, window_bounds = array<i64: 2, 8, 32>}, {transform_indices = @transform_1, window_bounds = array<i64: 2, 8, 32>}, {transform_indices = @transform_2, window_bounds = array<i64: 2, 1, 8>}, {transform_indices = @transform_3, window_bounds = array<i64: 2, 1, 8>}, {pipeline_mode = #tpu.pipeline_mode<synchronous>, transform_indices = @transform_4, window_bounds = array<i64: 32, 96>}, {pipeline_mode = #tpu.pipeline_mode<synchronous>, transform_indices = @transform_5, window_bounds = array<i64: 1, 96>}, {pipeline_mode = #tpu.pipeline_mode<synchronous>, transform_indices = @transform_6, window_bounds = array<i64: 32, 32>}, {pipeline_mode = #tpu.pipeline_mode<synchronous>, transform_indices = @transform_7, window_bounds = array<i64: 1, 32>}, {pipeline_mode = #tpu.pipeline_mode<synchronous>, transform_indices = @transform_8, window_bounds = array<i64: 32, 32>}, {pipeline_mode = #tpu.pipeline_mode<synchronous>, transform_indices = @transform_9, window_bounds = array<i64: 1, 32>}, {pipeline_mode = #tpu.pipeline_mode<synchronous>, transform_indices = @transform_10, window_bounds = array<i64: 32, 64>}, {pipeline_mode = #tpu.pipeline_mode<synchronous>, transform_indices = @transform_11, window_bounds = array<i64: 1, 64>}, {pipeline_mode = #tpu.pipeline_mode<synchronous>, transform_indices = @transform_12, window_bounds = array<i64: 32, 32>}, {pipeline_mode = #tpu.pipeline_mode<synchronous>, transform_indices = @transform_13, window_bounds = array<i64: 1, 32>}, {pipeline_mode = #tpu.pipeline_mode<synchronous>, transform_indices = @transform_14, window_bounds = array<i64: 32, 2048>}, {pipeline_mode = #tpu.pipeline_mode<synchronous>, transform_indices = @transform_15, window_bounds = array<i64: 1, 2048>}, {pipeline_mode = #tpu.pipeline_mode<synchronous>, transform_indices = @transform_16, window_bounds = array<i64: 2048, 32>}, {pipeline_mode = #tpu.pipeline_mode<synchronous>, transform_indices = @transform_17, window_bounds = array<i64: 1, 32>}, {pipeline_mode = #tpu.pipeline_mode<synchronous>, transform_indices = @transform_18, window_bounds = array<i64: 1, 32>}, {pipeline_mode = #tpu.pipeline_mode<synchronous>, transform_indices = @transform_19, window_bounds = array<i64: 1, 32>}, {pipeline_mode = #tpu.pipeline_mode<synchronous>, transform_indices = @transform_20, window_bounds = array<i64: 1, 32>}, {pipeline_mode = #tpu.pipeline_mode<synchronous>, transform_indices = @transform_21, window_bounds = array<i64: 1, 32>}, {pipeline_mode = #tpu.pipeline_mode<synchronous>, transform_indices = @transform_22, window_bounds = array<i64: 1, 32>}, {pipeline_mode = #tpu.pipeline_mode<synchronous>, transform_indices = @transform_23, window_bounds = array<i64: 1, 32>}, {transform_indices = @transform_24, window_bounds = array<i64: 2, 8, 32>}]} {
    %c0 = arith.constant 0 : index
    %c0_0 = arith.constant 0 : index
    %c0_1 = arith.constant 0 : index
    %0 = vector.load %arg1[%c0, %c0_0, %c0_1] : memref<2x8x32xf32, #tpu.memory_space<vmem>>, vector<2x8x32xf32>
    %1 = vector.shape_cast %0 : vector<2x8x32xf32> to vector<16x32xf32>
    %c0_2 = arith.constant 0 : index
    %c0_3 = arith.constant 0 : index
    %c0_4 = arith.constant 0 : index
    %2 = vector.load %arg2[%c0_2, %c0_3, %c0_4] : memref<2x8x32xf32, #tpu.memory_space<vmem>>, vector<2x8x32xf32>
    %3 = vector.shape_cast %2 : vector<2x8x32xf32> to vector<16x32xf32>
    %c0_5 = arith.constant 0 : index
    %c0_6 = arith.constant 0 : index
    %c0_7 = arith.constant 0 : index
    %4 = vector.load %arg3[%c0_5, %c0_6, %c0_7] : memref<2x1x8xf32, #tpu.memory_space<vmem>>, vector<2x1x8xf32>
    %cst = arith.constant 5.000000e-01 : f32
    %5 = vector.broadcast %cst : f32 to vector<2x1x8xf32>
    %6 = arith.cmpf ogt, %4, %5 : vector<2x1x8xf32>
    %cst_8 = arith.constant -1.000000e+30 : f32
    %cst_9 = arith.constant 0.000000e+00 : f32
    %7 = vector.broadcast %cst_8 : f32 to vector<2x1x8xf32>
    %8 = vector.broadcast %cst_9 : f32 to vector<2x1x8xf32>
    %9 = arith.select %6, %7, %8 : vector<2x1x8xi1>, vector<2x1x8xf32>
    %c0_10 = arith.constant 0 : index
    %c0_11 = arith.constant 0 : index
    %c0_12 = arith.constant 0 : index
    %10 = vector.load %arg4[%c0_10, %c0_11, %c0_12] : memref<2x1x8xf32, #tpu.memory_space<vmem>>, vector<2x1x8xf32>
    %cst_13 = arith.constant 5.000000e-01 : f32
    %11 = vector.broadcast %cst_13 : f32 to vector<2x1x8xf32>
    %12 = arith.cmpf ogt, %10, %11 : vector<2x1x8xf32>
    %cst_14 = arith.constant -1.000000e+30 : f32
    %cst_15 = arith.constant 0.000000e+00 : f32
    %13 = vector.broadcast %cst_14 : f32 to vector<2x1x8xf32>
    %14 = vector.broadcast %cst_15 : f32 to vector<2x1x8xf32>
    %15 = arith.select %12, %13, %14 : vector<2x1x8xi1>, vector<2x1x8xf32>
    %16 = arith.truncf %1 : vector<16x32xf32> to vector<16x32xbf16>
    %c0_16 = arith.constant 0 : index
    %c0_17 = arith.constant 0 : index
    %17 = vector.load %arg5[%c0_16, %c0_17] : memref<32x96xbf16, #tpu.memory_space<vmem>>, vector<32x96xbf16>
    %cst_18 = arith.constant dense<0.000000e+00> : vector<16x96xf32>
    %18 = tpu.matmul %16, %17, %cst_18 {dimension_numbers = #tpu.dot_dimension_numbers<[1], [0], [0], [1], [0, 0, 1, 1], [], []>} : vector<16x32xbf16>, vector<32x96xbf16>, vector<16x96xf32> -> vector<16x96xf32>
    %c0_19 = arith.constant 0 : index
    %c0_20 = arith.constant 0 : index
    %19 = vector.load %arg6[%c0_19, %c0_20] : memref<1x96xf32, #tpu.memory_space<vmem>>, vector<1x96xf32>
    %20 = vector.broadcast %19 : vector<1x96xf32> to vector<16x96xf32>
    %21 = arith.addf %18, %20 : vector<16x96xf32>
    %22 = vector.extract_strided_slice %21 {offsets = [0, 0], sizes = [16, 32], strides = [1, 1]} : vector<16x96xf32> to vector<16x32xf32>
    %23 = vector.extract_strided_slice %21 {offsets = [0, 32], sizes = [16, 32], strides = [1, 1]} : vector<16x96xf32> to vector<16x32xf32>
    %24 = vector.extract_strided_slice %21 {offsets = [0, 64], sizes = [16, 32], strides = [1, 1]} : vector<16x96xf32> to vector<16x32xf32>
    %c0_21 = arith.constant 0 : index
    %c0_22 = arith.constant 0 : index
    %25 = vector.load %arg7[%c0_21, %c0_22] : memref<32x32xbf16, #tpu.memory_space<vmem>>, vector<32x32xbf16>
    %c0_23 = arith.constant 0 : index
    %c0_24 = arith.constant 0 : index
    %26 = vector.load %arg8[%c0_23, %c0_24] : memref<1x32xf32, #tpu.memory_space<vmem>>, vector<1x32xf32>
    %cst_25 = arith.constant 5.000000e-01 : f32
    %27 = vector.broadcast %cst_25 : f32 to vector<16x32xf32>
    %28 = arith.mulf %22, %27 : vector<16x32xf32>
    %29 = vector.shape_cast %28 : vector<16x32xf32> to vector<2x8x32xf32>
    %30 = arith.truncf %29 : vector<2x8x32xf32> to vector<2x8x32xbf16>
    %31 = vector.shape_cast %23 : vector<16x32xf32> to vector<2x8x32xf32>
    %32 = arith.truncf %31 : vector<2x8x32xf32> to vector<2x8x32xbf16>
    %33 = vector.shape_cast %24 : vector<16x32xf32> to vector<2x8x32xf32>
    %34 = arith.truncf %33 : vector<2x8x32xf32> to vector<2x8x32xbf16>
    %35 = vector.shape_cast %9 : vector<2x1x8xf32> to vector<2x1x8xf32>
    %36 = vector.broadcast %35 : vector<2x1x8xf32> to vector<2x8x8xf32>
    %37 = vector.extract_strided_slice %30 {offsets = [0, 0, 0], sizes = [2, 8, 4], strides = [1, 1, 1]} : vector<2x8x32xbf16> to vector<2x8x4xbf16>
    %38 = vector.extract_strided_slice %32 {offsets = [0, 0, 0], sizes = [2, 8, 4], strides = [1, 1, 1]} : vector<2x8x32xbf16> to vector<2x8x4xbf16>
    "tpu.trace_start"() <{level = 10 : i32, message = "bqd,bkd->bqk"}> : () -> ()
    %cst_26 = arith.constant dense<0.000000e+00> : vector<2x8x8xf32>
    %39 = tpu.matmul %37, %38, %cst_26 {dimension_numbers = #tpu.dot_dimension_numbers<[2], [2], [1], [1], [0, 0, 0, 1, 1, 1], [0], [0]>} : vector<2x8x4xbf16>, vector<2x8x4xbf16>, vector<2x8x8xf32> -> vector<2x8x8xf32>
    "tpu.trace_stop"() : () -> ()
    %40 = arith.addf %39, %36 : vector<2x8x8xf32>
    %cst_27 = arith.constant dense<0xFF800000> : vector<2x8xf32>
    %41 = vector.multi_reduction <maximumf>, %40, %cst_27 [2] : vector<2x8x8xf32> to vector<2x8xf32>
    %42 = vector.shape_cast %41 : vector<2x8xf32> to vector<2x8x1xf32>
    %43 = vector.broadcast %42 : vector<2x8x1xf32> to vector<2x8x8xf32>
    %44 = arith.subf %40, %43 : vector<2x8x8xf32>
    %45 = math.exp %44 : vector<2x8x8xf32>
    %cst_28 = arith.constant dense<0.000000e+00> : vector<2x8xf32>
    %46 = vector.multi_reduction <add>, %45, %cst_28 [2] : vector<2x8x8xf32> to vector<2x8xf32>
    %47 = vector.shape_cast %46 : vector<2x8xf32> to vector<2x8x1xf32>
    %48 = tpu.reciprocal %47 {approx = true} : vector<2x8x1xf32> -> vector<2x8x1xf32>
    %49 = vector.broadcast %48 : vector<2x8x1xf32> to vector<2x8x8xf32>
    %50 = arith.mulf %45, %49 : vector<2x8x8xf32>
    %51 = arith.truncf %50 : vector<2x8x8xf32> to vector<2x8x8xbf16>
    %52 = vector.extract_strided_slice %34 {offsets = [0, 0, 0], sizes = [2, 8, 4], strides = [1, 1, 1]} : vector<2x8x32xbf16> to vector<2x8x4xbf16>
    "tpu.trace_start"() <{level = 10 : i32, message = "bqk,bkd->bqd"}> : () -> ()
    %cst_29 = arith.constant dense<0.000000e+00> : vector<2x8x4xf32>
    %53 = tpu.matmul %51, %52, %cst_29 {dimension_numbers = #tpu.dot_dimension_numbers<[2], [1], [1], [2], [0, 0, 0, 1, 1, 2], [0], [0]>} : vector<2x8x8xbf16>, vector<2x8x4xbf16>, vector<2x8x4xf32> -> vector<2x8x4xf32>
    "tpu.trace_stop"() : () -> ()
    %54 = vector.extract_strided_slice %30 {offsets = [0, 0, 4], sizes = [2, 8, 4], strides = [1, 1, 1]} : vector<2x8x32xbf16> to vector<2x8x4xbf16>
    %55 = vector.extract_strided_slice %32 {offsets = [0, 0, 4], sizes = [2, 8, 4], strides = [1, 1, 1]} : vector<2x8x32xbf16> to vector<2x8x4xbf16>
    "tpu.trace_start"() <{level = 10 : i32, message = "bqd,bkd->bqk"}> : () -> ()
    %cst_30 = arith.constant dense<0.000000e+00> : vector<2x8x8xf32>
    %56 = tpu.matmul %54, %55, %cst_30 {dimension_numbers = #tpu.dot_dimension_numbers<[2], [2], [1], [1], [0, 0, 0, 1, 1, 1], [0], [0]>} : vector<2x8x4xbf16>, vector<2x8x4xbf16>, vector<2x8x8xf32> -> vector<2x8x8xf32>
    "tpu.trace_stop"() : () -> ()
    %57 = arith.addf %56, %36 : vector<2x8x8xf32>
    %cst_31 = arith.constant dense<0xFF800000> : vector<2x8xf32>
    %58 = vector.multi_reduction <maximumf>, %57, %cst_31 [2] : vector<2x8x8xf32> to vector<2x8xf32>
    %59 = vector.shape_cast %58 : vector<2x8xf32> to vector<2x8x1xf32>
    %60 = vector.broadcast %59 : vector<2x8x1xf32> to vector<2x8x8xf32>
    %61 = arith.subf %57, %60 : vector<2x8x8xf32>
    %62 = math.exp %61 : vector<2x8x8xf32>
    %cst_32 = arith.constant dense<0.000000e+00> : vector<2x8xf32>
    %63 = vector.multi_reduction <add>, %62, %cst_32 [2] : vector<2x8x8xf32> to vector<2x8xf32>
    %64 = vector.shape_cast %63 : vector<2x8xf32> to vector<2x8x1xf32>
    %65 = tpu.reciprocal %64 {approx = true} : vector<2x8x1xf32> -> vector<2x8x1xf32>
    %66 = vector.broadcast %65 : vector<2x8x1xf32> to vector<2x8x8xf32>
    %67 = arith.mulf %62, %66 : vector<2x8x8xf32>
    %68 = arith.truncf %67 : vector<2x8x8xf32> to vector<2x8x8xbf16>
    %69 = vector.extract_strided_slice %34 {offsets = [0, 0, 4], sizes = [2, 8, 4], strides = [1, 1, 1]} : vector<2x8x32xbf16> to vector<2x8x4xbf16>
    "tpu.trace_start"() <{level = 10 : i32, message = "bqk,bkd->bqd"}> : () -> ()
    %cst_33 = arith.constant dense<0.000000e+00> : vector<2x8x4xf32>
    %70 = tpu.matmul %68, %69, %cst_33 {dimension_numbers = #tpu.dot_dimension_numbers<[2], [1], [1], [2], [0, 0, 0, 1, 1, 2], [0], [0]>} : vector<2x8x8xbf16>, vector<2x8x4xbf16>, vector<2x8x4xf32> -> vector<2x8x4xf32>
    "tpu.trace_stop"() : () -> ()
    %71 = vector.extract_strided_slice %30 {offsets = [0, 0, 8], sizes = [2, 8, 4], strides = [1, 1, 1]} : vector<2x8x32xbf16> to vector<2x8x4xbf16>
    %72 = vector.extract_strided_slice %32 {offsets = [0, 0, 8], sizes = [2, 8, 4], strides = [1, 1, 1]} : vector<2x8x32xbf16> to vector<2x8x4xbf16>
    "tpu.trace_start"() <{level = 10 : i32, message = "bqd,bkd->bqk"}> : () -> ()
    %cst_34 = arith.constant dense<0.000000e+00> : vector<2x8x8xf32>
    %73 = tpu.matmul %71, %72, %cst_34 {dimension_numbers = #tpu.dot_dimension_numbers<[2], [2], [1], [1], [0, 0, 0, 1, 1, 1], [0], [0]>} : vector<2x8x4xbf16>, vector<2x8x4xbf16>, vector<2x8x8xf32> -> vector<2x8x8xf32>
    "tpu.trace_stop"() : () -> ()
    %74 = arith.addf %73, %36 : vector<2x8x8xf32>
    %cst_35 = arith.constant dense<0xFF800000> : vector<2x8xf32>
    %75 = vector.multi_reduction <maximumf>, %74, %cst_35 [2] : vector<2x8x8xf32> to vector<2x8xf32>
    %76 = vector.shape_cast %75 : vector<2x8xf32> to vector<2x8x1xf32>
    %77 = vector.broadcast %76 : vector<2x8x1xf32> to vector<2x8x8xf32>
    %78 = arith.subf %74, %77 : vector<2x8x8xf32>
    %79 = math.exp %78 : vector<2x8x8xf32>
    %cst_36 = arith.constant dense<0.000000e+00> : vector<2x8xf32>
    %80 = vector.multi_reduction <add>, %79, %cst_36 [2] : vector<2x8x8xf32> to vector<2x8xf32>
    %81 = vector.shape_cast %80 : vector<2x8xf32> to vector<2x8x1xf32>
    %82 = tpu.reciprocal %81 {approx = true} : vector<2x8x1xf32> -> vector<2x8x1xf32>
    %83 = vector.broadcast %82 : vector<2x8x1xf32> to vector<2x8x8xf32>
    %84 = arith.mulf %79, %83 : vector<2x8x8xf32>
    %85 = arith.truncf %84 : vector<2x8x8xf32> to vector<2x8x8xbf16>
    %86 = vector.extract_strided_slice %34 {offsets = [0, 0, 8], sizes = [2, 8, 4], strides = [1, 1, 1]} : vector<2x8x32xbf16> to vector<2x8x4xbf16>
    "tpu.trace_start"() <{level = 10 : i32, message = "bqk,bkd->bqd"}> : () -> ()
    %cst_37 = arith.constant dense<0.000000e+00> : vector<2x8x4xf32>
    %87 = tpu.matmul %85, %86, %cst_37 {dimension_numbers = #tpu.dot_dimension_numbers<[2], [1], [1], [2], [0, 0, 0, 1, 1, 2], [0], [0]>} : vector<2x8x8xbf16>, vector<2x8x4xbf16>, vector<2x8x4xf32> -> vector<2x8x4xf32>
    "tpu.trace_stop"() : () -> ()
    %88 = vector.extract_strided_slice %30 {offsets = [0, 0, 12], sizes = [2, 8, 4], strides = [1, 1, 1]} : vector<2x8x32xbf16> to vector<2x8x4xbf16>
    %89 = vector.extract_strided_slice %32 {offsets = [0, 0, 12], sizes = [2, 8, 4], strides = [1, 1, 1]} : vector<2x8x32xbf16> to vector<2x8x4xbf16>
    "tpu.trace_start"() <{level = 10 : i32, message = "bqd,bkd->bqk"}> : () -> ()
    %cst_38 = arith.constant dense<0.000000e+00> : vector<2x8x8xf32>
    %90 = tpu.matmul %88, %89, %cst_38 {dimension_numbers = #tpu.dot_dimension_numbers<[2], [2], [1], [1], [0, 0, 0, 1, 1, 1], [0], [0]>} : vector<2x8x4xbf16>, vector<2x8x4xbf16>, vector<2x8x8xf32> -> vector<2x8x8xf32>
    "tpu.trace_stop"() : () -> ()
    %91 = arith.addf %90, %36 : vector<2x8x8xf32>
    %cst_39 = arith.constant dense<0xFF800000> : vector<2x8xf32>
    %92 = vector.multi_reduction <maximumf>, %91, %cst_39 [2] : vector<2x8x8xf32> to vector<2x8xf32>
    %93 = vector.shape_cast %92 : vector<2x8xf32> to vector<2x8x1xf32>
    %94 = vector.broadcast %93 : vector<2x8x1xf32> to vector<2x8x8xf32>
    %95 = arith.subf %91, %94 : vector<2x8x8xf32>
    %96 = math.exp %95 : vector<2x8x8xf32>
    %cst_40 = arith.constant dense<0.000000e+00> : vector<2x8xf32>
    %97 = vector.multi_reduction <add>, %96, %cst_40 [2] : vector<2x8x8xf32> to vector<2x8xf32>
    %98 = vector.shape_cast %97 : vector<2x8xf32> to vector<2x8x1xf32>
    %99 = tpu.reciprocal %98 {approx = true} : vector<2x8x1xf32> -> vector<2x8x1xf32>
    %100 = vector.broadcast %99 : vector<2x8x1xf32> to vector<2x8x8xf32>
    %101 = arith.mulf %96, %100 : vector<2x8x8xf32>
    %102 = arith.truncf %101 : vector<2x8x8xf32> to vector<2x8x8xbf16>
    %103 = vector.extract_strided_slice %34 {offsets = [0, 0, 12], sizes = [2, 8, 4], strides = [1, 1, 1]} : vector<2x8x32xbf16> to vector<2x8x4xbf16>
    "tpu.trace_start"() <{level = 10 : i32, message = "bqk,bkd->bqd"}> : () -> ()
    %cst_41 = arith.constant dense<0.000000e+00> : vector<2x8x4xf32>
    %104 = tpu.matmul %102, %103, %cst_41 {dimension_numbers = #tpu.dot_dimension_numbers<[2], [1], [1], [2], [0, 0, 0, 1, 1, 2], [0], [0]>} : vector<2x8x8xbf16>, vector<2x8x4xbf16>, vector<2x8x4xf32> -> vector<2x8x4xf32>
    "tpu.trace_stop"() : () -> ()
    %105 = vector.extract_strided_slice %30 {offsets = [0, 0, 16], sizes = [2, 8, 4], strides = [1, 1, 1]} : vector<2x8x32xbf16> to vector<2x8x4xbf16>
    %106 = vector.extract_strided_slice %32 {offsets = [0, 0, 16], sizes = [2, 8, 4], strides = [1, 1, 1]} : vector<2x8x32xbf16> to vector<2x8x4xbf16>
    "tpu.trace_start"() <{level = 10 : i32, message = "bqd,bkd->bqk"}> : () -> ()
    %cst_42 = arith.constant dense<0.000000e+00> : vector<2x8x8xf32>
    %107 = tpu.matmul %105, %106, %cst_42 {dimension_numbers = #tpu.dot_dimension_numbers<[2], [2], [1], [1], [0, 0, 0, 1, 1, 1], [0], [0]>} : vector<2x8x4xbf16>, vector<2x8x4xbf16>, vector<2x8x8xf32> -> vector<2x8x8xf32>
    "tpu.trace_stop"() : () -> ()
    %108 = arith.addf %107, %36 : vector<2x8x8xf32>
    %cst_43 = arith.constant dense<0xFF800000> : vector<2x8xf32>
    %109 = vector.multi_reduction <maximumf>, %108, %cst_43 [2] : vector<2x8x8xf32> to vector<2x8xf32>
    %110 = vector.shape_cast %109 : vector<2x8xf32> to vector<2x8x1xf32>
    %111 = vector.broadcast %110 : vector<2x8x1xf32> to vector<2x8x8xf32>
    %112 = arith.subf %108, %111 : vector<2x8x8xf32>
    %113 = math.exp %112 : vector<2x8x8xf32>
    %cst_44 = arith.constant dense<0.000000e+00> : vector<2x8xf32>
    %114 = vector.multi_reduction <add>, %113, %cst_44 [2] : vector<2x8x8xf32> to vector<2x8xf32>
    %115 = vector.shape_cast %114 : vector<2x8xf32> to vector<2x8x1xf32>
    %116 = tpu.reciprocal %115 {approx = true} : vector<2x8x1xf32> -> vector<2x8x1xf32>
    %117 = vector.broadcast %116 : vector<2x8x1xf32> to vector<2x8x8xf32>
    %118 = arith.mulf %113, %117 : vector<2x8x8xf32>
    %119 = arith.truncf %118 : vector<2x8x8xf32> to vector<2x8x8xbf16>
    %120 = vector.extract_strided_slice %34 {offsets = [0, 0, 16], sizes = [2, 8, 4], strides = [1, 1, 1]} : vector<2x8x32xbf16> to vector<2x8x4xbf16>
    "tpu.trace_start"() <{level = 10 : i32, message = "bqk,bkd->bqd"}> : () -> ()
    %cst_45 = arith.constant dense<0.000000e+00> : vector<2x8x4xf32>
    %121 = tpu.matmul %119, %120, %cst_45 {dimension_numbers = #tpu.dot_dimension_numbers<[2], [1], [1], [2], [0, 0, 0, 1, 1, 2], [0], [0]>} : vector<2x8x8xbf16>, vector<2x8x4xbf16>, vector<2x8x4xf32> -> vector<2x8x4xf32>
    "tpu.trace_stop"() : () -> ()
    %122 = vector.extract_strided_slice %30 {offsets = [0, 0, 20], sizes = [2, 8, 4], strides = [1, 1, 1]} : vector<2x8x32xbf16> to vector<2x8x4xbf16>
    %123 = vector.extract_strided_slice %32 {offsets = [0, 0, 20], sizes = [2, 8, 4], strides = [1, 1, 1]} : vector<2x8x32xbf16> to vector<2x8x4xbf16>
    "tpu.trace_start"() <{level = 10 : i32, message = "bqd,bkd->bqk"}> : () -> ()
    %cst_46 = arith.constant dense<0.000000e+00> : vector<2x8x8xf32>
    %124 = tpu.matmul %122, %123, %cst_46 {dimension_numbers = #tpu.dot_dimension_numbers<[2], [2], [1], [1], [0, 0, 0, 1, 1, 1], [0], [0]>} : vector<2x8x4xbf16>, vector<2x8x4xbf16>, vector<2x8x8xf32> -> vector<2x8x8xf32>
    "tpu.trace_stop"() : () -> ()
    %125 = arith.addf %124, %36 : vector<2x8x8xf32>
    %cst_47 = arith.constant dense<0xFF800000> : vector<2x8xf32>
    %126 = vector.multi_reduction <maximumf>, %125, %cst_47 [2] : vector<2x8x8xf32> to vector<2x8xf32>
    %127 = vector.shape_cast %126 : vector<2x8xf32> to vector<2x8x1xf32>
    %128 = vector.broadcast %127 : vector<2x8x1xf32> to vector<2x8x8xf32>
    %129 = arith.subf %125, %128 : vector<2x8x8xf32>
    %130 = math.exp %129 : vector<2x8x8xf32>
    %cst_48 = arith.constant dense<0.000000e+00> : vector<2x8xf32>
    %131 = vector.multi_reduction <add>, %130, %cst_48 [2] : vector<2x8x8xf32> to vector<2x8xf32>
    %132 = vector.shape_cast %131 : vector<2x8xf32> to vector<2x8x1xf32>
    %133 = tpu.reciprocal %132 {approx = true} : vector<2x8x1xf32> -> vector<2x8x1xf32>
    %134 = vector.broadcast %133 : vector<2x8x1xf32> to vector<2x8x8xf32>
    %135 = arith.mulf %130, %134 : vector<2x8x8xf32>
    %136 = arith.truncf %135 : vector<2x8x8xf32> to vector<2x8x8xbf16>
    %137 = vector.extract_strided_slice %34 {offsets = [0, 0, 20], sizes = [2, 8, 4], strides = [1, 1, 1]} : vector<2x8x32xbf16> to vector<2x8x4xbf16>
    "tpu.trace_start"() <{level = 10 : i32, message = "bqk,bkd->bqd"}> : () -> ()
    %cst_49 = arith.constant dense<0.000000e+00> : vector<2x8x4xf32>
    %138 = tpu.matmul %136, %137, %cst_49 {dimension_numbers = #tpu.dot_dimension_numbers<[2], [1], [1], [2], [0, 0, 0, 1, 1, 2], [0], [0]>} : vector<2x8x8xbf16>, vector<2x8x4xbf16>, vector<2x8x4xf32> -> vector<2x8x4xf32>
    "tpu.trace_stop"() : () -> ()
    %139 = vector.extract_strided_slice %30 {offsets = [0, 0, 24], sizes = [2, 8, 4], strides = [1, 1, 1]} : vector<2x8x32xbf16> to vector<2x8x4xbf16>
    %140 = vector.extract_strided_slice %32 {offsets = [0, 0, 24], sizes = [2, 8, 4], strides = [1, 1, 1]} : vector<2x8x32xbf16> to vector<2x8x4xbf16>
    "tpu.trace_start"() <{level = 10 : i32, message = "bqd,bkd->bqk"}> : () -> ()
    %cst_50 = arith.constant dense<0.000000e+00> : vector<2x8x8xf32>
    %141 = tpu.matmul %139, %140, %cst_50 {dimension_numbers = #tpu.dot_dimension_numbers<[2], [2], [1], [1], [0, 0, 0, 1, 1, 1], [0], [0]>} : vector<2x8x4xbf16>, vector<2x8x4xbf16>, vector<2x8x8xf32> -> vector<2x8x8xf32>
    "tpu.trace_stop"() : () -> ()
    %142 = arith.addf %141, %36 : vector<2x8x8xf32>
    %cst_51 = arith.constant dense<0xFF800000> : vector<2x8xf32>
    %143 = vector.multi_reduction <maximumf>, %142, %cst_51 [2] : vector<2x8x8xf32> to vector<2x8xf32>
    %144 = vector.shape_cast %143 : vector<2x8xf32> to vector<2x8x1xf32>
    %145 = vector.broadcast %144 : vector<2x8x1xf32> to vector<2x8x8xf32>
    %146 = arith.subf %142, %145 : vector<2x8x8xf32>
    %147 = math.exp %146 : vector<2x8x8xf32>
    %cst_52 = arith.constant dense<0.000000e+00> : vector<2x8xf32>
    %148 = vector.multi_reduction <add>, %147, %cst_52 [2] : vector<2x8x8xf32> to vector<2x8xf32>
    %149 = vector.shape_cast %148 : vector<2x8xf32> to vector<2x8x1xf32>
    %150 = tpu.reciprocal %149 {approx = true} : vector<2x8x1xf32> -> vector<2x8x1xf32>
    %151 = vector.broadcast %150 : vector<2x8x1xf32> to vector<2x8x8xf32>
    %152 = arith.mulf %147, %151 : vector<2x8x8xf32>
    %153 = arith.truncf %152 : vector<2x8x8xf32> to vector<2x8x8xbf16>
    %154 = vector.extract_strided_slice %34 {offsets = [0, 0, 24], sizes = [2, 8, 4], strides = [1, 1, 1]} : vector<2x8x32xbf16> to vector<2x8x4xbf16>
    "tpu.trace_start"() <{level = 10 : i32, message = "bqk,bkd->bqd"}> : () -> ()
    %cst_53 = arith.constant dense<0.000000e+00> : vector<2x8x4xf32>
    %155 = tpu.matmul %153, %154, %cst_53 {dimension_numbers = #tpu.dot_dimension_numbers<[2], [1], [1], [2], [0, 0, 0, 1, 1, 2], [0], [0]>} : vector<2x8x8xbf16>, vector<2x8x4xbf16>, vector<2x8x4xf32> -> vector<2x8x4xf32>
    "tpu.trace_stop"() : () -> ()
    %156 = vector.extract_strided_slice %30 {offsets = [0, 0, 28], sizes = [2, 8, 4], strides = [1, 1, 1]} : vector<2x8x32xbf16> to vector<2x8x4xbf16>
    %157 = vector.extract_strided_slice %32 {offsets = [0, 0, 28], sizes = [2, 8, 4], strides = [1, 1, 1]} : vector<2x8x32xbf16> to vector<2x8x4xbf16>
    "tpu.trace_start"() <{level = 10 : i32, message = "bqd,bkd->bqk"}> : () -> ()
    %cst_54 = arith.constant dense<0.000000e+00> : vector<2x8x8xf32>
    %158 = tpu.matmul %156, %157, %cst_54 {dimension_numbers = #tpu.dot_dimension_numbers<[2], [2], [1], [1], [0, 0, 0, 1, 1, 1], [0], [0]>} : vector<2x8x4xbf16>, vector<2x8x4xbf16>, vector<2x8x8xf32> -> vector<2x8x8xf32>
    "tpu.trace_stop"() : () -> ()
    %159 = arith.addf %158, %36 : vector<2x8x8xf32>
    %cst_55 = arith.constant dense<0xFF800000> : vector<2x8xf32>
    %160 = vector.multi_reduction <maximumf>, %159, %cst_55 [2] : vector<2x8x8xf32> to vector<2x8xf32>
    %161 = vector.shape_cast %160 : vector<2x8xf32> to vector<2x8x1xf32>
    %162 = vector.broadcast %161 : vector<2x8x1xf32> to vector<2x8x8xf32>
    %163 = arith.subf %159, %162 : vector<2x8x8xf32>
    %164 = math.exp %163 : vector<2x8x8xf32>
    %cst_56 = arith.constant dense<0.000000e+00> : vector<2x8xf32>
    %165 = vector.multi_reduction <add>, %164, %cst_56 [2] : vector<2x8x8xf32> to vector<2x8xf32>
    %166 = vector.shape_cast %165 : vector<2x8xf32> to vector<2x8x1xf32>
    %167 = tpu.reciprocal %166 {approx = true} : vector<2x8x1xf32> -> vector<2x8x1xf32>
    %168 = vector.broadcast %167 : vector<2x8x1xf32> to vector<2x8x8xf32>
    %169 = arith.mulf %164, %168 : vector<2x8x8xf32>
    %170 = arith.truncf %169 : vector<2x8x8xf32> to vector<2x8x8xbf16>
    %171 = vector.extract_strided_slice %34 {offsets = [0, 0, 28], sizes = [2, 8, 4], strides = [1, 1, 1]} : vector<2x8x32xbf16> to vector<2x8x4xbf16>
    "tpu.trace_start"() <{level = 10 : i32, message = "bqk,bkd->bqd"}> : () -> ()
    %cst_57 = arith.constant dense<0.000000e+00> : vector<2x8x4xf32>
    %172 = tpu.matmul %170, %171, %cst_57 {dimension_numbers = #tpu.dot_dimension_numbers<[2], [1], [1], [2], [0, 0, 0, 1, 1, 2], [0], [0]>} : vector<2x8x8xbf16>, vector<2x8x4xbf16>, vector<2x8x4xf32> -> vector<2x8x4xf32>
    "tpu.trace_stop"() : () -> ()
    %173 = tpu.concatenate %53, %70, %87, %104, %121, %138, %155, %172 in 2 : vector<2x8x4xf32>, vector<2x8x4xf32>, vector<2x8x4xf32>, vector<2x8x4xf32>, vector<2x8x4xf32>, vector<2x8x4xf32>, vector<2x8x4xf32>, vector<2x8x4xf32> -> vector<2x8x32xf32>
    %174 = vector.shape_cast %173 : vector<2x8x32xf32> to vector<16x32xf32>
    %175 = arith.truncf %174 : vector<16x32xf32> to vector<16x32xbf16>
    %cst_58 = arith.constant dense<0.000000e+00> : vector<16x32xf32>
    %176 = tpu.matmul %175, %25, %cst_58 {dimension_numbers = #tpu.dot_dimension_numbers<[1], [0], [0], [1], [0, 0, 1, 1], [], []>} : vector<16x32xbf16>, vector<32x32xbf16>, vector<16x32xf32> -> vector<16x32xf32>
    %177 = vector.broadcast %26 : vector<1x32xf32> to vector<16x32xf32>
    %178 = arith.addf %176, %177 : vector<16x32xf32>
    %179 = arith.addf %1, %178 : vector<16x32xf32>
    %c0_59 = arith.constant 0 : index
    %c0_60 = arith.constant 0 : index
    %180 = vector.load %arg19[%c0_59, %c0_60] : memref<1x32xf32, #tpu.memory_space<vmem>>, vector<1x32xf32>
    %c0_61 = arith.constant 0 : index
    %c0_62 = arith.constant 0 : index
    %181 = vector.load %arg20[%c0_61, %c0_62] : memref<1x32xf32, #tpu.memory_space<vmem>>, vector<1x32xf32>
    %cst_63 = arith.constant dense<0.000000e+00> : vector<16xf32>
    %182 = vector.multi_reduction <add>, %179, %cst_63 [1] : vector<16x32xf32> to vector<16xf32>
    %183 = vector.shape_cast %182 : vector<16xf32> to vector<16x1xf32>
    %cst_64 = arith.constant 3.200000e+01 : f32
    %184 = vector.broadcast %cst_64 : f32 to vector<16x1xf32>
    %185 = arith.divf %183, %184 : vector<16x1xf32>
    %186 = vector.broadcast %185 : vector<16x1xf32> to vector<16x32xf32>
    %187 = arith.subf %179, %186 : vector<16x32xf32>
    %188 = arith.mulf %187, %187 : vector<16x32xf32>
    %cst_65 = arith.constant dense<0.000000e+00> : vector<16xf32>
    %189 = vector.multi_reduction <add>, %188, %cst_65 [1] : vector<16x32xf32> to vector<16xf32>
    %190 = vector.shape_cast %189 : vector<16xf32> to vector<16x1xf32>
    %cst_66 = arith.constant 3.200000e+01 : f32
    %191 = vector.broadcast %cst_66 : f32 to vector<16x1xf32>
    %192 = arith.divf %190, %191 : vector<16x1xf32>
    %cst_67 = arith.constant 9.99999974E-6 : f32
    %193 = vector.broadcast %cst_67 : f32 to vector<16x1xf32>
    %194 = arith.addf %192, %193 : vector<16x1xf32>
    %195 = math.rsqrt %194 : vector<16x1xf32>
    %196 = vector.broadcast %195 : vector<16x1xf32> to vector<16x32xf32>
    %197 = arith.mulf %187, %196 : vector<16x32xf32>
    %198 = vector.broadcast %180 : vector<1x32xf32> to vector<16x32xf32>
    %199 = arith.mulf %197, %198 : vector<16x32xf32>
    %200 = vector.broadcast %181 : vector<1x32xf32> to vector<16x32xf32>
    %201 = arith.addf %199, %200 : vector<16x32xf32>
    %202 = arith.truncf %201 : vector<16x32xf32> to vector<16x32xbf16>
    %c0_68 = arith.constant 0 : index
    %c0_69 = arith.constant 0 : index
    %203 = vector.load %arg9[%c0_68, %c0_69] : memref<32x32xbf16, #tpu.memory_space<vmem>>, vector<32x32xbf16>
    %cst_70 = arith.constant dense<0.000000e+00> : vector<16x32xf32>
    %204 = tpu.matmul %202, %203, %cst_70 {dimension_numbers = #tpu.dot_dimension_numbers<[1], [0], [0], [1], [0, 0, 1, 1], [], []>} : vector<16x32xbf16>, vector<32x32xbf16>, vector<16x32xf32> -> vector<16x32xf32>
    %c0_71 = arith.constant 0 : index
    %c0_72 = arith.constant 0 : index
    %205 = vector.load %arg10[%c0_71, %c0_72] : memref<1x32xf32, #tpu.memory_space<vmem>>, vector<1x32xf32>
    %206 = vector.broadcast %205 : vector<1x32xf32> to vector<16x32xf32>
    %207 = arith.addf %204, %206 : vector<16x32xf32>
    %208 = arith.truncf %3 : vector<16x32xf32> to vector<16x32xbf16>
    %c0_73 = arith.constant 0 : index
    %c0_74 = arith.constant 0 : index
    %209 = vector.load %arg11[%c0_73, %c0_74] : memref<32x64xbf16, #tpu.memory_space<vmem>>, vector<32x64xbf16>
    %cst_75 = arith.constant dense<0.000000e+00> : vector<16x64xf32>
    %210 = tpu.matmul %208, %209, %cst_75 {dimension_numbers = #tpu.dot_dimension_numbers<[1], [0], [0], [1], [0, 0, 1, 1], [], []>} : vector<16x32xbf16>, vector<32x64xbf16>, vector<16x64xf32> -> vector<16x64xf32>
    %c0_76 = arith.constant 0 : index
    %c0_77 = arith.constant 0 : index
    %211 = vector.load %arg12[%c0_76, %c0_77] : memref<1x64xf32, #tpu.memory_space<vmem>>, vector<1x64xf32>
    %212 = vector.broadcast %211 : vector<1x64xf32> to vector<16x64xf32>
    %213 = arith.addf %210, %212 : vector<16x64xf32>
    %214 = vector.extract_strided_slice %213 {offsets = [0, 0], sizes = [16, 32], strides = [1, 1]} : vector<16x64xf32> to vector<16x32xf32>
    %215 = vector.extract_strided_slice %213 {offsets = [0, 32], sizes = [16, 32], strides = [1, 1]} : vector<16x64xf32> to vector<16x32xf32>
    %c0_78 = arith.constant 0 : index
    %c0_79 = arith.constant 0 : index
    %216 = vector.load %arg13[%c0_78, %c0_79] : memref<32x32xbf16, #tpu.memory_space<vmem>>, vector<32x32xbf16>
    %c0_80 = arith.constant 0 : index
    %c0_81 = arith.constant 0 : index
    %217 = vector.load %arg14[%c0_80, %c0_81] : memref<1x32xf32, #tpu.memory_space<vmem>>, vector<1x32xf32>
    %cst_82 = arith.constant 5.000000e-01 : f32
    %218 = vector.broadcast %cst_82 : f32 to vector<16x32xf32>
    %219 = arith.mulf %207, %218 : vector<16x32xf32>
    %220 = vector.shape_cast %219 : vector<16x32xf32> to vector<2x8x32xf32>
    %221 = arith.truncf %220 : vector<2x8x32xf32> to vector<2x8x32xbf16>
    %222 = vector.shape_cast %214 : vector<16x32xf32> to vector<2x8x32xf32>
    %223 = arith.truncf %222 : vector<2x8x32xf32> to vector<2x8x32xbf16>
    %224 = vector.shape_cast %215 : vector<16x32xf32> to vector<2x8x32xf32>
    %225 = arith.truncf %224 : vector<2x8x32xf32> to vector<2x8x32xbf16>
    %226 = vector.shape_cast %15 : vector<2x1x8xf32> to vector<2x1x8xf32>
    %227 = vector.broadcast %226 : vector<2x1x8xf32> to vector<2x8x8xf32>
    %228 = vector.extract_strided_slice %221 {offsets = [0, 0, 0], sizes = [2, 8, 4], strides = [1, 1, 1]} : vector<2x8x32xbf16> to vector<2x8x4xbf16>
    %229 = vector.extract_strided_slice %223 {offsets = [0, 0, 0], sizes = [2, 8, 4], strides = [1, 1, 1]} : vector<2x8x32xbf16> to vector<2x8x4xbf16>
    "tpu.trace_start"() <{level = 10 : i32, message = "bqd,bkd->bqk"}> : () -> ()
    %cst_83 = arith.constant dense<0.000000e+00> : vector<2x8x8xf32>
    %230 = tpu.matmul %228, %229, %cst_83 {dimension_numbers = #tpu.dot_dimension_numbers<[2], [2], [1], [1], [0, 0, 0, 1, 1, 1], [0], [0]>} : vector<2x8x4xbf16>, vector<2x8x4xbf16>, vector<2x8x8xf32> -> vector<2x8x8xf32>
    "tpu.trace_stop"() : () -> ()
    %231 = arith.addf %230, %227 : vector<2x8x8xf32>
    %cst_84 = arith.constant dense<0xFF800000> : vector<2x8xf32>
    %232 = vector.multi_reduction <maximumf>, %231, %cst_84 [2] : vector<2x8x8xf32> to vector<2x8xf32>
    %233 = vector.shape_cast %232 : vector<2x8xf32> to vector<2x8x1xf32>
    %234 = vector.broadcast %233 : vector<2x8x1xf32> to vector<2x8x8xf32>
    %235 = arith.subf %231, %234 : vector<2x8x8xf32>
    %236 = math.exp %235 : vector<2x8x8xf32>
    %cst_85 = arith.constant dense<0.000000e+00> : vector<2x8xf32>
    %237 = vector.multi_reduction <add>, %236, %cst_85 [2] : vector<2x8x8xf32> to vector<2x8xf32>
    %238 = vector.shape_cast %237 : vector<2x8xf32> to vector<2x8x1xf32>
    %239 = tpu.reciprocal %238 {approx = true} : vector<2x8x1xf32> -> vector<2x8x1xf32>
    %240 = vector.broadcast %239 : vector<2x8x1xf32> to vector<2x8x8xf32>
    %241 = arith.mulf %236, %240 : vector<2x8x8xf32>
    %242 = arith.truncf %241 : vector<2x8x8xf32> to vector<2x8x8xbf16>
    %243 = vector.extract_strided_slice %225 {offsets = [0, 0, 0], sizes = [2, 8, 4], strides = [1, 1, 1]} : vector<2x8x32xbf16> to vector<2x8x4xbf16>
    "tpu.trace_start"() <{level = 10 : i32, message = "bqk,bkd->bqd"}> : () -> ()
    %cst_86 = arith.constant dense<0.000000e+00> : vector<2x8x4xf32>
    %244 = tpu.matmul %242, %243, %cst_86 {dimension_numbers = #tpu.dot_dimension_numbers<[2], [1], [1], [2], [0, 0, 0, 1, 1, 2], [0], [0]>} : vector<2x8x8xbf16>, vector<2x8x4xbf16>, vector<2x8x4xf32> -> vector<2x8x4xf32>
    "tpu.trace_stop"() : () -> ()
    %245 = vector.extract_strided_slice %221 {offsets = [0, 0, 4], sizes = [2, 8, 4], strides = [1, 1, 1]} : vector<2x8x32xbf16> to vector<2x8x4xbf16>
    %246 = vector.extract_strided_slice %223 {offsets = [0, 0, 4], sizes = [2, 8, 4], strides = [1, 1, 1]} : vector<2x8x32xbf16> to vector<2x8x4xbf16>
    "tpu.trace_start"() <{level = 10 : i32, message = "bqd,bkd->bqk"}> : () -> ()
    %cst_87 = arith.constant dense<0.000000e+00> : vector<2x8x8xf32>
    %247 = tpu.matmul %245, %246, %cst_87 {dimension_numbers = #tpu.dot_dimension_numbers<[2], [2], [1], [1], [0, 0, 0, 1, 1, 1], [0], [0]>} : vector<2x8x4xbf16>, vector<2x8x4xbf16>, vector<2x8x8xf32> -> vector<2x8x8xf32>
    "tpu.trace_stop"() : () -> ()
    %248 = arith.addf %247, %227 : vector<2x8x8xf32>
    %cst_88 = arith.constant dense<0xFF800000> : vector<2x8xf32>
    %249 = vector.multi_reduction <maximumf>, %248, %cst_88 [2] : vector<2x8x8xf32> to vector<2x8xf32>
    %250 = vector.shape_cast %249 : vector<2x8xf32> to vector<2x8x1xf32>
    %251 = vector.broadcast %250 : vector<2x8x1xf32> to vector<2x8x8xf32>
    %252 = arith.subf %248, %251 : vector<2x8x8xf32>
    %253 = math.exp %252 : vector<2x8x8xf32>
    %cst_89 = arith.constant dense<0.000000e+00> : vector<2x8xf32>
    %254 = vector.multi_reduction <add>, %253, %cst_89 [2] : vector<2x8x8xf32> to vector<2x8xf32>
    %255 = vector.shape_cast %254 : vector<2x8xf32> to vector<2x8x1xf32>
    %256 = tpu.reciprocal %255 {approx = true} : vector<2x8x1xf32> -> vector<2x8x1xf32>
    %257 = vector.broadcast %256 : vector<2x8x1xf32> to vector<2x8x8xf32>
    %258 = arith.mulf %253, %257 : vector<2x8x8xf32>
    %259 = arith.truncf %258 : vector<2x8x8xf32> to vector<2x8x8xbf16>
    %260 = vector.extract_strided_slice %225 {offsets = [0, 0, 4], sizes = [2, 8, 4], strides = [1, 1, 1]} : vector<2x8x32xbf16> to vector<2x8x4xbf16>
    "tpu.trace_start"() <{level = 10 : i32, message = "bqk,bkd->bqd"}> : () -> ()
    %cst_90 = arith.constant dense<0.000000e+00> : vector<2x8x4xf32>
    %261 = tpu.matmul %259, %260, %cst_90 {dimension_numbers = #tpu.dot_dimension_numbers<[2], [1], [1], [2], [0, 0, 0, 1, 1, 2], [0], [0]>} : vector<2x8x8xbf16>, vector<2x8x4xbf16>, vector<2x8x4xf32> -> vector<2x8x4xf32>
    "tpu.trace_stop"() : () -> ()
    %262 = vector.extract_strided_slice %221 {offsets = [0, 0, 8], sizes = [2, 8, 4], strides = [1, 1, 1]} : vector<2x8x32xbf16> to vector<2x8x4xbf16>
    %263 = vector.extract_strided_slice %223 {offsets = [0, 0, 8], sizes = [2, 8, 4], strides = [1, 1, 1]} : vector<2x8x32xbf16> to vector<2x8x4xbf16>
    "tpu.trace_start"() <{level = 10 : i32, message = "bqd,bkd->bqk"}> : () -> ()
    %cst_91 = arith.constant dense<0.000000e+00> : vector<2x8x8xf32>
    %264 = tpu.matmul %262, %263, %cst_91 {dimension_numbers = #tpu.dot_dimension_numbers<[2], [2], [1], [1], [0, 0, 0, 1, 1, 1], [0], [0]>} : vector<2x8x4xbf16>, vector<2x8x4xbf16>, vector<2x8x8xf32> -> vector<2x8x8xf32>
    "tpu.trace_stop"() : () -> ()
    %265 = arith.addf %264, %227 : vector<2x8x8xf32>
    %cst_92 = arith.constant dense<0xFF800000> : vector<2x8xf32>
    %266 = vector.multi_reduction <maximumf>, %265, %cst_92 [2] : vector<2x8x8xf32> to vector<2x8xf32>
    %267 = vector.shape_cast %266 : vector<2x8xf32> to vector<2x8x1xf32>
    %268 = vector.broadcast %267 : vector<2x8x1xf32> to vector<2x8x8xf32>
    %269 = arith.subf %265, %268 : vector<2x8x8xf32>
    %270 = math.exp %269 : vector<2x8x8xf32>
    %cst_93 = arith.constant dense<0.000000e+00> : vector<2x8xf32>
    %271 = vector.multi_reduction <add>, %270, %cst_93 [2] : vector<2x8x8xf32> to vector<2x8xf32>
    %272 = vector.shape_cast %271 : vector<2x8xf32> to vector<2x8x1xf32>
    %273 = tpu.reciprocal %272 {approx = true} : vector<2x8x1xf32> -> vector<2x8x1xf32>
    %274 = vector.broadcast %273 : vector<2x8x1xf32> to vector<2x8x8xf32>
    %275 = arith.mulf %270, %274 : vector<2x8x8xf32>
    %276 = arith.truncf %275 : vector<2x8x8xf32> to vector<2x8x8xbf16>
    %277 = vector.extract_strided_slice %225 {offsets = [0, 0, 8], sizes = [2, 8, 4], strides = [1, 1, 1]} : vector<2x8x32xbf16> to vector<2x8x4xbf16>
    "tpu.trace_start"() <{level = 10 : i32, message = "bqk,bkd->bqd"}> : () -> ()
    %cst_94 = arith.constant dense<0.000000e+00> : vector<2x8x4xf32>
    %278 = tpu.matmul %276, %277, %cst_94 {dimension_numbers = #tpu.dot_dimension_numbers<[2], [1], [1], [2], [0, 0, 0, 1, 1, 2], [0], [0]>} : vector<2x8x8xbf16>, vector<2x8x4xbf16>, vector<2x8x4xf32> -> vector<2x8x4xf32>
    "tpu.trace_stop"() : () -> ()
    %279 = vector.extract_strided_slice %221 {offsets = [0, 0, 12], sizes = [2, 8, 4], strides = [1, 1, 1]} : vector<2x8x32xbf16> to vector<2x8x4xbf16>
    %280 = vector.extract_strided_slice %223 {offsets = [0, 0, 12], sizes = [2, 8, 4], strides = [1, 1, 1]} : vector<2x8x32xbf16> to vector<2x8x4xbf16>
    "tpu.trace_start"() <{level = 10 : i32, message = "bqd,bkd->bqk"}> : () -> ()
    %cst_95 = arith.constant dense<0.000000e+00> : vector<2x8x8xf32>
    %281 = tpu.matmul %279, %280, %cst_95 {dimension_numbers = #tpu.dot_dimension_numbers<[2], [2], [1], [1], [0, 0, 0, 1, 1, 1], [0], [0]>} : vector<2x8x4xbf16>, vector<2x8x4xbf16>, vector<2x8x8xf32> -> vector<2x8x8xf32>
    "tpu.trace_stop"() : () -> ()
    %282 = arith.addf %281, %227 : vector<2x8x8xf32>
    %cst_96 = arith.constant dense<0xFF800000> : vector<2x8xf32>
    %283 = vector.multi_reduction <maximumf>, %282, %cst_96 [2] : vector<2x8x8xf32> to vector<2x8xf32>
    %284 = vector.shape_cast %283 : vector<2x8xf32> to vector<2x8x1xf32>
    %285 = vector.broadcast %284 : vector<2x8x1xf32> to vector<2x8x8xf32>
    %286 = arith.subf %282, %285 : vector<2x8x8xf32>
    %287 = math.exp %286 : vector<2x8x8xf32>
    %cst_97 = arith.constant dense<0.000000e+00> : vector<2x8xf32>
    %288 = vector.multi_reduction <add>, %287, %cst_97 [2] : vector<2x8x8xf32> to vector<2x8xf32>
    %289 = vector.shape_cast %288 : vector<2x8xf32> to vector<2x8x1xf32>
    %290 = tpu.reciprocal %289 {approx = true} : vector<2x8x1xf32> -> vector<2x8x1xf32>
    %291 = vector.broadcast %290 : vector<2x8x1xf32> to vector<2x8x8xf32>
    %292 = arith.mulf %287, %291 : vector<2x8x8xf32>
    %293 = arith.truncf %292 : vector<2x8x8xf32> to vector<2x8x8xbf16>
    %294 = vector.extract_strided_slice %225 {offsets = [0, 0, 12], sizes = [2, 8, 4], strides = [1, 1, 1]} : vector<2x8x32xbf16> to vector<2x8x4xbf16>
    "tpu.trace_start"() <{level = 10 : i32, message = "bqk,bkd->bqd"}> : () -> ()
    %cst_98 = arith.constant dense<0.000000e+00> : vector<2x8x4xf32>
    %295 = tpu.matmul %293, %294, %cst_98 {dimension_numbers = #tpu.dot_dimension_numbers<[2], [1], [1], [2], [0, 0, 0, 1, 1, 2], [0], [0]>} : vector<2x8x8xbf16>, vector<2x8x4xbf16>, vector<2x8x4xf32> -> vector<2x8x4xf32>
    "tpu.trace_stop"() : () -> ()
    %296 = vector.extract_strided_slice %221 {offsets = [0, 0, 16], sizes = [2, 8, 4], strides = [1, 1, 1]} : vector<2x8x32xbf16> to vector<2x8x4xbf16>
    %297 = vector.extract_strided_slice %223 {offsets = [0, 0, 16], sizes = [2, 8, 4], strides = [1, 1, 1]} : vector<2x8x32xbf16> to vector<2x8x4xbf16>
    "tpu.trace_start"() <{level = 10 : i32, message = "bqd,bkd->bqk"}> : () -> ()
    %cst_99 = arith.constant dense<0.000000e+00> : vector<2x8x8xf32>
    %298 = tpu.matmul %296, %297, %cst_99 {dimension_numbers = #tpu.dot_dimension_numbers<[2], [2], [1], [1], [0, 0, 0, 1, 1, 1], [0], [0]>} : vector<2x8x4xbf16>, vector<2x8x4xbf16>, vector<2x8x8xf32> -> vector<2x8x8xf32>
    "tpu.trace_stop"() : () -> ()
    %299 = arith.addf %298, %227 : vector<2x8x8xf32>
    %cst_100 = arith.constant dense<0xFF800000> : vector<2x8xf32>
    %300 = vector.multi_reduction <maximumf>, %299, %cst_100 [2] : vector<2x8x8xf32> to vector<2x8xf32>
    %301 = vector.shape_cast %300 : vector<2x8xf32> to vector<2x8x1xf32>
    %302 = vector.broadcast %301 : vector<2x8x1xf32> to vector<2x8x8xf32>
    %303 = arith.subf %299, %302 : vector<2x8x8xf32>
    %304 = math.exp %303 : vector<2x8x8xf32>
    %cst_101 = arith.constant dense<0.000000e+00> : vector<2x8xf32>
    %305 = vector.multi_reduction <add>, %304, %cst_101 [2] : vector<2x8x8xf32> to vector<2x8xf32>
    %306 = vector.shape_cast %305 : vector<2x8xf32> to vector<2x8x1xf32>
    %307 = tpu.reciprocal %306 {approx = true} : vector<2x8x1xf32> -> vector<2x8x1xf32>
    %308 = vector.broadcast %307 : vector<2x8x1xf32> to vector<2x8x8xf32>
    %309 = arith.mulf %304, %308 : vector<2x8x8xf32>
    %310 = arith.truncf %309 : vector<2x8x8xf32> to vector<2x8x8xbf16>
    %311 = vector.extract_strided_slice %225 {offsets = [0, 0, 16], sizes = [2, 8, 4], strides = [1, 1, 1]} : vector<2x8x32xbf16> to vector<2x8x4xbf16>
    "tpu.trace_start"() <{level = 10 : i32, message = "bqk,bkd->bqd"}> : () -> ()
    %cst_102 = arith.constant dense<0.000000e+00> : vector<2x8x4xf32>
    %312 = tpu.matmul %310, %311, %cst_102 {dimension_numbers = #tpu.dot_dimension_numbers<[2], [1], [1], [2], [0, 0, 0, 1, 1, 2], [0], [0]>} : vector<2x8x8xbf16>, vector<2x8x4xbf16>, vector<2x8x4xf32> -> vector<2x8x4xf32>
    "tpu.trace_stop"() : () -> ()
    %313 = vector.extract_strided_slice %221 {offsets = [0, 0, 20], sizes = [2, 8, 4], strides = [1, 1, 1]} : vector<2x8x32xbf16> to vector<2x8x4xbf16>
    %314 = vector.extract_strided_slice %223 {offsets = [0, 0, 20], sizes = [2, 8, 4], strides = [1, 1, 1]} : vector<2x8x32xbf16> to vector<2x8x4xbf16>
    "tpu.trace_start"() <{level = 10 : i32, message = "bqd,bkd->bqk"}> : () -> ()
    %cst_103 = arith.constant dense<0.000000e+00> : vector<2x8x8xf32>
    %315 = tpu.matmul %313, %314, %cst_103 {dimension_numbers = #tpu.dot_dimension_numbers<[2], [2], [1], [1], [0, 0, 0, 1, 1, 1], [0], [0]>} : vector<2x8x4xbf16>, vector<2x8x4xbf16>, vector<2x8x8xf32> -> vector<2x8x8xf32>
    "tpu.trace_stop"() : () -> ()
    %316 = arith.addf %315, %227 : vector<2x8x8xf32>
    %cst_104 = arith.constant dense<0xFF800000> : vector<2x8xf32>
    %317 = vector.multi_reduction <maximumf>, %316, %cst_104 [2] : vector<2x8x8xf32> to vector<2x8xf32>
    %318 = vector.shape_cast %317 : vector<2x8xf32> to vector<2x8x1xf32>
    %319 = vector.broadcast %318 : vector<2x8x1xf32> to vector<2x8x8xf32>
    %320 = arith.subf %316, %319 : vector<2x8x8xf32>
    %321 = math.exp %320 : vector<2x8x8xf32>
    %cst_105 = arith.constant dense<0.000000e+00> : vector<2x8xf32>
    %322 = vector.multi_reduction <add>, %321, %cst_105 [2] : vector<2x8x8xf32> to vector<2x8xf32>
    %323 = vector.shape_cast %322 : vector<2x8xf32> to vector<2x8x1xf32>
    %324 = tpu.reciprocal %323 {approx = true} : vector<2x8x1xf32> -> vector<2x8x1xf32>
    %325 = vector.broadcast %324 : vector<2x8x1xf32> to vector<2x8x8xf32>
    %326 = arith.mulf %321, %325 : vector<2x8x8xf32>
    %327 = arith.truncf %326 : vector<2x8x8xf32> to vector<2x8x8xbf16>
    %328 = vector.extract_strided_slice %225 {offsets = [0, 0, 20], sizes = [2, 8, 4], strides = [1, 1, 1]} : vector<2x8x32xbf16> to vector<2x8x4xbf16>
    "tpu.trace_start"() <{level = 10 : i32, message = "bqk,bkd->bqd"}> : () -> ()
    %cst_106 = arith.constant dense<0.000000e+00> : vector<2x8x4xf32>
    %329 = tpu.matmul %327, %328, %cst_106 {dimension_numbers = #tpu.dot_dimension_numbers<[2], [1], [1], [2], [0, 0, 0, 1, 1, 2], [0], [0]>} : vector<2x8x8xbf16>, vector<2x8x4xbf16>, vector<2x8x4xf32> -> vector<2x8x4xf32>
    "tpu.trace_stop"() : () -> ()
    %330 = vector.extract_strided_slice %221 {offsets = [0, 0, 24], sizes = [2, 8, 4], strides = [1, 1, 1]} : vector<2x8x32xbf16> to vector<2x8x4xbf16>
    %331 = vector.extract_strided_slice %223 {offsets = [0, 0, 24], sizes = [2, 8, 4], strides = [1, 1, 1]} : vector<2x8x32xbf16> to vector<2x8x4xbf16>
    "tpu.trace_start"() <{level = 10 : i32, message = "bqd,bkd->bqk"}> : () -> ()
    %cst_107 = arith.constant dense<0.000000e+00> : vector<2x8x8xf32>
    %332 = tpu.matmul %330, %331, %cst_107 {dimension_numbers = #tpu.dot_dimension_numbers<[2], [2], [1], [1], [0, 0, 0, 1, 1, 1], [0], [0]>} : vector<2x8x4xbf16>, vector<2x8x4xbf16>, vector<2x8x8xf32> -> vector<2x8x8xf32>
    "tpu.trace_stop"() : () -> ()
    %333 = arith.addf %332, %227 : vector<2x8x8xf32>
    %cst_108 = arith.constant dense<0xFF800000> : vector<2x8xf32>
    %334 = vector.multi_reduction <maximumf>, %333, %cst_108 [2] : vector<2x8x8xf32> to vector<2x8xf32>
    %335 = vector.shape_cast %334 : vector<2x8xf32> to vector<2x8x1xf32>
    %336 = vector.broadcast %335 : vector<2x8x1xf32> to vector<2x8x8xf32>
    %337 = arith.subf %333, %336 : vector<2x8x8xf32>
    %338 = math.exp %337 : vector<2x8x8xf32>
    %cst_109 = arith.constant dense<0.000000e+00> : vector<2x8xf32>
    %339 = vector.multi_reduction <add>, %338, %cst_109 [2] : vector<2x8x8xf32> to vector<2x8xf32>
    %340 = vector.shape_cast %339 : vector<2x8xf32> to vector<2x8x1xf32>
    %341 = tpu.reciprocal %340 {approx = true} : vector<2x8x1xf32> -> vector<2x8x1xf32>
    %342 = vector.broadcast %341 : vector<2x8x1xf32> to vector<2x8x8xf32>
    %343 = arith.mulf %338, %342 : vector<2x8x8xf32>
    %344 = arith.truncf %343 : vector<2x8x8xf32> to vector<2x8x8xbf16>
    %345 = vector.extract_strided_slice %225 {offsets = [0, 0, 24], sizes = [2, 8, 4], strides = [1, 1, 1]} : vector<2x8x32xbf16> to vector<2x8x4xbf16>
    "tpu.trace_start"() <{level = 10 : i32, message = "bqk,bkd->bqd"}> : () -> ()
    %cst_110 = arith.constant dense<0.000000e+00> : vector<2x8x4xf32>
    %346 = tpu.matmul %344, %345, %cst_110 {dimension_numbers = #tpu.dot_dimension_numbers<[2], [1], [1], [2], [0, 0, 0, 1, 1, 2], [0], [0]>} : vector<2x8x8xbf16>, vector<2x8x4xbf16>, vector<2x8x4xf32> -> vector<2x8x4xf32>
    "tpu.trace_stop"() : () -> ()
    %347 = vector.extract_strided_slice %221 {offsets = [0, 0, 28], sizes = [2, 8, 4], strides = [1, 1, 1]} : vector<2x8x32xbf16> to vector<2x8x4xbf16>
    %348 = vector.extract_strided_slice %223 {offsets = [0, 0, 28], sizes = [2, 8, 4], strides = [1, 1, 1]} : vector<2x8x32xbf16> to vector<2x8x4xbf16>
    "tpu.trace_start"() <{level = 10 : i32, message = "bqd,bkd->bqk"}> : () -> ()
    %cst_111 = arith.constant dense<0.000000e+00> : vector<2x8x8xf32>
    %349 = tpu.matmul %347, %348, %cst_111 {dimension_numbers = #tpu.dot_dimension_numbers<[2], [2], [1], [1], [0, 0, 0, 1, 1, 1], [0], [0]>} : vector<2x8x4xbf16>, vector<2x8x4xbf16>, vector<2x8x8xf32> -> vector<2x8x8xf32>
    "tpu.trace_stop"() : () -> ()
    %350 = arith.addf %349, %227 : vector<2x8x8xf32>
    %cst_112 = arith.constant dense<0xFF800000> : vector<2x8xf32>
    %351 = vector.multi_reduction <maximumf>, %350, %cst_112 [2] : vector<2x8x8xf32> to vector<2x8xf32>
    %352 = vector.shape_cast %351 : vector<2x8xf32> to vector<2x8x1xf32>
    %353 = vector.broadcast %352 : vector<2x8x1xf32> to vector<2x8x8xf32>
    %354 = arith.subf %350, %353 : vector<2x8x8xf32>
    %355 = math.exp %354 : vector<2x8x8xf32>
    %cst_113 = arith.constant dense<0.000000e+00> : vector<2x8xf32>
    %356 = vector.multi_reduction <add>, %355, %cst_113 [2] : vector<2x8x8xf32> to vector<2x8xf32>
    %357 = vector.shape_cast %356 : vector<2x8xf32> to vector<2x8x1xf32>
    %358 = tpu.reciprocal %357 {approx = true} : vector<2x8x1xf32> -> vector<2x8x1xf32>
    %359 = vector.broadcast %358 : vector<2x8x1xf32> to vector<2x8x8xf32>
    %360 = arith.mulf %355, %359 : vector<2x8x8xf32>
    %361 = arith.truncf %360 : vector<2x8x8xf32> to vector<2x8x8xbf16>
    %362 = vector.extract_strided_slice %225 {offsets = [0, 0, 28], sizes = [2, 8, 4], strides = [1, 1, 1]} : vector<2x8x32xbf16> to vector<2x8x4xbf16>
    "tpu.trace_start"() <{level = 10 : i32, message = "bqk,bkd->bqd"}> : () -> ()
    %cst_114 = arith.constant dense<0.000000e+00> : vector<2x8x4xf32>
    %363 = tpu.matmul %361, %362, %cst_114 {dimension_numbers = #tpu.dot_dimension_numbers<[2], [1], [1], [2], [0, 0, 0, 1, 1, 2], [0], [0]>} : vector<2x8x8xbf16>, vector<2x8x4xbf16>, vector<2x8x4xf32> -> vector<2x8x4xf32>
    "tpu.trace_stop"() : () -> ()
    %364 = tpu.concatenate %244, %261, %278, %295, %312, %329, %346, %363 in 2 : vector<2x8x4xf32>, vector<2x8x4xf32>, vector<2x8x4xf32>, vector<2x8x4xf32>, vector<2x8x4xf32>, vector<2x8x4xf32>, vector<2x8x4xf32>, vector<2x8x4xf32> -> vector<2x8x32xf32>
    %365 = vector.shape_cast %364 : vector<2x8x32xf32> to vector<16x32xf32>
    %366 = arith.truncf %365 : vector<16x32xf32> to vector<16x32xbf16>
    %cst_115 = arith.constant dense<0.000000e+00> : vector<16x32xf32>
    %367 = tpu.matmul %366, %216, %cst_115 {dimension_numbers = #tpu.dot_dimension_numbers<[1], [0], [0], [1], [0, 0, 1, 1], [], []>} : vector<16x32xbf16>, vector<32x32xbf16>, vector<16x32xf32> -> vector<16x32xf32>
    %368 = vector.broadcast %217 : vector<1x32xf32> to vector<16x32xf32>
    %369 = arith.addf %367, %368 : vector<16x32xf32>
    %370 = arith.addf %201, %369 : vector<16x32xf32>
    %c0_116 = arith.constant 0 : index
    %c0_117 = arith.constant 0 : index
    %371 = vector.load %arg21[%c0_116, %c0_117] : memref<1x32xf32, #tpu.memory_space<vmem>>, vector<1x32xf32>
    %c0_118 = arith.constant 0 : index
    %c0_119 = arith.constant 0 : index
    %372 = vector.load %arg22[%c0_118, %c0_119] : memref<1x32xf32, #tpu.memory_space<vmem>>, vector<1x32xf32>
    %cst_120 = arith.constant dense<0.000000e+00> : vector<16xf32>
    %373 = vector.multi_reduction <add>, %370, %cst_120 [1] : vector<16x32xf32> to vector<16xf32>
    %374 = vector.shape_cast %373 : vector<16xf32> to vector<16x1xf32>
    %cst_121 = arith.constant 3.200000e+01 : f32
    %375 = vector.broadcast %cst_121 : f32 to vector<16x1xf32>
    %376 = arith.divf %374, %375 : vector<16x1xf32>
    %377 = vector.broadcast %376 : vector<16x1xf32> to vector<16x32xf32>
    %378 = arith.subf %370, %377 : vector<16x32xf32>
    %379 = arith.mulf %378, %378 : vector<16x32xf32>
    %cst_122 = arith.constant dense<0.000000e+00> : vector<16xf32>
    %380 = vector.multi_reduction <add>, %379, %cst_122 [1] : vector<16x32xf32> to vector<16xf32>
    %381 = vector.shape_cast %380 : vector<16xf32> to vector<16x1xf32>
    %cst_123 = arith.constant 3.200000e+01 : f32
    %382 = vector.broadcast %cst_123 : f32 to vector<16x1xf32>
    %383 = arith.divf %381, %382 : vector<16x1xf32>
    %cst_124 = arith.constant 9.99999974E-6 : f32
    %384 = vector.broadcast %cst_124 : f32 to vector<16x1xf32>
    %385 = arith.addf %383, %384 : vector<16x1xf32>
    %386 = math.rsqrt %385 : vector<16x1xf32>
    %387 = vector.broadcast %386 : vector<16x1xf32> to vector<16x32xf32>
    %388 = arith.mulf %378, %387 : vector<16x32xf32>
    %389 = vector.broadcast %371 : vector<1x32xf32> to vector<16x32xf32>
    %390 = arith.mulf %388, %389 : vector<16x32xf32>
    %391 = vector.broadcast %372 : vector<1x32xf32> to vector<16x32xf32>
    %392 = arith.addf %390, %391 : vector<16x32xf32>
    %393 = arith.truncf %392 : vector<16x32xf32> to vector<16x32xbf16>
    %c0_125 = arith.constant 0 : index
    %c0_126 = arith.constant 0 : index
    %394 = vector.load %arg15[%c0_125, %c0_126] : memref<32x2048xbf16, #tpu.memory_space<vmem>>, vector<32x2048xbf16>
    %cst_127 = arith.constant dense<0.000000e+00> : vector<16x2048xf32>
    %395 = tpu.matmul %393, %394, %cst_127 {dimension_numbers = #tpu.dot_dimension_numbers<[1], [0], [0], [1], [0, 0, 1, 1], [], []>} : vector<16x32xbf16>, vector<32x2048xbf16>, vector<16x2048xf32> -> vector<16x2048xf32>
    %c0_128 = arith.constant 0 : index
    %c0_129 = arith.constant 0 : index
    %396 = vector.load %arg16[%c0_128, %c0_129] : memref<1x2048xf32, #tpu.memory_space<vmem>>, vector<1x2048xf32>
    %397 = vector.broadcast %396 : vector<1x2048xf32> to vector<16x2048xf32>
    %398 = arith.addf %395, %397 : vector<16x2048xf32>
    %cst_130 = arith.constant 0.000000e+00 : f32
    %399 = vector.broadcast %cst_130 : f32 to vector<16x2048xf32>
    %400 = arith.maximumf %398, %399 : vector<16x2048xf32>
    %401 = arith.truncf %400 : vector<16x2048xf32> to vector<16x2048xbf16>
    %c0_131 = arith.constant 0 : index
    %c0_132 = arith.constant 0 : index
    %402 = vector.load %arg17[%c0_131, %c0_132] : memref<2048x32xbf16, #tpu.memory_space<vmem>>, vector<2048x32xbf16>
    %cst_133 = arith.constant dense<0.000000e+00> : vector<16x32xf32>
    %403 = tpu.matmul %401, %402, %cst_133 {dimension_numbers = #tpu.dot_dimension_numbers<[1], [0], [0], [1], [0, 0, 1, 1], [], []>} : vector<16x2048xbf16>, vector<2048x32xbf16>, vector<16x32xf32> -> vector<16x32xf32>
    %c0_134 = arith.constant 0 : index
    %c0_135 = arith.constant 0 : index
    %404 = vector.load %arg18[%c0_134, %c0_135] : memref<1x32xf32, #tpu.memory_space<vmem>>, vector<1x32xf32>
    %405 = vector.broadcast %404 : vector<1x32xf32> to vector<16x32xf32>
    %406 = arith.addf %403, %405 : vector<16x32xf32>
    %407 = arith.addf %392, %406 : vector<16x32xf32>
    %c0_136 = arith.constant 0 : index
    %c0_137 = arith.constant 0 : index
    %408 = vector.load %arg23[%c0_136, %c0_137] : memref<1x32xf32, #tpu.memory_space<vmem>>, vector<1x32xf32>
    %c0_138 = arith.constant 0 : index
    %c0_139 = arith.constant 0 : index
    %409 = vector.load %arg24[%c0_138, %c0_139] : memref<1x32xf32, #tpu.memory_space<vmem>>, vector<1x32xf32>
    %cst_140 = arith.constant dense<0.000000e+00> : vector<16xf32>
    %410 = vector.multi_reduction <add>, %407, %cst_140 [1] : vector<16x32xf32> to vector<16xf32>
    %411 = vector.shape_cast %410 : vector<16xf32> to vector<16x1xf32>
    %cst_141 = arith.constant 3.200000e+01 : f32
    %412 = vector.broadcast %cst_141 : f32 to vector<16x1xf32>
    %413 = arith.divf %411, %412 : vector<16x1xf32>
    %414 = vector.broadcast %413 : vector<16x1xf32> to vector<16x32xf32>
    %415 = arith.subf %407, %414 : vector<16x32xf32>
    %416 = arith.mulf %415, %415 : vector<16x32xf32>
    %cst_142 = arith.constant dense<0.000000e+00> : vector<16xf32>
    %417 = vector.multi_reduction <add>, %416, %cst_142 [1] : vector<16x32xf32> to vector<16xf32>
    %418 = vector.shape_cast %417 : vector<16xf32> to vector<16x1xf32>
    %cst_143 = arith.constant 3.200000e+01 : f32
    %419 = vector.broadcast %cst_143 : f32 to vector<16x1xf32>
    %420 = arith.divf %418, %419 : vector<16x1xf32>
    %cst_144 = arith.constant 9.99999974E-6 : f32
    %421 = vector.broadcast %cst_144 : f32 to vector<16x1xf32>
    %422 = arith.addf %420, %421 : vector<16x1xf32>
    %423 = math.rsqrt %422 : vector<16x1xf32>
    %424 = vector.broadcast %423 : vector<16x1xf32> to vector<16x32xf32>
    %425 = arith.mulf %415, %424 : vector<16x32xf32>
    %426 = vector.broadcast %408 : vector<1x32xf32> to vector<16x32xf32>
    %427 = arith.mulf %425, %426 : vector<16x32xf32>
    %428 = vector.broadcast %409 : vector<1x32xf32> to vector<16x32xf32>
    %429 = arith.addf %427, %428 : vector<16x32xf32>
    %430 = vector.shape_cast %429 : vector<16x32xf32> to vector<2x8x32xf32>
    %c0_145 = arith.constant 0 : index
    %c0_146 = arith.constant 0 : index
    %c0_147 = arith.constant 0 : index
    %431 = vector.load %arg25[%c0_145, %c0_146, %c0_147] : memref<2x8x32xf32, #tpu.memory_space<vmem>>, vector<2x8x32xf32>
    tpu.vector_store %arg25[%c0_145, %c0_146, %c0_147], %430 {strides = array<i32>} : memref<2x8x32xf32, #tpu.memory_space<vmem>>, vector<2x8x32xf32>,
    return
  }
  func.func @transform_0(%arg0: i32) -> (i32, i32, i32) {
    %c0_i32 = arith.constant 0 : i32
    %c0_i32_0 = arith.constant 0 : i32
    %c0_i32_1 = arith.constant 0 : i32
    return %arg0, %c0_i32, %c0_i32_0 : i32, i32, i32
  }
  func.func @transform_1(%arg0: i32) -> (i32, i32, i32) {
    %c0_i32 = arith.constant 0 : i32
    %c0_i32_0 = arith.constant 0 : i32
    %c0_i32_1 = arith.constant 0 : i32
    return %arg0, %c0_i32, %c0_i32_0 : i32, i32, i32
  }
  func.func @transform_2(%arg0: i32) -> (i32, i32, i32) {
    %c0_i32 = arith.constant 0 : i32
    %c0_i32_0 = arith.constant 0 : i32
    %c0_i32_1 = arith.constant 0 : i32
    return %arg0, %c0_i32, %c0_i32_0 : i32, i32, i32
  }
  func.func @transform_3(%arg0: i32) -> (i32, i32, i32) {
    %c0_i32 = arith.constant 0 : i32
    %c0_i32_0 = arith.constant 0 : i32
    %c0_i32_1 = arith.constant 0 : i32
    return %arg0, %c0_i32, %c0_i32_0 : i32, i32, i32
  }
  func.func @transform_4(%arg0: i32) -> (i32, i32) {
    %c0_i32 = arith.constant 0 : i32
    %c0_i32_0 = arith.constant 0 : i32
    %c0_i32_1 = arith.constant 0 : i32
    return %c0_i32, %c0_i32_0 : i32, i32
  }
  func.func @transform_5(%arg0: i32) -> (i32, i32) {
    %c0_i32 = arith.constant 0 : i32
    %c0_i32_0 = arith.constant 0 : i32
    %c0_i32_1 = arith.constant 0 : i32
    return %c0_i32, %c0_i32_0 : i32, i32
  }
  func.func @transform_6(%arg0: i32) -> (i32, i32) {
    %c0_i32 = arith.constant 0 : i32
    %c0_i32_0 = arith.constant 0 : i32
    %c0_i32_1 = arith.constant 0 : i32
    return %c0_i32, %c0_i32_0 : i32, i32
  }
  func.func @transform_7(%arg0: i32) -> (i32, i32) {
    %c0_i32 = arith.constant 0 : i32
    %c0_i32_0 = arith.constant 0 : i32
    %c0_i32_1 = arith.constant 0 : i32
    return %c0_i32, %c0_i32_0 : i32, i32
  }
  func.func @transform_8(%arg0: i32) -> (i32, i32) {
    %c0_i32 = arith.constant 0 : i32
    %c0_i32_0 = arith.constant 0 : i32
    %c0_i32_1 = arith.constant 0 : i32
    return %c0_i32, %c0_i32_0 : i32, i32
  }
  func.func @transform_9(%arg0: i32) -> (i32, i32) {
    %c0_i32 = arith.constant 0 : i32
    %c0_i32_0 = arith.constant 0 : i32
    %c0_i32_1 = arith.constant 0 : i32
    return %c0_i32, %c0_i32_0 : i32, i32
  }
  func.func @transform_10(%arg0: i32) -> (i32, i32) {
    %c0_i32 = arith.constant 0 : i32
    %c0_i32_0 = arith.constant 0 : i32
    %c0_i32_1 = arith.constant 0 : i32
    return %c0_i32, %c0_i32_0 : i32, i32
  }
  func.func @transform_11(%arg0: i32) -> (i32, i32) {
    %c0_i32 = arith.constant 0 : i32
    %c0_i32_0 = arith.constant 0 : i32
    %c0_i32_1 = arith.constant 0 : i32
    return %c0_i32, %c0_i32_0 : i32, i32
  }
  func.func @transform_12(%arg0: i32) -> (i32, i32) {
    %c0_i32 = arith.constant 0 : i32
    %c0_i32_0 = arith.constant 0 : i32
    %c0_i32_1 = arith.constant 0 : i32
    return %c0_i32, %c0_i32_0 : i32, i32
  }
  func.func @transform_13(%arg0: i32) -> (i32, i32) {
    %c0_i32 = arith.constant 0 : i32
    %c0_i32_0 = arith.constant 0 : i32
    %c0_i32_1 = arith.constant 0 : i32
    return %c0_i32, %c0_i32_0 : i32, i32
  }
  func.func @transform_14(%arg0: i32) -> (i32, i32) {
    %c0_i32 = arith.constant 0 : i32
    %c0_i32_0 = arith.constant 0 : i32
    %c0_i32_1 = arith.constant 0 : i32
    return %c0_i32, %c0_i32_0 : i32, i32
  }
  func.func @transform_15(%arg0: i32) -> (i32, i32) {
    %c0_i32 = arith.constant 0 : i32
    %c0_i32_0 = arith.constant 0 : i32
    %c0_i32_1 = arith.constant 0 : i32
    return %c0_i32, %c0_i32_0 : i32, i32
  }
  func.func @transform_16(%arg0: i32) -> (i32, i32) {
    %c0_i32 = arith.constant 0 : i32
    %c0_i32_0 = arith.constant 0 : i32
    %c0_i32_1 = arith.constant 0 : i32
    return %c0_i32, %c0_i32_0 : i32, i32
  }
  func.func @transform_17(%arg0: i32) -> (i32, i32) {
    %c0_i32 = arith.constant 0 : i32
    %c0_i32_0 = arith.constant 0 : i32
    %c0_i32_1 = arith.constant 0 : i32
    return %c0_i32, %c0_i32_0 : i32, i32
  }
  func.func @transform_18(%arg0: i32) -> (i32, i32) {
    %c0_i32 = arith.constant 0 : i32
    %c0_i32_0 = arith.constant 0 : i32
    %c0_i32_1 = arith.constant 0 : i32
    return %c0_i32, %c0_i32_0 : i32, i32
  }
  func.func @transform_19(%arg0: i32) -> (i32, i32) {
    %c0_i32 = arith.constant 0 : i32
    %c0_i32_0 = arith.constant 0 : i32
    %c0_i32_1 = arith.constant 0 : i32
    return %c0_i32, %c0_i32_0 : i32, i32
  }
  func.func @transform_20(%arg0: i32) -> (i32, i32) {
    %c0_i32 = arith.constant 0 : i32
    %c0_i32_0 = arith.constant 0 : i32
    %c0_i32_1 = arith.constant 0 : i32
    return %c0_i32, %c0_i32_0 : i32, i32
  }
  func.func @transform_21(%arg0: i32) -> (i32, i32) {
    %c0_i32 = arith.constant 0 : i32
    %c0_i32_0 = arith.constant 0 : i32
    %c0_i32_1 = arith.constant 0 : i32
    return %c0_i32, %c0_i32_0 : i32, i32
  }
  func.func @transform_22(%arg0: i32) -> (i32, i32) {
    %c0_i32 = arith.constant 0 : i32
    %c0_i32_0 = arith.constant 0 : i32
    %c0_i32_1 = arith.constant 0 : i32
    return %c0_i32, %c0_i32_0 : i32, i32
  }
  func.func @transform_23(%arg0: i32) -> (i32, i32) {
    %c0_i32 = arith.constant 0 : i32
    %c0_i32_0 = arith.constant 0 : i32
    %c0_i32_1 = arith.constant 0 : i32
    return %c0_i32, %c0_i32_0 : i32, i32
  }
  func.func @transform_24(%arg0: i32) -> (i32, i32, i32) {
    %c0_i32 = arith.constant 0 : i32
    %c0_i32_0 = arith.constant 0 : i32
    %c0_i32_1 = arith.constant 0 : i32
    return %arg0, %c0_i32, %c0_i32_0 : i32, i32, i32
  }
}

</mosaic_0001>

<llo_original>
// kernel: tpu_custom_call.1
$region0: #{tpu_custom_call.1}
  #allocation0 [shape = 'u32[]', space=smem, size = 0x4, offset = 0x4, fixed_abs, tag = 'smem constant byte address 0x4 - core index']
  #allocation1 [shape = 'u32[144,128]{1,0:T(1,128)}', space=vmem, size = 0x12000, scoped, tag = 'internal scratch']
  %s0 = inlined_call_operand.vmem [shape: f32[4,8,32], index: 0, kind: input, shape index: {}]
  %s1 = inlined_call_operand.vmem [shape: f32[4,8,32], index: 1, kind: input, shape index: {}]
  %s2 = inlined_call_operand.vmem [shape: f32[4,1,8], index: 2, kind: input, shape index: {}]
  %s3 = inlined_call_operand.vmem [shape: f32[4,1,8], index: 3, kind: input, shape index: {}]
  %s4 = inlined_call_operand.vmem [shape: bf16[32,96], index: 4, kind: input, shape index: {}]
  %s5 = inlined_call_operand.vmem [shape: f32[1,96], index: 5, kind: input, shape index: {}]
  %s6 = inlined_call_operand.vmem [shape: bf16[32,32], index: 6, kind: input, shape index: {}]
  %s7 = inlined_call_operand.vmem [shape: f32[1,32], index: 7, kind: input, shape index: {}]
  %s8 = inlined_call_operand.vmem [shape: bf16[32,32], index: 8, kind: input, shape index: {}]
  %s9 = inlined_call_operand.vmem [shape: f32[1,32], index: 9, kind: input, shape index: {}]
  %s10 = inlined_call_operand.vmem [shape: bf16[32,64], index: 10, kind: input, shape index: {}]
  %s11 = inlined_call_operand.vmem [shape: f32[1,64], index: 11, kind: input, shape index: {}]
  %s12 = inlined_call_operand.vmem [shape: bf16[32,32], index: 12, kind: input, shape index: {}]
  %s13 = inlined_call_operand.vmem [shape: f32[1,32], index: 13, kind: input, shape index: {}]
  %s14 = inlined_call_operand.vmem [shape: bf16[32,2048], index: 14, kind: input, shape index: {}]
  %s15 = inlined_call_operand.vmem [shape: f32[1,2048], index: 15, kind: input, shape index: {}]
  %s16 = inlined_call_operand.vmem [shape: bf16[2048,32], index: 16, kind: input, shape index: {}]
  %s17 = inlined_call_operand.vmem [shape: f32[1,32], index: 17, kind: input, shape index: {}]
  %s18 = inlined_call_operand.vmem [shape: f32[1,32], index: 18, kind: input, shape index: {}]
  %s19 = inlined_call_operand.vmem [shape: f32[1,32], index: 19, kind: input, shape index: {}]
  %s20 = inlined_call_operand.vmem [shape: f32[1,32], index: 20, kind: input, shape index: {}]
  %s21 = inlined_call_operand.vmem [shape: f32[1,32], index: 21, kind: input, shape index: {}]
  %s22 = inlined_call_operand.vmem [shape: f32[1,32], index: 22, kind: input, shape index: {}]
  %s23 = inlined_call_operand.vmem [shape: f32[1,32], index: 23, kind: input, shape index: {}]
  %s24 = inlined_call_operand.hbm [shape: f32[4,8,32], index: 24, kind: output, shape index: {}]
  %s25 = sld [smem:[#allocation0]]
  $region129: #{tpu_custom_call.1} parent=0
    _
  %s27 = ssub.s32 1, %s25
  %s28 = scalar_select 0, %s27, %s25
  $region1: #{tpu_custom_call.1} parent=0
    #allocation2 [shape = 'u8[16384]{0}', space=vmem, size = 0x4000, scoped, tag = 'output window, operand 0']
    #allocation3 [shape = 's32[2]{0}', space=sflag, size = 0x8, scoped, tag = 'scoped memory for tpu_custom_call.1']
    %29 = vsyncpa [#allocation3], 0
    %s30 = scalar_lea.sflag [#allocation3], 1
    %31 = vsyncpa %s30, 0
    loop: start=0, step=1, limit=4
    $region2: #{tpu_custom_call.1} parent=1 // loop_pre_header
      _
    $region3: #{tpu_custom_call.1} parent=1 // loop_header
      %s33 = sphi 0, %s37
      %p34 = scmp.ge.s32.totalorder %s33, 4
      %s43 = sphi 0, %s45
      %s46 = sphi 0, %s43
      %s47 = sphi 0, %s46
      %s63 = sphi 0, %s47
      %s69 = sphi 0, %s71
      %s72 = sphi 0, %s69
      %s73 = sphi 0, %s72
      %s89 = sphi 0, %s73
      %s95 = sphi 0, %s97
      %s98 = sphi 0, %s95
      %s99 = sphi 0, %s98
      %s115 = sphi 0, %s99
      %s121 = sphi 0, %s123
      %s124 = sphi 0, %s121
      %s125 = sphi 0, %s124
      %s141 = sphi 0, %s125
      %s145 = sphi 0, %s145
      %s147 = sphi 0, %s145
      %s148 = sphi 0, %s147
      %s162 = sphi 0, %s148
      %s166 = sphi 0, %s166
      %s168 = sphi 0, %s166
      %s169 = sphi 0, %s168
      %s183 = sphi 0, %s169
      %s187 = sphi 0, %s187
      %s189 = sphi 0, %s187
      %s190 = sphi 0, %s189
      %s204 = sphi 0, %s190
      %s208 = sphi 0, %s208
      %s210 = sphi 0, %s208
      %s211 = sphi 0, %s210
      %s225 = sphi 0, %s211
      %s229 = sphi 0, %s229
      %s231 = sphi 0, %s229
      %s232 = sphi 0, %s231
      %s246 = sphi 0, %s232
      %s250 = sphi 0, %s250
      %s252 = sphi 0, %s250
      %s253 = sphi 0, %s252
      %s267 = sphi 0, %s253
      %s271 = sphi 0, %s271
      %s273 = sphi 0, %s271
      %s274 = sphi 0, %s273
      %s288 = sphi 0, %s274
      %s292 = sphi 0, %s292
      %s294 = sphi 0, %s292
      %s295 = sphi 0, %s294
      %s309 = sphi 0, %s295
      %s313 = sphi 0, %s313
      %s315 = sphi 0, %s313
      %s316 = sphi 0, %s315
      %s330 = sphi 0, %s316
      %s334 = sphi 0, %s334
      %s336 = sphi 0, %s334
      %s337 = sphi 0, %s336
      %s351 = sphi 0, %s337
      %s355 = sphi 0, %s355
      %s357 = sphi 0, %s355
      %s358 = sphi 0, %s357
      %s372 = sphi 0, %s358
      %s376 = sphi 0, %s376
      %s378 = sphi 0, %s376
      %s379 = sphi 0, %s378
      %s393 = sphi 0, %s379
      %s397 = sphi 0, %s397
      %s399 = sphi 0, %s397
      %s400 = sphi 0, %s399
      %s414 = sphi 0, %s400
      %s418 = sphi 0, %s418
      %s420 = sphi 0, %s418
      %s421 = sphi 0, %s420
      %s435 = sphi 0, %s421
      %s439 = sphi 0, %s439
      %s441 = sphi 0, %s439
      %s442 = sphi 0, %s441
      %s456 = sphi 0, %s442
      %s460 = sphi 0, %s460
      %s462 = sphi 0, %s460
      %s463 = sphi 0, %s462
      %s477 = sphi 0, %s463
      %s481 = sphi 0, %s481
      %s483 = sphi 0, %s481
      %s484 = sphi 0, %s483
      %s498 = sphi 0, %s484
      %s502 = sphi 0, %s502
      %s504 = sphi 0, %s502
      %s505 = sphi 0, %s504
      %s519 = sphi 0, %s505
      %s523 = sphi 0, %s523
      %s525 = sphi 0, %s523
      %s526 = sphi 0, %s525
      %s540 = sphi 0, %s526
      %s544 = sphi 0, %s544
      %s546 = sphi 0, %s544
      %s547 = sphi 0, %s546
      %s561 = sphi 0, %s547
      %s567 = sphi 0, %s569
      %s570 = sphi 0, %s567
      %s571 = sphi 0, %s570
      %s587 = sphi 0, %s571
    $region4: #{tpu_custom_call.1} parent=1 // loop_header_branch
      %36 = sbr.rel (%p34) target = $region8
    $region5: #{tpu_custom_call.1} parent=1 // loop_body
      %s38 = ssub.s32 %s33, 1
      %s39 = ssub.s32 %s33, 2
      %s40 = sadd.s32 %s33, 1
      %s41 = ssub.s32 %s33, %s40
      %p42 = scmp.eq.s32.totalorder %s41, 0
      %s44 = sadd.s32 %s43, 1
      %s45 = scalar_select %p42, %s43, %s44
      %p48 = pneg %p42
      %p49 = scmp.eq.s32.totalorder %s33, 1
      %p50 = por %p48, %p49
      %p51 = scmp.ne.s32.totalorder %s43, %s46
      %p52 = scmp.eq.s32.totalorder %s33, 0
      %p53 = por %p51, %p52
      %p54 = scmp.ne.s32.totalorder %s43, %s46
      %p55 = scmp.eq.s32.totalorder %s38, 1
      %p56 = por %p54, %p55
      %p57 = scmp.ne.s32.totalorder %s46, %s47
      %p58 = scmp.eq.s32.totalorder %s38, 0
      %p59 = por %p57, %p58
      %p60 = scmp.ne.s32.totalorder %s46, %s47
      %p61 = scmp.eq.s32.totalorder %s39, 1
      %p62 = por %p60, %p61
      %p64 = scmp.ne.s32.totalorder %s47, %s63
      %p65 = scmp.eq.s32.totalorder %s39, 0
      %p66 = por %p64, %p65
      %s67 = ssub.s32 %s33, %s40
      %p68 = scmp.eq.s32.totalorder %s67, 0
      %s70 = sadd.s32 %s69, 1
      %s71 = scalar_select %p68, %s69, %s70
      %p74 = pneg %p68
      %p75 = scmp.eq.s32.totalorder %s33, 1
      %p76 = por %p74, %p75
      %p77 = scmp.ne.s32.totalorder %s69, %s72
      %p78 = scmp.eq.s32.totalorder %s33, 0
      %p79 = por %p77, %p78
      %p80 = scmp.ne.s32.totalorder %s69, %s72
      %p81 = scmp.eq.s32.totalorder %s38, 1
      %p82 = por %p80, %p81
      %p83 = scmp.ne.s32.totalorder %s72, %s73
      %p84 = scmp.eq.s32.totalorder %s38, 0
      %p85 = por %p83, %p84
      %p86 = scmp.ne.s32.totalorder %s72, %s73
      %p87 = scmp.eq.s32.totalorder %s39, 1
      %p88 = por %p86, %p87
      %p90 = scmp.ne.s32.totalorder %s73, %s89
      %p91 = scmp.eq.s32.totalorder %s39, 0
      %p92 = por %p90, %p91
      %s93 = ssub.s32 %s33, %s40
      %p94 = scmp.eq.s32.totalorder %s93, 0
      %s96 = sadd.s32 %s95, 1
      %s97 = scalar_select %p94, %s95, %s96
      %p100 = pneg %p94
      %p101 = scmp.eq.s32.totalorder %s33, 1
      %p102 = por %p100, %p101
      %p103 = scmp.ne.s32.totalorder %s95, %s98
      %p104 = scmp.eq.s32.totalorder %s33, 0
      %p105 = por %p103, %p104
      %p106 = scmp.ne.s32.totalorder %s95, %s98
      %p107 = scmp.eq.s32.totalorder %s38, 1
      %p108 = por %p106, %p107
      %p109 = scmp.ne.s32.totalorder %s98, %s99
      %p110 = scmp.eq.s32.totalorder %s38, 0
      %p111 = por %p109, %p110
      %p112 = scmp.ne.s32.totalorder %s98, %s99
      %p113 = scmp.eq.s32.totalorder %s39, 1
      %p114 = por %p112, %p113
      %p116 = scmp.ne.s32.totalorder %s99, %s115
      %p117 = scmp.eq.s32.totalorder %s39, 0
      %p118 = por %p116, %p117
      %s119 = ssub.s32 %s33, %s40
      %p120 = scmp.eq.s32.totalorder %s119, 0
      %s122 = sadd.s32 %s121, 1
      %s123 = scalar_select %p120, %s121, %s122
      %p126 = pneg %p120
      %p127 = scmp.eq.s32.totalorder %s33, 1
      %p128 = por %p126, %p127
      %p129 = scmp.ne.s32.totalorder %s121, %s124
      %p130 = scmp.eq.s32.totalorder %s33, 0
      %p131 = por %p129, %p130
      %p132 = scmp.ne.s32.totalorder %s121, %s124
      %p133 = scmp.eq.s32.totalorder %s38, 1
      %p134 = por %p132, %p133
      %p135 = scmp.ne.s32.totalorder %s124, %s125
      %p136 = scmp.eq.s32.totalorder %s38, 0
      %p137 = por %p135, %p136
      %p138 = scmp.ne.s32.totalorder %s124, %s125
      %p139 = scmp.eq.s32.totalorder %s39, 1
      %p140 = por %p138, %p139
      %p142 = scmp.ne.s32.totalorder %s125, %s141
      %p143 = scmp.eq.s32.totalorder %s39, 0
      %p144 = por %p142, %p143
      %s146 = sadd.s32 %s145, 1
      %p149 = scmp.eq.s32.totalorder %s33, 1
      %p150 = scmp.ne.s32.totalorder %s145, %s147
      %p151 = scmp.eq.s32.totalorder %s33, 0
      %p152 = por %p150, %p151
      %p153 = scmp.ne.s32.totalorder %s145, %s147
      %p154 = scmp.eq.s32.totalorder %s38, 1
      %p155 = por %p153, %p154
      %p156 = scmp.ne.s32.totalorder %s147, %s148
      %p157 = scmp.eq.s32.totalorder %s38, 0
      %p158 = por %p156, %p157
      %p159 = scmp.ne.s32.totalorder %s147, %s148
      %p160 = scmp.eq.s32.totalorder %s39, 1
      %p161 = por %p159, %p160
      %p163 = scmp.ne.s32.totalorder %s148, %s162
      %p164 = scmp.eq.s32.totalorder %s39, 0
      %p165 = por %p163, %p164
      %s167 = sadd.s32 %s166, 1
      %p170 = scmp.eq.s32.totalorder %s33, 1
      %p171 = scmp.ne.s32.totalorder %s166, %s168
      %p172 = scmp.eq.s32.totalorder %s33, 0
      %p173 = por %p171, %p172
      %p174 = scmp.ne.s32.totalorder %s166, %s168
      %p175 = scmp.eq.s32.totalorder %s38, 1
      %p176 = por %p174, %p175
      %p177 = scmp.ne.s32.totalorder %s168, %s169
      %p178 = scmp.eq.s32.totalorder %s38, 0
      %p179 = por %p177, %p178
      %p180 = scmp.ne.s32.totalorder %s168, %s169
      %p181 = scmp.eq.s32.totalorder %s39, 1
      %p182 = por %p180, %p181
      %p184 = scmp.ne.s32.totalorder %s169, %s183
      %p185 = scmp.eq.s32.totalorder %s39, 0
      %p186 = por %p184, %p185
      %s188 = sadd.s32 %s187, 1
      %p191 = scmp.eq.s32.totalorder %s33, 1
      %p192 = scmp.ne.s32.totalorder %s187, %s189
      %p193 = scmp.eq.s32.totalorder %s33, 0
      %p194 = por %p192, %p193
      %p195 = scmp.ne.s32.totalorder %s187, %s189
      %p196 = scmp.eq.s32.totalorder %s38, 1
      %p197 = por %p195, %p196
      %p198 = scmp.ne.s32.totalorder %s189, %s190
      %p199 = scmp.eq.s32.totalorder %s38, 0
      %p200 = por %p198, %p199
      %p201 = scmp.ne.s32.totalorder %s189, %s190
      %p202 = scmp.eq.s32.totalorder %s39, 1
      %p203 = por %p201, %p202
      %p205 = scmp.ne.s32.totalorder %s190, %s204
      %p206 = scmp.eq.s32.totalorder %s39, 0
      %p207 = por %p205, %p206
      %s209 = sadd.s32 %s208, 1
      %p212 = scmp.eq.s32.totalorder %s33, 1
      %p213 = scmp.ne.s32.totalorder %s208, %s210
      %p214 = scmp.eq.s32.totalorder %s33, 0
      %p215 = por %p213, %p214
      %p216 = scmp.ne.s32.totalorder %s208, %s210
      %p217 = scmp.eq.s32.totalorder %s38, 1
      %p218 = por %p216, %p217
      %p219 = scmp.ne.s32.totalorder %s210, %s211
      %p220 = scmp.eq.s32.totalorder %s38, 0
      %p221 = por %p219, %p220
      %p222 = scmp.ne.s32.totalorder %s210, %s211
      %p223 = scmp.eq.s32.totalorder %s39, 1
      %p224 = por %p222, %p223
      %p226 = scmp.ne.s32.totalorder %s211, %s225
      %p227 = scmp.eq.s32.totalorder %s39, 0
      %p228 = por %p226, %p227
      %s230 = sadd.s32 %s229, 1
      %p233 = scmp.eq.s32.totalorder %s33, 1
      %p234 = scmp.ne.s32.totalorder %s229, %s231
      %p235 = scmp.eq.s32.totalorder %s33, 0
      %p236 = por %p234, %p235
      %p237 = scmp.ne.s32.totalorder %s229, %s231
      %p238 = scmp.eq.s32.totalorder %s38, 1
      %p239 = por %p237, %p238
      %p240 = scmp.ne.s32.totalorder %s231, %s232
      %p241 = scmp.eq.s32.totalorder %s38, 0
      %p242 = por %p240, %p241
      %p243 = scmp.ne.s32.totalorder %s231, %s232
      %p244 = scmp.eq.s32.totalorder %s39, 1
      %p245 = por %p243, %p244
      %p247 = scmp.ne.s32.totalorder %s232, %s246
      %p248 = scmp.eq.s32.totalorder %s39, 0
      %p249 = por %p247, %p248
      %s251 = sadd.s32 %s250, 1
      %p254 = scmp.eq.s32.totalorder %s33, 1
      %p255 = scmp.ne.s32.totalorder %s250, %s252
      %p256 = scmp.eq.s32.totalorder %s33, 0
      %p257 = por %p255, %p256
      %p258 = scmp.ne.s32.totalorder %s250, %s252
      %p259 = scmp.eq.s32.totalorder %s38, 1
      %p260 = por %p258, %p259
      %p261 = scmp.ne.s32.totalorder %s252, %s253
      %p262 = scmp.eq.s32.totalorder %s38, 0
      %p263 = por %p261, %p262
      %p264 = scmp.ne.s32.totalorder %s252, %s253
      %p265 = scmp.eq.s32.totalorder %s39, 1
      %p266 = por %p264, %p265
      %p268 = scmp.ne.s32.totalorder %s253, %s267
      %p269 = scmp.eq.s32.totalorder %s39, 0
      %p270 = por %p268, %p269
      %s272 = sadd.s32 %s271, 1
      %p275 = scmp.eq.s32.totalorder %s33, 1
      %p276 = scmp.ne.s32.totalorder %s271, %s273
      %p277 = scmp.eq.s32.totalorder %s33, 0
      %p278 = por %p276, %p277
      %p279 = scmp.ne.s32.totalorder %s271, %s273
      %p280 = scmp.eq.s32.totalorder %s38, 1
      %p281 = por %p279, %p280
      %p282 = scmp.ne.s32.totalorder %s273, %s274
      %p283 = scmp.eq.s32.totalorder %s38, 0
      %p284 = por %p282, %p283
      %p285 = scmp.ne.s32.totalorder %s273, %s274
      %p286 = scmp.eq.s32.totalorder %s39, 1
      %p287 = por %p285, %p286
      %p289 = scmp.ne.s32.totalorder %s274, %s288
      %p290 = scmp.eq.s32.totalorder %s39, 0
      %p291 = por %p289, %p290
      %s293 = sadd.s32 %s292, 1
      %p296 = scmp.eq.s32.totalorder %s33, 1
      %p297 = scmp.ne.s32.totalorder %s292, %s294
      %p298 = scmp.eq.s32.totalorder %s33, 0
      %p299 = por %p297, %p298
      %p300 = scmp.ne.s32.totalorder %s292, %s294
      %p301 = scmp.eq.s32.totalorder %s38, 1
      %p302 = por %p300, %p301
      %p303 = scmp.ne.s32.totalorder %s294, %s295
      %p304 = scmp.eq.s32.totalorder %s38, 0
      %p305 = por %p303, %p304
      %p306 = scmp.ne.s32.totalorder %s294, %s295
      %p307 = scmp.eq.s32.totalorder %s39, 1
      %p308 = por %p306, %p307
      %p310 = scmp.ne.s32.totalorder %s295, %s309
      %p311 = scmp.eq.s32.totalorder %s39, 0
      %p312 = por %p310, %p311
      %s314 = sadd.s32 %s313, 1
      %p317 = scmp.eq.s32.totalorder %s33, 1
      %p318 = scmp.ne.s32.totalorder %s313, %s315
      %p319 = scmp.eq.s32.totalorder %s33, 0
      %p320 = por %p318, %p319
      %p321 = scmp.ne.s32.totalorder %s313, %s315
      %p322 = scmp.eq.s32.totalorder %s38, 1
      %p323 = por %p321, %p322
      %p324 = scmp.ne.s32.totalorder %s315, %s316
      %p325 = scmp.eq.s32.totalorder %s38, 0
      %p326 = por %p324, %p325
      %p327 = scmp.ne.s32.totalorder %s315, %s316
      %p328 = scmp.eq.s32.totalorder %s39, 1
      %p329 = por %p327, %p328
      %p331 = scmp.ne.s32.totalorder %s316, %s330
      %p332 = scmp.eq.s32.totalorder %s39, 0
      %p333 = por %p331, %p332
      %s335 = sadd.s32 %s334, 1
      %p338 = scmp.eq.s32.totalorder %s33, 1
      %p339 = scmp.ne.s32.totalorder %s334, %s336
      %p340 = scmp.eq.s32.totalorder %s33, 0
      %p341 = por %p339, %p340
      %p342 = scmp.ne.s32.totalorder %s334, %s336
      %p343 = scmp.eq.s32.totalorder %s38, 1
      %p344 = por %p342, %p343
      %p345 = scmp.ne.s32.totalorder %s336, %s337
      %p346 = scmp.eq.s32.totalorder %s38, 0
      %p347 = por %p345, %p346
      %p348 = scmp.ne.s32.totalorder %s336, %s337
      %p349 = scmp.eq.s32.totalorder %s39, 1
      %p350 = por %p348, %p349
      %p352 = scmp.ne.s32.totalorder %s337, %s351
      %p353 = scmp.eq.s32.totalorder %s39, 0
      %p354 = por %p352, %p353
      %s356 = sadd.s32 %s355, 1
      %p359 = scmp.eq.s32.totalorder %s33, 1
      %p360 = scmp.ne.s32.totalorder %s355, %s357
      %p361 = scmp.eq.s32.totalorder %s33, 0
      %p362 = por %p360, %p361
      %p363 = scmp.ne.s32.totalorder %s355, %s357
      %p364 = scmp.eq.s32.totalorder %s38, 1
      %p365 = por %p363, %p364
      %p366 = scmp.ne.s32.totalorder %s357, %s358
      %p367 = scmp.eq.s32.totalorder %s38, 0
      %p368 = por %p366, %p367
      %p369 = scmp.ne.s32.totalorder %s357, %s358
      %p370 = scmp.eq.s32.totalorder %s39, 1
      %p371 = por %p369, %p370
      %p373 = scmp.ne.s32.totalorder %s358, %s372
      %p374 = scmp.eq.s32.totalorder %s39, 0
      %p375 = por %p373, %p374
      %s377 = sadd.s32 %s376, 1
      %p380 = scmp.eq.s32.totalorder %s33, 1
      %p381 = scmp.ne.s32.totalorder %s376, %s378
      %p382 = scmp.eq.s32.totalorder %s33, 0
      %p383 = por %p381, %p382
      %p384 = scmp.ne.s32.totalorder %s376, %s378
      %p385 = scmp.eq.s32.totalorder %s38, 1
      %p386 = por %p384, %p385
      %p387 = scmp.ne.s32.totalorder %s378, %s379
      %p388 = scmp.eq.s32.totalorder %s38, 0
      %p389 = por %p387, %p388
      %p390 = scmp.ne.s32.totalorder %s378, %s379
      %p391 = scmp.eq.s32.totalorder %s39, 1
      %p392 = por %p390, %p391
      %p394 = scmp.ne.s32.totalorder %s379, %s393
      %p395 = scmp.eq.s32.totalorder %s39, 0
      %p396 = por %p394, %p395
      %s398 = sadd.s32 %s397, 1
      %p401 = scmp.eq.s32.totalorder %s33, 1
      %p402 = scmp.ne.s32.totalorder %s397, %s399
      %p403 = scmp.eq.s32.totalorder %s33, 0
      %p404 = por %p402, %p403
      %p405 = scmp.ne.s32.totalorder %s397, %s399
      %p406 = scmp.eq.s32.totalorder %s38, 1
      %p407 = por %p405, %p406
      %p408 = scmp.ne.s32.totalorder %s399, %s400
      %p409 = scmp.eq.s32.totalorder %s38, 0
      %p410 = por %p408, %p409
      %p411 = scmp.ne.s32.totalorder %s399, %s400
      %p412 = scmp.eq.s32.totalorder %s39, 1
      %p413 = por %p411, %p412
      %p415 = scmp.ne.s32.totalorder %s400, %s414
      %p416 = scmp.eq.s32.totalorder %s39, 0
      %p417 = por %p415, %p416
      %s419 = sadd.s32 %s418, 1
      %p422 = scmp.eq.s32.totalorder %s33, 1
      %p423 = scmp.ne.s32.totalorder %s418, %s420
      %p424 = scmp.eq.s32.totalorder %s33, 0
      %p425 = por %p423, %p424
      %p426 = scmp.ne.s32.totalorder %s418, %s420
      %p427 = scmp.eq.s32.totalorder %s38, 1
      %p428 = por %p426, %p427
      %p429 = scmp.ne.s32.totalorder %s420, %s421
      %p430 = scmp.eq.s32.totalorder %s38, 0
      %p431 = por %p429, %p430
      %p432 = scmp.ne.s32.totalorder %s420, %s421
      %p433 = scmp.eq.s32.totalorder %s39, 1
      %p434 = por %p432, %p433
      %p436 = scmp.ne.s32.totalorder %s421, %s435
      %p437 = scmp.eq.s32.totalorder %s39, 0
      %p438 = por %p436, %p437
      %s440 = sadd.s32 %s439, 1
      %p443 = scmp.eq.s32.totalorder %s33, 1
      %p444 = scmp.ne.s32.totalorder %s439, %s441
      %p445 = scmp.eq.s32.totalorder %s33, 0
      %p446 = por %p444, %p445
      %p447 = scmp.ne.s32.totalorder %s439, %s441
      %p448 = scmp.eq.s32.totalorder %s38, 1
      %p449 = por %p447, %p448
      %p450 = scmp.ne.s32.totalorder %s441, %s442
      %p451 = scmp.eq.s32.totalorder %s38, 0
      %p452 = por %p450, %p451
      %p453 = scmp.ne.s32.totalorder %s441, %s442
      %p454 = scmp.eq.s32.totalorder %s39, 1
      %p455 = por %p453, %p454
      %p457 = scmp.ne.s32.totalorder %s442, %s456
      %p458 = scmp.eq.s32.totalorder %s39, 0
      %p459 = por %p457, %p458
      %s461 = sadd.s32 %s460, 1
      %p464 = scmp.eq.s32.totalorder %s33, 1
      %p465 = scmp.ne.s32.totalorder %s460, %s462
      %p466 = scmp.eq.s32.totalorder %s33, 0
      %p467 = por %p465, %p466
      %p468 = scmp.ne.s32.totalorder %s460, %s462
      %p469 = scmp.eq.s32.totalorder %s38, 1
      %p470 = por %p468, %p469
      %p471 = scmp.ne.s32.totalorder %s462, %s463
      %p472 = scmp.eq.s32.totalorder %s38, 0
      %p473 = por %p471, %p472
      %p474 = scmp.ne.s32.totalorder %s462, %s463
      %p475 = scmp.eq.s32.totalorder %s39, 1
      %p476 = por %p474, %p475
      %p478 = scmp.ne.s32.totalorder %s463, %s477
      %p479 = scmp.eq.s32.totalorder %s39, 0
      %p480 = por %p478, %p479
      %s482 = sadd.s32 %s481, 1
      %p485 = scmp.eq.s32.totalorder %s33, 1
      %p486 = scmp.ne.s32.totalorder %s481, %s483
      %p487 = scmp.eq.s32.totalorder %s33, 0
      %p488 = por %p486, %p487
      %p489 = scmp.ne.s32.totalorder %s481, %s483
      %p490 = scmp.eq.s32.totalorder %s38, 1
      %p491 = por %p489, %p490
      %p492 = scmp.ne.s32.totalorder %s483, %s484
      %p493 = scmp.eq.s32.totalorder %s38, 0
      %p494 = por %p492, %p493
      %p495 = scmp.ne.s32.totalorder %s483, %s484
      %p496 = scmp.eq.s32.totalorder %s39, 1
      %p497 = por %p495, %p496
      %p499 = scmp.ne.s32.totalorder %s484, %s498
      %p500 = scmp.eq.s32.totalorder %s39, 0
      %p501 = por %p499, %p500
      %s503 = sadd.s32 %s502, 1
      %p506 = scmp.eq.s32.totalorder %s33, 1
      %p507 = scmp.ne.s32.totalorder %s502, %s504
      %p508 = scmp.eq.s32.totalorder %s33, 0
      %p509 = por %p507, %p508
      %p510 = scmp.ne.s32.totalorder %s502, %s504
      %p511 = scmp.eq.s32.totalorder %s38, 1
      %p512 = por %p510, %p511
      %p513 = scmp.ne.s32.totalorder %s504, %s505
      %p514 = scmp.eq.s32.totalorder %s38, 0
      %p515 = por %p513, %p514
      %p516 = scmp.ne.s32.totalorder %s504, %s505
      %p517 = scmp.eq.s32.totalorder %s39, 1
      %p518 = por %p516, %p517
      %p520 = scmp.ne.s32.totalorder %s505, %s519
      %p521 = scmp.eq.s32.totalorder %s39, 0
      %p522 = por %p520, %p521
      %s524 = sadd.s32 %s523, 1
      %p527 = scmp.eq.s32.totalorder %s33, 1
      %p528 = scmp.ne.s32.totalorder %s523, %s525
      %p529 = scmp.eq.s32.totalorder %s33, 0
      %p530 = por %p528, %p529
      %p531 = scmp.ne.s32.totalorder %s523, %s525
      %p532 = scmp.eq.s32.totalorder %s38, 1
      %p533 = por %p531, %p532
      %p534 = scmp.ne.s32.totalorder %s525, %s526
      %p535 = scmp.eq.s32.totalorder %s38, 0
      %p536 = por %p534, %p535
      %p537 = scmp.ne.s32.totalorder %s525, %s526
      %p538 = scmp.eq.s32.totalorder %s39, 1
      %p539 = por %p537, %p538
      %p541 = scmp.ne.s32.totalorder %s526, %s540
      %p542 = scmp.eq.s32.totalorder %s39, 0
      %p543 = por %p541, %p542
      %s545 = sadd.s32 %s544, 1
      %p548 = scmp.eq.s32.totalorder %s33, 1
      %p549 = scmp.ne.s32.totalorder %s544, %s546
      %p550 = scmp.eq.s32.totalorder %s33, 0
      %p551 = por %p549, %p550
      %p552 = scmp.ne.s32.totalorder %s544, %s546
      %p553 = scmp.eq.s32.totalorder %s38, 1
      %p554 = por %p552, %p553
      %p555 = scmp.ne.s32.totalorder %s546, %s547
      %p556 = scmp.eq.s32.totalorder %s38, 0
      %p557 = por %p555, %p556
      %p558 = scmp.ne.s32.totalorder %s546, %s547
      %p559 = scmp.eq.s32.totalorder %s39, 1
      %p560 = por %p558, %p559
      %p562 = scmp.ne.s32.totalorder %s547, %s561
      %p563 = scmp.eq.s32.totalorder %s39, 0
      %p564 = por %p562, %p563
      %s565 = ssub.s32 %s33, %s40
      %p566 = scmp.eq.s32.totalorder %s565, 0
      %s568 = sadd.s32 %s567, 1
      %s569 = scalar_select %p566, %s567, %s568
      %p572 = pneg %p566
      %p573 = scmp.eq.s32.totalorder %s33, 1
      %p574 = por %p572, %p573
      %p575 = scmp.ne.s32.totalorder %s567, %s570
      %p576 = scmp.eq.s32.totalorder %s33, 0
      %p577 = por %p575, %p576
      %p578 = scmp.ne.s32.totalorder %s567, %s570
      %p579 = scmp.eq.s32.totalorder %s38, 1
      %p580 = por %p578, %p579
      %p581 = scmp.ne.s32.totalorder %s570, %s571
      %p582 = scmp.eq.s32.totalorder %s38, 0
      %p583 = por %p581, %p582
      %p584 = scmp.ne.s32.totalorder %s570, %s571
      %p585 = scmp.eq.s32.totalorder %s39, 1
      %p586 = por %p584, %p585
      %p588 = scmp.ne.s32.totalorder %s571, %s587
      %p589 = scmp.eq.s32.totalorder %s39, 0
      %p590 = por %p588, %p589
      %p591 = scmp.le.s32.totalorder 1, %s33
      %p592 = scmp.lt.s32.totalorder %s33, 3
      %p593 = pnand %p591, %p592
      %p594 = pneg %p593
      // Predicated region
      $region9: #{tpu_custom_call.1} parent=5 // pred_check
        _
      $region10: #{tpu_custom_call.1} parent=5 // pred_check_branch
        %596 = sbr.rel (%p593) target = $region12
      $region11: #{tpu_custom_call.1} parent=5 // pred_region
        %s597 = ssub.s32 %s33, 1
        // Predicated region
        $region13: #{tpu_custom_call.1} parent=11 // pred_check
          %p598 = pneg %p158
        $region14: #{tpu_custom_call.1} parent=11 // pred_check_branch
          %600 = sbr.rel (%p598) target = $region16
        $region15: #{tpu_custom_call.1} parent=11 // pred_region
          _
        $region16: #{tpu_custom_call.1} parent=11 // pred_fallthru
          _
        // Predicated region
        $region17: #{tpu_custom_call.1} parent=11 // pred_check
          %p601 = pneg %p179
        $region18: #{tpu_custom_call.1} parent=11 // pred_check_branch
          %603 = sbr.rel (%p601) target = $region20
        $region19: #{tpu_custom_call.1} parent=11 // pred_region
          _
        $region20: #{tpu_custom_call.1} parent=11 // pred_fallthru
          _
        // Predicated region
        $region21: #{tpu_custom_call.1} parent=11 // pred_check
          %p604 = pneg %p200
        $region22: #{tpu_custom_call.1} parent=11 // pred_check_branch
          %606 = sbr.rel (%p604) target = $region24
        $region23: #{tpu_custom_call.1} parent=11 // pred_region
          _
        $region24: #{tpu_custom_call.1} parent=11 // pred_fallthru
          _
        // Predicated region
        $region25: #{tpu_custom_call.1} parent=11 // pred_check
          %p607 = pneg %p221
        $region26: #{tpu_custom_call.1} parent=11 // pred_check_branch
          %609 = sbr.rel (%p607) target = $region28
        $region27: #{tpu_custom_call.1} parent=11 // pred_region
          _
        $region28: #{tpu_custom_call.1} parent=11 // pred_fallthru
          _
        // Predicated region
        $region29: #{tpu_custom_call.1} parent=11 // pred_check
          %p610 = pneg %p242
        $region30: #{tpu_custom_call.1} parent=11 // pred_check_branch
          %612 = sbr.rel (%p610) target = $region32
        $region31: #{tpu_custom_call.1} parent=11 // pred_region
          _
        $region32: #{tpu_custom_call.1} parent=11 // pred_fallthru
          _
        // Predicated region
        $region33: #{tpu_custom_call.1} parent=11 // pred_check
          %p613 = pneg %p263
        $region34: #{tpu_custom_call.1} parent=11 // pred_check_branch
          %615 = sbr.rel (%p613) target = $region36
        $region35: #{tpu_custom_call.1} parent=11 // pred_region
          _
        $region36: #{tpu_custom_call.1} parent=11 // pred_fallthru
          _
        // Predicated region
        $region37: #{tpu_custom_call.1} parent=11 // pred_check
          %p616 = pneg %p284
        $region38: #{tpu_custom_call.1} parent=11 // pred_check_branch
          %618 = sbr.rel (%p616) target = $region40
        $region39: #{tpu_custom_call.1} parent=11 // pred_region
          _
        $region40: #{tpu_custom_call.1} parent=11 // pred_fallthru
          _
        // Predicated region
        $region41: #{tpu_custom_call.1} parent=11 // pred_check
          %p619 = pneg %p305
        $region42: #{tpu_custom_call.1} parent=11 // pred_check_branch
          %621 = sbr.rel (%p619) target = $region44
        $region43: #{tpu_custom_call.1} parent=11 // pred_region
          _
        $region44: #{tpu_custom_call.1} parent=11 // pred_fallthru
          _
        // Predicated region
        $region45: #{tpu_custom_call.1} parent=11 // pred_check
          %p622 = pneg %p326
        $region46: #{tpu_custom_call.1} parent=11 // pred_check_branch
          %624 = sbr.rel (%p622) target = $region48
        $region47: #{tpu_custom_call.1} parent=11 // pred_region
          _
        $region48: #{tpu_custom_call.1} parent=11 // pred_fallthru
          _
        // Predicated region
        $region49: #{tpu_custom_call.1} parent=11 // pred_check
          %p625 = pneg %p347
        $region50: #{tpu_custom_call.1} parent=11 // pred_check_branch
          %627 = sbr.rel (%p625) target = $region52
        $region51: #{tpu_custom_call.1} parent=11 // pred_region
          _
        $region52: #{tpu_custom_call.1} parent=11 // pred_fallthru
          _
        // Predicated region
        $region53: #{tpu_custom_call.1} parent=11 // pred_check
          %p628 = pneg %p368
        $region54: #{tpu_custom_call.1} parent=11 // pred_check_branch
          %630 = sbr.rel (%p628) target = $region56
        $region55: #{tpu_custom_call.1} parent=11 // pred_region
          _
        $region56: #{tpu_custom_call.1} parent=11 // pred_fallthru
          _
        // Predicated region
        $region57: #{tpu_custom_call.1} parent=11 // pred_check
          %p631 = pneg %p389
        $region58: #{tpu_custom_call.1} parent=11 // pred_check_branch
          %633 = sbr.rel (%p631) target = $region60
        $region59: #{tpu_custom_call.1} parent=11 // pred_region
          _
        $region60: #{tpu_custom_call.1} parent=11 // pred_fallthru
          _
        // Predicated region
        $region61: #{tpu_custom_call.1} parent=11 // pred_check
          %p634 = pneg %p410
        $region62: #{tpu_custom_call.1} parent=11 // pred_check_branch
          %636 = sbr.rel (%p634) target = $region64
        $region63: #{tpu_custom_call.1} parent=11 // pred_region
          _
        $region64: #{tpu_custom_call.1} parent=11 // pred_fallthru
          _
        // Predicated region
        $region65: #{tpu_custom_call.1} parent=11 // pred_check
          %p637 = pneg %p431
        $region66: #{tpu_custom_call.1} parent=11 // pred_check_branch
          %639 = sbr.rel (%p637) target = $region68
        $region67: #{tpu_custom_call.1} parent=11 // pred_region
          _
        $region68: #{tpu_custom_call.1} parent=11 // pred_fallthru
          _
        // Predicated region
        $region69: #{tpu_custom_call.1} parent=11 // pred_check
          %p640 = pneg %p452
        $region70: #{tpu_custom_call.1} parent=11 // pred_check_branch
          %642 = sbr.rel (%p640) target = $region72
        $region71: #{tpu_custom_call.1} parent=11 // pred_region
          _
        $region72: #{tpu_custom_call.1} parent=11 // pred_fallthru
          _
        // Predicated region
        $region73: #{tpu_custom_call.1} parent=11 // pred_check
          %p643 = pneg %p473
        $region74: #{tpu_custom_call.1} parent=11 // pred_check_branch
          %645 = sbr.rel (%p643) target = $region76
        $region75: #{tpu_custom_call.1} parent=11 // pred_region
          _
        $region76: #{tpu_custom_call.1} parent=11 // pred_fallthru
          _
        // Predicated region
        $region77: #{tpu_custom_call.1} parent=11 // pred_check
          %p646 = pneg %p494
        $region78: #{tpu_custom_call.1} parent=11 // pred_check_branch
          %648 = sbr.rel (%p646) target = $region80
        $region79: #{tpu_custom_call.1} parent=11 // pred_region
          _
        $region80: #{tpu_custom_call.1} parent=11 // pred_fallthru
          _
        // Predicated region
        $region81: #{tpu_custom_call.1} parent=11 // pred_check
          %p649 = pneg %p515
        $region82: #{tpu_custom_call.1} parent=11 // pred_check_branch
          %651 = sbr.rel (%p649) target = $region84
        $region83: #{tpu_custom_call.1} parent=11 // pred_region
          _
        $region84: #{tpu_custom_call.1} parent=11 // pred_fallthru
          _
        // Predicated region
        $region85: #{tpu_custom_call.1} parent=11 // pred_check
          %p652 = pneg %p536
        $region86: #{tpu_custom_call.1} parent=11 // pred_check_branch
          %654 = sbr.rel (%p652) target = $region88
        $region87: #{tpu_custom_call.1} parent=11 // pred_region
          _
        $region88: #{tpu_custom_call.1} parent=11 // pred_fallthru
          _
        // Predicated region
        $region89: #{tpu_custom_call.1} parent=11 // pred_check
          %p655 = pneg %p557
        $region90: #{tpu_custom_call.1} parent=11 // pred_check_branch
          %657 = sbr.rel (%p655) target = $region92
        $region91: #{tpu_custom_call.1} parent=11 // pred_region
          _
        $region92: #{tpu_custom_call.1} parent=11 // pred_fallthru
          _
      $region12: #{tpu_custom_call.1} parent=5 // pred_fallthru
        _
      %p658 = scmp.lt.s32.totalorder %s33, 2
      // Predicated region
      $region93: #{tpu_custom_call.1} parent=5 // pred_check
        %p659 = pneg %p658
      $region94: #{tpu_custom_call.1} parent=5 // pred_check_branch
        %661 = sbr.rel (%p659) target = $region96
      $region95: #{tpu_custom_call.1} parent=5 // pred_region
        // Predicated region
        $region97: #{tpu_custom_call.1} parent=95 // pred_check
          %p662 = pneg %p53
        $region98: #{tpu_custom_call.1} parent=95 // pred_check_branch
          %664 = sbr.rel (%p662) target = $region100
        $region99: #{tpu_custom_call.1} parent=95 // pred_region
          %s665 = smul.u32 2, %s33
          %p666 = scmp.lt.s32.totalorder %s665, 3
          %s667 = scalar_select %p666, %s665, 3
          %s668 = smul.addr %s667, 8
          %s669 = scalar_lea.vmem %s0, %s668
          %s670 = smul.u32 2, %s33
        $region100: #{tpu_custom_call.1} parent=95 // pred_fallthru
          _
        // Predicated region
        $region101: #{tpu_custom_call.1} parent=95 // pred_check
          %p671 = pneg %p79
        $region102: #{tpu_custom_call.1} parent=95 // pred_check_branch
          %673 = sbr.rel (%p671) target = $region104
        $region103: #{tpu_custom_call.1} parent=95 // pred_region
          %s674 = smul.u32 2, %s33
          %p675 = scmp.lt.s32.totalorder %s674, 3
          %s676 = scalar_select %p675, %s674, 3
          %s677 = smul.addr %s676, 8
          %s678 = scalar_lea.vmem %s1, %s677
          %s679 = smul.u32 2, %s33
        $region104: #{tpu_custom_call.1} parent=95 // pred_fallthru
          _
        // Predicated region
        $region105: #{tpu_custom_call.1} parent=95 // pred_check
          %p680 = pneg %p105
        $region106: #{tpu_custom_call.1} parent=95 // pred_check_branch
          %682 = sbr.rel (%p680) target = $region108
        $region107: #{tpu_custom_call.1} parent=95 // pred_region
          %s683 = smul.u32 2, %s33
          %p684 = scmp.lt.s32.totalorder %s683, 3
          %s685 = scalar_select %p684, %s683, 3
          %s686 = scalar_lea.vmem %s2, %s685
          %s687 = smul.u32 2, %s33
        $region108: #{tpu_custom_call.1} parent=95 // pred_fallthru
          _
        // Predicated region
        $region109: #{tpu_custom_call.1} parent=95 // pred_check
          %p688 = pneg %p131
        $region110: #{tpu_custom_call.1} parent=95 // pred_check_branch
          %690 = sbr.rel (%p688) target = $region112
        $region111: #{tpu_custom_call.1} parent=95 // pred_region
          %s691 = smul.u32 2, %s33
          %p692 = scmp.lt.s32.totalorder %s691, 3
          %s693 = scalar_select %p692, %s691, 3
          %s694 = scalar_lea.vmem %s3, %s693
          %s695 = smul.u32 2, %s33
        $region112: #{tpu_custom_call.1} parent=95 // pred_fallthru
          _
      $region96: #{tpu_custom_call.1} parent=5 // pred_fallthru
        _
      %p696 = scmp.le.s32.totalorder 1, %s33
      %p697 = scmp.lt.s32.totalorder %s33, 3
      %p698 = pnand %p696, %p697
      %p699 = pneg %p698
      // Predicated region
      $region113: #{tpu_custom_call.1} parent=5 // pred_check
        _
      $region114: #{tpu_custom_call.1} parent=5 // pred_check_branch
        %701 = sbr.rel (%p698) target = $region116
      $region115: #{tpu_custom_call.1} parent=5 // pred_region
        %s702 = ssub.s32 %s33, 1
        %s703 = smul.u32 2, %s38
        %p704 = scmp.lt.s32.totalorder %s703, 3
        %s705 = scalar_select %p704, %s703, 3
        %s706 = smul.addr %s705, 8
        %s707 = scalar_lea.vmem %s0, %s706
        %p708 = pneg %p59
        %p709 = pneg %p56
        %s710 = smul.u32 2, %s38
        %p711 = scmp.lt.s32.totalorder %s710, 3
        %s712 = scalar_select %p711, %s710, 3
        %s713 = smul.addr %s712, 8
        %s714 = scalar_lea.vmem %s1, %s713
        %p715 = pneg %p85
        %p716 = pneg %p82
        %s717 = smul.u32 2, %s38
        %p718 = scmp.lt.s32.totalorder %s717, 3
        %s719 = scalar_select %p718, %s717, 3
        %s720 = scalar_lea.vmem %s2, %s719
        %p721 = pneg %p111
        %p722 = pneg %p108
        %s723 = smul.u32 2, %s38
        %p724 = scmp.lt.s32.totalorder %s723, 3
        %s725 = scalar_select %p724, %s723, 3
        %s726 = scalar_lea.vmem %s3, %s725
        %p727 = pneg %p137
        %p728 = pneg %p134
        %p729 = pneg %p158
        %p730 = pneg %p155
        %p731 = pneg %p179
        %p732 = pneg %p176
        %p733 = pneg %p200
        %p734 = pneg %p197
        %p735 = pneg %p221
        %p736 = pneg %p218
        %p737 = pneg %p242
        %p738 = pneg %p239
        %p739 = pneg %p263
        %p740 = pneg %p260
        %p741 = pneg %p284
        %p742 = pneg %p281
        %p743 = pneg %p305
        %p744 = pneg %p302
        %p745 = pneg %p326
        %p746 = pneg %p323
        %p747 = pneg %p347
        %p748 = pneg %p344
        %p749 = pneg %p368
        %p750 = pneg %p365
        %p751 = pneg %p389
        %p752 = pneg %p386
        %p753 = pneg %p410
        %p754 = pneg %p407
        %p755 = pneg %p431
        %p756 = pneg %p428
        %p757 = pneg %p452
        %p758 = pneg %p449
        %p759 = pneg %p473
        %p760 = pneg %p470
        %p761 = pneg %p494
        %p762 = pneg %p491
        %p763 = pneg %p515
        %p764 = pneg %p512
        %p765 = pneg %p536
        %p766 = pneg %p533
        %p767 = pneg %p557
        %p768 = pneg %p554
        %p769 = pneg %p583
        %p770 = pneg %p580
        %s771 = sand.u32 %s570, 1
        %s772 = scalar_lea.sflag [#allocation3], %s771
        %s773 = sand.u32 %s570, 1
        %s774 = smul.addr %s773, 16
        %s775 = scalar_lea.vmem [#allocation2], %s774
        %s776 = smul.u32 2, %s38
        %p777 = scmp.lt.s32.totalorder %s776, 3
        %s778 = scalar_select %p777, %s776, 3
        %s779 = smul.addr %s778, 8
        %s780 = scalar_lea.vmem %s0, %s779
        %s781 = smul.u32 2, %s38
        %s782 = smul.u32 2, %s38
        %p783 = scmp.lt.s32.totalorder %s782, 3
        %s784 = scalar_select %p783, %s782, 3
        %s785 = smul.addr %s784, 8
        %s786 = scalar_lea.vmem %s1, %s785
        %s787 = smul.u32 2, %s38
        %s788 = smul.u32 2, %s38
        %p789 = scmp.lt.s32.totalorder %s788, 3
        %s790 = scalar_select %p789, %s788, 3
        %s791 = scalar_lea.vmem %s2, %s790
        %s792 = smul.u32 2, %s38
        %s793 = smul.u32 2, %s38
        %p794 = scmp.lt.s32.totalorder %s793, 3
        %s795 = scalar_select %p794, %s793, 3
        %s796 = scalar_lea.vmem %s3, %s795
        %s797 = smul.u32 2, %s38
        %s798 = smul.u32 2, %s38
        %v800 = vld [vmem:[%s780] sm:$0xff]
        %v801 = vld [vmem:[%s780 + $0x8] sm:$0xff]
        %v802 = vld [vmem:[%s786] sm:$0xff]
        %v803 = vld [vmem:[%s786 + $0x8] sm:$0xff]
        %v804 = vld [vmem:[%s791] sm:$0x1]
        %v805 = vld [vmem:[%s791 + $0x1] sm:$0x1]
        %vm806 = vcmp.gt.f32.partialorder %v804, 0.5
        %vm807 = vcmp.gt.f32.partialorder %v805, 0.5
        %v808 = vsel %vm806, -1e+30, 0.0
        %v809 = vsel %vm807, -1e+30, 0.0
        %v810 = vld [vmem:[%s796] sm:$0x1]
        %v811 = vld [vmem:[%s796 + $0x1] sm:$0x1]
        %vm812 = vcmp.gt.f32.partialorder %v810, 0.5
        %vm813 = vcmp.gt.f32.partialorder %v811, 0.5
        %v814 = vsel %vm812, -1e+30, 0.0
        %v815 = vsel %vm813, -1e+30, 0.0
        %v816 = vpack.c.bf16 %v801, %v800
        %v817 = vld [vmem:[%s4] sm:$0xf]
        %v818 = vld [vmem:[%s4 + $0x4] sm:$0xf]
        %v819 = vld [vmem:[%s4 + $0x8] sm:$0xf]
        %v820 = vld [vmem:[%s4 + $0xc] sm:$0xf]
        %v821 = vld [vmem:[%s5] sm:$0x1]
        %v823 = vlaneseq
        %v824 = vshrl.u32 %v823, 7
        %v825 = vsub.s32 0, %v824
        %v826 = vrot.slane %v821, %v825
        %v832 = vunpack.c.l.b16 %v817
        %v833 = vunpack.c.l.b16 %v818
        %v834 = vunpack.c.l.b16 %v819
        %v835 = vunpack.c.l.b16 %v820
        %v836 = vpack.c.b16 %v833, %v832
        %v837 = vpack.c.b16 %v835, %v834
        %vm840 = vcmask 261120
        %v842 = vsel %vm840, %v816, 0
        %844 = vmatprep.subr.bf16.mxu0 0
        %845 = vmatpush1.bf16.msra.mxu0 %v836
        %846 = vmatprep.subr.bf16.mxu0 0
        %847 = vmatpush1.bf16.msra.mxu0 %v837
        %848 = vmatprep.subr.bf16.mxu0 0
        %849 = vmatpush1.bf16.msra.mxu0 0
        %850 = vmatprep.subr.bf16.mxu0 0
        %851 = vmatpush1.bf16.msra.mxu0 0
        %852 = vmatprep.subr.bf16.mxu0 0
        %853 = vmatpush1.bf16.msra.mxu0 0
        %854 = vmatprep.subr.bf16.mxu0 0
        %855 = vmatpush1.bf16.msra.mxu0 0
        %856 = vmatprep.subr.bf16.mxu0 0
        %857 = vmatpush1.bf16.msra.mxu0 0
        %858 = vmatprep.subr.bf16.mxu0 0
        %859 = vmatpush1.bf16.msra.mxu0 0
        %860 = vmatprep.subr.bf16.mxu0 0
        %861 = vmatpush1.bf16.msra.mxu0 0
        %862 = vmatprep.subr.bf16.mxu0 0
        %863 = vmatpush1.bf16.msra.mxu0 0
        %864 = vmatprep.subr.bf16.mxu0 0
        %865 = vmatpush1.bf16.msra.mxu0 0
        %866 = vmatprep.subr.bf16.mxu0 0
        %867 = vmatpush1.bf16.msra.mxu0 0
        %868 = vmatprep.subr.bf16.mxu0 0
        %869 = vmatpush1.bf16.msra.mxu0 0
        %870 = vmatprep.subr.bf16.mxu0 0
        %871 = vmatpush1.bf16.msra.mxu0 0
        %872 = vmatprep.subr.bf16.mxu0 0
        %873 = vmatpush1.bf16.msra.mxu0 0
        %874 = vmatprep.subr.bf16.mxu0 0
        %875 = vmatpush1.bf16.msra.mxu0 0
        %876 = vmatprep.mubr.bf16.mxu0 0
        %877 = vmatmul.mubr.bf16.gmra.mrb[0].mxu0 %v842
        %v878 = vpop.f32.mrb[0].mxu0
        %v879 = vadd.f32 %v826, %v878
        %v880 = vpop.f32.mrb[0].mxu0
        %v881 = vpop.f32.mrb[0].mxu0
        %v882 = vadd.f32 %v826, %v881
        %v883 = vpop.f32.mrb[0].mxu0
        %884 = vdwg.mxu0
        %v885 = vld [vmem:[%s6] sm:$0xf]
        %v886 = vld [vmem:[%s6 + $0x4] sm:$0xf]
        %v887 = vld [vmem:[%s6 + $0x8] sm:$0xf]
        %v888 = vld [vmem:[%s6 + $0xc] sm:$0xf]
        %v889 = vld [vmem:[%s7] sm:$0x1]
        %v890 = vmul.f32 %v879, 0.5
        %v891 = vmul.f32 %v882, 0.5
        %v892 = vpack.c.bf16 %v890, %v890
        %v893 = vpack.c.bf16 %v891, %v891
        %v894 = vpack.c.bf16 %v879, %v879
        %v895 = vpack.c.bf16 %v882, %v882
        %v898 = vlaneseq
        %v899 = vshrl.u32 %v898, 7
        %v900 = vsub.s32 0, %v899
        %v901 = vrot.slane %v808, %v900
        %v902 = vlaneseq
        %v903 = vshrl.u32 %v902, 7
        %v904 = vsub.s32 0, %v903
        %v905 = vrot.slane %v809, %v904
        %909 = vrot.lane.b32.xlu0 %v894, 96
        %v910 = vpop.permute.xlu0 %909
        %vm911 = vcmask 31744
        %v913 = vsel %vm911, %v892, 0
        %v916 = vsel %vm911, %v910, 0
        %918 = vmatprep.subr.bf16.mxu0 0
        %919 = vmatpush1.bf16.xpose.msra.mxu0 %v916
        %920 = vmatprep.subr.bf16.mxu0 0
        %921 = vmatpush1.bf16.xpose.msra.mxu0 0
        %922 = vmatprep.subr.bf16.mxu0 0
        %923 = vmatpush1.bf16.xpose.msra.mxu0 0
        %924 = vmatprep.subr.bf16.mxu0 0
        %925 = vmatpush1.bf16.xpose.msra.mxu0 0
        %926 = vmatprep.subr.bf16.mxu0 0
        %927 = vmatpush1.bf16.xpose.msra.mxu0 0
        %928 = vmatprep.subr.bf16.mxu0 0
        %929 = vmatpush1.bf16.xpose.msra.mxu0 0
        %930 = vmatprep.subr.bf16.mxu0 0
        %931 = vmatpush1.bf16.xpose.msra.mxu0 0
        %932 = vmatprep.subr.bf16.mxu0 0
        %933 = vmatpush1.bf16.xpose.msra.mxu0 0
        %934 = vmatprep.subr.bf16.mxu0 0
        %935 = vmatpush1.bf16.xpose.msra.mxu0 0
        %936 = vmatprep.subr.bf16.mxu0 0
        %937 = vmatpush1.bf16.xpose.msra.mxu0 0
        %938 = vmatprep.subr.bf16.mxu0 0
        %939 = vmatpush1.bf16.xpose.msra.mxu0 0
        %940 = vmatprep.subr.bf16.mxu0 0
        %941 = vmatpush1.bf16.xpose.msra.mxu0 0
        %942 = vmatprep.subr.bf16.mxu0 0
        %943 = vmatpush1.bf16.xpose.msra.mxu0 0
        %944 = vmatprep.subr.bf16.mxu0 0
        %945 = vmatpush1.bf16.xpose.msra.mxu0 0
        %946 = vmatprep.subr.bf16.mxu0 0
        %947 = vmatpush1.bf16.xpose.msra.mxu0 0
        %948 = vmatprep.subr.bf16.mxu0 0
        %949 = vmatpush1.bf16.xpose.msra.mxu0 0
        %950 = vmatprep.mubr.bf16.mxu0 0
        %951 = vmatmul.mubr.bf16.gmra.mrb[0].mxu0 %v913
        %v952 = vpop.f32.mrb[0].mxu0
        %v953 = vadd.f32 %v901, %v952
        %v954 = vpop.f32.mrb[0].mxu0
        %v955 = vpop.f32.mrb[0].mxu0
        %v956 = vpop.f32.mrb[0].mxu0
        %957 = vdwg.mxu0
        %959 = vrot.lane.b32.xlu0 %v895, 96
        %v960 = vpop.permute.xlu0 %959
        %v962 = vsel %vm911, %v893, 0
        %v965 = vsel %vm911, %v960, 0
        %967 = vmatprep.subr.bf16.mxu0 0
        %968 = vmatpush1.bf16.xpose.msra.mxu0 %v965
        %969 = vmatprep.subr.bf16.mxu0 0
        %970 = vmatpush1.bf16.xpose.msra.mxu0 0
        %971 = vmatprep.subr.bf16.mxu0 0
        %972 = vmatpush1.bf16.xpose.msra.mxu0 0
        %973 = vmatprep.subr.bf16.mxu0 0
        %974 = vmatpush1.bf16.xpose.msra.mxu0 0
        %975 = vmatprep.subr.bf16.mxu0 0
        %976 = vmatpush1.bf16.xpose.msra.mxu0 0
        %977 = vmatprep.subr.bf16.mxu0 0
        %978 = vmatpush1.bf16.xpose.msra.mxu0 0
        %979 = vmatprep.subr.bf16.mxu0 0
        %980 = vmatpush1.bf16.xpose.msra.mxu0 0
        %981 = vmatprep.subr.bf16.mxu0 0
        %982 = vmatpush1.bf16.xpose.msra.mxu0 0
        %983 = vmatprep.subr.bf16.mxu0 0
        %984 = vmatpush1.bf16.xpose.msra.mxu0 0
        %985 = vmatprep.subr.bf16.mxu0 0
        %986 = vmatpush1.bf16.xpose.msra.mxu0 0
        %987 = vmatprep.subr.bf16.mxu0 0
        %988 = vmatpush1.bf16.xpose.msra.mxu0 0
        %989 = vmatprep.subr.bf16.mxu0 0
        %990 = vmatpush1.bf16.xpose.msra.mxu0 0
        %991 = vmatprep.subr.bf16.mxu0 0
        %992 = vmatpush1.bf16.xpose.msra.mxu0 0
        %993 = vmatprep.subr.bf16.mxu0 0
        %994 = vmatpush1.bf16.xpose.msra.mxu0 0
        %995 = vmatprep.subr.bf16.mxu0 0
        %996 = vmatpush1.bf16.xpose.msra.mxu0 0
        %997 = vmatprep.subr.bf16.mxu0 0
        %998 = vmatpush1.bf16.xpose.msra.mxu0 0
        %999 = vmatprep.mubr.bf16.mxu0 0
        %1000 = vmatmul.mubr.bf16.gmra.mrb[0].mxu0 %v962
        %v1001 = vpop.f32.mrb[0].mxu0
        %v1002 = vadd.f32 %v905, %v1001
        %v1003 = vpop.f32.mrb[0].mxu0
        %v1004 = vpop.f32.mrb[0].mxu0
        %v1005 = vpop.f32.mrb[0].mxu0
        %1006 = vdwg.mxu0
        %vm1007 = vcmask 64512
        %v1008 = vsel %vm1007, %v953, -inf
        %1009 = vmax.xlane.f32.xlu0 %v1008
        %v1010 = vpop.xlane.xlu0 %1009
        %v1011 = vsel %vm1007, %v1002, -inf
        %1012 = vmax.xlane.f32.xlu0 %v1011
        %v1013 = vpop.xlane.xlu0 %1012
        %v1014 = vsub.f32 %v953, %v1010
        %v1015 = vsub.f32 %v1002, %v1013
        %v1016 = vmul.f32 %v1014, 1.442695
        %v1017 = vpow.pop %v1016
        %v1018 = vmul.f32 %v1015, 1.442695
        %v1019 = vpow.pop %v1018
        %v1020 = vsel %vm1007, %v1017, 0.0
        %1021 = vadd.xlane.f32.xlu0 %v1020
        %v1022 = vpop.xlane.xlu0 %1021
        %v1023 = vsel %vm1007, %v1019, 0.0
        %1024 = vadd.xlane.f32.xlu0 %v1023
        %v1025 = vpop.xlane.xlu0 %1024
        %v1026 = vrcp.pop %v1022
        %v1027 = vrcp.pop %v1025
        %v1028 = vmul.f32 %v1017, %v1026
        %v1029 = vmul.f32 %v1019, %v1027
        %v1030 = vpack.c.bf16 %v1028, %v1028
        %v1031 = vpack.c.bf16 %v1029, %v1029
        %1032 = vrot.lane.b32.xlu0 %v894, 64
        %v1033 = vpop.permute.xlu0 %1032
        %v1035 = vsel %vm1007, %v1030, 0
        %vm1037 = vcmask 1043456
        %v1039 = vsel %vm1037, %v1033, 0
        %1041 = vmatprep.subr.bf16.mxu0 0
        %1042 = vmatpush1.bf16.msra.mxu0 %v1039
        %1043 = vmatprep.subr.bf16.mxu0 0
        %1044 = vmatpush1.bf16.msra.mxu0 0
        %1045 = vmatprep.subr.bf16.mxu0 0
        %1046 = vmatpush1.bf16.msra.mxu0 0
        %1047 = vmatprep.subr.bf16.mxu0 0
        %1048 = vmatpush1.bf16.msra.mxu0 0
        %1049 = vmatprep.subr.bf16.mxu0 0
        %1050 = vmatpush1.bf16.msra.mxu0 0
        %1051 = vmatprep.subr.bf16.mxu0 0
        %1052 = vmatpush1.bf16.msra.mxu0 0
        %1053 = vmatprep.subr.bf16.mxu0 0
        %1054 = vmatpush1.bf16.msra.mxu0 0
        %1055 = vmatprep.subr.bf16.mxu0 0
        %1056 = vmatpush1.bf16.msra.mxu0 0
        %1057 = vmatprep.subr.bf16.mxu0 0
        %1058 = vmatpush1.bf16.msra.mxu0 0
        %1059 = vmatprep.subr.bf16.mxu0 0
        %1060 = vmatpush1.bf16.msra.mxu0 0
        %1061 = vmatprep.subr.bf16.mxu0 0
        %1062 = vmatpush1.bf16.msra.mxu0 0
        %1063 = vmatprep.subr.bf16.mxu0 0
        %1064 = vmatpush1.bf16.msra.mxu0 0
        %1065 = vmatprep.subr.bf16.mxu0 0
        %1066 = vmatpush1.bf16.msra.mxu0 0
        %1067 = vmatprep.subr.bf16.mxu0 0
        %1068 = vmatpush1.bf16.msra.mxu0 0
        %1069 = vmatprep.subr.bf16.mxu0 0
        %1070 = vmatpush1.bf16.msra.mxu0 0
        %1071 = vmatprep.subr.bf16.mxu0 0
        %1072 = vmatpush1.bf16.msra.mxu0 0
        %1073 = vmatprep.mubr.bf16.mxu0 0
        %1074 = vmatmul.mubr.bf16.gmra.mrb[0].mxu0 %v1035
        %v1075 = vpop.f32.mrb[0].mxu0
        %v1076 = vadd.f32 0.0, %v1075
        %v1077 = vpop.f32.mrb[0].mxu0
        %v1078 = vpop.f32.mrb[0].mxu0
        %v1079 = vpop.f32.mrb[0].mxu0
        %1080 = vdwg.mxu0
        %1081 = vrot.lane.b32.xlu0 %v895, 64
        %v1082 = vpop.permute.xlu0 %1081
        %v1084 = vsel %vm1007, %v1031, 0
        %v1087 = vsel %vm1037, %v1082, 0
        %1089 = vmatprep.subr.bf16.mxu0 0
        %1090 = vmatpush1.bf16.msra.mxu0 %v1087
        %1091 = vmatprep.subr.bf16.mxu0 0
        %1092 = vmatpush1.bf16.msra.mxu0 0
        %1093 = vmatprep.subr.bf16.mxu0 0
        %1094 = vmatpush1.bf16.msra.mxu0 0
        %1095 = vmatprep.subr.bf16.mxu0 0
        %1096 = vmatpush1.bf16.msra.mxu0 0
        %1097 = vmatprep.subr.bf16.mxu0 0
        %1098 = vmatpush1.bf16.msra.mxu0 0
        %1099 = vmatprep.subr.bf16.mxu0 0
        %1100 = vmatpush1.bf16.msra.mxu0 0
        %1101 = vmatprep.subr.bf16.mxu0 0
        %1102 = vmatpush1.bf16.msra.mxu0 0
        %1103 = vmatprep.subr.bf16.mxu0 0
        %1104 = vmatpush1.bf16.msra.mxu0 0
        %1105 = vmatprep.subr.bf16.mxu0 0
        %1106 = vmatpush1.bf16.msra.mxu0 0
        %1107 = vmatprep.subr.bf16.mxu0 0
        %1108 = vmatpush1.bf16.msra.mxu0 0
        %1109 = vmatprep.subr.bf16.mxu0 0
        %1110 = vmatpush1.bf16.msra.mxu0 0
        %1111 = vmatprep.subr.bf16.mxu0 0
        %1112 = vmatpush1.bf16.msra.mxu0 0
        %1113 = vmatprep.subr.bf16.mxu0 0
        %1114 = vmatpush1.bf16.msra.mxu0 0
        %1115 = vmatprep.subr.bf16.mxu0 0
        %1116 = vmatpush1.bf16.msra.mxu0 0
        %1117 = vmatprep.subr.bf16.mxu0 0
        %1118 = vmatpush1.bf16.msra.mxu0 0
        %1119 = vmatprep.subr.bf16.mxu0 0
        %1120 = vmatpush1.bf16.msra.mxu0 0
        %1121 = vmatprep.mubr.bf16.mxu0 0
        %1122 = vmatmul.mubr.bf16.gmra.mrb[0].mxu0 %v1084
        %v1123 = vpop.f32.mrb[0].mxu0
        %v1124 = vadd.f32 0.0, %v1123
        %v1125 = vpop.f32.mrb[0].mxu0
        %v1126 = vpop.f32.mrb[0].mxu0
        %v1127 = vpop.f32.mrb[0].mxu0
        %1128 = vdwg.mxu0
        %1130 = vrot.lane.b32.xlu0 %v892, 124
        %v1131 = vpop.permute.xlu0 %1130
        %1132 = vrot.lane.b32.xlu0 %v894, 92
        %v1133 = vpop.permute.xlu0 %1132
        %v1135 = vsel %vm911, %v1131, 0
        %v1138 = vsel %vm911, %v1133, 0
        %1140 = vmatprep.subr.bf16.mxu0 0
        %1141 = vmatpush1.bf16.xpose.msra.mxu0 %v1138
        %1142 = vmatprep.subr.bf16.mxu0 0
        %1143 = vmatpush1.bf16.xpose.msra.mxu0 0
        %1144 = vmatprep.subr.bf16.mxu0 0
        %1145 = vmatpush1.bf16.xpose.msra.mxu0 0
        %1146 = vmatprep.subr.bf16.mxu0 0
        %1147 = vmatpush1.bf16.xpose.msra.mxu0 0
        %1148 = vmatprep.subr.bf16.mxu0 0
        %1149 = vmatpush1.bf16.xpose.msra.mxu0 0
        %1150 = vmatprep.subr.bf16.mxu0 0
        %1151 = vmatpush1.bf16.xpose.msra.mxu0 0
        %1152 = vmatprep.subr.bf16.mxu0 0
        %1153 = vmatpush1.bf16.xpose.msra.mxu0 0
        %1154 = vmatprep.subr.bf16.mxu0 0
        %1155 = vmatpush1.bf16.xpose.msra.mxu0 0
        %1156 = vmatprep.subr.bf16.mxu0 0
        %1157 = vmatpush1.bf16.xpose.msra.mxu0 0
        %1158 = vmatprep.subr.bf16.mxu0 0
        %1159 = vmatpush1.bf16.xpose.msra.mxu0 0
        %1160 = vmatprep.subr.bf16.mxu0 0
        %1161 = vmatpush1.bf16.xpose.msra.mxu0 0
        %1162 = vmatprep.subr.bf16.mxu0 0
        %1163 = vmatpush1.bf16.xpose.msra.mxu0 0
        %1164 = vmatprep.subr.bf16.mxu0 0
        %1165 = vmatpush1.bf16.xpose.msra.mxu0 0
        %1166 = vmatprep.subr.bf16.mxu0 0
        %1167 = vmatpush1.bf16.xpose.msra.mxu0 0
        %1168 = vmatprep.subr.bf16.mxu0 0
        %1169 = vmatpush1.bf16.xpose.msra.mxu0 0
        %1170 = vmatprep.subr.bf16.mxu0 0
        %1171 = vmatpush1.bf16.xpose.msra.mxu0 0
        %1172 = vmatprep.mubr.bf16.mxu0 0
        %1173 = vmatmul.mubr.bf16.gmra.mrb[0].mxu0 %v1135
        %v1174 = vpop.f32.mrb[0].mxu0
        %v1175 = vadd.f32 %v901, %v1174
        %v1176 = vpop.f32.mrb[0].mxu0
        %v1177 = vpop.f32.mrb[0].mxu0
        %v1178 = vpop.f32.mrb[0].mxu0
        %1179 = vdwg.mxu0
        %1181 = vrot.lane.b32.xlu0 %v893, 124
        %v1182 = vpop.permute.xlu0 %1181
        %1183 = vrot.lane.b32.xlu0 %v895, 92
        %v1184 = vpop.permute.xlu0 %1183
        %v1186 = vsel %vm911, %v1182, 0
        %v1189 = vsel %vm911, %v1184, 0
        %1191 = vmatprep.subr.bf16.mxu0 0
        %1192 = vmatpush1.bf16.xpose.msra.mxu0 %v1189
        %1193 = vmatprep.subr.bf16.mxu0 0
        %1194 = vmatpush1.bf16.xpose.msra.mxu0 0
        %1195 = vmatprep.subr.bf16.mxu0 0
        %1196 = vmatpush1.bf16.xpose.msra.mxu0 0
        %1197 = vmatprep.subr.bf16.mxu0 0
        %1198 = vmatpush1.bf16.xpose.msra.mxu0 0
        %1199 = vmatprep.subr.bf16.mxu0 0
        %1200 = vmatpush1.bf16.xpose.msra.mxu0 0
        %1201 = vmatprep.subr.bf16.mxu0 0
        %1202 = vmatpush1.bf16.xpose.msra.mxu0 0
        %1203 = vmatprep.subr.bf16.mxu0 0
        %1204 = vmatpush1.bf16.xpose.msra.mxu0 0
        %1205 = vmatprep.subr.bf16.mxu0 0
        %1206 = vmatpush1.bf16.xpose.msra.mxu0 0
        %1207 = vmatprep.subr.bf16.mxu0 0
        %1208 = vmatpush1.bf16.xpose.msra.mxu0 0
        %1209 = vmatprep.subr.bf16.mxu0 0
        %1210 = vmatpush1.bf16.xpose.msra.mxu0 0
        %1211 = vmatprep.subr.bf16.mxu0 0
        %1212 = vmatpush1.bf16.xpose.msra.mxu0 0
        %1213 = vmatprep.subr.bf16.mxu0 0
        %1214 = vmatpush1.bf16.xpose.msra.mxu0 0
        %1215 = vmatprep.subr.bf16.mxu0 0
        %1216 = vmatpush1.bf16.xpose.msra.mxu0 0
        %1217 = vmatprep.subr.bf16.mxu0 0
        %1218 = vmatpush1.bf16.xpose.msra.mxu0 0
        %1219 = vmatprep.subr.bf16.mxu0 0
        %1220 = vmatpush1.bf16.xpose.msra.mxu0 0
        %1221 = vmatprep.subr.bf16.mxu0 0
        %1222 = vmatpush1.bf16.xpose.msra.mxu0 0
        %1223 = vmatprep.mubr.bf16.mxu0 0
        %1224 = vmatmul.mubr.bf16.gmra.mrb[0].mxu0 %v1186
        %v1225 = vpop.f32.mrb[0].mxu0
        %v1226 = vadd.f32 %v905, %v1225
        %v1227 = vpop.f32.mrb[0].mxu0
        %v1228 = vpop.f32.mrb[0].mxu0
        %v1229 = vpop.f32.mrb[0].mxu0
        %1230 = vdwg.mxu0
        %v1231 = vsel %vm1007, %v1175, -inf
        %1232 = vmax.xlane.f32.xlu0 %v1231
        %v1233 = vpop.xlane.xlu0 %1232
        %v1234 = vsel %vm1007, %v1226, -inf
        %1235 = vmax.xlane.f32.xlu0 %v1234
        %v1236 = vpop.xlane.xlu0 %1235
        %v1237 = vsub.f32 %v1175, %v1233
        %v1238 = vsub.f32 %v1226, %v1236
        %v1239 = vmul.f32 %v1237, 1.442695
        %v1240 = vpow.pop %v1239
        %v1241 = vmul.f32 %v1238, 1.442695
        %v1242 = vpow.pop %v1241
        %v1243 = vsel %vm1007, %v1240, 0.0
        %1244 = vadd.xlane.f32.xlu0 %v1243
        %v1245 = vpop.xlane.xlu0 %1244
        %v1246 = vsel %vm1007, %v1242, 0.0
        %1247 = vadd.xlane.f32.xlu0 %v1246
        %v1248 = vpop.xlane.xlu0 %1247
        %v1249 = vrcp.pop %v1245
        %v1250 = vrcp.pop %v1248
        %v1251 = vmul.f32 %v1240, %v1249
        %v1252 = vmul.f32 %v1242, %v1250
        %v1253 = vpack.c.bf16 %v1251, %v1251
        %v1254 = vpack.c.bf16 %v1252, %v1252
        %1255 = vrot.lane.b32.xlu0 %v894, 60
        %v1256 = vpop.permute.xlu0 %1255
        %v1258 = vsel %vm1007, %v1253, 0
        %v1261 = vsel %vm1037, %v1256, 0
        %1263 = vmatprep.subr.bf16.mxu0 0
        %1264 = vmatpush1.bf16.msra.mxu0 %v1261
        %1265 = vmatprep.subr.bf16.mxu0 0
        %1266 = vmatpush1.bf16.msra.mxu0 0
        %1267 = vmatprep.subr.bf16.mxu0 0
        %1268 = vmatpush1.bf16.msra.mxu0 0
        %1269 = vmatprep.subr.bf16.mxu0 0
        %1270 = vmatpush1.bf16.msra.mxu0 0
        %1271 = vmatprep.subr.bf16.mxu0 0
        %1272 = vmatpush1.bf16.msra.mxu0 0
        %1273 = vmatprep.subr.bf16.mxu0 0
        %1274 = vmatpush1.bf16.msra.mxu0 0
        %1275 = vmatprep.subr.bf16.mxu0 0
        %1276 = vmatpush1.bf16.msra.mxu0 0
        %1277 = vmatprep.subr.bf16.mxu0 0
        %1278 = vmatpush1.bf16.msra.mxu0 0
        %1279 = vmatprep.subr.bf16.mxu0 0
        %1280 = vmatpush1.bf16.msra.mxu0 0
        %1281 = vmatprep.subr.bf16.mxu0 0
        %1282 = vmatpush1.bf16.msra.mxu0 0
        %1283 = vmatprep.subr.bf16.mxu0 0
        %1284 = vmatpush1.bf16.msra.mxu0 0
        %1285 = vmatprep.subr.bf16.mxu0 0
        %1286 = vmatpush1.bf16.msra.mxu0 0
        %1287 = vmatprep.subr.bf16.mxu0 0
        %1288 = vmatpush1.bf16.msra.mxu0 0
        %1289 = vmatprep.subr.bf16.mxu0 0
        %1290 = vmatpush1.bf16.msra.mxu0 0
        %1291 = vmatprep.subr.bf16.mxu0 0
        %1292 = vmatpush1.bf16.msra.mxu0 0
        %1293 = vmatprep.subr.bf16.mxu0 0
        %1294 = vmatpush1.bf16.msra.mxu0 0
        %1295 = vmatprep.mubr.bf16.mxu0 0
        %1296 = vmatmul.mubr.bf16.gmra.mrb[0].mxu0 %v1258
        %v1297 = vpop.f32.mrb[0].mxu0
        %v1298 = vadd.f32 0.0, %v1297
        %v1299 = vpop.f32.mrb[0].mxu0
        %v1300 = vpop.f32.mrb[0].mxu0
        %v1301 = vpop.f32.mrb[0].mxu0
        %1302 = vdwg.mxu0
        %1303 = vrot.lane.b32.xlu0 %v895, 60
        %v1304 = vpop.permute.xlu0 %1303
        %v1306 = vsel %vm1007, %v1254, 0
        %v1309 = vsel %vm1037, %v1304, 0
        %1311 = vmatprep.subr.bf16.mxu0 0
        %1312 = vmatpush1.bf16.msra.mxu0 %v1309
        %1313 = vmatprep.subr.bf16.mxu0 0
        %1314 = vmatpush1.bf16.msra.mxu0 0
        %1315 = vmatprep.subr.bf16.mxu0 0
        %1316 = vmatpush1.bf16.msra.mxu0 0
        %1317 = vmatprep.subr.bf16.mxu0 0
        %1318 = vmatpush1.bf16.msra.mxu0 0
        %1319 = vmatprep.subr.bf16.mxu0 0
        %1320 = vmatpush1.bf16.msra.mxu0 0
        %1321 = vmatprep.subr.bf16.mxu0 0
        %1322 = vmatpush1.bf16.msra.mxu0 0
        %1323 = vmatprep.subr.bf16.mxu0 0
        %1324 = vmatpush1.bf16.msra.mxu0 0
        %1325 = vmatprep.subr.bf16.mxu0 0
        %1326 = vmatpush1.bf16.msra.mxu0 0
        %1327 = vmatprep.subr.bf16.mxu0 0
        %1328 = vmatpush1.bf16.msra.mxu0 0
        %1329 = vmatprep.subr.bf16.mxu0 0
        %1330 = vmatpush1.bf16.msra.mxu0 0
        %1331 = vmatprep.subr.bf16.mxu0 0
        %1332 = vmatpush1.bf16.msra.mxu0 0
        %1333 = vmatprep.subr.bf16.mxu0 0
        %1334 = vmatpush1.bf16.msra.mxu0 0
        %1335 = vmatprep.subr.bf16.mxu0 0
        %1336 = vmatpush1.bf16.msra.mxu0 0
        %1337 = vmatprep.subr.bf16.mxu0 0
        %1338 = vmatpush1.bf16.msra.mxu0 0
        %1339 = vmatprep.subr.bf16.mxu0 0
        %1340 = vmatpush1.bf16.msra.mxu0 0
        %1341 = vmatprep.subr.bf16.mxu0 0
        %1342 = vmatpush1.bf16.msra.mxu0 0
        %1343 = vmatprep.mubr.bf16.mxu0 0
        %1344 = vmatmul.mubr.bf16.gmra.mrb[0].mxu0 %v1306
        %v1345 = vpop.f32.mrb[0].mxu0
        %v1346 = vadd.f32 0.0, %v1345
        %v1347 = vpop.f32.mrb[0].mxu0
        %v1348 = vpop.f32.mrb[0].mxu0
        %v1349 = vpop.f32.mrb[0].mxu0
        %1350 = vdwg.mxu0
        %1351 = vrot.lane.b32.xlu0 %v892, 120
        %v1352 = vpop.permute.xlu0 %1351
        %1353 = vrot.lane.b32.xlu0 %v894, 88
        %v1354 = vpop.permute.xlu0 %1353
        %v1356 = vsel %vm911, %v1352, 0
        %v1359 = vsel %vm911, %v1354, 0
        %1361 = vmatprep.subr.bf16.mxu0 0
        %1362 = vmatpush1.bf16.xpose.msra.mxu0 %v1359
        %1363 = vmatprep.subr.bf16.mxu0 0
        %1364 = vmatpush1.bf16.xpose.msra.mxu0 0
        %1365 = vmatprep.subr.bf16.mxu0 0
        %1366 = vmatpush1.bf16.xpose.msra.mxu0 0
        %1367 = vmatprep.subr.bf16.mxu0 0
        %1368 = vmatpush1.bf16.xpose.msra.mxu0 0
        %1369 = vmatprep.subr.bf16.mxu0 0
        %1370 = vmatpush1.bf16.xpose.msra.mxu0 0
        %1371 = vmatprep.subr.bf16.mxu0 0
        %1372 = vmatpush1.bf16.xpose.msra.mxu0 0
        %1373 = vmatprep.subr.bf16.mxu0 0
        %1374 = vmatpush1.bf16.xpose.msra.mxu0 0
        %1375 = vmatprep.subr.bf16.mxu0 0
        %1376 = vmatpush1.bf16.xpose.msra.mxu0 0
        %1377 = vmatprep.subr.bf16.mxu0 0
        %1378 = vmatpush1.bf16.xpose.msra.mxu0 0
        %1379 = vmatprep.subr.bf16.mxu0 0
        %1380 = vmatpush1.bf16.xpose.msra.mxu0 0
        %1381 = vmatprep.subr.bf16.mxu0 0
        %1382 = vmatpush1.bf16.xpose.msra.mxu0 0
        %1383 = vmatprep.subr.bf16.mxu0 0
        %1384 = vmatpush1.bf16.xpose.msra.mxu0 0
        %1385 = vmatprep.subr.bf16.mxu0 0
        %1386 = vmatpush1.bf16.xpose.msra.mxu0 0
        %1387 = vmatprep.subr.bf16.mxu0 0
        %1388 = vmatpush1.bf16.xpose.msra.mxu0 0
        %1389 = vmatprep.subr.bf16.mxu0 0
        %1390 = vmatpush1.bf16.xpose.msra.mxu0 0
        %1391 = vmatprep.subr.bf16.mxu0 0
        %1392 = vmatpush1.bf16.xpose.msra.mxu0 0
        %1393 = vmatprep.mubr.bf16.mxu0 0
        %1394 = vmatmul.mubr.bf16.gmra.mrb[0].mxu0 %v1356
        %v1395 = vpop.f32.mrb[0].mxu0
        %v1396 = vadd.f32 %v901, %v1395
        %v1397 = vpop.f32.mrb[0].mxu0
        %v1398 = vpop.f32.mrb[0].mxu0
        %v1399 = vpop.f32.mrb[0].mxu0
        %1400 = vdwg.mxu0
        %1401 = vrot.lane.b32.xlu0 %v893, 120
        %v1402 = vpop.permute.xlu0 %1401
        %1403 = vrot.lane.b32.xlu0 %v895, 88
        %v1404 = vpop.permute.xlu0 %1403
        %v1406 = vsel %vm911, %v1402, 0
        %v1409 = vsel %vm911, %v1404, 0
        %1411 = vmatprep.subr.bf16.mxu0 0
        %1412 = vmatpush1.bf16.xpose.msra.mxu0 %v1409
        %1413 = vmatprep.subr.bf16.mxu0 0
        %1414 = vmatpush1.bf16.xpose.msra.mxu0 0
        %1415 = vmatprep.subr.bf16.mxu0 0
        %1416 = vmatpush1.bf16.xpose.msra.mxu0 0
        %1417 = vmatprep.subr.bf16.mxu0 0
        %1418 = vmatpush1.bf16.xpose.msra.mxu0 0
        %1419 = vmatprep.subr.bf16.mxu0 0
        %1420 = vmatpush1.bf16.xpose.msra.mxu0 0
        %1421 = vmatprep.subr.bf16.mxu0 0
        %1422 = vmatpush1.bf16.xpose.msra.mxu0 0
        %1423 = vmatprep.subr.bf16.mxu0 0
        %1424 = vmatpush1.bf16.xpose.msra.mxu0 0
        %1425 = vmatprep.subr.bf16.mxu0 0
        %1426 = vmatpush1.bf16.xpose.msra.mxu0 0
        %1427 = vmatprep.subr.bf16.mxu0 0
        %1428 = vmatpush1.bf16.xpose.msra.mxu0 0
        %1429 = vmatprep.subr.bf16.mxu0 0
        %1430 = vmatpush1.bf16.xpose.msra.mxu0 0
        %1431 = vmatprep.subr.bf16.mxu0 0
        %1432 = vmatpush1.bf16.xpose.msra.mxu0 0
        %1433 = vmatprep.subr.bf16.mxu0 0
        %1434 = vmatpush1.bf16.xpose.msra.mxu0 0
        %1435 = vmatprep.subr.bf16.mxu0 0
        %1436 = vmatpush1.bf16.xpose.msra.mxu0 0
        %1437 = vmatprep.subr.bf16.mxu0 0
        %1438 = vmatpush1.bf16.xpose.msra.mxu0 0
        %1439 = vmatprep.subr.bf16.mxu0 0
        %1440 = vmatpush1.bf16.xpose.msra.mxu0 0
        %1441 = vmatprep.subr.bf16.mxu0 0
        %1442 = vmatpush1.bf16.xpose.msra.mxu0 0
        %1443 = vmatprep.mubr.bf16.mxu0 0
        %1444 = vmatmul.mubr.bf16.gmra.mrb[0].mxu0 %v1406
        %v1445 = vpop.f32.mrb[0].mxu0
        %v1446 = vadd.f32 %v905, %v1445
        %v1447 = vpop.f32.mrb[0].mxu0
        %v1448 = vpop.f32.mrb[0].mxu0
        %v1449 = vpop.f32.mrb[0].mxu0
        %1450 = vdwg.mxu0
        %v1451 = vsel %vm1007, %v1396, -inf
        %1452 = vmax.xlane.f32.xlu0 %v1451
        %v1453 = vpop.xlane.xlu0 %1452
        %v1454 = vsel %vm1007, %v1446, -inf
        %1455 = vmax.xlane.f32.xlu0 %v1454
        %v1456 = vpop.xlane.xlu0 %1455
        %v1457 = vsub.f32 %v1396, %v1453
        %v1458 = vsub.f32 %v1446, %v1456
        %v1459 = vmul.f32 %v1457, 1.442695
        %v1460 = vpow.pop %v1459
        %v1461 = vmul.f32 %v1458, 1.442695
        %v1462 = vpow.pop %v1461
        %v1463 = vsel %vm1007, %v1460, 0.0
        %1464 = vadd.xlane.f32.xlu0 %v1463
        %v1465 = vpop.xlane.xlu0 %1464
        %v1466 = vsel %vm1007, %v1462, 0.0
        %1467 = vadd.xlane.f32.xlu0 %v1466
        %v1468 = vpop.xlane.xlu0 %1467
        %v1469 = vrcp.pop %v1465
        %v1470 = vrcp.pop %v1468
        %v1471 = vmul.f32 %v1460, %v1469
        %v1472 = vmul.f32 %v1462, %v1470
        %v1473 = vpack.c.bf16 %v1471, %v1471
        %v1474 = vpack.c.bf16 %v1472, %v1472
        %1475 = vrot.lane.b32.xlu0 %v894, 56
        %v1476 = vpop.permute.xlu0 %1475
        %v1478 = vsel %vm1007, %v1473, 0
        %v1481 = vsel %vm1037, %v1476, 0
        %1483 = vmatprep.subr.bf16.mxu0 0
        %1484 = vmatpush1.bf16.msra.mxu0 %v1481
        %1485 = vmatprep.subr.bf16.mxu0 0
        %1486 = vmatpush1.bf16.msra.mxu0 0
        %1487 = vmatprep.subr.bf16.mxu0 0
        %1488 = vmatpush1.bf16.msra.mxu0 0
        %1489 = vmatprep.subr.bf16.mxu0 0
        %1490 = vmatpush1.bf16.msra.mxu0 0
        %1491 = vmatprep.subr.bf16.mxu0 0
        %1492 = vmatpush1.bf16.msra.mxu0 0
        %1493 = vmatprep.subr.bf16.mxu0 0
        %1494 = vmatpush1.bf16.msra.mxu0 0
        %1495 = vmatprep.subr.bf16.mxu0 0
        %1496 = vmatpush1.bf16.msra.mxu0 0
        %1497 = vmatprep.subr.bf16.mxu0 0
        %1498 = vmatpush1.bf16.msra.mxu0 0
        %1499 = vmatprep.subr.bf16.mxu0 0
        %1500 = vmatpush1.bf16.msra.mxu0 0
        %1501 = vmatprep.subr.bf16.mxu0 0
        %1502 = vmatpush1.bf16.msra.mxu0 0
        %1503 = vmatprep.subr.bf16.mxu0 0
        %1504 = vmatpush1.bf16.msra.mxu0 0
        %1505 = vmatprep.subr.bf16.mxu0 0
        %1506 = vmatpush1.bf16.msra.mxu0 0
        %1507 = vmatprep.subr.bf16.mxu0 0
        %1508 = vmatpush1.bf16.msra.mxu0 0
        %1509 = vmatprep.subr.bf16.mxu0 0
        %1510 = vmatpush1.bf16.msra.mxu0 0
        %1511 = vmatprep.subr.bf16.mxu0 0
        %1512 = vmatpush1.bf16.msra.mxu0 0
        %1513 = vmatprep.subr.bf16.mxu0 0
        %1514 = vmatpush1.bf16.msra.mxu0 0
        %1515 = vmatprep.mubr.bf16.mxu0 0
        %1516 = vmatmul.mubr.bf16.gmra.mrb[0].mxu0 %v1478
        %v1517 = vpop.f32.mrb[0].mxu0
        %v1518 = vadd.f32 0.0, %v1517
        %v1519 = vpop.f32.mrb[0].mxu0
        %v1520 = vpop.f32.mrb[0].mxu0
        %v1521 = vpop.f32.mrb[0].mxu0
        %1522 = vdwg.mxu0
        %1523 = vrot.lane.b32.xlu0 %v895, 56
        %v1524 = vpop.permute.xlu0 %1523
        %v1526 = vsel %vm1007, %v1474, 0
        %v1529 = vsel %vm1037, %v1524, 0
        %1531 = vmatprep.subr.bf16.mxu0 0
        %1532 = vmatpush1.bf16.msra.mxu0 %v1529
        %1533 = vmatprep.subr.bf16.mxu0 0
        %1534 = vmatpush1.bf16.msra.mxu0 0
        %1535 = vmatprep.subr.bf16.mxu0 0
        %1536 = vmatpush1.bf16.msra.mxu0 0
        %1537 = vmatprep.subr.bf16.mxu0 0
        %1538 = vmatpush1.bf16.msra.mxu0 0
        %1539 = vmatprep.subr.bf16.mxu0 0
        %1540 = vmatpush1.bf16.msra.mxu0 0
        %1541 = vmatprep.subr.bf16.mxu0 0
        %1542 = vmatpush1.bf16.msra.mxu0 0
        %1543 = vmatprep.subr.bf16.mxu0 0
        %1544 = vmatpush1.bf16.msra.mxu0 0
        %1545 = vmatprep.subr.bf16.mxu0 0
        %1546 = vmatpush1.bf16.msra.mxu0 0
        %1547 = vmatprep.subr.bf16.mxu0 0
        %1548 = vmatpush1.bf16.msra.mxu0 0
        %1549 = vmatprep.subr.bf16.mxu0 0
        %1550 = vmatpush1.bf16.msra.mxu0 0
        %1551 = vmatprep.subr.bf16.mxu0 0
        %1552 = vmatpush1.bf16.msra.mxu0 0
        %1553 = vmatprep.subr.bf16.mxu0 0
        %1554 = vmatpush1.bf16.msra.mxu0 0
        %1555 = vmatprep.subr.bf16.mxu0 0
        %1556 = vmatpush1.bf16.msra.mxu0 0
        %1557 = vmatprep.subr.bf16.mxu0 0
        %1558 = vmatpush1.bf16.msra.mxu0 0
        %1559 = vmatprep.subr.bf16.mxu0 0
        %1560 = vmatpush1.bf16.msra.mxu0 0
        %1561 = vmatprep.subr.bf16.mxu0 0
        %1562 = vmatpush1.bf16.msra.mxu0 0
        %1563 = vmatprep.mubr.bf16.mxu0 0
        %1564 = vmatmul.mubr.bf16.gmra.mrb[0].mxu0 %v1526
        %v1565 = vpop.f32.mrb[0].mxu0
        %v1566 = vadd.f32 0.0, %v1565
        %v1567 = vpop.f32.mrb[0].mxu0
        %v1568 = vpop.f32.mrb[0].mxu0
        %v1569 = vpop.f32.mrb[0].mxu0
        %1570 = vdwg.mxu0
        %1571 = vrot.lane.b32.xlu0 %v892, 116
        %v1572 = vpop.permute.xlu0 %1571
        %1573 = vrot.lane.b32.xlu0 %v894, 84
        %v1574 = vpop.permute.xlu0 %1573
        %v1576 = vsel %vm911, %v1572, 0
        %v1579 = vsel %vm911, %v1574, 0
        %1581 = vmatprep.subr.bf16.mxu0 0
        %1582 = vmatpush1.bf16.xpose.msra.mxu0 %v1579
        %1583 = vmatprep.subr.bf16.mxu0 0
        %1584 = vmatpush1.bf16.xpose.msra.mxu0 0
        %1585 = vmatprep.subr.bf16.mxu0 0
        %1586 = vmatpush1.bf16.xpose.msra.mxu0 0
        %1587 = vmatprep.subr.bf16.mxu0 0
        %1588 = vmatpush1.bf16.xpose.msra.mxu0 0
        %1589 = vmatprep.subr.bf16.mxu0 0
        %1590 = vmatpush1.bf16.xpose.msra.mxu0 0
        %1591 = vmatprep.subr.bf16.mxu0 0
        %1592 = vmatpush1.bf16.xpose.msra.mxu0 0
        %1593 = vmatprep.subr.bf16.mxu0 0
        %1594 = vmatpush1.bf16.xpose.msra.mxu0 0
        %1595 = vmatprep.subr.bf16.mxu0 0
        %1596 = vmatpush1.bf16.xpose.msra.mxu0 0
        %1597 = vmatprep.subr.bf16.mxu0 0
        %1598 = vmatpush1.bf16.xpose.msra.mxu0 0
        %1599 = vmatprep.subr.bf16.mxu0 0
        %1600 = vmatpush1.bf16.xpose.msra.mxu0 0
        %1601 = vmatprep.subr.bf16.mxu0 0
        %1602 = vmatpush1.bf16.xpose.msra.mxu0 0
        %1603 = vmatprep.subr.bf16.mxu0 0
        %1604 = vmatpush1.bf16.xpose.msra.mxu0 0
        %1605 = vmatprep.subr.bf16.mxu0 0
        %1606 = vmatpush1.bf16.xpose.msra.mxu0 0
        %1607 = vmatprep.subr.bf16.mxu0 0
        %1608 = vmatpush1.bf16.xpose.msra.mxu0 0
        %1609 = vmatprep.subr.bf16.mxu0 0
        %1610 = vmatpush1.bf16.xpose.msra.mxu0 0
        %1611 = vmatprep.subr.bf16.mxu0 0
        %1612 = vmatpush1.bf16.xpose.msra.mxu0 0
        %1613 = vmatprep.mubr.bf16.mxu0 0
        %1614 = vmatmul.mubr.bf16.gmra.mrb[0].mxu0 %v1576
        %v1615 = vpop.f32.mrb[0].mxu0
        %v1616 = vadd.f32 %v901, %v1615
        %v1617 = vpop.f32.mrb[0].mxu0
        %v1618 = vpop.f32.mrb[0].mxu0
        %v1619 = vpop.f32.mrb[0].mxu0
        %1620 = vdwg.mxu0
        %1621 = vrot.lane.b32.xlu0 %v893, 116
        %v1622 = vpop.permute.xlu0 %1621
        %1623 = vrot.lane.b32.xlu0 %v895, 84
        %v1624 = vpop.permute.xlu0 %1623
        %v1626 = vsel %vm911, %v1622, 0
        %v1629 = vsel %vm911, %v1624, 0
        %1631 = vmatprep.subr.bf16.mxu0 0
        %1632 = vmatpush1.bf16.xpose.msra.mxu0 %v1629
        %1633 = vmatprep.subr.bf16.mxu0 0
        %1634 = vmatpush1.bf16.xpose.msra.mxu0 0
        %1635 = vmatprep.subr.bf16.mxu0 0
        %1636 = vmatpush1.bf16.xpose.msra.mxu0 0
        %1637 = vmatprep.subr.bf16.mxu0 0
        %1638 = vmatpush1.bf16.xpose.msra.mxu0 0
        %1639 = vmatprep.subr.bf16.mxu0 0
        %1640 = vmatpush1.bf16.xpose.msra.mxu0 0
        %1641 = vmatprep.subr.bf16.mxu0 0
        %1642 = vmatpush1.bf16.xpose.msra.mxu0 0
        %1643 = vmatprep.subr.bf16.mxu0 0
        %1644 = vmatpush1.bf16.xpose.msra.mxu0 0
        %1645 = vmatprep.subr.bf16.mxu0 0
        %1646 = vmatpush1.bf16.xpose.msra.mxu0 0
        %1647 = vmatprep.subr.bf16.mxu0 0
        %1648 = vmatpush1.bf16.xpose.msra.mxu0 0
        %1649 = vmatprep.subr.bf16.mxu0 0
        %1650 = vmatpush1.bf16.xpose.msra.mxu0 0
        %1651 = vmatprep.subr.bf16.mxu0 0
        %1652 = vmatpush1.bf16.xpose.msra.mxu0 0
        %1653 = vmatprep.subr.bf16.mxu0 0
        %1654 = vmatpush1.bf16.xpose.msra.mxu0 0
        %1655 = vmatprep.subr.bf16.mxu0 0
        %1656 = vmatpush1.bf16.xpose.msra.mxu0 0
        %1657 = vmatprep.subr.bf16.mxu0 0
        %1658 = vmatpush1.bf16.xpose.msra.mxu0 0
        %1659 = vmatprep.subr.bf16.mxu0 0
        %1660 = vmatpush1.bf16.xpose.msra.mxu0 0
        %1661 = vmatprep.subr.bf16.mxu0 0
        %1662 = vmatpush1.bf16.xpose.msra.mxu0 0
        %1663 = vmatprep.mubr.bf16.mxu0 0
        %1664 = vmatmul.mubr.bf16.gmra.mrb[0].mxu0 %v1626
        %v1665 = vpop.f32.mrb[0].mxu0
        %v1666 = vadd.f32 %v905, %v1665
        %v1667 = vpop.f32.mrb[0].mxu0
        %v1668 = vpop.f32.mrb[0].mxu0
        %v1669 = vpop.f32.mrb[0].mxu0
        %1670 = vdwg.mxu0
        %v1671 = vsel %vm1007, %v1616, -inf
        %1672 = vmax.xlane.f32.xlu0 %v1671
        %v1673 = vpop.xlane.xlu0 %1672
        %v1674 = vsel %vm1007, %v1666, -inf
        %1675 = vmax.xlane.f32.xlu0 %v1674
        %v1676 = vpop.xlane.xlu0 %1675
        %v1677 = vsub.f32 %v1616, %v1673
        %v1678 = vsub.f32 %v1666, %v1676
        %v1679 = vmul.f32 %v1677, 1.442695
        %v1680 = vpow.pop %v1679
        %v1681 = vmul.f32 %v1678, 1.442695
        %v1682 = vpow.pop %v1681
        %v1683 = vsel %vm1007, %v1680, 0.0
        %1684 = vadd.xlane.f32.xlu0 %v1683
        %v1685 = vpop.xlane.xlu0 %1684
        %v1686 = vsel %vm1007, %v1682, 0.0
        %1687 = vadd.xlane.f32.xlu0 %v1686
        %v1688 = vpop.xlane.xlu0 %1687
        %v1689 = vrcp.pop %v1685
        %v1690 = vrcp.pop %v1688
        %v1691 = vmul.f32 %v1680, %v1689
        %v1692 = vmul.f32 %v1682, %v1690
        %v1693 = vpack.c.bf16 %v1691, %v1691
        %v1694 = vpack.c.bf16 %v1692, %v1692
        %1695 = vrot.lane.b32.xlu0 %v894, 52
        %v1696 = vpop.permute.xlu0 %1695
        %v1698 = vsel %vm1007, %v1693, 0
        %v1701 = vsel %vm1037, %v1696, 0
        %1703 = vmatprep.subr.bf16.mxu0 0
        %1704 = vmatpush1.bf16.msra.mxu0 %v1701
        %1705 = vmatprep.subr.bf16.mxu0 0
        %1706 = vmatpush1.bf16.msra.mxu0 0
        %1707 = vmatprep.subr.bf16.mxu0 0
        %1708 = vmatpush1.bf16.msra.mxu0 0
        %1709 = vmatprep.subr.bf16.mxu0 0
        %1710 = vmatpush1.bf16.msra.mxu0 0
        %1711 = vmatprep.subr.bf16.mxu0 0
        %1712 = vmatpush1.bf16.msra.mxu0 0
        %1713 = vmatprep.subr.bf16.mxu0 0
        %1714 = vmatpush1.bf16.msra.mxu0 0
        %1715 = vmatprep.subr.bf16.mxu0 0
        %1716 = vmatpush1.bf16.msra.mxu0 0
        %1717 = vmatprep.subr.bf16.mxu0 0
        %1718 = vmatpush1.bf16.msra.mxu0 0
        %1719 = vmatprep.subr.bf16.mxu0 0
        %1720 = vmatpush1.bf16.msra.mxu0 0
        %1721 = vmatprep.subr.bf16.mxu0 0
        %1722 = vmatpush1.bf16.msra.mxu0 0
        %1723 = vmatprep.subr.bf16.mxu0 0
        %1724 = vmatpush1.bf16.msra.mxu0 0
        %1725 = vmatprep.subr.bf16.mxu0 0
        %1726 = vmatpush1.bf16.msra.mxu0 0
        %1727 = vmatprep.subr.bf16.mxu0 0
        %1728 = vmatpush1.bf16.msra.mxu0 0
        %1729 = vmatprep.subr.bf16.mxu0 0
        %1730 = vmatpush1.bf16.msra.mxu0 0
        %1731 = vmatprep.subr.bf16.mxu0 0
        %1732 = vmatpush1.bf16.msra.mxu0 0
        %1733 = vmatprep.subr.bf16.mxu0 0
        %1734 = vmatpush1.bf16.msra.mxu0 0
        %1735 = vmatprep.mubr.bf16.mxu0 0
        %1736 = vmatmul.mubr.bf16.gmra.mrb[0].mxu0 %v1698
        %v1737 = vpop.f32.mrb[0].mxu0
        %v1738 = vadd.f32 0.0, %v1737
        %v1739 = vpop.f32.mrb[0].mxu0
        %v1740 = vpop.f32.mrb[0].mxu0
        %v1741 = vpop.f32.mrb[0].mxu0
        %1742 = vdwg.mxu0
        %1743 = vrot.lane.b32.xlu0 %v895, 52
        %v1744 = vpop.permute.xlu0 %1743
        %v1746 = vsel %vm1007, %v1694, 0
        %v1749 = vsel %vm1037, %v1744, 0
        %1751 = vmatprep.subr.bf16.mxu0 0
        %1752 = vmatpush1.bf16.msra.mxu0 %v1749
        %1753 = vmatprep.subr.bf16.mxu0 0
        %1754 = vmatpush1.bf16.msra.mxu0 0
        %1755 = vmatprep.subr.bf16.mxu0 0
        %1756 = vmatpush1.bf16.msra.mxu0 0
        %1757 = vmatprep.subr.bf16.mxu0 0
        %1758 = vmatpush1.bf16.msra.mxu0 0
        %1759 = vmatprep.subr.bf16.mxu0 0
        %1760 = vmatpush1.bf16.msra.mxu0 0
        %1761 = vmatprep.subr.bf16.mxu0 0
        %1762 = vmatpush1.bf16.msra.mxu0 0
        %1763 = vmatprep.subr.bf16.mxu0 0
        %1764 = vmatpush1.bf16.msra.mxu0 0
        %1765 = vmatprep.subr.bf16.mxu0 0
        %1766 = vmatpush1.bf16.msra.mxu0 0
        %1767 = vmatprep.subr.bf16.mxu0 0
        %1768 = vmatpush1.bf16.msra.mxu0 0
        %1769 = vmatprep.subr.bf16.mxu0 0
        %1770 = vmatpush1.bf16.msra.mxu0 0
        %1771 = vmatprep.subr.bf16.mxu0 0
        %1772 = vmatpush1.bf16.msra.mxu0 0
        %1773 = vmatprep.subr.bf16.mxu0 0
        %1774 = vmatpush1.bf16.msra.mxu0 0
        %1775 = vmatprep.subr.bf16.mxu0 0
        %1776 = vmatpush1.bf16.msra.mxu0 0
        %1777 = vmatprep.subr.bf16.mxu0 0
        %1778 = vmatpush1.bf16.msra.mxu0 0
        %1779 = vmatprep.subr.bf16.mxu0 0
        %1780 = vmatpush1.bf16.msra.mxu0 0
        %1781 = vmatprep.subr.bf16.mxu0 0
        %1782 = vmatpush1.bf16.msra.mxu0 0
        %1783 = vmatprep.mubr.bf16.mxu0 0
        %1784 = vmatmul.mubr.bf16.gmra.mrb[0].mxu0 %v1746
        %v1785 = vpop.f32.mrb[0].mxu0
        %v1786 = vadd.f32 0.0, %v1785
        %v1787 = vpop.f32.mrb[0].mxu0
        %v1788 = vpop.f32.mrb[0].mxu0
        %v1789 = vpop.f32.mrb[0].mxu0
        %1790 = vdwg.mxu0
        %1791 = vrot.lane.b32.xlu0 %v892, 112
        %v1792 = vpop.permute.xlu0 %1791
        %1793 = vrot.lane.b32.xlu0 %v894, 80
        %v1794 = vpop.permute.xlu0 %1793
        %v1796 = vsel %vm911, %v1792, 0
        %v1799 = vsel %vm911, %v1794, 0
        %1801 = vmatprep.subr.bf16.mxu0 0
        %1802 = vmatpush1.bf16.xpose.msra.mxu0 %v1799
        %1803 = vmatprep.subr.bf16.mxu0 0
        %1804 = vmatpush1.bf16.xpose.msra.mxu0 0
        %1805 = vmatprep.subr.bf16.mxu0 0
        %1806 = vmatpush1.bf16.xpose.msra.mxu0 0
        %1807 = vmatprep.subr.bf16.mxu0 0
        %1808 = vmatpush1.bf16.xpose.msra.mxu0 0
        %1809 = vmatprep.subr.bf16.mxu0 0
        %1810 = vmatpush1.bf16.xpose.msra.mxu0 0
        %1811 = vmatprep.subr.bf16.mxu0 0
        %1812 = vmatpush1.bf16.xpose.msra.mxu0 0
        %1813 = vmatprep.subr.bf16.mxu0 0
        %1814 = vmatpush1.bf16.xpose.msra.mxu0 0
        %1815 = vmatprep.subr.bf16.mxu0 0
        %1816 = vmatpush1.bf16.xpose.msra.mxu0 0
        %1817 = vmatprep.subr.bf16.mxu0 0
        %1818 = vmatpush1.bf16.xpose.msra.mxu0 0
        %1819 = vmatprep.subr.bf16.mxu0 0
        %1820 = vmatpush1.bf16.xpose.msra.mxu0 0
        %1821 = vmatprep.subr.bf16.mxu0 0
        %1822 = vmatpush1.bf16.xpose.msra.mxu0 0
        %1823 = vmatprep.subr.bf16.mxu0 0
        %1824 = vmatpush1.bf16.xpose.msra.mxu0 0
        %1825 = vmatprep.subr.bf16.mxu0 0
        %1826 = vmatpush1.bf16.xpose.msra.mxu0 0
        %1827 = vmatprep.subr.bf16.mxu0 0
        %1828 = vmatpush1.bf16.xpose.msra.mxu0 0
        %1829 = vmatprep.subr.bf16.mxu0 0
        %1830 = vmatpush1.bf16.xpose.msra.mxu0 0
        %1831 = vmatprep.subr.bf16.mxu0 0
        %1832 = vmatpush1.bf16.xpose.msra.mxu0 0
        %1833 = vmatprep.mubr.bf16.mxu0 0
        %1834 = vmatmul.mubr.bf16.gmra.mrb[0].mxu0 %v1796
        %v1835 = vpop.f32.mrb[0].mxu0
        %v1836 = vadd.f32 %v901, %v1835
        %v1837 = vpop.f32.mrb[0].mxu0
        %v1838 = vpop.f32.mrb[0].mxu0
        %v1839 = vpop.f32.mrb[0].mxu0
        %1840 = vdwg.mxu0
        %1841 = vrot.lane.b32.xlu0 %v893, 112
        %v1842 = vpop.permute.xlu0 %1841
        %1843 = vrot.lane.b32.xlu0 %v895, 80
        %v1844 = vpop.permute.xlu0 %1843
        %v1846 = vsel %vm911, %v1842, 0
        %v1849 = vsel %vm911, %v1844, 0
        %1851 = vmatprep.subr.bf16.mxu0 0
        %1852 = vmatpush1.bf16.xpose.msra.mxu0 %v1849
        %1853 = vmatprep.subr.bf16.mxu0 0
        %1854 = vmatpush1.bf16.xpose.msra.mxu0 0
        %1855 = vmatprep.subr.bf16.mxu0 0
        %1856 = vmatpush1.bf16.xpose.msra.mxu0 0
        %1857 = vmatprep.subr.bf16.mxu0 0
        %1858 = vmatpush1.bf16.xpose.msra.mxu0 0
        %1859 = vmatprep.subr.bf16.mxu0 0
        %1860 = vmatpush1.bf16.xpose.msra.mxu0 0
        %1861 = vmatprep.subr.bf16.mxu0 0
        %1862 = vmatpush1.bf16.xpose.msra.mxu0 0
        %1863 = vmatprep.subr.bf16.mxu0 0
        %1864 = vmatpush1.bf16.xpose.msra.mxu0 0
        %1865 = vmatprep.subr.bf16.mxu0 0
        %1866 = vmatpush1.bf16.xpose.msra.mxu0 0
        %1867 = vmatprep.subr.bf16.mxu0 0
        %1868 = vmatpush1.bf16.xpose.msra.mxu0 0
        %1869 = vmatprep.subr.bf16.mxu0 0
        %1870 = vmatpush1.bf16.xpose.msra.mxu0 0
        %1871 = vmatprep.subr.bf16.mxu0 0
        %1872 = vmatpush1.bf16.xpose.msra.mxu0 0
        %1873 = vmatprep.subr.bf16.mxu0 0
        %1874 = vmatpush1.bf16.xpose.msra.mxu0 0
        %1875 = vmatprep.subr.bf16.mxu0 0
        %1876 = vmatpush1.bf16.xpose.msra.mxu0 0
        %1877 = vmatprep.subr.bf16.mxu0 0
        %1878 = vmatpush1.bf16.xpose.msra.mxu0 0
        %1879 = vmatprep.subr.bf16.mxu0 0
        %1880 = vmatpush1.bf16.xpose.msra.mxu0 0
        %1881 = vmatprep.subr.bf16.mxu0 0
        %1882 = vmatpush1.bf16.xpose.msra.mxu0 0
        %1883 = vmatprep.mubr.bf16.mxu0 0
        %1884 = vmatmul.mubr.bf16.gmra.mrb[0].mxu0 %v1846
        %v1885 = vpop.f32.mrb[0].mxu0
        %v1886 = vadd.f32 %v905, %v1885
        %v1887 = vpop.f32.mrb[0].mxu0
        %v1888 = vpop.f32.mrb[0].mxu0
        %v1889 = vpop.f32.mrb[0].mxu0
        %1890 = vdwg.mxu0
        %v1891 = vsel %vm1007, %v1836, -inf
        %1892 = vmax.xlane.f32.xlu0 %v1891
        %v1893 = vpop.xlane.xlu0 %1892
        %v1894 = vsel %vm1007, %v1886, -inf
        %1895 = vmax.xlane.f32.xlu0 %v1894
        %v1896 = vpop.xlane.xlu0 %1895
        %v1897 = vsub.f32 %v1836, %v1893
        %v1898 = vsub.f32 %v1886, %v1896
        %v1899 = vmul.f32 %v1897, 1.442695
        %v1900 = vpow.pop %v1899
        %v1901 = vmul.f32 %v1898, 1.442695
        %v1902 = vpow.pop %v1901
        %v1903 = vsel %vm1007, %v1900, 0.0
        %1904 = vadd.xlane.f32.xlu0 %v1903
        %v1905 = vpop.xlane.xlu0 %1904
        %v1906 = vsel %vm1007, %v1902, 0.0
        %1907 = vadd.xlane.f32.xlu0 %v1906
        %v1908 = vpop.xlane.xlu0 %1907
        %v1909 = vrcp.pop %v1905
        %v1910 = vrcp.pop %v1908
        %v1911 = vmul.f32 %v1900, %v1909
        %v1912 = vmul.f32 %v1902, %v1910
        %v1913 = vpack.c.bf16 %v1911, %v1911
        %v1914 = vpack.c.bf16 %v1912, %v1912
        %1915 = vrot.lane.b32.xlu0 %v894, 48
        %v1916 = vpop.permute.xlu0 %1915
        %v1918 = vsel %vm1007, %v1913, 0
        %v1921 = vsel %vm1037, %v1916, 0
        %1923 = vmatprep.subr.bf16.mxu0 0
        %1924 = vmatpush1.bf16.msra.mxu0 %v1921
        %1925 = vmatprep.subr.bf16.mxu0 0
        %1926 = vmatpush1.bf16.msra.mxu0 0
        %1927 = vmatprep.subr.bf16.mxu0 0
        %1928 = vmatpush1.bf16.msra.mxu0 0
        %1929 = vmatprep.subr.bf16.mxu0 0
        %1930 = vmatpush1.bf16.msra.mxu0 0
        %1931 = vmatprep.subr.bf16.mxu0 0
        %1932 = vmatpush1.bf16.msra.mxu0 0
        %1933 = vmatprep.subr.bf16.mxu0 0
        %1934 = vmatpush1.bf16.msra.mxu0 0
        %1935 = vmatprep.subr.bf16.mxu0 0
        %1936 = vmatpush1.bf16.msra.mxu0 0
        %1937 = vmatprep.subr.bf16.mxu0 0
        %1938 = vmatpush1.bf16.msra.mxu0 0
        %1939 = vmatprep.subr.bf16.mxu0 0
        %1940 = vmatpush1.bf16.msra.mxu0 0
        %1941 = vmatprep.subr.bf16.mxu0 0
        %1942 = vmatpush1.bf16.msra.mxu0 0
        %1943 = vmatprep.subr.bf16.mxu0 0
        %1944 = vmatpush1.bf16.msra.mxu0 0
        %1945 = vmatprep.subr.bf16.mxu0 0
        %1946 = vmatpush1.bf16.msra.mxu0 0
        %1947 = vmatprep.subr.bf16.mxu0 0
        %1948 = vmatpush1.bf16.msra.mxu0 0
        %1949 = vmatprep.subr.bf16.mxu0 0
        %1950 = vmatpush1.bf16.msra.mxu0 0
        %1951 = vmatprep.subr.bf16.mxu0 0
        %1952 = vmatpush1.bf16.msra.mxu0 0
        %1953 = vmatprep.subr.bf16.mxu0 0
        %1954 = vmatpush1.bf16.msra.mxu0 0
        %1955 = vmatprep.mubr.bf16.mxu0 0
        %1956 = vmatmul.mubr.bf16.gmra.mrb[0].mxu0 %v1918
        %v1957 = vpop.f32.mrb[0].mxu0
        %v1958 = vadd.f32 0.0, %v1957
        %v1959 = vpop.f32.mrb[0].mxu0
        %v1960 = vpop.f32.mrb[0].mxu0
        %v1961 = vpop.f32.mrb[0].mxu0
        %1962 = vdwg.mxu0
        %1963 = vrot.lane.b32.xlu0 %v895, 48
        %v1964 = vpop.permute.xlu0 %1963
        %v1966 = vsel %vm1007, %v1914, 0
        %v1969 = vsel %vm1037, %v1964, 0
        %1971 = vmatprep.subr.bf16.mxu0 0
        %1972 = vmatpush1.bf16.msra.mxu0 %v1969
        %1973 = vmatprep.subr.bf16.mxu0 0
        %1974 = vmatpush1.bf16.msra.mxu0 0
        %1975 = vmatprep.subr.bf16.mxu0 0
        %1976 = vmatpush1.bf16.msra.mxu0 0
        %1977 = vmatprep.subr.bf16.mxu0 0
        %1978 = vmatpush1.bf16.msra.mxu0 0
        %1979 = vmatprep.subr.bf16.mxu0 0
        %1980 = vmatpush1.bf16.msra.mxu0 0
        %1981 = vmatprep.subr.bf16.mxu0 0
        %1982 = vmatpush1.bf16.msra.mxu0 0
        %1983 = vmatprep.subr.bf16.mxu0 0
        %1984 = vmatpush1.bf16.msra.mxu0 0
        %1985 = vmatprep.subr.bf16.mxu0 0
        %1986 = vmatpush1.bf16.msra.mxu0 0
        %1987 = vmatprep.subr.bf16.mxu0 0
        %1988 = vmatpush1.bf16.msra.mxu0 0
        %1989 = vmatprep.subr.bf16.mxu0 0
        %1990 = vmatpush1.bf16.msra.mxu0 0
        %1991 = vmatprep.subr.bf16.mxu0 0
        %1992 = vmatpush1.bf16.msra.mxu0 0
        %1993 = vmatprep.subr.bf16.mxu0 0
        %1994 = vmatpush1.bf16.msra.mxu0 0
        %1995 = vmatprep.subr.bf16.mxu0 0
        %1996 = vmatpush1.bf16.msra.mxu0 0
        %1997 = vmatprep.subr.bf16.mxu0 0
        %1998 = vmatpush1.bf16.msra.mxu0 0
        %1999 = vmatprep.subr.bf16.mxu0 0
        %2000 = vmatpush1.bf16.msra.mxu0 0
        %2001 = vmatprep.subr.bf16.mxu0 0
        %2002 = vmatpush1.bf16.msra.mxu0 0
        %2003 = vmatprep.mubr.bf16.mxu0 0
        %2004 = vmatmul.mubr.bf16.gmra.mrb[0].mxu0 %v1966
        %v2005 = vpop.f32.mrb[0].mxu0
        %v2006 = vadd.f32 0.0, %v2005
        %v2007 = vpop.f32.mrb[0].mxu0
        %v2008 = vpop.f32.mrb[0].mxu0
        %v2009 = vpop.f32.mrb[0].mxu0
        %2010 = vdwg.mxu0
        %2011 = vrot.lane.b32.xlu0 %v892, 108
        %v2012 = vpop.permute.xlu0 %2011
        %2013 = vrot.lane.b32.xlu0 %v894, 76
        %v2014 = vpop.permute.xlu0 %2013
        %v2016 = vsel %vm911, %v2012, 0
        %v2019 = vsel %vm911, %v2014, 0
        %2021 = vmatprep.subr.bf16.mxu0 0
        %2022 = vmatpush1.bf16.xpose.msra.mxu0 %v2019
        %2023 = vmatprep.subr.bf16.mxu0 0
        %2024 = vmatpush1.bf16.xpose.msra.mxu0 0
        %2025 = vmatprep.subr.bf16.mxu0 0
        %2026 = vmatpush1.bf16.xpose.msra.mxu0 0
        %2027 = vmatprep.subr.bf16.mxu0 0
        %2028 = vmatpush1.bf16.xpose.msra.mxu0 0
        %2029 = vmatprep.subr.bf16.mxu0 0
        %2030 = vmatpush1.bf16.xpose.msra.mxu0 0
        %2031 = vmatprep.subr.bf16.mxu0 0
        %2032 = vmatpush1.bf16.xpose.msra.mxu0 0
        %2033 = vmatprep.subr.bf16.mxu0 0
        %2034 = vmatpush1.bf16.xpose.msra.mxu0 0
        %2035 = vmatprep.subr.bf16.mxu0 0
        %2036 = vmatpush1.bf16.xpose.msra.mxu0 0
        %2037 = vmatprep.subr.bf16.mxu0 0
        %2038 = vmatpush1.bf16.xpose.msra.mxu0 0
        %2039 = vmatprep.subr.bf16.mxu0 0
        %2040 = vmatpush1.bf16.xpose.msra.mxu0 0
        %2041 = vmatprep.subr.bf16.mxu0 0
        %2042 = vmatpush1.bf16.xpose.msra.mxu0 0
        %2043 = vmatprep.subr.bf16.mxu0 0
        %2044 = vmatpush1.bf16.xpose.msra.mxu0 0
        %2045 = vmatprep.subr.bf16.mxu0 0
        %2046 = vmatpush1.bf16.xpose.msra.mxu0 0
        %2047 = vmatprep.subr.bf16.mxu0 0
        %2048 = vmatpush1.bf16.xpose.msra.mxu0 0
        %2049 = vmatprep.subr.bf16.mxu0 0
        %2050 = vmatpush1.bf16.xpose.msra.mxu0 0
        %2051 = vmatprep.subr.bf16.mxu0 0
        %2052 = vmatpush1.bf16.xpose.msra.mxu0 0
        %2053 = vmatprep.mubr.bf16.mxu0 0
        %2054 = vmatmul.mubr.bf16.gmra.mrb[0].mxu0 %v2016
        %v2055 = vpop.f32.mrb[0].mxu0
        %v2056 = vadd.f32 %v901, %v2055
        %v2057 = vpop.f32.mrb[0].mxu0
        %v2058 = vpop.f32.mrb[0].mxu0
        %v2059 = vpop.f32.mrb[0].mxu0
        %2060 = vdwg.mxu0
        %2061 = vrot.lane.b32.xlu0 %v893, 108
        %v2062 = vpop.permute.xlu0 %2061
        %2063 = vrot.lane.b32.xlu0 %v895, 76
        %v2064 = vpop.permute.xlu0 %2063
        %v2066 = vsel %vm911, %v2062, 0
        %v2069 = vsel %vm911, %v2064, 0
        %2071 = vmatprep.subr.bf16.mxu0 0
        %2072 = vmatpush1.bf16.xpose.msra.mxu0 %v2069
        %2073 = vmatprep.subr.bf16.mxu0 0
        %2074 = vmatpush1.bf16.xpose.msra.mxu0 0
        %2075 = vmatprep.subr.bf16.mxu0 0
        %2076 = vmatpush1.bf16.xpose.msra.mxu0 0
        %2077 = vmatprep.subr.bf16.mxu0 0
        %2078 = vmatpush1.bf16.xpose.msra.mxu0 0
        %2079 = vmatprep.subr.bf16.mxu0 0
        %2080 = vmatpush1.bf16.xpose.msra.mxu0 0
        %2081 = vmatprep.subr.bf16.mxu0 0
        %2082 = vmatpush1.bf16.xpose.msra.mxu0 0
        %2083 = vmatprep.subr.bf16.mxu0 0
        %2084 = vmatpush1.bf16.xpose.msra.mxu0 0
        %2085 = vmatprep.subr.bf16.mxu0 0
        %2086 = vmatpush1.bf16.xpose.msra.mxu0 0
        %2087 = vmatprep.subr.bf16.mxu0 0
        %2088 = vmatpush1.bf16.xpose.msra.mxu0 0
        %2089 = vmatprep.subr.bf16.mxu0 0
        %2090 = vmatpush1.bf16.xpose.msra.mxu0 0
        %2091 = vmatprep.subr.bf16.mxu0 0
        %2092 = vmatpush1.bf16.xpose.msra.mxu0 0
        %2093 = vmatprep.subr.bf16.mxu0 0
        %2094 = vmatpush1.bf16.xpose.msra.mxu0 0
        %2095 = vmatprep.subr.bf16.mxu0 0
        %2096 = vmatpush1.bf16.xpose.msra.mxu0 0
        %2097 = vmatprep.subr.bf16.mxu0 0
        %2098 = vmatpush1.bf16.xpose.msra.mxu0 0
        %2099 = vmatprep.subr.bf16.mxu0 0
        %2100 = vmatpush1.bf16.xpose.msra.mxu0 0
        %2101 = vmatprep.subr.bf16.mxu0 0
        %2102 = vmatpush1.bf16.xpose.msra.mxu0 0
        %2103 = vmatprep.mubr.bf16.mxu0 0
        %2104 = vmatmul.mubr.bf16.gmra.mrb[0].mxu0 %v2066
        %v2105 = vpop.f32.mrb[0].mxu0
        %v2106 = vadd.f32 %v905, %v2105
        %v2107 = vpop.f32.mrb[0].mxu0
        %v2108 = vpop.f32.mrb[0].mxu0
        %v2109 = vpop.f32.mrb[0].mxu0
        %2110 = vdwg.mxu0
        %v2111 = vsel %vm1007, %v2056, -inf
        %2112 = vmax.xlane.f32.xlu0 %v2111
        %v2113 = vpop.xlane.xlu0 %2112
        %v2114 = vsel %vm1007, %v2106, -inf
        %2115 = vmax.xlane.f32.xlu0 %v2114
        %v2116 = vpop.xlane.xlu0 %2115
        %v2117 = vsub.f32 %v2056, %v2113
        %v2118 = vsub.f32 %v2106, %v2116
        %v2119 = vmul.f32 %v2117, 1.442695
        %v2120 = vpow.pop %v2119
        %v2121 = vmul.f32 %v2118, 1.442695
        %v2122 = vpow.pop %v2121
        %v2123 = vsel %vm1007, %v2120, 0.0
        %2124 = vadd.xlane.f32.xlu0 %v2123
        %v2125 = vpop.xlane.xlu0 %2124
        %v2126 = vsel %vm1007, %v2122, 0.0
        %2127 = vadd.xlane.f32.xlu0 %v2126
        %v2128 = vpop.xlane.xlu0 %2127
        %v2129 = vrcp.pop %v2125
        %v2130 = vrcp.pop %v2128
        %v2131 = vmul.f32 %v2120, %v2129
        %v2132 = vmul.f32 %v2122, %v2130
        %v2133 = vpack.c.bf16 %v2131, %v2131
        %v2134 = vpack.c.bf16 %v2132, %v2132
        %2135 = vrot.lane.b32.xlu0 %v894, 44
        %v2136 = vpop.permute.xlu0 %2135
        %v2138 = vsel %vm1007, %v2133, 0
        %v2141 = vsel %vm1037, %v2136, 0
        %2143 = vmatprep.subr.bf16.mxu0 0
        %2144 = vmatpush1.bf16.msra.mxu0 %v2141
        %2145 = vmatprep.subr.bf16.mxu0 0
        %2146 = vmatpush1.bf16.msra.mxu0 0
        %2147 = vmatprep.subr.bf16.mxu0 0
        %2148 = vmatpush1.bf16.msra.mxu0 0
        %2149 = vmatprep.subr.bf16.mxu0 0
        %2150 = vmatpush1.bf16.msra.mxu0 0
        %2151 = vmatprep.subr.bf16.mxu0 0
        %2152 = vmatpush1.bf16.msra.mxu0 0
        %2153 = vmatprep.subr.bf16.mxu0 0
        %2154 = vmatpush1.bf16.msra.mxu0 0
        %2155 = vmatprep.subr.bf16.mxu0 0
        %2156 = vmatpush1.bf16.msra.mxu0 0
        %2157 = vmatprep.subr.bf16.mxu0 0
        %2158 = vmatpush1.bf16.msra.mxu0 0
        %2159 = vmatprep.subr.bf16.mxu0 0
        %2160 = vmatpush1.bf16.msra.mxu0 0
        %2161 = vmatprep.subr.bf16.mxu0 0
        %2162 = vmatpush1.bf16.msra.mxu0 0
        %2163 = vmatprep.subr.bf16.mxu0 0
        %2164 = vmatpush1.bf16.msra.mxu0 0
        %2165 = vmatprep.subr.bf16.mxu0 0
        %2166 = vmatpush1.bf16.msra.mxu0 0
        %2167 = vmatprep.subr.bf16.mxu0 0
        %2168 = vmatpush1.bf16.msra.mxu0 0
        %2169 = vmatprep.subr.bf16.mxu0 0
        %2170 = vmatpush1.bf16.msra.mxu0 0
        %2171 = vmatprep.subr.bf16.mxu0 0
        %2172 = vmatpush1.bf16.msra.mxu0 0
        %2173 = vmatprep.subr.bf16.mxu0 0
        %2174 = vmatpush1.bf16.msra.mxu0 0
        %2175 = vmatprep.mubr.bf16.mxu0 0
        %2176 = vmatmul.mubr.bf16.gmra.mrb[0].mxu0 %v2138
        %v2177 = vpop.f32.mrb[0].mxu0
        %v2178 = vadd.f32 0.0, %v2177
        %v2179 = vpop.f32.mrb[0].mxu0
        %v2180 = vpop.f32.mrb[0].mxu0
        %v2181 = vpop.f32.mrb[0].mxu0
        %2182 = vdwg.mxu0
        %2183 = vrot.lane.b32.xlu0 %v895, 44
        %v2184 = vpop.permute.xlu0 %2183
        %v2186 = vsel %vm1007, %v2134, 0
        %v2189 = vsel %vm1037, %v2184, 0
        %2191 = vmatprep.subr.bf16.mxu0 0
        %2192 = vmatpush1.bf16.msra.mxu0 %v2189
        %2193 = vmatprep.subr.bf16.mxu0 0
        %2194 = vmatpush1.bf16.msra.mxu0 0
        %2195 = vmatprep.subr.bf16.mxu0 0
        %2196 = vmatpush1.bf16.msra.mxu0 0
        %2197 = vmatprep.subr.bf16.mxu0 0
        %2198 = vmatpush1.bf16.msra.mxu0 0
        %2199 = vmatprep.subr.bf16.mxu0 0
        %2200 = vmatpush1.bf16.msra.mxu0 0
        %2201 = vmatprep.subr.bf16.mxu0 0
        %2202 = vmatpush1.bf16.msra.mxu0 0
        %2203 = vmatprep.subr.bf16.mxu0 0
        %2204 = vmatpush1.bf16.msra.mxu0 0
        %2205 = vmatprep.subr.bf16.mxu0 0
        %2206 = vmatpush1.bf16.msra.mxu0 0
        %2207 = vmatprep.subr.bf16.mxu0 0
        %2208 = vmatpush1.bf16.msra.mxu0 0
        %2209 = vmatprep.subr.bf16.mxu0 0
        %2210 = vmatpush1.bf16.msra.mxu0 0
        %2211 = vmatprep.subr.bf16.mxu0 0
        %2212 = vmatpush1.bf16.msra.mxu0 0
        %2213 = vmatprep.subr.bf16.mxu0 0
        %2214 = vmatpush1.bf16.msra.mxu0 0
        %2215 = vmatprep.subr.bf16.mxu0 0
        %2216 = vmatpush1.bf16.msra.mxu0 0
        %2217 = vmatprep.subr.bf16.mxu0 0
        %2218 = vmatpush1.bf16.msra.mxu0 0
        %2219 = vmatprep.subr.bf16.mxu0 0
        %2220 = vmatpush1.bf16.msra.mxu0 0
        %2221 = vmatprep.subr.bf16.mxu0 0
        %2222 = vmatpush1.bf16.msra.mxu0 0
        %2223 = vmatprep.mubr.bf16.mxu0 0
        %2224 = vmatmul.mubr.bf16.gmra.mrb[0].mxu0 %v2186
        %v2225 = vpop.f32.mrb[0].mxu0
        %v2226 = vadd.f32 0.0, %v2225
        %v2227 = vpop.f32.mrb[0].mxu0
        %v2228 = vpop.f32.mrb[0].mxu0
        %v2229 = vpop.f32.mrb[0].mxu0
        %2230 = vdwg.mxu0
        %2231 = vrot.lane.b32.xlu0 %v892, 104
        %v2232 = vpop.permute.xlu0 %2231
        %2233 = vrot.lane.b32.xlu0 %v894, 72
        %v2234 = vpop.permute.xlu0 %2233
        %v2236 = vsel %vm911, %v2232, 0
        %v2239 = vsel %vm911, %v2234, 0
        %2241 = vmatprep.subr.bf16.mxu0 0
        %2242 = vmatpush1.bf16.xpose.msra.mxu0 %v2239
        %2243 = vmatprep.subr.bf16.mxu0 0
        %2244 = vmatpush1.bf16.xpose.msra.mxu0 0
        %2245 = vmatprep.subr.bf16.mxu0 0
        %2246 = vmatpush1.bf16.xpose.msra.mxu0 0
        %2247 = vmatprep.subr.bf16.mxu0 0
        %2248 = vmatpush1.bf16.xpose.msra.mxu0 0
        %2249 = vmatprep.subr.bf16.mxu0 0
        %2250 = vmatpush1.bf16.xpose.msra.mxu0 0
        %2251 = vmatprep.subr.bf16.mxu0 0
        %2252 = vmatpush1.bf16.xpose.msra.mxu0 0
        %2253 = vmatprep.subr.bf16.mxu0 0
        %2254 = vmatpush1.bf16.xpose.msra.mxu0 0
        %2255 = vmatprep.subr.bf16.mxu0 0
        %2256 = vmatpush1.bf16.xpose.msra.mxu0 0
        %2257 = vmatprep.subr.bf16.mxu0 0
        %2258 = vmatpush1.bf16.xpose.msra.mxu0 0
        %2259 = vmatprep.subr.bf16.mxu0 0
        %2260 = vmatpush1.bf16.xpose.msra.mxu0 0
        %2261 = vmatprep.subr.bf16.mxu0 0
        %2262 = vmatpush1.bf16.xpose.msra.mxu0 0
        %2263 = vmatprep.subr.bf16.mxu0 0
        %2264 = vmatpush1.bf16.xpose.msra.mxu0 0
        %2265 = vmatprep.subr.bf16.mxu0 0
        %2266 = vmatpush1.bf16.xpose.msra.mxu0 0
        %2267 = vmatprep.subr.bf16.mxu0 0
        %2268 = vmatpush1.bf16.xpose.msra.mxu0 0
        %2269 = vmatprep.subr.bf16.mxu0 0
        %2270 = vmatpush1.bf16.xpose.msra.mxu0 0
        %2271 = vmatprep.subr.bf16.mxu0 0
        %2272 = vmatpush1.bf16.xpose.msra.mxu0 0
        %2273 = vmatprep.mubr.bf16.mxu0 0
        %2274 = vmatmul.mubr.bf16.gmra.mrb[0].mxu0 %v2236
        %v2275 = vpop.f32.mrb[0].mxu0
        %v2276 = vadd.f32 %v901, %v2275
        %v2277 = vpop.f32.mrb[0].mxu0
        %v2278 = vpop.f32.mrb[0].mxu0
        %v2279 = vpop.f32.mrb[0].mxu0
        %2280 = vdwg.mxu0
        %2281 = vrot.lane.b32.xlu0 %v893, 104
        %v2282 = vpop.permute.xlu0 %2281
        %2283 = vrot.lane.b32.xlu0 %v895, 72
        %v2284 = vpop.permute.xlu0 %2283
        %v2286 = vsel %vm911, %v2282, 0
        %v2289 = vsel %vm911, %v2284, 0
        %2291 = vmatprep.subr.bf16.mxu0 0
        %2292 = vmatpush1.bf16.xpose.msra.mxu0 %v2289
        %2293 = vmatprep.subr.bf16.mxu0 0
        %2294 = vmatpush1.bf16.xpose.msra.mxu0 0
        %2295 = vmatprep.subr.bf16.mxu0 0
        %2296 = vmatpush1.bf16.xpose.msra.mxu0 0
        %2297 = vmatprep.subr.bf16.mxu0 0
        %2298 = vmatpush1.bf16.xpose.msra.mxu0 0
        %2299 = vmatprep.subr.bf16.mxu0 0
        %2300 = vmatpush1.bf16.xpose.msra.mxu0 0
        %2301 = vmatprep.subr.bf16.mxu0 0
        %2302 = vmatpush1.bf16.xpose.msra.mxu0 0
        %2303 = vmatprep.subr.bf16.mxu0 0
        %2304 = vmatpush1.bf16.xpose.msra.mxu0 0
        %2305 = vmatprep.subr.bf16.mxu0 0
        %2306 = vmatpush1.bf16.xpose.msra.mxu0 0
        %2307 = vmatprep.subr.bf16.mxu0 0
        %2308 = vmatpush1.bf16.xpose.msra.mxu0 0
        %2309 = vmatprep.subr.bf16.mxu0 0
        %2310 = vmatpush1.bf16.xpose.msra.mxu0 0
        %2311 = vmatprep.subr.bf16.mxu0 0
        %2312 = vmatpush1.bf16.xpose.msra.mxu0 0
        %2313 = vmatprep.subr.bf16.mxu0 0
        %2314 = vmatpush1.bf16.xpose.msra.mxu0 0
        %2315 = vmatprep.subr.bf16.mxu0 0
        %2316 = vmatpush1.bf16.xpose.msra.mxu0 0
        %2317 = vmatprep.subr.bf16.mxu0 0
        %2318 = vmatpush1.bf16.xpose.msra.mxu0 0
        %2319 = vmatprep.subr.bf16.mxu0 0
        %2320 = vmatpush1.bf16.xpose.msra.mxu0 0
        %2321 = vmatprep.subr.bf16.mxu0 0
        %2322 = vmatpush1.bf16.xpose.msra.mxu0 0
        %2323 = vmatprep.mubr.bf16.mxu0 0
        %2324 = vmatmul.mubr.bf16.gmra.mrb[0].mxu0 %v2286
        %v2325 = vpop.f32.mrb[0].mxu0
        %v2326 = vadd.f32 %v905, %v2325
        %v2327 = vpop.f32.mrb[0].mxu0
        %v2328 = vpop.f32.mrb[0].mxu0
        %v2329 = vpop.f32.mrb[0].mxu0
        %2330 = vdwg.mxu0
        %v2331 = vsel %vm1007, %v2276, -inf
        %2332 = vmax.xlane.f32.xlu0 %v2331
        %v2333 = vpop.xlane.xlu0 %2332
        %v2334 = vsel %vm1007, %v2326, -inf
        %2335 = vmax.xlane.f32.xlu0 %v2334
        %v2336 = vpop.xlane.xlu0 %2335
        %v2337 = vsub.f32 %v2276, %v2333
        %v2338 = vsub.f32 %v2326, %v2336
        %v2339 = vmul.f32 %v2337, 1.442695
        %v2340 = vpow.pop %v2339
        %v2341 = vmul.f32 %v2338, 1.442695
        %v2342 = vpow.pop %v2341
        %v2343 = vsel %vm1007, %v2340, 0.0
        %2344 = vadd.xlane.f32.xlu0 %v2343
        %v2345 = vpop.xlane.xlu0 %2344
        %v2346 = vsel %vm1007, %v2342, 0.0
        %2347 = vadd.xlane.f32.xlu0 %v2346
        %v2348 = vpop.xlane.xlu0 %2347
        %v2349 = vrcp.pop %v2345
        %v2350 = vrcp.pop %v2348
        %v2351 = vmul.f32 %v2340, %v2349
        %v2352 = vmul.f32 %v2342, %v2350
        %v2353 = vpack.c.bf16 %v2351, %v2351
        %v2354 = vpack.c.bf16 %v2352, %v2352
        %2355 = vrot.lane.b32.xlu0 %v894, 40
        %v2356 = vpop.permute.xlu0 %2355
        %v2358 = vsel %vm1007, %v2353, 0
        %v2361 = vsel %vm1037, %v2356, 0
        %2363 = vmatprep.subr.bf16.mxu0 0
        %2364 = vmatpush1.bf16.msra.mxu0 %v2361
        %2365 = vmatprep.subr.bf16.mxu0 0
        %2366 = vmatpush1.bf16.msra.mxu0 0
        %2367 = vmatprep.subr.bf16.mxu0 0
        %2368 = vmatpush1.bf16.msra.mxu0 0
        %2369 = vmatprep.subr.bf16.mxu0 0
        %2370 = vmatpush1.bf16.msra.mxu0 0
        %2371 = vmatprep.subr.bf16.mxu0 0
        %2372 = vmatpush1.bf16.msra.mxu0 0
        %2373 = vmatprep.subr.bf16.mxu0 0
        %2374 = vmatpush1.bf16.msra.mxu0 0
        %2375 = vmatprep.subr.bf16.mxu0 0
        %2376 = vmatpush1.bf16.msra.mxu0 0
        %2377 = vmatprep.subr.bf16.mxu0 0
        %2378 = vmatpush1.bf16.msra.mxu0 0
        %2379 = vmatprep.subr.bf16.mxu0 0
        %2380 = vmatpush1.bf16.msra.mxu0 0
        %2381 = vmatprep.subr.bf16.mxu0 0
        %2382 = vmatpush1.bf16.msra.mxu0 0
        %2383 = vmatprep.subr.bf16.mxu0 0
        %2384 = vmatpush1.bf16.msra.mxu0 0
        %2385 = vmatprep.subr.bf16.mxu0 0
        %2386 = vmatpush1.bf16.msra.mxu0 0
        %2387 = vmatprep.subr.bf16.mxu0 0
        %2388 = vmatpush1.bf16.msra.mxu0 0
        %2389 = vmatprep.subr.bf16.mxu0 0
        %2390 = vmatpush1.bf16.msra.mxu0 0
        %2391 = vmatprep.subr.bf16.mxu0 0
        %2392 = vmatpush1.bf16.msra.mxu0 0
        %2393 = vmatprep.subr.bf16.mxu0 0
        %2394 = vmatpush1.bf16.msra.mxu0 0
        %2395 = vmatprep.mubr.bf16.mxu0 0
        %2396 = vmatmul.mubr.bf16.gmra.mrb[0].mxu0 %v2358
        %v2397 = vpop.f32.mrb[0].mxu0
        %v2398 = vadd.f32 0.0, %v2397
        %v2399 = vpop.f32.mrb[0].mxu0
        %v2400 = vpop.f32.mrb[0].mxu0
        %v2401 = vpop.f32.mrb[0].mxu0
        %2402 = vdwg.mxu0
        %2403 = vrot.lane.b32.xlu0 %v895, 40
        %v2404 = vpop.permute.xlu0 %2403
        %v2406 = vsel %vm1007, %v2354, 0
        %v2409 = vsel %vm1037, %v2404, 0
        %2411 = vmatprep.subr.bf16.mxu0 0
        %2412 = vmatpush1.bf16.msra.mxu0 %v2409
        %2413 = vmatprep.subr.bf16.mxu0 0
        %2414 = vmatpush1.bf16.msra.mxu0 0
        %2415 = vmatprep.subr.bf16.mxu0 0
        %2416 = vmatpush1.bf16.msra.mxu0 0
        %2417 = vmatprep.subr.bf16.mxu0 0
        %2418 = vmatpush1.bf16.msra.mxu0 0
        %2419 = vmatprep.subr.bf16.mxu0 0
        %2420 = vmatpush1.bf16.msra.mxu0 0
        %2421 = vmatprep.subr.bf16.mxu0 0
        %2422 = vmatpush1.bf16.msra.mxu0 0
        %2423 = vmatprep.subr.bf16.mxu0 0
        %2424 = vmatpush1.bf16.msra.mxu0 0
        %2425 = vmatprep.subr.bf16.mxu0 0
        %2426 = vmatpush1.bf16.msra.mxu0 0
        %2427 = vmatprep.subr.bf16.mxu0 0
        %2428 = vmatpush1.bf16.msra.mxu0 0
        %2429 = vmatprep.subr.bf16.mxu0 0
        %2430 = vmatpush1.bf16.msra.mxu0 0
        %2431 = vmatprep.subr.bf16.mxu0 0
        %2432 = vmatpush1.bf16.msra.mxu0 0
        %2433 = vmatprep.subr.bf16.mxu0 0
        %2434 = vmatpush1.bf16.msra.mxu0 0
        %2435 = vmatprep.subr.bf16.mxu0 0
        %2436 = vmatpush1.bf16.msra.mxu0 0
        %2437 = vmatprep.subr.bf16.mxu0 0
        %2438 = vmatpush1.bf16.msra.mxu0 0
        %2439 = vmatprep.subr.bf16.mxu0 0
        %2440 = vmatpush1.bf16.msra.mxu0 0
        %2441 = vmatprep.subr.bf16.mxu0 0
        %2442 = vmatpush1.bf16.msra.mxu0 0
        %2443 = vmatprep.mubr.bf16.mxu0 0
        %2444 = vmatmul.mubr.bf16.gmra.mrb[0].mxu0 %v2406
        %v2445 = vpop.f32.mrb[0].mxu0
        %v2446 = vadd.f32 0.0, %v2445
        %v2447 = vpop.f32.mrb[0].mxu0
        %v2448 = vpop.f32.mrb[0].mxu0
        %v2449 = vpop.f32.mrb[0].mxu0
        %2450 = vdwg.mxu0
        %2451 = vrot.lane.b32.xlu0 %v892, 100
        %v2452 = vpop.permute.xlu0 %2451
        %2453 = vrot.lane.b32.xlu0 %v894, 68
        %v2454 = vpop.permute.xlu0 %2453
        %v2456 = vsel %vm911, %v2452, 0
        %v2459 = vsel %vm911, %v2454, 0
        %2461 = vmatprep.subr.bf16.mxu0 0
        %2462 = vmatpush1.bf16.xpose.msra.mxu0 %v2459
        %2463 = vmatprep.subr.bf16.mxu0 0
        %2464 = vmatpush1.bf16.xpose.msra.mxu0 0
        %2465 = vmatprep.subr.bf16.mxu0 0
        %2466 = vmatpush1.bf16.xpose.msra.mxu0 0
        %2467 = vmatprep.subr.bf16.mxu0 0
        %2468 = vmatpush1.bf16.xpose.msra.mxu0 0
        %2469 = vmatprep.subr.bf16.mxu0 0
        %2470 = vmatpush1.bf16.xpose.msra.mxu0 0
        %2471 = vmatprep.subr.bf16.mxu0 0
        %2472 = vmatpush1.bf16.xpose.msra.mxu0 0
        %2473 = vmatprep.subr.bf16.mxu0 0
        %2474 = vmatpush1.bf16.xpose.msra.mxu0 0
        %2475 = vmatprep.subr.bf16.mxu0 0
        %2476 = vmatpush1.bf16.xpose.msra.mxu0 0
        %2477 = vmatprep.subr.bf16.mxu0 0
        %2478 = vmatpush1.bf16.xpose.msra.mxu0 0
        %2479 = vmatprep.subr.bf16.mxu0 0
        %2480 = vmatpush1.bf16.xpose.msra.mxu0 0
        %2481 = vmatprep.subr.bf16.mxu0 0
        %2482 = vmatpush1.bf16.xpose.msra.mxu0 0
        %2483 = vmatprep.subr.bf16.mxu0 0
        %2484 = vmatpush1.bf16.xpose.msra.mxu0 0
        %2485 = vmatprep.subr.bf16.mxu0 0
        %2486 = vmatpush1.bf16.xpose.msra.mxu0 0
        %2487 = vmatprep.subr.bf16.mxu0 0
        %2488 = vmatpush1.bf16.xpose.msra.mxu0 0
        %2489 = vmatprep.subr.bf16.mxu0 0
        %2490 = vmatpush1.bf16.xpose.msra.mxu0 0
        %2491 = vmatprep.subr.bf16.mxu0 0
        %2492 = vmatpush1.bf16.xpose.msra.mxu0 0
        %2493 = vmatprep.mubr.bf16.mxu0 0
        %2494 = vmatmul.mubr.bf16.gmra.mrb[0].mxu0 %v2456
        %v2495 = vpop.f32.mrb[0].mxu0
        %v2496 = vadd.f32 %v901, %v2495
        %v2497 = vpop.f32.mrb[0].mxu0
        %v2498 = vpop.f32.mrb[0].mxu0
        %v2499 = vpop.f32.mrb[0].mxu0
        %2500 = vdwg.mxu0
        %2501 = vrot.lane.b32.xlu0 %v893, 100
        %v2502 = vpop.permute.xlu0 %2501
        %2503 = vrot.lane.b32.xlu0 %v895, 68
        %v2504 = vpop.permute.xlu0 %2503
        %v2506 = vsel %vm911, %v2502, 0
        %v2509 = vsel %vm911, %v2504, 0
        %2511 = vmatprep.subr.bf16.mxu0 0
        %2512 = vmatpush1.bf16.xpose.msra.mxu0 %v2509
        %2513 = vmatprep.subr.bf16.mxu0 0
        %2514 = vmatpush1.bf16.xpose.msra.mxu0 0
        %2515 = vmatprep.subr.bf16.mxu0 0
        %2516 = vmatpush1.bf16.xpose.msra.mxu0 0
        %2517 = vmatprep.subr.bf16.mxu0 0
        %2518 = vmatpush1.bf16.xpose.msra.mxu0 0
        %2519 = vmatprep.subr.bf16.mxu0 0
        %2520 = vmatpush1.bf16.xpose.msra.mxu0 0
        %2521 = vmatprep.subr.bf16.mxu0 0
        %2522 = vmatpush1.bf16.xpose.msra.mxu0 0
        %2523 = vmatprep.subr.bf16.mxu0 0
        %2524 = vmatpush1.bf16.xpose.msra.mxu0 0
        %2525 = vmatprep.subr.bf16.mxu0 0
        %2526 = vmatpush1.bf16.xpose.msra.mxu0 0
        %2527 = vmatprep.subr.bf16.mxu0 0
        %2528 = vmatpush1.bf16.xpose.msra.mxu0 0
        %2529 = vmatprep.subr.bf16.mxu0 0
        %2530 = vmatpush1.bf16.xpose.msra.mxu0 0
        %2531 = vmatprep.subr.bf16.mxu0 0
        %2532 = vmatpush1.bf16.xpose.msra.mxu0 0
        %2533 = vmatprep.subr.bf16.mxu0 0
        %2534 = vmatpush1.bf16.xpose.msra.mxu0 0
        %2535 = vmatprep.subr.bf16.mxu0 0
        %2536 = vmatpush1.bf16.xpose.msra.mxu0 0
        %2537 = vmatprep.subr.bf16.mxu0 0
        %2538 = vmatpush1.bf16.xpose.msra.mxu0 0
        %2539 = vmatprep.subr.bf16.mxu0 0
        %2540 = vmatpush1.bf16.xpose.msra.mxu0 0
        %2541 = vmatprep.subr.bf16.mxu0 0
        %2542 = vmatpush1.bf16.xpose.msra.mxu0 0
        %2543 = vmatprep.mubr.bf16.mxu0 0
        %2544 = vmatmul.mubr.bf16.gmra.mrb[0].mxu0 %v2506
        %v2545 = vpop.f32.mrb[0].mxu0
        %v2546 = vadd.f32 %v905, %v2545
        %v2547 = vpop.f32.mrb[0].mxu0
        %v2548 = vpop.f32.mrb[0].mxu0
        %v2549 = vpop.f32.mrb[0].mxu0
        %2550 = vdwg.mxu0
        %v2551 = vsel %vm1007, %v2496, -inf
        %2552 = vmax.xlane.f32.xlu0 %v2551
        %v2553 = vpop.xlane.xlu0 %2552
        %v2554 = vsel %vm1007, %v2546, -inf
        %2555 = vmax.xlane.f32.xlu0 %v2554
        %v2556 = vpop.xlane.xlu0 %2555
        %v2557 = vsub.f32 %v2496, %v2553
        %v2558 = vsub.f32 %v2546, %v2556
        %v2559 = vmul.f32 %v2557, 1.442695
        %v2560 = vpow.pop %v2559
        %v2561 = vmul.f32 %v2558, 1.442695
        %v2562 = vpow.pop %v2561
        %v2563 = vsel %vm1007, %v2560, 0.0
        %2564 = vadd.xlane.f32.xlu0 %v2563
        %v2565 = vpop.xlane.xlu0 %2564
        %v2566 = vsel %vm1007, %v2562, 0.0
        %2567 = vadd.xlane.f32.xlu0 %v2566
        %v2568 = vpop.xlane.xlu0 %2567
        %v2569 = vrcp.pop %v2565
        %v2570 = vrcp.pop %v2568
        %v2571 = vmul.f32 %v2560, %v2569
        %v2572 = vmul.f32 %v2562, %v2570
        %v2573 = vpack.c.bf16 %v2571, %v2571
        %v2574 = vpack.c.bf16 %v2572, %v2572
        %2575 = vrot.lane.b32.xlu0 %v894, 36
        %v2576 = vpop.permute.xlu0 %2575
        %v2578 = vsel %vm1007, %v2573, 0
        %v2581 = vsel %vm1037, %v2576, 0
        %2583 = vmatprep.subr.bf16.mxu0 0
        %2584 = vmatpush1.bf16.msra.mxu0 %v2581
        %2585 = vmatprep.subr.bf16.mxu0 0
        %2586 = vmatpush1.bf16.msra.mxu0 0
        %2587 = vmatprep.subr.bf16.mxu0 0
        %2588 = vmatpush1.bf16.msra.mxu0 0
        %2589 = vmatprep.subr.bf16.mxu0 0
        %2590 = vmatpush1.bf16.msra.mxu0 0
        %2591 = vmatprep.subr.bf16.mxu0 0
        %2592 = vmatpush1.bf16.msra.mxu0 0
        %2593 = vmatprep.subr.bf16.mxu0 0
        %2594 = vmatpush1.bf16.msra.mxu0 0
        %2595 = vmatprep.subr.bf16.mxu0 0
        %2596 = vmatpush1.bf16.msra.mxu0 0
        %2597 = vmatprep.subr.bf16.mxu0 0
        %2598 = vmatpush1.bf16.msra.mxu0 0
        %2599 = vmatprep.subr.bf16.mxu0 0
        %2600 = vmatpush1.bf16.msra.mxu0 0
        %2601 = vmatprep.subr.bf16.mxu0 0
        %2602 = vmatpush1.bf16.msra.mxu0 0
        %2603 = vmatprep.subr.bf16.mxu0 0
        %2604 = vmatpush1.bf16.msra.mxu0 0
        %2605 = vmatprep.subr.bf16.mxu0 0
        %2606 = vmatpush1.bf16.msra.mxu0 0
        %2607 = vmatprep.subr.bf16.mxu0 0
        %2608 = vmatpush1.bf16.msra.mxu0 0
        %2609 = vmatprep.subr.bf16.mxu0 0
        %2610 = vmatpush1.bf16.msra.mxu0 0
        %2611 = vmatprep.subr.bf16.mxu0 0
        %2612 = vmatpush1.bf16.msra.mxu0 0
        %2613 = vmatprep.subr.bf16.mxu0 0
        %2614 = vmatpush1.bf16.msra.mxu0 0
        %2615 = vmatprep.mubr.bf16.mxu0 0
        %2616 = vmatmul.mubr.bf16.gmra.mrb[0].mxu0 %v2578
        %v2617 = vpop.f32.mrb[0].mxu0
        %v2618 = vadd.f32 0.0, %v2617
        %v2619 = vpop.f32.mrb[0].mxu0
        %v2620 = vpop.f32.mrb[0].mxu0
        %v2621 = vpop.f32.mrb[0].mxu0
        %2622 = vdwg.mxu0
        %2623 = vrot.lane.b32.xlu0 %v895, 36
        %v2624 = vpop.permute.xlu0 %2623
        %v2626 = vsel %vm1007, %v2574, 0
        %v2629 = vsel %vm1037, %v2624, 0
        %2631 = vmatprep.subr.bf16.mxu0 0
        %2632 = vmatpush1.bf16.msra.mxu0 %v2629
        %2633 = vmatprep.subr.bf16.mxu0 0
        %2634 = vmatpush1.bf16.msra.mxu0 0
        %2635 = vmatprep.subr.bf16.mxu0 0
        %2636 = vmatpush1.bf16.msra.mxu0 0
        %2637 = vmatprep.subr.bf16.mxu0 0
        %2638 = vmatpush1.bf16.msra.mxu0 0
        %2639 = vmatprep.subr.bf16.mxu0 0
        %2640 = vmatpush1.bf16.msra.mxu0 0
        %2641 = vmatprep.subr.bf16.mxu0 0
        %2642 = vmatpush1.bf16.msra.mxu0 0
        %2643 = vmatprep.subr.bf16.mxu0 0
        %2644 = vmatpush1.bf16.msra.mxu0 0
        %2645 = vmatprep.subr.bf16.mxu0 0
        %2646 = vmatpush1.bf16.msra.mxu0 0
        %2647 = vmatprep.subr.bf16.mxu0 0
        %2648 = vmatpush1.bf16.msra.mxu0 0
        %2649 = vmatprep.subr.bf16.mxu0 0
        %2650 = vmatpush1.bf16.msra.mxu0 0
        %2651 = vmatprep.subr.bf16.mxu0 0
        %2652 = vmatpush1.bf16.msra.mxu0 0
        %2653 = vmatprep.subr.bf16.mxu0 0
        %2654 = vmatpush1.bf16.msra.mxu0 0
        %2655 = vmatprep.subr.bf16.mxu0 0
        %2656 = vmatpush1.bf16.msra.mxu0 0
        %2657 = vmatprep.subr.bf16.mxu0 0
        %2658 = vmatpush1.bf16.msra.mxu0 0
        %2659 = vmatprep.subr.bf16.mxu0 0
        %2660 = vmatpush1.bf16.msra.mxu0 0
        %2661 = vmatprep.subr.bf16.mxu0 0
        %2662 = vmatpush1.bf16.msra.mxu0 0
        %2663 = vmatprep.mubr.bf16.mxu0 0
        %2664 = vmatmul.mubr.bf16.gmra.mrb[0].mxu0 %v2626
        %v2665 = vpop.f32.mrb[0].mxu0
        %v2666 = vadd.f32 0.0, %v2665
        %v2667 = vpop.f32.mrb[0].mxu0
        %v2668 = vpop.f32.mrb[0].mxu0
        %v2669 = vpop.f32.mrb[0].mxu0
        %2670 = vdwg.mxu0
        %2673 = vrot.lane.b32.xlu0 %v1298, 4
        %v2674 = vpop.permute.xlu0 %2673
        %2675 = vrot.lane.b32.xlu0 %v1346, 4
        %v2676 = vpop.permute.xlu0 %2675
        %2681 = vrot.lane.b32.xlu0 %v1518, 8
        %v2682 = vpop.permute.xlu0 %2681
        %2683 = vrot.lane.b32.xlu0 %v1566, 8
        %v2684 = vpop.permute.xlu0 %2683
        %2689 = vrot.lane.b32.xlu0 %v1738, 12
        %v2690 = vpop.permute.xlu0 %2689
        %2691 = vrot.lane.b32.xlu0 %v1786, 12
        %v2692 = vpop.permute.xlu0 %2691
        %2697 = vrot.lane.b32.xlu0 %v1958, 16
        %v2698 = vpop.permute.xlu0 %2697
        %2699 = vrot.lane.b32.xlu0 %v2006, 16
        %v2700 = vpop.permute.xlu0 %2699
        %2705 = vrot.lane.b32.xlu0 %v2178, 20
        %v2706 = vpop.permute.xlu0 %2705
        %2707 = vrot.lane.b32.xlu0 %v2226, 20
        %v2708 = vpop.permute.xlu0 %2707
        %2713 = vrot.lane.b32.xlu0 %v2398, 24
        %v2714 = vpop.permute.xlu0 %2713
        %2715 = vrot.lane.b32.xlu0 %v2446, 24
        %v2716 = vpop.permute.xlu0 %2715
        %2721 = vrot.lane.b32.xlu0 %v2618, 28
        %v2722 = vpop.permute.xlu0 %2721
        %2723 = vrot.lane.b32.xlu0 %v2666, 28
        %v2724 = vpop.permute.xlu0 %2723
        %v2727 = vsel %vm911, %v1076, %v2674
        %v2728 = vsel %vm911, %v1124, %v2676
        %v2729 = vsel %vm1007, %v2727, %v2682
        %v2730 = vsel %vm1007, %v2728, %v2684
        %vm2731 = vcmask 97280
        %v2732 = vsel %vm2731, %v2729, %v2690
        %v2733 = vsel %vm2731, %v2730, %v2692
        %vm2734 = vcmask 130048
        %v2735 = vsel %vm2734, %v2732, %v2698
        %v2736 = vsel %vm2734, %v2733, %v2700
        %vm2737 = vcmask 162816
        %v2738 = vsel %vm2737, %v2735, %v2706
        %v2739 = vsel %vm2737, %v2736, %v2708
        %vm2740 = vcmask 195584
        %v2741 = vsel %vm2740, %v2738, %v2714
        %v2742 = vsel %vm2740, %v2739, %v2716
        %vm2743 = vcmask 228352
        %v2744 = vsel %vm2743, %v2741, %v2722
        %v2745 = vsel %vm2743, %v2742, %v2724
        %v2746 = vpack.c.bf16 %v2745, %v2744
        %v2748 = vlaneseq
        %v2749 = vshrl.u32 %v2748, 7
        %v2750 = vsub.s32 0, %v2749
        %v2751 = vrot.slane %v889, %v2750
        %v2757 = vunpack.c.l.b16 %v885
        %v2758 = vunpack.c.l.b16 %v886
        %v2759 = vunpack.c.l.b16 %v887
        %v2760 = vunpack.c.l.b16 %v888
        %v2761 = vpack.c.b16 %v2758, %v2757
        %v2762 = vpack.c.b16 %v2760, %v2759
        %v2766 = vsel %vm840, %v2746, 0
        %2768 = vmatprep.subr.bf16.mxu0 0
        %2769 = vmatpush1.bf16.msra.mxu0 %v2761
        %2770 = vmatprep.subr.bf16.mxu0 0
        %2771 = vmatpush1.bf16.msra.mxu0 %v2762
        %2772 = vmatprep.subr.bf16.mxu0 0
        %2773 = vmatpush1.bf16.msra.mxu0 0
        %2774 = vmatprep.subr.bf16.mxu0 0
        %2775 = vmatpush1.bf16.msra.mxu0 0
        %2776 = vmatprep.subr.bf16.mxu0 0
        %2777 = vmatpush1.bf16.msra.mxu0 0
        %2778 = vmatprep.subr.bf16.mxu0 0
        %2779 = vmatpush1.bf16.msra.mxu0 0
        %2780 = vmatprep.subr.bf16.mxu0 0
        %2781 = vmatpush1.bf16.msra.mxu0 0
        %2782 = vmatprep.subr.bf16.mxu0 0
        %2783 = vmatpush1.bf16.msra.mxu0 0
        %2784 = vmatprep.subr.bf16.mxu0 0
        %2785 = vmatpush1.bf16.msra.mxu0 0
        %2786 = vmatprep.subr.bf16.mxu0 0
        %2787 = vmatpush1.bf16.msra.mxu0 0
        %2788 = vmatprep.subr.bf16.mxu0 0
        %2789 = vmatpush1.bf16.msra.mxu0 0
        %2790 = vmatprep.subr.bf16.mxu0 0
        %2791 = vmatpush1.bf16.msra.mxu0 0
        %2792 = vmatprep.subr.bf16.mxu0 0
        %2793 = vmatpush1.bf16.msra.mxu0 0
        %2794 = vmatprep.subr.bf16.mxu0 0
        %2795 = vmatpush1.bf16.msra.mxu0 0
        %2796 = vmatprep.subr.bf16.mxu0 0
        %2797 = vmatpush1.bf16.msra.mxu0 0
        %2798 = vmatprep.subr.bf16.mxu0 0
        %2799 = vmatpush1.bf16.msra.mxu0 0
        %2800 = vmatprep.mubr.bf16.mxu0 0
        %2801 = vmatmul.mubr.bf16.gmra.mrb[0].mxu0 %v2766
        %v2802 = vpop.f32.mrb[0].mxu0
        %v2803 = vadd.f32 %v2751, %v2802
        %v2804 = vpop.f32.mrb[0].mxu0
        %v2805 = vpop.f32.mrb[0].mxu0
        %v2806 = vadd.f32 %v2751, %v2805
        %v2807 = vpop.f32.mrb[0].mxu0
        %2808 = vdwg.mxu0
        %v2809 = vadd.f32 %v800, %v2803
        %v2810 = vadd.f32 %v801, %v2806
        %v2811 = vld [vmem:[%s18] sm:$0x1]
        %v2812 = vld [vmem:[%s19] sm:$0x1]
        %v2813 = vsel %vm840, %v2809, 0.0
        %2814 = vadd.xlane.f32.xlu0 %v2813
        %v2815 = vpop.xlane.xlu0 %2814
        %v2816 = vsel %vm840, %v2810, 0.0
        %2817 = vadd.xlane.f32.xlu0 %v2816
        %v2818 = vpop.xlane.xlu0 %2817
        %v2819 = vrcp.pop 32.0
        %v2820 = vmul.f32 %v2815, %v2819
        %v2821 = vmul.f32 %v2818, %v2819
        %v2822 = vsub.f32 %v2809, %v2820
        %v2823 = vsub.f32 %v2810, %v2821
        %v2824 = vmul.f32 %v2822, %v2822
        %v2825 = vmul.f32 %v2823, %v2823
        %v2826 = vsel %vm840, %v2824, 0.0
        %2827 = vadd.xlane.f32.xlu0 %v2826
        %v2828 = vpop.xlane.xlu0 %2827
        %v2829 = vsel %vm840, %v2825, 0.0
        %2830 = vadd.xlane.f32.xlu0 %v2829
        %v2831 = vpop.xlane.xlu0 %2830
        %v2832 = vmul.f32 %v2828, %v2819
        %v2833 = vmul.f32 %v2831, %v2819
        %v2834 = vadd.f32 %v2832, 1e-05
        %v2835 = vadd.f32 %v2833, 1e-05
        %v2836 = vrsqrt.pop %v2834
        %v2837 = vrsqrt.pop %v2835
        %v2838 = vmul.f32 %v2822, %v2836
        %v2839 = vmul.f32 %v2823, %v2837
        %v2841 = vlaneseq
        %v2842 = vshrl.u32 %v2841, 7
        %v2843 = vsub.s32 0, %v2842
        %v2844 = vrot.slane %v2811, %v2843
        %v2846 = vmul.f32 %v2838, %v2844
        %v2847 = vmul.f32 %v2839, %v2844
        %v2849 = vlaneseq
        %v2850 = vshrl.u32 %v2849, 7
        %v2851 = vsub.s32 0, %v2850
        %v2852 = vrot.slane %v2812, %v2851
        %v2854 = vadd.f32 %v2846, %v2852
        %v2855 = vadd.f32 %v2847, %v2852
        %v2856 = vpack.c.bf16 %v2855, %v2854
        %v2857 = vld [vmem:[%s8] sm:$0xf]
        %v2858 = vld [vmem:[%s8 + $0x4] sm:$0xf]
        %v2859 = vld [vmem:[%s8 + $0x8] sm:$0xf]
        %v2860 = vld [vmem:[%s8 + $0xc] sm:$0xf]
        %v2861 = vld [vmem:[%s9] sm:$0x1]
        %v2863 = vlaneseq
        %v2864 = vshrl.u32 %v2863, 7
        %v2865 = vsub.s32 0, %v2864
        %v2866 = vrot.slane %v2861, %v2865
        %v2872 = vunpack.c.l.b16 %v2857
        %v2873 = vunpack.c.l.b16 %v2858
        %v2874 = vunpack.c.l.b16 %v2859
        %v2875 = vunpack.c.l.b16 %v2860
        %v2876 = vpack.c.b16 %v2873, %v2872
        %v2877 = vpack.c.b16 %v2875, %v2874
        %v2881 = vsel %vm840, %v2856, 0
        %2883 = vmatprep.subr.bf16.mxu0 0
        %2884 = vmatpush1.bf16.msra.mxu0 %v2876
        %2885 = vmatprep.subr.bf16.mxu0 0
        %2886 = vmatpush1.bf16.msra.mxu0 %v2877
        %2887 = vmatprep.subr.bf16.mxu0 0
        %2888 = vmatpush1.bf16.msra.mxu0 0
        %2889 = vmatprep.subr.bf16.mxu0 0
        %2890 = vmatpush1.bf16.msra.mxu0 0
        %2891 = vmatprep.subr.bf16.mxu0 0
        %2892 = vmatpush1.bf16.msra.mxu0 0
        %2893 = vmatprep.subr.bf16.mxu0 0
        %2894 = vmatpush1.bf16.msra.mxu0 0
        %2895 = vmatprep.subr.bf16.mxu0 0
        %2896 = vmatpush1.bf16.msra.mxu0 0
        %2897 = vmatprep.subr.bf16.mxu0 0
        %2898 = vmatpush1.bf16.msra.mxu0 0
        %2899 = vmatprep.subr.bf16.mxu0 0
        %2900 = vmatpush1.bf16.msra.mxu0 0
        %2901 = vmatprep.subr.bf16.mxu0 0
        %2902 = vmatpush1.bf16.msra.mxu0 0
        %2903 = vmatprep.subr.bf16.mxu0 0
        %2904 = vmatpush1.bf16.msra.mxu0 0
        %2905 = vmatprep.subr.bf16.mxu0 0
        %2906 = vmatpush1.bf16.msra.mxu0 0
        %2907 = vmatprep.subr.bf16.mxu0 0
        %2908 = vmatpush1.bf16.msra.mxu0 0
        %2909 = vmatprep.subr.bf16.mxu0 0
        %2910 = vmatpush1.bf16.msra.mxu0 0
        %2911 = vmatprep.subr.bf16.mxu0 0
        %2912 = vmatpush1.bf16.msra.mxu0 0
        %2913 = vmatprep.subr.bf16.mxu0 0
        %2914 = vmatpush1.bf16.msra.mxu0 0
        %2915 = vmatprep.mubr.bf16.mxu0 0
        %2916 = vmatmul.mubr.bf16.gmra.mrb[0].mxu0 %v2881
        %v2917 = vpop.f32.mrb[0].mxu0
        %v2918 = vadd.f32 %v2866, %v2917
        %v2919 = vpop.f32.mrb[0].mxu0
        %v2920 = vpop.f32.mrb[0].mxu0
        %v2921 = vadd.f32 %v2866, %v2920
        %v2922 = vpop.f32.mrb[0].mxu0
        %2923 = vdwg.mxu0
        %v2924 = vpack.c.bf16 %v803, %v802
        %v2925 = vld [vmem:[%s10] sm:$0xf]
        %v2926 = vld [vmem:[%s10 + $0x4] sm:$0xf]
        %v2927 = vld [vmem:[%s10 + $0x8] sm:$0xf]
        %v2928 = vld [vmem:[%s10 + $0xc] sm:$0xf]
        %v2929 = vld [vmem:[%s11] sm:$0x1]
        %v2931 = vlaneseq
        %v2932 = vshrl.u32 %v2931, 7
        %v2933 = vsub.s32 0, %v2932
        %v2934 = vrot.slane %v2929, %v2933
        %v2940 = vunpack.c.l.b16 %v2925
        %v2941 = vunpack.c.l.b16 %v2926
        %v2942 = vunpack.c.l.b16 %v2927
        %v2943 = vunpack.c.l.b16 %v2928
        %v2944 = vpack.c.b16 %v2941, %v2940
        %v2945 = vpack.c.b16 %v2943, %v2942
        %v2949 = vsel %vm840, %v2924, 0
        %2951 = vmatprep.subr.bf16.mxu0 0
        %2952 = vmatpush1.bf16.msra.mxu0 %v2944
        %2953 = vmatprep.subr.bf16.mxu0 0
        %2954 = vmatpush1.bf16.msra.mxu0 %v2945
        %2955 = vmatprep.subr.bf16.mxu0 0
        %2956 = vmatpush1.bf16.msra.mxu0 0
        %2957 = vmatprep.subr.bf16.mxu0 0
        %2958 = vmatpush1.bf16.msra.mxu0 0
        %2959 = vmatprep.subr.bf16.mxu0 0
        %2960 = vmatpush1.bf16.msra.mxu0 0
        %2961 = vmatprep.subr.bf16.mxu0 0
        %2962 = vmatpush1.bf16.msra.mxu0 0
        %2963 = vmatprep.subr.bf16.mxu0 0
        %2964 = vmatpush1.bf16.msra.mxu0 0
        %2965 = vmatprep.subr.bf16.mxu0 0
        %2966 = vmatpush1.bf16.msra.mxu0 0
        %2967 = vmatprep.subr.bf16.mxu0 0
        %2968 = vmatpush1.bf16.msra.mxu0 0
        %2969 = vmatprep.subr.bf16.mxu0 0
        %2970 = vmatpush1.bf16.msra.mxu0 0
        %2971 = vmatprep.subr.bf16.mxu0 0
        %2972 = vmatpush1.bf16.msra.mxu0 0
        %2973 = vmatprep.subr.bf16.mxu0 0
        %2974 = vmatpush1.bf16.msra.mxu0 0
        %2975 = vmatprep.subr.bf16.mxu0 0
        %2976 = vmatpush1.bf16.msra.mxu0 0
        %2977 = vmatprep.subr.bf16.mxu0 0
        %2978 = vmatpush1.bf16.msra.mxu0 0
        %2979 = vmatprep.subr.bf16.mxu0 0
        %2980 = vmatpush1.bf16.msra.mxu0 0
        %2981 = vmatprep.subr.bf16.mxu0 0
        %2982 = vmatpush1.bf16.msra.mxu0 0
        %2983 = vmatprep.mubr.bf16.mxu0 0
        %2984 = vmatmul.mubr.bf16.gmra.mrb[0].mxu0 %v2949
        %v2985 = vpop.f32.mrb[0].mxu0
        %v2986 = vadd.f32 %v2934, %v2985
        %v2987 = vpop.f32.mrb[0].mxu0
        %v2988 = vpop.f32.mrb[0].mxu0
        %v2989 = vadd.f32 %v2934, %v2988
        %v2990 = vpop.f32.mrb[0].mxu0
        %2991 = vdwg.mxu0
        %v2992 = vld [vmem:[%s12] sm:$0xf]
        %v2993 = vld [vmem:[%s12 + $0x4] sm:$0xf]
        %v2994 = vld [vmem:[%s12 + $0x8] sm:$0xf]
        %v2995 = vld [vmem:[%s12 + $0xc] sm:$0xf]
        %v2996 = vld [vmem:[%s13] sm:$0x1]
        %v2997 = vmul.f32 %v2918, 0.5
        %v2998 = vmul.f32 %v2921, 0.5
        %v2999 = vpack.c.bf16 %v2997, %v2997
        %v3000 = vpack.c.bf16 %v2998, %v2998
        %v3001 = vpack.c.bf16 %v2986, %v2986
        %v3002 = vpack.c.bf16 %v2989, %v2989
        %v3005 = vlaneseq
        %v3006 = vshrl.u32 %v3005, 7
        %v3007 = vsub.s32 0, %v3006
        %v3008 = vrot.slane %v814, %v3007
        %v3009 = vlaneseq
        %v3010 = vshrl.u32 %v3009, 7
        %v3011 = vsub.s32 0, %v3010
        %v3012 = vrot.slane %v815, %v3011
        %v3016 = vsel %vm911, %v2999, 0
        %v3019 = vsel %vm911, %v3001, 0
        %3021 = vmatprep.subr.bf16.mxu0 0
        %3022 = vmatpush1.bf16.xpose.msra.mxu0 %v3019
        %3023 = vmatprep.subr.bf16.mxu0 0
        %3024 = vmatpush1.bf16.xpose.msra.mxu0 0
        %3025 = vmatprep.subr.bf16.mxu0 0
        %3026 = vmatpush1.bf16.xpose.msra.mxu0 0
        %3027 = vmatprep.subr.bf16.mxu0 0
        %3028 = vmatpush1.bf16.xpose.msra.mxu0 0
        %3029 = vmatprep.subr.bf16.mxu0 0
        %3030 = vmatpush1.bf16.xpose.msra.mxu0 0
        %3031 = vmatprep.subr.bf16.mxu0 0
        %3032 = vmatpush1.bf16.xpose.msra.mxu0 0
        %3033 = vmatprep.subr.bf16.mxu0 0
        %3034 = vmatpush1.bf16.xpose.msra.mxu0 0
        %3035 = vmatprep.subr.bf16.mxu0 0
        %3036 = vmatpush1.bf16.xpose.msra.mxu0 0
        %3037 = vmatprep.subr.bf16.mxu0 0
        %3038 = vmatpush1.bf16.xpose.msra.mxu0 0
        %3039 = vmatprep.subr.bf16.mxu0 0
        %3040 = vmatpush1.bf16.xpose.msra.mxu0 0
        %3041 = vmatprep.subr.bf16.mxu0 0
        %3042 = vmatpush1.bf16.xpose.msra.mxu0 0
        %3043 = vmatprep.subr.bf16.mxu0 0
        %3044 = vmatpush1.bf16.xpose.msra.mxu0 0
        %3045 = vmatprep.subr.bf16.mxu0 0
        %3046 = vmatpush1.bf16.xpose.msra.mxu0 0
        %3047 = vmatprep.subr.bf16.mxu0 0
        %3048 = vmatpush1.bf16.xpose.msra.mxu0 0
        %3049 = vmatprep.subr.bf16.mxu0 0
        %3050 = vmatpush1.bf16.xpose.msra.mxu0 0
        %3051 = vmatprep.subr.bf16.mxu0 0
        %3052 = vmatpush1.bf16.xpose.msra.mxu0 0
        %3053 = vmatprep.mubr.bf16.mxu0 0
        %3054 = vmatmul.mubr.bf16.gmra.mrb[0].mxu0 %v3016
        %v3055 = vpop.f32.mrb[0].mxu0
        %v3056 = vadd.f32 %v3008, %v3055
        %v3057 = vpop.f32.mrb[0].mxu0
        %v3058 = vpop.f32.mrb[0].mxu0
        %v3059 = vpop.f32.mrb[0].mxu0
        %3060 = vdwg.mxu0
        %v3062 = vsel %vm911, %v3000, 0
        %v3065 = vsel %vm911, %v3002, 0
        %3067 = vmatprep.subr.bf16.mxu0 0
        %3068 = vmatpush1.bf16.xpose.msra.mxu0 %v3065
        %3069 = vmatprep.subr.bf16.mxu0 0
        %3070 = vmatpush1.bf16.xpose.msra.mxu0 0
        %3071 = vmatprep.subr.bf16.mxu0 0
        %3072 = vmatpush1.bf16.xpose.msra.mxu0 0
        %3073 = vmatprep.subr.bf16.mxu0 0
        %3074 = vmatpush1.bf16.xpose.msra.mxu0 0
        %3075 = vmatprep.subr.bf16.mxu0 0
        %3076 = vmatpush1.bf16.xpose.msra.mxu0 0
        %3077 = vmatprep.subr.bf16.mxu0 0
        %3078 = vmatpush1.bf16.xpose.msra.mxu0 0
        %3079 = vmatprep.subr.bf16.mxu0 0
        %3080 = vmatpush1.bf16.xpose.msra.mxu0 0
        %3081 = vmatprep.subr.bf16.mxu0 0
        %3082 = vmatpush1.bf16.xpose.msra.mxu0 0
        %3083 = vmatprep.subr.bf16.mxu0 0
        %3084 = vmatpush1.bf16.xpose.msra.mxu0 0
        %3085 = vmatprep.subr.bf16.mxu0 0
        %3086 = vmatpush1.bf16.xpose.msra.mxu0 0
        %3087 = vmatprep.subr.bf16.mxu0 0
        %3088 = vmatpush1.bf16.xpose.msra.mxu0 0
        %3089 = vmatprep.subr.bf16.mxu0 0
        %3090 = vmatpush1.bf16.xpose.msra.mxu0 0
        %3091 = vmatprep.subr.bf16.mxu0 0
        %3092 = vmatpush1.bf16.xpose.msra.mxu0 0
        %3093 = vmatprep.subr.bf16.mxu0 0
        %3094 = vmatpush1.bf16.xpose.msra.mxu0 0
        %3095 = vmatprep.subr.bf16.mxu0 0
        %3096 = vmatpush1.bf16.xpose.msra.mxu0 0
        %3097 = vmatprep.subr.bf16.mxu0 0
        %3098 = vmatpush1.bf16.xpose.msra.mxu0 0
        %3099 = vmatprep.mubr.bf16.mxu0 0
        %3100 = vmatmul.mubr.bf16.gmra.mrb[0].mxu0 %v3062
        %v3101 = vpop.f32.mrb[0].mxu0
        %v3102 = vadd.f32 %v3012, %v3101
        %v3103 = vpop.f32.mrb[0].mxu0
        %v3104 = vpop.f32.mrb[0].mxu0
        %v3105 = vpop.f32.mrb[0].mxu0
        %3106 = vdwg.mxu0
        %v3107 = vsel %vm1007, %v3056, -inf
        %3108 = vmax.xlane.f32.xlu0 %v3107
        %v3109 = vpop.xlane.xlu0 %3108
        %v3110 = vsel %vm1007, %v3102, -inf
        %3111 = vmax.xlane.f32.xlu0 %v3110
        %v3112 = vpop.xlane.xlu0 %3111
        %v3113 = vsub.f32 %v3056, %v3109
        %v3114 = vsub.f32 %v3102, %v3112
        %v3115 = vmul.f32 %v3113, 1.442695
        %v3116 = vpow.pop %v3115
        %v3117 = vmul.f32 %v3114, 1.442695
        %v3118 = vpow.pop %v3117
        %v3119 = vsel %vm1007, %v3116, 0.0
        %3120 = vadd.xlane.f32.xlu0 %v3119
        %v3121 = vpop.xlane.xlu0 %3120
        %v3122 = vsel %vm1007, %v3118, 0.0
        %3123 = vadd.xlane.f32.xlu0 %v3122
        %v3124 = vpop.xlane.xlu0 %3123
        %v3125 = vrcp.pop %v3121
        %v3126 = vrcp.pop %v3124
        %v3127 = vmul.f32 %v3116, %v3125
        %v3128 = vmul.f32 %v3118, %v3126
        %v3129 = vpack.c.bf16 %v3127, %v3127
        %v3130 = vpack.c.bf16 %v3128, %v3128
        %3132 = vrot.lane.b32.xlu0 %v3001, 96
        %v3133 = vpop.permute.xlu0 %3132
        %v3135 = vsel %vm1007, %v3129, 0
        %v3138 = vsel %vm1037, %v3133, 0
        %3140 = vmatprep.subr.bf16.mxu0 0
        %3141 = vmatpush1.bf16.msra.mxu0 %v3138
        %3142 = vmatprep.subr.bf16.mxu0 0
        %3143 = vmatpush1.bf16.msra.mxu0 0
        %3144 = vmatprep.subr.bf16.mxu0 0
        %3145 = vmatpush1.bf16.msra.mxu0 0
        %3146 = vmatprep.subr.bf16.mxu0 0
        %3147 = vmatpush1.bf16.msra.mxu0 0
        %3148 = vmatprep.subr.bf16.mxu0 0
        %3149 = vmatpush1.bf16.msra.mxu0 0
        %3150 = vmatprep.subr.bf16.mxu0 0
        %3151 = vmatpush1.bf16.msra.mxu0 0
        %3152 = vmatprep.subr.bf16.mxu0 0
        %3153 = vmatpush1.bf16.msra.mxu0 0
        %3154 = vmatprep.subr.bf16.mxu0 0
        %3155 = vmatpush1.bf16.msra.mxu0 0
        %3156 = vmatprep.subr.bf16.mxu0 0
        %3157 = vmatpush1.bf16.msra.mxu0 0
        %3158 = vmatprep.subr.bf16.mxu0 0
        %3159 = vmatpush1.bf16.msra.mxu0 0
        %3160 = vmatprep.subr.bf16.mxu0 0
        %3161 = vmatpush1.bf16.msra.mxu0 0
        %3162 = vmatprep.subr.bf16.mxu0 0
        %3163 = vmatpush1.bf16.msra.mxu0 0
        %3164 = vmatprep.subr.bf16.mxu0 0
        %3165 = vmatpush1.bf16.msra.mxu0 0
        %3166 = vmatprep.subr.bf16.mxu0 0
        %3167 = vmatpush1.bf16.msra.mxu0 0
        %3168 = vmatprep.subr.bf16.mxu0 0
        %3169 = vmatpush1.bf16.msra.mxu0 0
        %3170 = vmatprep.subr.bf16.mxu0 0
        %3171 = vmatpush1.bf16.msra.mxu0 0
        %3172 = vmatprep.mubr.bf16.mxu0 0
        %3173 = vmatmul.mubr.bf16.gmra.mrb[0].mxu0 %v3135
        %v3174 = vpop.f32.mrb[0].mxu0
        %v3175 = vadd.f32 0.0, %v3174
        %v3176 = vpop.f32.mrb[0].mxu0
        %v3177 = vpop.f32.mrb[0].mxu0
        %v3178 = vpop.f32.mrb[0].mxu0
        %3179 = vdwg.mxu0
        %3181 = vrot.lane.b32.xlu0 %v3002, 96
        %v3182 = vpop.permute.xlu0 %3181
        %v3184 = vsel %vm1007, %v3130, 0
        %v3187 = vsel %vm1037, %v3182, 0
        %3189 = vmatprep.subr.bf16.mxu0 0
        %3190 = vmatpush1.bf16.msra.mxu0 %v3187
        %3191 = vmatprep.subr.bf16.mxu0 0
        %3192 = vmatpush1.bf16.msra.mxu0 0
        %3193 = vmatprep.subr.bf16.mxu0 0
        %3194 = vmatpush1.bf16.msra.mxu0 0
        %3195 = vmatprep.subr.bf16.mxu0 0
        %3196 = vmatpush1.bf16.msra.mxu0 0
        %3197 = vmatprep.subr.bf16.mxu0 0
        %3198 = vmatpush1.bf16.msra.mxu0 0
        %3199 = vmatprep.subr.bf16.mxu0 0
        %3200 = vmatpush1.bf16.msra.mxu0 0
        %3201 = vmatprep.subr.bf16.mxu0 0
        %3202 = vmatpush1.bf16.msra.mxu0 0
        %3203 = vmatprep.subr.bf16.mxu0 0
        %3204 = vmatpush1.bf16.msra.mxu0 0
        %3205 = vmatprep.subr.bf16.mxu0 0
        %3206 = vmatpush1.bf16.msra.mxu0 0
        %3207 = vmatprep.subr.bf16.mxu0 0
        %3208 = vmatpush1.bf16.msra.mxu0 0
        %3209 = vmatprep.subr.bf16.mxu0 0
        %3210 = vmatpush1.bf16.msra.mxu0 0
        %3211 = vmatprep.subr.bf16.mxu0 0
        %3212 = vmatpush1.bf16.msra.mxu0 0
        %3213 = vmatprep.subr.bf16.mxu0 0
        %3214 = vmatpush1.bf16.msra.mxu0 0
        %3215 = vmatprep.subr.bf16.mxu0 0
        %3216 = vmatpush1.bf16.msra.mxu0 0
        %3217 = vmatprep.subr.bf16.mxu0 0
        %3218 = vmatpush1.bf16.msra.mxu0 0
        %3219 = vmatprep.subr.bf16.mxu0 0
        %3220 = vmatpush1.bf16.msra.mxu0 0
        %3221 = vmatprep.mubr.bf16.mxu0 0
        %3222 = vmatmul.mubr.bf16.gmra.mrb[0].mxu0 %v3184
        %v3223 = vpop.f32.mrb[0].mxu0
        %v3224 = vadd.f32 0.0, %v3223
        %v3225 = vpop.f32.mrb[0].mxu0
        %v3226 = vpop.f32.mrb[0].mxu0
        %v3227 = vpop.f32.mrb[0].mxu0
        %3228 = vdwg.mxu0
        %3230 = vrot.lane.b32.xlu0 %v2999, 124
        %v3231 = vpop.permute.xlu0 %3230
        %3232 = vrot.lane.b32.xlu0 %v3001, 124
        %v3233 = vpop.permute.xlu0 %3232
        %v3235 = vsel %vm911, %v3231, 0
        %v3238 = vsel %vm911, %v3233, 0
        %3240 = vmatprep.subr.bf16.mxu0 0
        %3241 = vmatpush1.bf16.xpose.msra.mxu0 %v3238
        %3242 = vmatprep.subr.bf16.mxu0 0
        %3243 = vmatpush1.bf16.xpose.msra.mxu0 0
        %3244 = vmatprep.subr.bf16.mxu0 0
        %3245 = vmatpush1.bf16.xpose.msra.mxu0 0
        %3246 = vmatprep.subr.bf16.mxu0 0
        %3247 = vmatpush1.bf16.xpose.msra.mxu0 0
        %3248 = vmatprep.subr.bf16.mxu0 0
        %3249 = vmatpush1.bf16.xpose.msra.mxu0 0
        %3250 = vmatprep.subr.bf16.mxu0 0
        %3251 = vmatpush1.bf16.xpose.msra.mxu0 0
        %3252 = vmatprep.subr.bf16.mxu0 0
        %3253 = vmatpush1.bf16.xpose.msra.mxu0 0
        %3254 = vmatprep.subr.bf16.mxu0 0
        %3255 = vmatpush1.bf16.xpose.msra.mxu0 0
        %3256 = vmatprep.subr.bf16.mxu0 0
        %3257 = vmatpush1.bf16.xpose.msra.mxu0 0
        %3258 = vmatprep.subr.bf16.mxu0 0
        %3259 = vmatpush1.bf16.xpose.msra.mxu0 0
        %3260 = vmatprep.subr.bf16.mxu0 0
        %3261 = vmatpush1.bf16.xpose.msra.mxu0 0
        %3262 = vmatprep.subr.bf16.mxu0 0
        %3263 = vmatpush1.bf16.xpose.msra.mxu0 0
        %3264 = vmatprep.subr.bf16.mxu0 0
        %3265 = vmatpush1.bf16.xpose.msra.mxu0 0
        %3266 = vmatprep.subr.bf16.mxu0 0
        %3267 = vmatpush1.bf16.xpose.msra.mxu0 0
        %3268 = vmatprep.subr.bf16.mxu0 0
        %3269 = vmatpush1.bf16.xpose.msra.mxu0 0
        %3270 = vmatprep.subr.bf16.mxu0 0
        %3271 = vmatpush1.bf16.xpose.msra.mxu0 0
        %3272 = vmatprep.mubr.bf16.mxu0 0
        %3273 = vmatmul.mubr.bf16.gmra.mrb[0].mxu0 %v3235
        %v3274 = vpop.f32.mrb[0].mxu0
        %v3275 = vadd.f32 %v3008, %v3274
        %v3276 = vpop.f32.mrb[0].mxu0
        %v3277 = vpop.f32.mrb[0].mxu0
        %v3278 = vpop.f32.mrb[0].mxu0
        %3279 = vdwg.mxu0
        %3281 = vrot.lane.b32.xlu0 %v3000, 124
        %v3282 = vpop.permute.xlu0 %3281
        %3283 = vrot.lane.b32.xlu0 %v3002, 124
        %v3284 = vpop.permute.xlu0 %3283
        %v3286 = vsel %vm911, %v3282, 0
        %v3289 = vsel %vm911, %v3284, 0
        %3291 = vmatprep.subr.bf16.mxu0 0
        %3292 = vmatpush1.bf16.xpose.msra.mxu0 %v3289
        %3293 = vmatprep.subr.bf16.mxu0 0
        %3294 = vmatpush1.bf16.xpose.msra.mxu0 0
        %3295 = vmatprep.subr.bf16.mxu0 0
        %3296 = vmatpush1.bf16.xpose.msra.mxu0 0
        %3297 = vmatprep.subr.bf16.mxu0 0
        %3298 = vmatpush1.bf16.xpose.msra.mxu0 0
        %3299 = vmatprep.subr.bf16.mxu0 0
        %3300 = vmatpush1.bf16.xpose.msra.mxu0 0
        %3301 = vmatprep.subr.bf16.mxu0 0
        %3302 = vmatpush1.bf16.xpose.msra.mxu0 0
        %3303 = vmatprep.subr.bf16.mxu0 0
        %3304 = vmatpush1.bf16.xpose.msra.mxu0 0
        %3305 = vmatprep.subr.bf16.mxu0 0
        %3306 = vmatpush1.bf16.xpose.msra.mxu0 0
        %3307 = vmatprep.subr.bf16.mxu0 0
        %3308 = vmatpush1.bf16.xpose.msra.mxu0 0
        %3309 = vmatprep.subr.bf16.mxu0 0
        %3310 = vmatpush1.bf16.xpose.msra.mxu0 0
        %3311 = vmatprep.subr.bf16.mxu0 0
        %3312 = vmatpush1.bf16.xpose.msra.mxu0 0
        %3313 = vmatprep.subr.bf16.mxu0 0
        %3314 = vmatpush1.bf16.xpose.msra.mxu0 0
        %3315 = vmatprep.subr.bf16.mxu0 0
        %3316 = vmatpush1.bf16.xpose.msra.mxu0 0
        %3317 = vmatprep.subr.bf16.mxu0 0
        %3318 = vmatpush1.bf16.xpose.msra.mxu0 0
        %3319 = vmatprep.subr.bf16.mxu0 0
        %3320 = vmatpush1.bf16.xpose.msra.mxu0 0
        %3321 = vmatprep.subr.bf16.mxu0 0
        %3322 = vmatpush1.bf16.xpose.msra.mxu0 0
        %3323 = vmatprep.mubr.bf16.mxu0 0
        %3324 = vmatmul.mubr.bf16.gmra.mrb[0].mxu0 %v3286
        %v3325 = vpop.f32.mrb[0].mxu0
        %v3326 = vadd.f32 %v3012, %v3325
        %v3327 = vpop.f32.mrb[0].mxu0
        %v3328 = vpop.f32.mrb[0].mxu0
        %v3329 = vpop.f32.mrb[0].mxu0
        %3330 = vdwg.mxu0
        %v3331 = vsel %vm1007, %v3275, -inf
        %3332 = vmax.xlane.f32.xlu0 %v3331
        %v3333 = vpop.xlane.xlu0 %3332
        %v3334 = vsel %vm1007, %v3326, -inf
        %3335 = vmax.xlane.f32.xlu0 %v3334
        %v3336 = vpop.xlane.xlu0 %3335
        %v3337 = vsub.f32 %v3275, %v3333
        %v3338 = vsub.f32 %v3326, %v3336
        %v3339 = vmul.f32 %v3337, 1.442695
        %v3340 = vpow.pop %v3339
        %v3341 = vmul.f32 %v3338, 1.442695
        %v3342 = vpow.pop %v3341
        %v3343 = vsel %vm1007, %v3340, 0.0
        %3344 = vadd.xlane.f32.xlu0 %v3343
        %v3345 = vpop.xlane.xlu0 %3344
        %v3346 = vsel %vm1007, %v3342, 0.0
        %3347 = vadd.xlane.f32.xlu0 %v3346
        %v3348 = vpop.xlane.xlu0 %3347
        %v3349 = vrcp.pop %v3345
        %v3350 = vrcp.pop %v3348
        %v3351 = vmul.f32 %v3340, %v3349
        %v3352 = vmul.f32 %v3342, %v3350
        %v3353 = vpack.c.bf16 %v3351, %v3351
        %v3354 = vpack.c.bf16 %v3352, %v3352
        %3355 = vrot.lane.b32.xlu0 %v3001, 92
        %v3356 = vpop.permute.xlu0 %3355
        %v3358 = vsel %vm1007, %v3353, 0
        %v3361 = vsel %vm1037, %v3356, 0
        %3363 = vmatprep.subr.bf16.mxu0 0
        %3364 = vmatpush1.bf16.msra.mxu0 %v3361
        %3365 = vmatprep.subr.bf16.mxu0 0
        %3366 = vmatpush1.bf16.msra.mxu0 0
        %3367 = vmatprep.subr.bf16.mxu0 0
        %3368 = vmatpush1.bf16.msra.mxu0 0
        %3369 = vmatprep.subr.bf16.mxu0 0
        %3370 = vmatpush1.bf16.msra.mxu0 0
        %3371 = vmatprep.subr.bf16.mxu0 0
        %3372 = vmatpush1.bf16.msra.mxu0 0
        %3373 = vmatprep.subr.bf16.mxu0 0
        %3374 = vmatpush1.bf16.msra.mxu0 0
        %3375 = vmatprep.subr.bf16.mxu0 0
        %3376 = vmatpush1.bf16.msra.mxu0 0
        %3377 = vmatprep.subr.bf16.mxu0 0
        %3378 = vmatpush1.bf16.msra.mxu0 0
        %3379 = vmatprep.subr.bf16.mxu0 0
        %3380 = vmatpush1.bf16.msra.mxu0 0
        %3381 = vmatprep.subr.bf16.mxu0 0
        %3382 = vmatpush1.bf16.msra.mxu0 0
        %3383 = vmatprep.subr.bf16.mxu0 0
        %3384 = vmatpush1.bf16.msra.mxu0 0
        %3385 = vmatprep.subr.bf16.mxu0 0
        %3386 = vmatpush1.bf16.msra.mxu0 0
        %3387 = vmatprep.subr.bf16.mxu0 0
        %3388 = vmatpush1.bf16.msra.mxu0 0
        %3389 = vmatprep.subr.bf16.mxu0 0
        %3390 = vmatpush1.bf16.msra.mxu0 0
        %3391 = vmatprep.subr.bf16.mxu0 0
        %3392 = vmatpush1.bf16.msra.mxu0 0
        %3393 = vmatprep.subr.bf16.mxu0 0
        %3394 = vmatpush1.bf16.msra.mxu0 0
        %3395 = vmatprep.mubr.bf16.mxu0 0
        %3396 = vmatmul.mubr.bf16.gmra.mrb[0].mxu0 %v3358
        %v3397 = vpop.f32.mrb[0].mxu0
        %v3398 = vadd.f32 0.0, %v3397
        %v3399 = vpop.f32.mrb[0].mxu0
        %v3400 = vpop.f32.mrb[0].mxu0
        %v3401 = vpop.f32.mrb[0].mxu0
        %3402 = vdwg.mxu0
        %3403 = vrot.lane.b32.xlu0 %v3002, 92
        %v3404 = vpop.permute.xlu0 %3403
        %v3406 = vsel %vm1007, %v3354, 0
        %v3409 = vsel %vm1037, %v3404, 0
        %3411 = vmatprep.subr.bf16.mxu0 0
        %3412 = vmatpush1.bf16.msra.mxu0 %v3409
        %3413 = vmatprep.subr.bf16.mxu0 0
        %3414 = vmatpush1.bf16.msra.mxu0 0
        %3415 = vmatprep.subr.bf16.mxu0 0
        %3416 = vmatpush1.bf16.msra.mxu0 0
        %3417 = vmatprep.subr.bf16.mxu0 0
        %3418 = vmatpush1.bf16.msra.mxu0 0
        %3419 = vmatprep.subr.bf16.mxu0 0
        %3420 = vmatpush1.bf16.msra.mxu0 0
        %3421 = vmatprep.subr.bf16.mxu0 0
        %3422 = vmatpush1.bf16.msra.mxu0 0
        %3423 = vmatprep.subr.bf16.mxu0 0
        %3424 = vmatpush1.bf16.msra.mxu0 0
        %3425 = vmatprep.subr.bf16.mxu0 0
        %3426 = vmatpush1.bf16.msra.mxu0 0
        %3427 = vmatprep.subr.bf16.mxu0 0
        %3428 = vmatpush1.bf16.msra.mxu0 0
        %3429 = vmatprep.subr.bf16.mxu0 0
        %3430 = vmatpush1.bf16.msra.mxu0 0
        %3431 = vmatprep.subr.bf16.mxu0 0
        %3432 = vmatpush1.bf16.msra.mxu0 0
        %3433 = vmatprep.subr.bf16.mxu0 0
        %3434 = vmatpush1.bf16.msra.mxu0 0
        %3435 = vmatprep.subr.bf16.mxu0 0
        %3436 = vmatpush1.bf16.msra.mxu0 0
        %3437 = vmatprep.subr.bf16.mxu0 0
        %3438 = vmatpush1.bf16.msra.mxu0 0
        %3439 = vmatprep.subr.bf16.mxu0 0
        %3440 = vmatpush1.bf16.msra.mxu0 0
        %3441 = vmatprep.subr.bf16.mxu0 0
        %3442 = vmatpush1.bf16.msra.mxu0 0
        %3443 = vmatprep.mubr.bf16.mxu0 0
        %3444 = vmatmul.mubr.bf16.gmra.mrb[0].mxu0 %v3406
        %v3445 = vpop.f32.mrb[0].mxu0
        %v3446 = vadd.f32 0.0, %v3445
        %v3447 = vpop.f32.mrb[0].mxu0
        %v3448 = vpop.f32.mrb[0].mxu0
        %v3449 = vpop.f32.mrb[0].mxu0
        %3450 = vdwg.mxu0
        %3451 = vrot.lane.b32.xlu0 %v2999, 120
        %v3452 = vpop.permute.xlu0 %3451
        %3453 = vrot.lane.b32.xlu0 %v3001, 120
        %v3454 = vpop.permute.xlu0 %3453
        %v3456 = vsel %vm911, %v3452, 0
        %v3459 = vsel %vm911, %v3454, 0
        %3461 = vmatprep.subr.bf16.mxu0 0
        %3462 = vmatpush1.bf16.xpose.msra.mxu0 %v3459
        %3463 = vmatprep.subr.bf16.mxu0 0
        %3464 = vmatpush1.bf16.xpose.msra.mxu0 0
        %3465 = vmatprep.subr.bf16.mxu0 0
        %3466 = vmatpush1.bf16.xpose.msra.mxu0 0
        %3467 = vmatprep.subr.bf16.mxu0 0
        %3468 = vmatpush1.bf16.xpose.msra.mxu0 0
        %3469 = vmatprep.subr.bf16.mxu0 0
        %3470 = vmatpush1.bf16.xpose.msra.mxu0 0
        %3471 = vmatprep.subr.bf16.mxu0 0
        %3472 = vmatpush1.bf16.xpose.msra.mxu0 0
        %3473 = vmatprep.subr.bf16.mxu0 0
        %3474 = vmatpush1.bf16.xpose.msra.mxu0 0
        %3475 = vmatprep.subr.bf16.mxu0 0
        %3476 = vmatpush1.bf16.xpose.msra.mxu0 0
        %3477 = vmatprep.subr.bf16.mxu0 0
        %3478 = vmatpush1.bf16.xpose.msra.mxu0 0
        %3479 = vmatprep.subr.bf16.mxu0 0
        %3480 = vmatpush1.bf16.xpose.msra.mxu0 0
        %3481 = vmatprep.subr.bf16.mxu0 0
        %3482 = vmatpush1.bf16.xpose.msra.mxu0 0
        %3483 = vmatprep.subr.bf16.mxu0 0
        %3484 = vmatpush1.bf16.xpose.msra.mxu0 0
        %3485 = vmatprep.subr.bf16.mxu0 0
        %3486 = vmatpush1.bf16.xpose.msra.mxu0 0
        %3487 = vmatprep.subr.bf16.mxu0 0
        %3488 = vmatpush1.bf16.xpose.msra.mxu0 0
        %3489 = vmatprep.subr.bf16.mxu0 0
        %3490 = vmatpush1.bf16.xpose.msra.mxu0 0
        %3491 = vmatprep.subr.bf16.mxu0 0
        %3492 = vmatpush1.bf16.xpose.msra.mxu0 0
        %3493 = vmatprep.mubr.bf16.mxu0 0
        %3494 = vmatmul.mubr.bf16.gmra.mrb[0].mxu0 %v3456
        %v3495 = vpop.f32.mrb[0].mxu0
        %v3496 = vadd.f32 %v3008, %v3495
        %v3497 = vpop.f32.mrb[0].mxu0
        %v3498 = vpop.f32.mrb[0].mxu0
        %v3499 = vpop.f32.mrb[0].mxu0
        %3500 = vdwg.mxu0
        %3501 = vrot.lane.b32.xlu0 %v3000, 120
        %v3502 = vpop.permute.xlu0 %3501
        %3503 = vrot.lane.b32.xlu0 %v3002, 120
        %v3504 = vpop.permute.xlu0 %3503
        %v3506 = vsel %vm911, %v3502, 0
        %v3509 = vsel %vm911, %v3504, 0
        %3511 = vmatprep.subr.bf16.mxu0 0
        %3512 = vmatpush1.bf16.xpose.msra.mxu0 %v3509
        %3513 = vmatprep.subr.bf16.mxu0 0
        %3514 = vmatpush1.bf16.xpose.msra.mxu0 0
        %3515 = vmatprep.subr.bf16.mxu0 0
        %3516 = vmatpush1.bf16.xpose.msra.mxu0 0
        %3517 = vmatprep.subr.bf16.mxu0 0
        %3518 = vmatpush1.bf16.xpose.msra.mxu0 0
        %3519 = vmatprep.subr.bf16.mxu0 0
        %3520 = vmatpush1.bf16.xpose.msra.mxu0 0
        %3521 = vmatprep.subr.bf16.mxu0 0
        %3522 = vmatpush1.bf16.xpose.msra.mxu0 0
        %3523 = vmatprep.subr.bf16.mxu0 0
        %3524 = vmatpush1.bf16.xpose.msra.mxu0 0
        %3525 = vmatprep.subr.bf16.mxu0 0
        %3526 = vmatpush1.bf16.xpose.msra.mxu0 0
        %3527 = vmatprep.subr.bf16.mxu0 0
        %3528 = vmatpush1.bf16.xpose.msra.mxu0 0
        %3529 = vmatprep.subr.bf16.mxu0 0
        %3530 = vmatpush1.bf16.xpose.msra.mxu0 0
        %3531 = vmatprep.subr.bf16.mxu0 0
        %3532 = vmatpush1.bf16.xpose.msra.mxu0 0
        %3533 = vmatprep.subr.bf16.mxu0 0
        %3534 = vmatpush1.bf16.xpose.msra.mxu0 0
        %3535 = vmatprep.subr.bf16.mxu0 0
        %3536 = vmatpush1.bf16.xpose.msra.mxu0 0
        %3537 = vmatprep.subr.bf16.mxu0 0
        %3538 = vmatpush1.bf16.xpose.msra.mxu0 0
        %3539 = vmatprep.subr.bf16.mxu0 0
        %3540 = vmatpush1.bf16.xpose.msra.mxu0 0
        %3541 = vmatprep.subr.bf16.mxu0 0
        %3542 = vmatpush1.bf16.xpose.msra.mxu0 0
        %3543 = vmatprep.mubr.bf16.mxu0 0
        %3544 = vmatmul.mubr.bf16.gmra.mrb[0].mxu0 %v3506
        %v3545 = vpop.f32.mrb[0].mxu0
        %v3546 = vadd.f32 %v3012, %v3545
        %v3547 = vpop.f32.mrb[0].mxu0
        %v3548 = vpop.f32.mrb[0].mxu0
        %v3549 = vpop.f32.mrb[0].mxu0
        %3550 = vdwg.mxu0
        %v3551 = vsel %vm1007, %v3496, -inf
        %3552 = vmax.xlane.f32.xlu0 %v3551
        %v3553 = vpop.xlane.xlu0 %3552
        %v3554 = vsel %vm1007, %v3546, -inf
        %3555 = vmax.xlane.f32.xlu0 %v3554
        %v3556 = vpop.xlane.xlu0 %3555
        %v3557 = vsub.f32 %v3496, %v3553
        %v3558 = vsub.f32 %v3546, %v3556
        %v3559 = vmul.f32 %v3557, 1.442695
        %v3560 = vpow.pop %v3559
        %v3561 = vmul.f32 %v3558, 1.442695
        %v3562 = vpow.pop %v3561
        %v3563 = vsel %vm1007, %v3560, 0.0
        %3564 = vadd.xlane.f32.xlu0 %v3563
        %v3565 = vpop.xlane.xlu0 %3564
        %v3566 = vsel %vm1007, %v3562, 0.0
        %3567 = vadd.xlane.f32.xlu0 %v3566
        %v3568 = vpop.xlane.xlu0 %3567
        %v3569 = vrcp.pop %v3565
        %v3570 = vrcp.pop %v3568
        %v3571 = vmul.f32 %v3560, %v3569
        %v3572 = vmul.f32 %v3562, %v3570
        %v3573 = vpack.c.bf16 %v3571, %v3571
        %v3574 = vpack.c.bf16 %v3572, %v3572
        %3575 = vrot.lane.b32.xlu0 %v3001, 88
        %v3576 = vpop.permute.xlu0 %3575
        %v3578 = vsel %vm1007, %v3573, 0
        %v3581 = vsel %vm1037, %v3576, 0
        %3583 = vmatprep.subr.bf16.mxu0 0
        %3584 = vmatpush1.bf16.msra.mxu0 %v3581
        %3585 = vmatprep.subr.bf16.mxu0 0
        %3586 = vmatpush1.bf16.msra.mxu0 0
        %3587 = vmatprep.subr.bf16.mxu0 0
        %3588 = vmatpush1.bf16.msra.mxu0 0
        %3589 = vmatprep.subr.bf16.mxu0 0
        %3590 = vmatpush1.bf16.msra.mxu0 0
        %3591 = vmatprep.subr.bf16.mxu0 0
        %3592 = vmatpush1.bf16.msra.mxu0 0
        %3593 = vmatprep.subr.bf16.mxu0 0
        %3594 = vmatpush1.bf16.msra.mxu0 0
        %3595 = vmatprep.subr.bf16.mxu0 0
        %3596 = vmatpush1.bf16.msra.mxu0 0
        %3597 = vmatprep.subr.bf16.mxu0 0
        %3598 = vmatpush1.bf16.msra.mxu0 0
        %3599 = vmatprep.subr.bf16.mxu0 0
        %3600 = vmatpush1.bf16.msra.mxu0 0
        %3601 = vmatprep.subr.bf16.mxu0 0
        %3602 = vmatpush1.bf16.msra.mxu0 0
        %3603 = vmatprep.subr.bf16.mxu0 0
        %3604 = vmatpush1.bf16.msra.mxu0 0
        %3605 = vmatprep.subr.bf16.mxu0 0
        %3606 = vmatpush1.bf16.msra.mxu0 0
        %3607 = vmatprep.subr.bf16.mxu0 0
        %3608 = vmatpush1.bf16.msra.mxu0 0
        %3609 = vmatprep.subr.bf16.mxu0 0
        %3610 = vmatpush1.bf16.msra.mxu0 0
        %3611 = vmatprep.subr.bf16.mxu0 0
        %3612 = vmatpush1.bf16.msra.mxu0 0
        %3613 = vmatprep.subr.bf16.mxu0 0
        %3614 = vmatpush1.bf16.msra.mxu0 0
        %3615 = vmatprep.mubr.bf16.mxu0 0
        %3616 = vmatmul.mubr.bf16.gmra.mrb[0].mxu0 %v3578
        %v3617 = vpop.f32.mrb[0].mxu0
        %v3618 = vadd.f32 0.0, %v3617
        %v3619 = vpop.f32.mrb[0].mxu0
        %v3620 = vpop.f32.mrb[0].mxu0
        %v3621 = vpop.f32.mrb[0].mxu0
        %3622 = vdwg.mxu0
        %3623 = vrot.lane.b32.xlu0 %v3002, 88
        %v3624 = vpop.permute.xlu0 %3623
        %v3626 = vsel %vm1007, %v3574, 0
        %v3629 = vsel %vm1037, %v3624, 0
        %3631 = vmatprep.subr.bf16.mxu0 0
        %3632 = vmatpush1.bf16.msra.mxu0 %v3629
        %3633 = vmatprep.subr.bf16.mxu0 0
        %3634 = vmatpush1.bf16.msra.mxu0 0
        %3635 = vmatprep.subr.bf16.mxu0 0
        %3636 = vmatpush1.bf16.msra.mxu0 0
        %3637 = vmatprep.subr.bf16.mxu0 0
        %3638 = vmatpush1.bf16.msra.mxu0 0
        %3639 = vmatprep.subr.bf16.mxu0 0
        %3640 = vmatpush1.bf16.msra.mxu0 0
        %3641 = vmatprep.subr.bf16.mxu0 0
        %3642 = vmatpush1.bf16.msra.mxu0 0
        %3643 = vmatprep.subr.bf16.mxu0 0
        %3644 = vmatpush1.bf16.msra.mxu0 0
        %3645 = vmatprep.subr.bf16.mxu0 0
        %3646 = vmatpush1.bf16.msra.mxu0 0
        %3647 = vmatprep.subr.bf16.mxu0 0
        %3648 = vmatpush1.bf16.msra.mxu0 0
        %3649 = vmatprep.subr.bf16.mxu0 0
        %3650 = vmatpush1.bf16.msra.mxu0 0
        %3651 = vmatprep.subr.bf16.mxu0 0
        %3652 = vmatpush1.bf16.msra.mxu0 0
        %3653 = vmatprep.subr.bf16.mxu0 0
        %3654 = vmatpush1.bf16.msra.mxu0 0
        %3655 = vmatprep.subr.bf16.mxu0 0
        %3656 = vmatpush1.bf16.msra.mxu0 0
        %3657 = vmatprep.subr.bf16.mxu0 0
        %3658 = vmatpush1.bf16.msra.mxu0 0
        %3659 = vmatprep.subr.bf16.mxu0 0
        %3660 = vmatpush1.bf16.msra.mxu0 0
        %3661 = vmatprep.subr.bf16.mxu0 0
        %3662 = vmatpush1.bf16.msra.mxu0 0
        %3663 = vmatprep.mubr.bf16.mxu0 0
        %3664 = vmatmul.mubr.bf16.gmra.mrb[0].mxu0 %v3626
        %v3665 = vpop.f32.mrb[0].mxu0
        %v3666 = vadd.f32 0.0, %v3665
        %v3667 = vpop.f32.mrb[0].mxu0
        %v3668 = vpop.f32.mrb[0].mxu0
        %v3669 = vpop.f32.mrb[0].mxu0
        %3670 = vdwg.mxu0
        %3671 = vrot.lane.b32.xlu0 %v2999, 116
        %v3672 = vpop.permute.xlu0 %3671
        %3673 = vrot.lane.b32.xlu0 %v3001, 116
        %v3674 = vpop.permute.xlu0 %3673
        %v3676 = vsel %vm911, %v3672, 0
        %v3679 = vsel %vm911, %v3674, 0
        %3681 = vmatprep.subr.bf16.mxu0 0
        %3682 = vmatpush1.bf16.xpose.msra.mxu0 %v3679
        %3683 = vmatprep.subr.bf16.mxu0 0
        %3684 = vmatpush1.bf16.xpose.msra.mxu0 0
        %3685 = vmatprep.subr.bf16.mxu0 0
        %3686 = vmatpush1.bf16.xpose.msra.mxu0 0
        %3687 = vmatprep.subr.bf16.mxu0 0
        %3688 = vmatpush1.bf16.xpose.msra.mxu0 0
        %3689 = vmatprep.subr.bf16.mxu0 0
        %3690 = vmatpush1.bf16.xpose.msra.mxu0 0
        %3691 = vmatprep.subr.bf16.mxu0 0
        %3692 = vmatpush1.bf16.xpose.msra.mxu0 0
        %3693 = vmatprep.subr.bf16.mxu0 0
        %3694 = vmatpush1.bf16.xpose.msra.mxu0 0
        %3695 = vmatprep.subr.bf16.mxu0 0
        %3696 = vmatpush1.bf16.xpose.msra.mxu0 0
        %3697 = vmatprep.subr.bf16.mxu0 0
        %3698 = vmatpush1.bf16.xpose.msra.mxu0 0
        %3699 = vmatprep.subr.bf16.mxu0 0
        %3700 = vmatpush1.bf16.xpose.msra.mxu0 0
        %3701 = vmatprep.subr.bf16.mxu0 0
        %3702 = vmatpush1.bf16.xpose.msra.mxu0 0
        %3703 = vmatprep.subr.bf16.mxu0 0
        %3704 = vmatpush1.bf16.xpose.msra.mxu0 0
        %3705 = vmatprep.subr.bf16.mxu0 0
        %3706 = vmatpush1.bf16.xpose.msra.mxu0 0
        %3707 = vmatprep.subr.bf16.mxu0 0
        %3708 = vmatpush1.bf16.xpose.msra.mxu0 0
        %3709 = vmatprep.subr.bf16.mxu0 0
        %3710 = vmatpush1.bf16.xpose.msra.mxu0 0
        %3711 = vmatprep.subr.bf16.mxu0 0
        %3712 = vmatpush1.bf16.xpose.msra.mxu0 0
        %3713 = vmatprep.mubr.bf16.mxu0 0
        %3714 = vmatmul.mubr.bf16.gmra.mrb[0].mxu0 %v3676
        %v3715 = vpop.f32.mrb[0].mxu0
        %v3716 = vadd.f32 %v3008, %v3715
        %v3717 = vpop.f32.mrb[0].mxu0
        %v3718 = vpop.f32.mrb[0].mxu0
        %v3719 = vpop.f32.mrb[0].mxu0
        %3720 = vdwg.mxu0
        %3721 = vrot.lane.b32.xlu0 %v3000, 116
        %v3722 = vpop.permute.xlu0 %3721
        %3723 = vrot.lane.b32.xlu0 %v3002, 116
        %v3724 = vpop.permute.xlu0 %3723
        %v3726 = vsel %vm911, %v3722, 0
        %v3729 = vsel %vm911, %v3724, 0
        %3731 = vmatprep.subr.bf16.mxu0 0
        %3732 = vmatpush1.bf16.xpose.msra.mxu0 %v3729
        %3733 = vmatprep.subr.bf16.mxu0 0
        %3734 = vmatpush1.bf16.xpose.msra.mxu0 0
        %3735 = vmatprep.subr.bf16.mxu0 0
        %3736 = vmatpush1.bf16.xpose.msra.mxu0 0
        %3737 = vmatprep.subr.bf16.mxu0 0
        %3738 = vmatpush1.bf16.xpose.msra.mxu0 0
        %3739 = vmatprep.subr.bf16.mxu0 0
        %3740 = vmatpush1.bf16.xpose.msra.mxu0 0
        %3741 = vmatprep.subr.bf16.mxu0 0
        %3742 = vmatpush1.bf16.xpose.msra.mxu0 0
        %3743 = vmatprep.subr.bf16.mxu0 0
        %3744 = vmatpush1.bf16.xpose.msra.mxu0 0
        %3745 = vmatprep.subr.bf16.mxu0 0
        %3746 = vmatpush1.bf16.xpose.msra.mxu0 0
        %3747 = vmatprep.subr.bf16.mxu0 0
        %3748 = vmatpush1.bf16.xpose.msra.mxu0 0
        %3749 = vmatprep.subr.bf16.mxu0 0
        %3750 = vmatpush1.bf16.xpose.msra.mxu0 0
        %3751 = vmatprep.subr.bf16.mxu0 0
        %3752 = vmatpush1.bf16.xpose.msra.mxu0 0
        %3753 = vmatprep.subr.bf16.mxu0 0
        %3754 = vmatpush1.bf16.xpose.msra.mxu0 0
        %3755 = vmatprep.subr.bf16.mxu0 0
        %3756 = vmatpush1.bf16.xpose.msra.mxu0 0
        %3757 = vmatprep.subr.bf16.mxu0 0
        %3758 = vmatpush1.bf16.xpose.msra.mxu0 0
        %3759 = vmatprep.subr.bf16.mxu0 0
        %3760 = vmatpush1.bf16.xpose.msra.mxu0 0
        %3761 = vmatprep.subr.bf16.mxu0 0
        %3762 = vmatpush1.bf16.xpose.msra.mxu0 0
        %3763 = vmatprep.mubr.bf16.mxu0 0
        %3764 = vmatmul.mubr.bf16.gmra.mrb[0].mxu0 %v3726
        %v3765 = vpop.f32.mrb[0].mxu0
        %v3766 = vadd.f32 %v3012, %v3765
        %v3767 = vpop.f32.mrb[0].mxu0
        %v3768 = vpop.f32.mrb[0].mxu0
        %v3769 = vpop.f32.mrb[0].mxu0
        %3770 = vdwg.mxu0
        %v3771 = vsel %vm1007, %v3716, -inf
        %3772 = vmax.xlane.f32.xlu0 %v3771
        %v3773 = vpop.xlane.xlu0 %3772
        %v3774 = vsel %vm1007, %v3766, -inf
        %3775 = vmax.xlane.f32.xlu0 %v3774
        %v3776 = vpop.xlane.xlu0 %3775
        %v3777 = vsub.f32 %v3716, %v3773
        %v3778 = vsub.f32 %v3766, %v3776
        %v3779 = vmul.f32 %v3777, 1.442695
        %v3780 = vpow.pop %v3779
        %v3781 = vmul.f32 %v3778, 1.442695
        %v3782 = vpow.pop %v3781
        %v3783 = vsel %vm1007, %v3780, 0.0
        %3784 = vadd.xlane.f32.xlu0 %v3783
        %v3785 = vpop.xlane.xlu0 %3784
        %v3786 = vsel %vm1007, %v3782, 0.0
        %3787 = vadd.xlane.f32.xlu0 %v3786
        %v3788 = vpop.xlane.xlu0 %3787
        %v3789 = vrcp.pop %v3785
        %v3790 = vrcp.pop %v3788
        %v3791 = vmul.f32 %v3780, %v3789
        %v3792 = vmul.f32 %v3782, %v3790
        %v3793 = vpack.c.bf16 %v3791, %v3791
        %v3794 = vpack.c.bf16 %v3792, %v3792
        %3795 = vrot.lane.b32.xlu0 %v3001, 84
        %v3796 = vpop.permute.xlu0 %3795
        %v3798 = vsel %vm1007, %v3793, 0
        %v3801 = vsel %vm1037, %v3796, 0
        %3803 = vmatprep.subr.bf16.mxu0 0
        %3804 = vmatpush1.bf16.msra.mxu0 %v3801
        %3805 = vmatprep.subr.bf16.mxu0 0
        %3806 = vmatpush1.bf16.msra.mxu0 0
        %3807 = vmatprep.subr.bf16.mxu0 0
        %3808 = vmatpush1.bf16.msra.mxu0 0
        %3809 = vmatprep.subr.bf16.mxu0 0
        %3810 = vmatpush1.bf16.msra.mxu0 0
        %3811 = vmatprep.subr.bf16.mxu0 0
        %3812 = vmatpush1.bf16.msra.mxu0 0
        %3813 = vmatprep.subr.bf16.mxu0 0
        %3814 = vmatpush1.bf16.msra.mxu0 0
        %3815 = vmatprep.subr.bf16.mxu0 0
        %3816 = vmatpush1.bf16.msra.mxu0 0
        %3817 = vmatprep.subr.bf16.mxu0 0
        %3818 = vmatpush1.bf16.msra.mxu0 0
        %3819 = vmatprep.subr.bf16.mxu0 0
        %3820 = vmatpush1.bf16.msra.mxu0 0
        %3821 = vmatprep.subr.bf16.mxu0 0
        %3822 = vmatpush1.bf16.msra.mxu0 0
        %3823 = vmatprep.subr.bf16.mxu0 0
        %3824 = vmatpush1.bf16.msra.mxu0 0
        %3825 = vmatprep.subr.bf16.mxu0 0
        %3826 = vmatpush1.bf16.msra.mxu0 0
        %3827 = vmatprep.subr.bf16.mxu0 0
        %3828 = vmatpush1.bf16.msra.mxu0 0
        %3829 = vmatprep.subr.bf16.mxu0 0
        %3830 = vmatpush1.bf16.msra.mxu0 0
        %3831 = vmatprep.subr.bf16.mxu0 0
        %3832 = vmatpush1.bf16.msra.mxu0 0
        %3833 = vmatprep.subr.bf16.mxu0 0
        %3834 = vmatpush1.bf16.msra.mxu0 0
        %3835 = vmatprep.mubr.bf16.mxu0 0
        %3836 = vmatmul.mubr.bf16.gmra.mrb[0].mxu0 %v3798
        %v3837 = vpop.f32.mrb[0].mxu0
        %v3838 = vadd.f32 0.0, %v3837
        %v3839 = vpop.f32.mrb[0].mxu0
        %v3840 = vpop.f32.mrb[0].mxu0
        %v3841 = vpop.f32.mrb[0].mxu0
        %3842 = vdwg.mxu0
        %3843 = vrot.lane.b32.xlu0 %v3002, 84
        %v3844 = vpop.permute.xlu0 %3843
        %v3846 = vsel %vm1007, %v3794, 0
        %v3849 = vsel %vm1037, %v3844, 0
        %3851 = vmatprep.subr.bf16.mxu0 0
        %3852 = vmatpush1.bf16.msra.mxu0 %v3849
        %3853 = vmatprep.subr.bf16.mxu0 0
        %3854 = vmatpush1.bf16.msra.mxu0 0
        %3855 = vmatprep.subr.bf16.mxu0 0
        %3856 = vmatpush1.bf16.msra.mxu0 0
        %3857 = vmatprep.subr.bf16.mxu0 0
        %3858 = vmatpush1.bf16.msra.mxu0 0
        %3859 = vmatprep.subr.bf16.mxu0 0
        %3860 = vmatpush1.bf16.msra.mxu0 0
        %3861 = vmatprep.subr.bf16.mxu0 0
        %3862 = vmatpush1.bf16.msra.mxu0 0
        %3863 = vmatprep.subr.bf16.mxu0 0
        %3864 = vmatpush1.bf16.msra.mxu0 0
        %3865 = vmatprep.subr.bf16.mxu0 0
        %3866 = vmatpush1.bf16.msra.mxu0 0
        %3867 = vmatprep.subr.bf16.mxu0 0
        %3868 = vmatpush1.bf16.msra.mxu0 0
        %3869 = vmatprep.subr.bf16.mxu0 0
        %3870 = vmatpush1.bf16.msra.mxu0 0
        %3871 = vmatprep.subr.bf16.mxu0 0
        %3872 = vmatpush1.bf16.msra.mxu0 0
        %3873 = vmatprep.subr.bf16.mxu0 0
        %3874 = vmatpush1.bf16.msra.mxu0 0
        %3875 = vmatprep.subr.bf16.mxu0 0
        %3876 = vmatpush1.bf16.msra.mxu0 0
        %3877 = vmatprep.subr.bf16.mxu0 0
        %3878 = vmatpush1.bf16.msra.mxu0 0
        %3879 = vmatprep.subr.bf16.mxu0 0
        %3880 = vmatpush1.bf16.msra.mxu0 0
        %3881 = vmatprep.subr.bf16.mxu0 0
        %3882 = vmatpush1.bf16.msra.mxu0 0
        %3883 = vmatprep.mubr.bf16.mxu0 0
        %3884 = vmatmul.mubr.bf16.gmra.mrb[0].mxu0 %v3846
        %v3885 = vpop.f32.mrb[0].mxu0
        %v3886 = vadd.f32 0.0, %v3885
        %v3887 = vpop.f32.mrb[0].mxu0
        %v3888 = vpop.f32.mrb[0].mxu0
        %v3889 = vpop.f32.mrb[0].mxu0
        %3890 = vdwg.mxu0
        %3891 = vrot.lane.b32.xlu0 %v2999, 112
        %v3892 = vpop.permute.xlu0 %3891
        %3893 = vrot.lane.b32.xlu0 %v3001, 112
        %v3894 = vpop.permute.xlu0 %3893
        %v3896 = vsel %vm911, %v3892, 0
        %v3899 = vsel %vm911, %v3894, 0
        %3901 = vmatprep.subr.bf16.mxu0 0
        %3902 = vmatpush1.bf16.xpose.msra.mxu0 %v3899
        %3903 = vmatprep.subr.bf16.mxu0 0
        %3904 = vmatpush1.bf16.xpose.msra.mxu0 0
        %3905 = vmatprep.subr.bf16.mxu0 0
        %3906 = vmatpush1.bf16.xpose.msra.mxu0 0
        %3907 = vmatprep.subr.bf16.mxu0 0
        %3908 = vmatpush1.bf16.xpose.msra.mxu0 0
        %3909 = vmatprep.subr.bf16.mxu0 0
        %3910 = vmatpush1.bf16.xpose.msra.mxu0 0
        %3911 = vmatprep.subr.bf16.mxu0 0
        %3912 = vmatpush1.bf16.xpose.msra.mxu0 0
        %3913 = vmatprep.subr.bf16.mxu0 0
        %3914 = vmatpush1.bf16.xpose.msra.mxu0 0
        %3915 = vmatprep.subr.bf16.mxu0 0
        %3916 = vmatpush1.bf16.xpose.msra.mxu0 0
        %3917 = vmatprep.subr.bf16.mxu0 0
        %3918 = vmatpush1.bf16.xpose.msra.mxu0 0
        %3919 = vmatprep.subr.bf16.mxu0 0
        %3920 = vmatpush1.bf16.xpose.msra.mxu0 0
        %3921 = vmatprep.subr.bf16.mxu0 0
        %3922 = vmatpush1.bf16.xpose.msra.mxu0 0
        %3923 = vmatprep.subr.bf16.mxu0 0
        %3924 = vmatpush1.bf16.xpose.msra.mxu0 0
        %3925 = vmatprep.subr.bf16.mxu0 0
        %3926 = vmatpush1.bf16.xpose.msra.mxu0 0
        %3927 = vmatprep.subr.bf16.mxu0 0
        %3928 = vmatpush1.bf16.xpose.msra.mxu0 0
        %3929 = vmatprep.subr.bf16.mxu0 0
        %3930 = vmatpush1.bf16.xpose.msra.mxu0 0
        %3931 = vmatprep.subr.bf16.mxu0 0
        %3932 = vmatpush1.bf16.xpose.msra.mxu0 0
        %3933 = vmatprep.mubr.bf16.mxu0 0
        %3934 = vmatmul.mubr.bf16.gmra.mrb[0].mxu0 %v3896
        %v3935 = vpop.f32.mrb[0].mxu0
        %v3936 = vadd.f32 %v3008, %v3935
        %v3937 = vpop.f32.mrb[0].mxu0
        %v3938 = vpop.f32.mrb[0].mxu0
        %v3939 = vpop.f32.mrb[0].mxu0
        %3940 = vdwg.mxu0
        %3941 = vrot.lane.b32.xlu0 %v3000, 112
        %v3942 = vpop.permute.xlu0 %3941
        %3943 = vrot.lane.b32.xlu0 %v3002, 112
        %v3944 = vpop.permute.xlu0 %3943
        %v3946 = vsel %vm911, %v3942, 0
        %v3949 = vsel %vm911, %v3944, 0
        %3951 = vmatprep.subr.bf16.mxu0 0
        %3952 = vmatpush1.bf16.xpose.msra.mxu0 %v3949
        %3953 = vmatprep.subr.bf16.mxu0 0
        %3954 = vmatpush1.bf16.xpose.msra.mxu0 0
        %3955 = vmatprep.subr.bf16.mxu0 0
        %3956 = vmatpush1.bf16.xpose.msra.mxu0 0
        %3957 = vmatprep.subr.bf16.mxu0 0
        %3958 = vmatpush1.bf16.xpose.msra.mxu0 0
        %3959 = vmatprep.subr.bf16.mxu0 0
        %3960 = vmatpush1.bf16.xpose.msra.mxu0 0
        %3961 = vmatprep.subr.bf16.mxu0 0
        %3962 = vmatpush1.bf16.xpose.msra.mxu0 0
        %3963 = vmatprep.subr.bf16.mxu0 0
        %3964 = vmatpush1.bf16.xpose.msra.mxu0 0
        %3965 = vmatprep.subr.bf16.mxu0 0
        %3966 = vmatpush1.bf16.xpose.msra.mxu0 0
        %3967 = vmatprep.subr.bf16.mxu0 0
        %3968 = vmatpush1.bf16.xpose.msra.mxu0 0
        %3969 = vmatprep.subr.bf16.mxu0 0
        %3970 = vmatpush1.bf16.xpose.msra.mxu0 0
        %3971 = vmatprep.subr.bf16.mxu0 0
        %3972 = vmatpush1.bf16.xpose.msra.mxu0 0
        %3973 = vmatprep.subr.bf16.mxu0 0
        %3974 = vmatpush1.bf16.xpose.msra.mxu0 0
        %3975 = vmatprep.subr.bf16.mxu0 0
        %3976 = vmatpush1.bf16.xpose.msra.mxu0 0
        %3977 = vmatprep.subr.bf16.mxu0 0
        %3978 = vmatpush1.bf16.xpose.msra.mxu0 0
        %3979 = vmatprep.subr.bf16.mxu0 0
        %3980 = vmatpush1.bf16.xpose.msra.mxu0 0
        %3981 = vmatprep.subr.bf16.mxu0 0
        %3982 = vmatpush1.bf16.xpose.msra.mxu0 0
        %3983 = vmatprep.mubr.bf16.mxu0 0
        %3984 = vmatmul.mubr.bf16.gmra.mrb[0].mxu0 %v3946
        %v3985 = vpop.f32.mrb[0].mxu0
        %v3986 = vadd.f32 %v3012, %v3985
        %v3987 = vpop.f32.mrb[0].mxu0
        %v3988 = vpop.f32.mrb[0].mxu0
        %v3989 = vpop.f32.mrb[0].mxu0
        %3990 = vdwg.mxu0
        %v3991 = vsel %vm1007, %v3936, -inf
        %3992 = vmax.xlane.f32.xlu0 %v3991
        %v3993 = vpop.xlane.xlu0 %3992
        %v3994 = vsel %vm1007, %v3986, -inf
        %3995 = vmax.xlane.f32.xlu0 %v3994
        %v3996 = vpop.xlane.xlu0 %3995
        %v3997 = vsub.f32 %v3936, %v3993
        %v3998 = vsub.f32 %v3986, %v3996
        %v3999 = vmul.f32 %v3997, 1.442695
        %v4000 = vpow.pop %v3999
        %v4001 = vmul.f32 %v3998, 1.442695
        %v4002 = vpow.pop %v4001
        %v4003 = vsel %vm1007, %v4000, 0.0
        %4004 = vadd.xlane.f32.xlu0 %v4003
        %v4005 = vpop.xlane.xlu0 %4004
        %v4006 = vsel %vm1007, %v4002, 0.0
        %4007 = vadd.xlane.f32.xlu0 %v4006
        %v4008 = vpop.xlane.xlu0 %4007
        %v4009 = vrcp.pop %v4005
        %v4010 = vrcp.pop %v4008
        %v4011 = vmul.f32 %v4000, %v4009
        %v4012 = vmul.f32 %v4002, %v4010
        %v4013 = vpack.c.bf16 %v4011, %v4011
        %v4014 = vpack.c.bf16 %v4012, %v4012
        %4015 = vrot.lane.b32.xlu0 %v3001, 80
        %v4016 = vpop.permute.xlu0 %4015
        %v4018 = vsel %vm1007, %v4013, 0
        %v4021 = vsel %vm1037, %v4016, 0
        %4023 = vmatprep.subr.bf16.mxu0 0
        %4024 = vmatpush1.bf16.msra.mxu0 %v4021
        %4025 = vmatprep.subr.bf16.mxu0 0
        %4026 = vmatpush1.bf16.msra.mxu0 0
        %4027 = vmatprep.subr.bf16.mxu0 0
        %4028 = vmatpush1.bf16.msra.mxu0 0
        %4029 = vmatprep.subr.bf16.mxu0 0
        %4030 = vmatpush1.bf16.msra.mxu0 0
        %4031 = vmatprep.subr.bf16.mxu0 0
        %4032 = vmatpush1.bf16.msra.mxu0 0
        %4033 = vmatprep.subr.bf16.mxu0 0
        %4034 = vmatpush1.bf16.msra.mxu0 0
        %4035 = vmatprep.subr.bf16.mxu0 0
        %4036 = vmatpush1.bf16.msra.mxu0 0
        %4037 = vmatprep.subr.bf16.mxu0 0
        %4038 = vmatpush1.bf16.msra.mxu0 0
        %4039 = vmatprep.subr.bf16.mxu0 0
        %4040 = vmatpush1.bf16.msra.mxu0 0
        %4041 = vmatprep.subr.bf16.mxu0 0
        %4042 = vmatpush1.bf16.msra.mxu0 0
        %4043 = vmatprep.subr.bf16.mxu0 0
        %4044 = vmatpush1.bf16.msra.mxu0 0
        %4045 = vmatprep.subr.bf16.mxu0 0
        %4046 = vmatpush1.bf16.msra.mxu0 0
        %4047 = vmatprep.subr.bf16.mxu0 0
        %4048 = vmatpush1.bf16.msra.mxu0 0
        %4049 = vmatprep.subr.bf16.mxu0 0
        %4050 = vmatpush1.bf16.msra.mxu0 0
        %4051 = vmatprep.subr.bf16.mxu0 0
        %4052 = vmatpush1.bf16.msra.mxu0 0
        %4053 = vmatprep.subr.bf16.mxu0 0
        %4054 = vmatpush1.bf16.msra.mxu0 0
        %4055 = vmatprep.mubr.bf16.mxu0 0
        %4056 = vmatmul.mubr.bf16.gmra.mrb[0].mxu0 %v4018
        %v4057 = vpop.f32.mrb[0].mxu0
        %v4058 = vadd.f32 0.0, %v4057
        %v4059 = vpop.f32.mrb[0].mxu0
        %v4060 = vpop.f32.mrb[0].mxu0
        %v4061 = vpop.f32.mrb[0].mxu0
        %4062 = vdwg.mxu0
        %4063 = vrot.lane.b32.xlu0 %v3002, 80
        %v4064 = vpop.permute.xlu0 %4063
        %v4066 = vsel %vm1007, %v4014, 0
        %v4069 = vsel %vm1037, %v4064, 0
        %4071 = vmatprep.subr.bf16.mxu0 0
        %4072 = vmatpush1.bf16.msra.mxu0 %v4069
        %4073 = vmatprep.subr.bf16.mxu0 0
        %4074 = vmatpush1.bf16.msra.mxu0 0
        %4075 = vmatprep.subr.bf16.mxu0 0
        %4076 = vmatpush1.bf16.msra.mxu0 0
        %4077 = vmatprep.subr.bf16.mxu0 0
        %4078 = vmatpush1.bf16.msra.mxu0 0
        %4079 = vmatprep.subr.bf16.mxu0 0
        %4080 = vmatpush1.bf16.msra.mxu0 0
        %4081 = vmatprep.subr.bf16.mxu0 0
        %4082 = vmatpush1.bf16.msra.mxu0 0
        %4083 = vmatprep.subr.bf16.mxu0 0
        %4084 = vmatpush1.bf16.msra.mxu0 0
        %4085 = vmatprep.subr.bf16.mxu0 0
        %4086 = vmatpush1.bf16.msra.mxu0 0
        %4087 = vmatprep.subr.bf16.mxu0 0
        %4088 = vmatpush1.bf16.msra.mxu0 0
        %4089 = vmatprep.subr.bf16.mxu0 0
        %4090 = vmatpush1.bf16.msra.mxu0 0
        %4091 = vmatprep.subr.bf16.mxu0 0
        %4092 = vmatpush1.bf16.msra.mxu0 0
        %4093 = vmatprep.subr.bf16.mxu0 0
        %4094 = vmatpush1.bf16.msra.mxu0 0
        %4095 = vmatprep.subr.bf16.mxu0 0
        %4096 = vmatpush1.bf16.msra.mxu0 0
        %4097 = vmatprep.subr.bf16.mxu0 0
        %4098 = vmatpush1.bf16.msra.mxu0 0
        %4099 = vmatprep.subr.bf16.mxu0 0
        %4100 = vmatpush1.bf16.msra.mxu0 0
        %4101 = vmatprep.subr.bf16.mxu0 0
        %4102 = vmatpush1.bf16.msra.mxu0 0
        %4103 = vmatprep.mubr.bf16.mxu0 0
        %4104 = vmatmul.mubr.bf16.gmra.mrb[0].mxu0 %v4066
        %v4105 = vpop.f32.mrb[0].mxu0
        %v4106 = vadd.f32 0.0, %v4105
        %v4107 = vpop.f32.mrb[0].mxu0
        %v4108 = vpop.f32.mrb[0].mxu0
        %v4109 = vpop.f32.mrb[0].mxu0
        %4110 = vdwg.mxu0
        %4111 = vrot.lane.b32.xlu0 %v2999, 108
        %v4112 = vpop.permute.xlu0 %4111
        %4113 = vrot.lane.b32.xlu0 %v3001, 108
        %v4114 = vpop.permute.xlu0 %4113
        %v4116 = vsel %vm911, %v4112, 0
        %v4119 = vsel %vm911, %v4114, 0
        %4121 = vmatprep.subr.bf16.mxu0 0
        %4122 = vmatpush1.bf16.xpose.msra.mxu0 %v4119
        %4123 = vmatprep.subr.bf16.mxu0 0
        %4124 = vmatpush1.bf16.xpose.msra.mxu0 0
        %4125 = vmatprep.subr.bf16.mxu0 0
        %4126 = vmatpush1.bf16.xpose.msra.mxu0 0
        %4127 = vmatprep.subr.bf16.mxu0 0
        %4128 = vmatpush1.bf16.xpose.msra.mxu0 0
        %4129 = vmatprep.subr.bf16.mxu0 0
        %4130 = vmatpush1.bf16.xpose.msra.mxu0 0
        %4131 = vmatprep.subr.bf16.mxu0 0
        %4132 = vmatpush1.bf16.xpose.msra.mxu0 0
        %4133 = vmatprep.subr.bf16.mxu0 0
        %4134 = vmatpush1.bf16.xpose.msra.mxu0 0
        %4135 = vmatprep.subr.bf16.mxu0 0
        %4136 = vmatpush1.bf16.xpose.msra.mxu0 0
        %4137 = vmatprep.subr.bf16.mxu0 0
        %4138 = vmatpush1.bf16.xpose.msra.mxu0 0
        %4139 = vmatprep.subr.bf16.mxu0 0
        %4140 = vmatpush1.bf16.xpose.msra.mxu0 0
        %4141 = vmatprep.subr.bf16.mxu0 0
        %4142 = vmatpush1.bf16.xpose.msra.mxu0 0
        %4143 = vmatprep.subr.bf16.mxu0 0
        %4144 = vmatpush1.bf16.xpose.msra.mxu0 0
        %4145 = vmatprep.subr.bf16.mxu0 0
        %4146 = vmatpush1.bf16.xpose.msra.mxu0 0
        %4147 = vmatprep.subr.bf16.mxu0 0
        %4148 = vmatpush1.bf16.xpose.msra.mxu0 0
        %4149 = vmatprep.subr.bf16.mxu0 0
        %4150 = vmatpush1.bf16.xpose.msra.mxu0 0
        %4151 = vmatprep.subr.bf16.mxu0 0
        %4152 = vmatpush1.bf16.xpose.msra.mxu0 0
        %4153 = vmatprep.mubr.bf16.mxu0 0
        %4154 = vmatmul.mubr.bf16.gmra.mrb[0].mxu0 %v4116
        %v4155 = vpop.f32.mrb[0].mxu0
        %v4156 = vadd.f32 %v3008, %v4155
        %v4157 = vpop.f32.mrb[0].mxu0
        %v4158 = vpop.f32.mrb[0].mxu0
        %v4159 = vpop.f32.mrb[0].mxu0
        %4160 = vdwg.mxu0
        %4161 = vrot.lane.b32.xlu0 %v3000, 108
        %v4162 = vpop.permute.xlu0 %4161
        %4163 = vrot.lane.b32.xlu0 %v3002, 108
        %v4164 = vpop.permute.xlu0 %4163
        %v4166 = vsel %vm911, %v4162, 0
        %v4169 = vsel %vm911, %v4164, 0
        %4171 = vmatprep.subr.bf16.mxu0 0
        %4172 = vmatpush1.bf16.xpose.msra.mxu0 %v4169
        %4173 = vmatprep.subr.bf16.mxu0 0
        %4174 = vmatpush1.bf16.xpose.msra.mxu0 0
        %4175 = vmatprep.subr.bf16.mxu0 0
        %4176 = vmatpush1.bf16.xpose.msra.mxu0 0
        %4177 = vmatprep.subr.bf16.mxu0 0
        %4178 = vmatpush1.bf16.xpose.msra.mxu0 0
        %4179 = vmatprep.subr.bf16.mxu0 0
        %4180 = vmatpush1.bf16.xpose.msra.mxu0 0
        %4181 = vmatprep.subr.bf16.mxu0 0
        %4182 = vmatpush1.bf16.xpose.msra.mxu0 0
        %4183 = vmatprep.subr.bf16.mxu0 0
        %4184 = vmatpush1.bf16.xpose.msra.mxu0 0
        %4185 = vmatprep.subr.bf16.mxu0 0
        %4186 = vmatpush1.bf16.xpose.msra.mxu0 0
        %4187 = vmatprep.subr.bf16.mxu0 0
        %4188 = vmatpush1.bf16.xpose.msra.mxu0 0
        %4189 = vmatprep.subr.bf16.mxu0 0
        %4190 = vmatpush1.bf16.xpose.msra.mxu0 0
        %4191 = vmatprep.subr.bf16.mxu0 0
        %4192 = vmatpush1.bf16.xpose.msra.mxu0 0
        %4193 = vmatprep.subr.bf16.mxu0 0
        %4194 = vmatpush1.bf16.xpose.msra.mxu0 0
        %4195 = vmatprep.subr.bf16.mxu0 0
        %4196 = vmatpush1.bf16.xpose.msra.mxu0 0
        %4197 = vmatprep.subr.bf16.mxu0 0
        %4198 = vmatpush1.bf16.xpose.msra.mxu0 0
        %4199 = vmatprep.subr.bf16.mxu0 0
        %4200 = vmatpush1.bf16.xpose.msra.mxu0 0
        %4201 = vmatprep.subr.bf16.mxu0 0
        %4202 = vmatpush1.bf16.xpose.msra.mxu0 0
        %4203 = vmatprep.mubr.bf16.mxu0 0
        %4204 = vmatmul.mubr.bf16.gmra.mrb[0].mxu0 %v4166
        %v4205 = vpop.f32.mrb[0].mxu0
        %v4206 = vadd.f32 %v3012, %v4205
        %v4207 = vpop.f32.mrb[0].mxu0
        %v4208 = vpop.f32.mrb[0].mxu0
        %v4209 = vpop.f32.mrb[0].mxu0
        %4210 = vdwg.mxu0
        %v4211 = vsel %vm1007, %v4156, -inf
        %4212 = vmax.xlane.f32.xlu0 %v4211
        %v4213 = vpop.xlane.xlu0 %4212
        %v4214 = vsel %vm1007, %v4206, -inf
        %4215 = vmax.xlane.f32.xlu0 %v4214
        %v4216 = vpop.xlane.xlu0 %4215
        %v4217 = vsub.f32 %v4156, %v4213
        %v4218 = vsub.f32 %v4206, %v4216
        %v4219 = vmul.f32 %v4217, 1.442695
        %v4220 = vpow.pop %v4219
        %v4221 = vmul.f32 %v4218, 1.442695
        %v4222 = vpow.pop %v4221
        %v4223 = vsel %vm1007, %v4220, 0.0
        %4224 = vadd.xlane.f32.xlu0 %v4223
        %v4225 = vpop.xlane.xlu0 %4224
        %v4226 = vsel %vm1007, %v4222, 0.0
        %4227 = vadd.xlane.f32.xlu0 %v4226
        %v4228 = vpop.xlane.xlu0 %4227
        %v4229 = vrcp.pop %v4225
        %v4230 = vrcp.pop %v4228
        %v4231 = vmul.f32 %v4220, %v4229
        %v4232 = vmul.f32 %v4222, %v4230
        %v4233 = vpack.c.bf16 %v4231, %v4231
        %v4234 = vpack.c.bf16 %v4232, %v4232
        %4235 = vrot.lane.b32.xlu0 %v3001, 76
        %v4236 = vpop.permute.xlu0 %4235
        %v4238 = vsel %vm1007, %v4233, 0
        %v4241 = vsel %vm1037, %v4236, 0
        %4243 = vmatprep.subr.bf16.mxu0 0
        %4244 = vmatpush1.bf16.msra.mxu0 %v4241
        %4245 = vmatprep.subr.bf16.mxu0 0
        %4246 = vmatpush1.bf16.msra.mxu0 0
        %4247 = vmatprep.subr.bf16.mxu0 0
        %4248 = vmatpush1.bf16.msra.mxu0 0
        %4249 = vmatprep.subr.bf16.mxu0 0
        %4250 = vmatpush1.bf16.msra.mxu0 0
        %4251 = vmatprep.subr.bf16.mxu0 0
        %4252 = vmatpush1.bf16.msra.mxu0 0
        %4253 = vmatprep.subr.bf16.mxu0 0
        %4254 = vmatpush1.bf16.msra.mxu0 0
        %4255 = vmatprep.subr.bf16.mxu0 0
        %4256 = vmatpush1.bf16.msra.mxu0 0
        %4257 = vmatprep.subr.bf16.mxu0 0
        %4258 = vmatpush1.bf16.msra.mxu0 0
        %4259 = vmatprep.subr.bf16.mxu0 0
        %4260 = vmatpush1.bf16.msra.mxu0 0
        %4261 = vmatprep.subr.bf16.mxu0 0
        %4262 = vmatpush1.bf16.msra.mxu0 0
        %4263 = vmatprep.subr.bf16.mxu0 0
        %4264 = vmatpush1.bf16.msra.mxu0 0
        %4265 = vmatprep.subr.bf16.mxu0 0
        %4266 = vmatpush1.bf16.msra.mxu0 0
        %4267 = vmatprep.subr.bf16.mxu0 0
        %4268 = vmatpush1.bf16.msra.mxu0 0
        %4269 = vmatprep.subr.bf16.mxu0 0
        %4270 = vmatpush1.bf16.msra.mxu0 0
        %4271 = vmatprep.subr.bf16.mxu0 0
        %4272 = vmatpush1.bf16.msra.mxu0 0
        %4273 = vmatprep.subr.bf16.mxu0 0
        %4274 = vmatpush1.bf16.msra.mxu0 0
        %4275 = vmatprep.mubr.bf16.mxu0 0
        %4276 = vmatmul.mubr.bf16.gmra.mrb[0].mxu0 %v4238
        %v4277 = vpop.f32.mrb[0].mxu0
        %v4278 = vadd.f32 0.0, %v4277
        %v4279 = vpop.f32.mrb[0].mxu0
        %v4280 = vpop.f32.mrb[0].mxu0
        %v4281 = vpop.f32.mrb[0].mxu0
        %4282 = vdwg.mxu0
        %4283 = vrot.lane.b32.xlu0 %v3002, 76
        %v4284 = vpop.permute.xlu0 %4283
        %v4286 = vsel %vm1007, %v4234, 0
        %v4289 = vsel %vm1037, %v4284, 0
        %4291 = vmatprep.subr.bf16.mxu0 0
        %4292 = vmatpush1.bf16.msra.mxu0 %v4289
        %4293 = vmatprep.subr.bf16.mxu0 0
        %4294 = vmatpush1.bf16.msra.mxu0 0
        %4295 = vmatprep.subr.bf16.mxu0 0
        %4296 = vmatpush1.bf16.msra.mxu0 0
        %4297 = vmatprep.subr.bf16.mxu0 0
        %4298 = vmatpush1.bf16.msra.mxu0 0
        %4299 = vmatprep.subr.bf16.mxu0 0
        %4300 = vmatpush1.bf16.msra.mxu0 0
        %4301 = vmatprep.subr.bf16.mxu0 0
        %4302 = vmatpush1.bf16.msra.mxu0 0
        %4303 = vmatprep.subr.bf16.mxu0 0
        %4304 = vmatpush1.bf16.msra.mxu0 0
        %4305 = vmatprep.subr.bf16.mxu0 0
        %4306 = vmatpush1.bf16.msra.mxu0 0
        %4307 = vmatprep.subr.bf16.mxu0 0
        %4308 = vmatpush1.bf16.msra.mxu0 0
        %4309 = vmatprep.subr.bf16.mxu0 0
        %4310 = vmatpush1.bf16.msra.mxu0 0
        %4311 = vmatprep.subr.bf16.mxu0 0
        %4312 = vmatpush1.bf16.msra.mxu0 0
        %4313 = vmatprep.subr.bf16.mxu0 0
        %4314 = vmatpush1.bf16.msra.mxu0 0
        %4315 = vmatprep.subr.bf16.mxu0 0
        %4316 = vmatpush1.bf16.msra.mxu0 0
        %4317 = vmatprep.subr.bf16.mxu0 0
        %4318 = vmatpush1.bf16.msra.mxu0 0
        %4319 = vmatprep.subr.bf16.mxu0 0
        %4320 = vmatpush1.bf16.msra.mxu0 0
        %4321 = vmatprep.subr.bf16.mxu0 0
        %4322 = vmatpush1.bf16.msra.mxu0 0
        %4323 = vmatprep.mubr.bf16.mxu0 0
        %4324 = vmatmul.mubr.bf16.gmra.mrb[0].mxu0 %v4286
        %v4325 = vpop.f32.mrb[0].mxu0
        %v4326 = vadd.f32 0.0, %v4325
        %v4327 = vpop.f32.mrb[0].mxu0
        %v4328 = vpop.f32.mrb[0].mxu0
        %v4329 = vpop.f32.mrb[0].mxu0
        %4330 = vdwg.mxu0
        %4331 = vrot.lane.b32.xlu0 %v2999, 104
        %v4332 = vpop.permute.xlu0 %4331
        %4333 = vrot.lane.b32.xlu0 %v3001, 104
        %v4334 = vpop.permute.xlu0 %4333
        %v4336 = vsel %vm911, %v4332, 0
        %v4339 = vsel %vm911, %v4334, 0
        %4341 = vmatprep.subr.bf16.mxu0 0
        %4342 = vmatpush1.bf16.xpose.msra.mxu0 %v4339
        %4343 = vmatprep.subr.bf16.mxu0 0
        %4344 = vmatpush1.bf16.xpose.msra.mxu0 0
        %4345 = vmatprep.subr.bf16.mxu0 0
        %4346 = vmatpush1.bf16.xpose.msra.mxu0 0
        %4347 = vmatprep.subr.bf16.mxu0 0
        %4348 = vmatpush1.bf16.xpose.msra.mxu0 0
        %4349 = vmatprep.subr.bf16.mxu0 0
        %4350 = vmatpush1.bf16.xpose.msra.mxu0 0
        %4351 = vmatprep.subr.bf16.mxu0 0
        %4352 = vmatpush1.bf16.xpose.msra.mxu0 0
        %4353 = vmatprep.subr.bf16.mxu0 0
        %4354 = vmatpush1.bf16.xpose.msra.mxu0 0
        %4355 = vmatprep.subr.bf16.mxu0 0
        %4356 = vmatpush1.bf16.xpose.msra.mxu0 0
        %4357 = vmatprep.subr.bf16.mxu0 0
        %4358 = vmatpush1.bf16.xpose.msra.mxu0 0
        %4359 = vmatprep.subr.bf16.mxu0 0
        %4360 = vmatpush1.bf16.xpose.msra.mxu0 0
        %4361 = vmatprep.subr.bf16.mxu0 0
        %4362 = vmatpush1.bf16.xpose.msra.mxu0 0
        %4363 = vmatprep.subr.bf16.mxu0 0
        %4364 = vmatpush1.bf16.xpose.msra.mxu0 0
        %4365 = vmatprep.subr.bf16.mxu0 0
        %4366 = vmatpush1.bf16.xpose.msra.mxu0 0
        %4367 = vmatprep.subr.bf16.mxu0 0
        %4368 = vmatpush1.bf16.xpose.msra.mxu0 0
        %4369 = vmatprep.subr.bf16.mxu0 0
        %4370 = vmatpush1.bf16.xpose.msra.mxu0 0
        %4371 = vmatprep.subr.bf16.mxu0 0
        %4372 = vmatpush1.bf16.xpose.msra.mxu0 0
        %4373 = vmatprep.mubr.bf16.mxu0 0
        %4374 = vmatmul.mubr.bf16.gmra.mrb[0].mxu0 %v4336
        %v4375 = vpop.f32.mrb[0].mxu0
        %v4376 = vadd.f32 %v3008, %v4375
        %v4377 = vpop.f32.mrb[0].mxu0
        %v4378 = vpop.f32.mrb[0].mxu0
        %v4379 = vpop.f32.mrb[0].mxu0
        %4380 = vdwg.mxu0
        %4381 = vrot.lane.b32.xlu0 %v3000, 104
        %v4382 = vpop.permute.xlu0 %4381
        %4383 = vrot.lane.b32.xlu0 %v3002, 104
        %v4384 = vpop.permute.xlu0 %4383
        %v4386 = vsel %vm911, %v4382, 0
        %v4389 = vsel %vm911, %v4384, 0
        %4391 = vmatprep.subr.bf16.mxu0 0
        %4392 = vmatpush1.bf16.xpose.msra.mxu0 %v4389
        %4393 = vmatprep.subr.bf16.mxu0 0
        %4394 = vmatpush1.bf16.xpose.msra.mxu0 0
        %4395 = vmatprep.subr.bf16.mxu0 0
        %4396 = vmatpush1.bf16.xpose.msra.mxu0 0
        %4397 = vmatprep.subr.bf16.mxu0 0
        %4398 = vmatpush1.bf16.xpose.msra.mxu0 0
        %4399 = vmatprep.subr.bf16.mxu0 0
        %4400 = vmatpush1.bf16.xpose.msra.mxu0 0
        %4401 = vmatprep.subr.bf16.mxu0 0
        %4402 = vmatpush1.bf16.xpose.msra.mxu0 0
        %4403 = vmatprep.subr.bf16.mxu0 0
        %4404 = vmatpush1.bf16.xpose.msra.mxu0 0
        %4405 = vmatprep.subr.bf16.mxu0 0
        %4406 = vmatpush1.bf16.xpose.msra.mxu0 0
        %4407 = vmatprep.subr.bf16.mxu0 0
        %4408 = vmatpush1.bf16.xpose.msra.mxu0 0
        %4409 = vmatprep.subr.bf16.mxu0 0
        %4410 = vmatpush1.bf16.xpose.msra.mxu0 0
        %4411 = vmatprep.subr.bf16.mxu0 0
        %4412 = vmatpush1.bf16.xpose.msra.mxu0 0
        %4413 = vmatprep.subr.bf16.mxu0 0
        %4414 = vmatpush1.bf16.xpose.msra.mxu0 0
        %4415 = vmatprep.subr.bf16.mxu0 0
        %4416 = vmatpush1.bf16.xpose.msra.mxu0 0
        %4417 = vmatprep.subr.bf16.mxu0 0
        %4418 = vmatpush1.bf16.xpose.msra.mxu0 0
        %4419 = vmatprep.subr.bf16.mxu0 0
        %4420 = vmatpush1.bf16.xpose.msra.mxu0 0
        %4421 = vmatprep.subr.bf16.mxu0 0
        %4422 = vmatpush1.bf16.xpose.msra.mxu0 0
        %4423 = vmatprep.mubr.bf16.mxu0 0
        %4424 = vmatmul.mubr.bf16.gmra.mrb[0].mxu0 %v4386
        %v4425 = vpop.f32.mrb[0].mxu0
        %v4426 = vadd.f32 %v3012, %v4425
        %v4427 = vpop.f32.mrb[0].mxu0
        %v4428 = vpop.f32.mrb[0].mxu0
        %v4429 = vpop.f32.mrb[0].mxu0
        %4430 = vdwg.mxu0
        %v4431 = vsel %vm1007, %v4376, -inf
        %4432 = vmax.xlane.f32.xlu0 %v4431
        %v4433 = vpop.xlane.xlu0 %4432
        %v4434 = vsel %vm1007, %v4426, -inf
        %4435 = vmax.xlane.f32.xlu0 %v4434
        %v4436 = vpop.xlane.xlu0 %4435
        %v4437 = vsub.f32 %v4376, %v4433
        %v4438 = vsub.f32 %v4426, %v4436
        %v4439 = vmul.f32 %v4437, 1.442695
        %v4440 = vpow.pop %v4439
        %v4441 = vmul.f32 %v4438, 1.442695
        %v4442 = vpow.pop %v4441
        %v4443 = vsel %vm1007, %v4440, 0.0
        %4444 = vadd.xlane.f32.xlu0 %v4443
        %v4445 = vpop.xlane.xlu0 %4444
        %v4446 = vsel %vm1007, %v4442, 0.0
        %4447 = vadd.xlane.f32.xlu0 %v4446
        %v4448 = vpop.xlane.xlu0 %4447
        %v4449 = vrcp.pop %v4445
        %v4450 = vrcp.pop %v4448
        %v4451 = vmul.f32 %v4440, %v4449
        %v4452 = vmul.f32 %v4442, %v4450
        %v4453 = vpack.c.bf16 %v4451, %v4451
        %v4454 = vpack.c.bf16 %v4452, %v4452
        %4455 = vrot.lane.b32.xlu0 %v3001, 72
        %v4456 = vpop.permute.xlu0 %4455
        %v4458 = vsel %vm1007, %v4453, 0
        %v4461 = vsel %vm1037, %v4456, 0
        %4463 = vmatprep.subr.bf16.mxu0 0
        %4464 = vmatpush1.bf16.msra.mxu0 %v4461
        %4465 = vmatprep.subr.bf16.mxu0 0
        %4466 = vmatpush1.bf16.msra.mxu0 0
        %4467 = vmatprep.subr.bf16.mxu0 0
        %4468 = vmatpush1.bf16.msra.mxu0 0
        %4469 = vmatprep.subr.bf16.mxu0 0
        %4470 = vmatpush1.bf16.msra.mxu0 0
        %4471 = vmatprep.subr.bf16.mxu0 0
        %4472 = vmatpush1.bf16.msra.mxu0 0
        %4473 = vmatprep.subr.bf16.mxu0 0
        %4474 = vmatpush1.bf16.msra.mxu0 0
        %4475 = vmatprep.subr.bf16.mxu0 0
        %4476 = vmatpush1.bf16.msra.mxu0 0
        %4477 = vmatprep.subr.bf16.mxu0 0
        %4478 = vmatpush1.bf16.msra.mxu0 0
        %4479 = vmatprep.subr.bf16.mxu0 0
        %4480 = vmatpush1.bf16.msra.mxu0 0
        %4481 = vmatprep.subr.bf16.mxu0 0
        %4482 = vmatpush1.bf16.msra.mxu0 0
        %4483 = vmatprep.subr.bf16.mxu0 0
        %4484 = vmatpush1.bf16.msra.mxu0 0
        %4485 = vmatprep.subr.bf16.mxu0 0
        %4486 = vmatpush1.bf16.msra.mxu0 0
        %4487 = vmatprep.subr.bf16.mxu0 0
        %4488 = vmatpush1.bf16.msra.mxu0 0
        %4489 = vmatprep.subr.bf16.mxu0 0
        %4490 = vmatpush1.bf16.msra.mxu0 0
        %4491 = vmatprep.subr.bf16.mxu0 0
        %4492 = vmatpush1.bf16.msra.mxu0 0
        %4493 = vmatprep.subr.bf16.mxu0 0
        %4494 = vmatpush1.bf16.msra.mxu0 0
        %4495 = vmatprep.mubr.bf16.mxu0 0
        %4496 = vmatmul.mubr.bf16.gmra.mrb[0].mxu0 %v4458
        %v4497 = vpop.f32.mrb[0].mxu0
        %v4498 = vadd.f32 0.0, %v4497
        %v4499 = vpop.f32.mrb[0].mxu0
        %v4500 = vpop.f32.mrb[0].mxu0
        %v4501 = vpop.f32.mrb[0].mxu0
        %4502 = vdwg.mxu0
        %4503 = vrot.lane.b32.xlu0 %v3002, 72
        %v4504 = vpop.permute.xlu0 %4503
        %v4506 = vsel %vm1007, %v4454, 0
        %v4509 = vsel %vm1037, %v4504, 0
        %4511 = vmatprep.subr.bf16.mxu0 0
        %4512 = vmatpush1.bf16.msra.mxu0 %v4509
        %4513 = vmatprep.subr.bf16.mxu0 0
        %4514 = vmatpush1.bf16.msra.mxu0 0
        %4515 = vmatprep.subr.bf16.mxu0 0
        %4516 = vmatpush1.bf16.msra.mxu0 0
        %4517 = vmatprep.subr.bf16.mxu0 0
        %4518 = vmatpush1.bf16.msra.mxu0 0
        %4519 = vmatprep.subr.bf16.mxu0 0
        %4520 = vmatpush1.bf16.msra.mxu0 0
        %4521 = vmatprep.subr.bf16.mxu0 0
        %4522 = vmatpush1.bf16.msra.mxu0 0
        %4523 = vmatprep.subr.bf16.mxu0 0
        %4524 = vmatpush1.bf16.msra.mxu0 0
        %4525 = vmatprep.subr.bf16.mxu0 0
        %4526 = vmatpush1.bf16.msra.mxu0 0
        %4527 = vmatprep.subr.bf16.mxu0 0
        %4528 = vmatpush1.bf16.msra.mxu0 0
        %4529 = vmatprep.subr.bf16.mxu0 0
        %4530 = vmatpush1.bf16.msra.mxu0 0
        %4531 = vmatprep.subr.bf16.mxu0 0
        %4532 = vmatpush1.bf16.msra.mxu0 0
        %4533 = vmatprep.subr.bf16.mxu0 0
        %4534 = vmatpush1.bf16.msra.mxu0 0
        %4535 = vmatprep.subr.bf16.mxu0 0
        %4536 = vmatpush1.bf16.msra.mxu0 0
        %4537 = vmatprep.subr.bf16.mxu0 0
        %4538 = vmatpush1.bf16.msra.mxu0 0
        %4539 = vmatprep.subr.bf16.mxu0 0
        %4540 = vmatpush1.bf16.msra.mxu0 0
        %4541 = vmatprep.subr.bf16.mxu0 0
        %4542 = vmatpush1.bf16.msra.mxu0 0
        %4543 = vmatprep.mubr.bf16.mxu0 0
        %4544 = vmatmul.mubr.bf16.gmra.mrb[0].mxu0 %v4506
        %v4545 = vpop.f32.mrb[0].mxu0
        %v4546 = vadd.f32 0.0, %v4545
        %v4547 = vpop.f32.mrb[0].mxu0
        %v4548 = vpop.f32.mrb[0].mxu0
        %v4549 = vpop.f32.mrb[0].mxu0
        %4550 = vdwg.mxu0
        %4551 = vrot.lane.b32.xlu0 %v2999, 100
        %v4552 = vpop.permute.xlu0 %4551
        %4553 = vrot.lane.b32.xlu0 %v3001, 100
        %v4554 = vpop.permute.xlu0 %4553
        %v4556 = vsel %vm911, %v4552, 0
        %v4559 = vsel %vm911, %v4554, 0
        %4561 = vmatprep.subr.bf16.mxu0 0
        %4562 = vmatpush1.bf16.xpose.msra.mxu0 %v4559
        %4563 = vmatprep.subr.bf16.mxu0 0
        %4564 = vmatpush1.bf16.xpose.msra.mxu0 0
        %4565 = vmatprep.subr.bf16.mxu0 0
        %4566 = vmatpush1.bf16.xpose.msra.mxu0 0
        %4567 = vmatprep.subr.bf16.mxu0 0
        %4568 = vmatpush1.bf16.xpose.msra.mxu0 0
        %4569 = vmatprep.subr.bf16.mxu0 0
        %4570 = vmatpush1.bf16.xpose.msra.mxu0 0
        %4571 = vmatprep.subr.bf16.mxu0 0
        %4572 = vmatpush1.bf16.xpose.msra.mxu0 0
        %4573 = vmatprep.subr.bf16.mxu0 0
        %4574 = vmatpush1.bf16.xpose.msra.mxu0 0
        %4575 = vmatprep.subr.bf16.mxu0 0
        %4576 = vmatpush1.bf16.xpose.msra.mxu0 0
        %4577 = vmatprep.subr.bf16.mxu0 0
        %4578 = vmatpush1.bf16.xpose.msra.mxu0 0
        %4579 = vmatprep.subr.bf16.mxu0 0
        %4580 = vmatpush1.bf16.xpose.msra.mxu0 0
        %4581 = vmatprep.subr.bf16.mxu0 0
        %4582 = vmatpush1.bf16.xpose.msra.mxu0 0
        %4583 = vmatprep.subr.bf16.mxu0 0
        %4584 = vmatpush1.bf16.xpose.msra.mxu0 0
        %4585 = vmatprep.subr.bf16.mxu0 0
        %4586 = vmatpush1.bf16.xpose.msra.mxu0 0
        %4587 = vmatprep.subr.bf16.mxu0 0
        %4588 = vmatpush1.bf16.xpose.msra.mxu0 0
        %4589 = vmatprep.subr.bf16.mxu0 0
        %4590 = vmatpush1.bf16.xpose.msra.mxu0 0
        %4591 = vmatprep.subr.bf16.mxu0 0
        %4592 = vmatpush1.bf16.xpose.msra.mxu0 0
        %4593 = vmatprep.mubr.bf16.mxu0 0
        %4594 = vmatmul.mubr.bf16.gmra.mrb[0].mxu0 %v4556
        %v4595 = vpop.f32.mrb[0].mxu0
        %v4596 = vadd.f32 %v3008, %v4595
        %v4597 = vpop.f32.mrb[0].mxu0
        %v4598 = vpop.f32.mrb[0].mxu0
        %v4599 = vpop.f32.mrb[0].mxu0
        %4600 = vdwg.mxu0
        %4601 = vrot.lane.b32.xlu0 %v3000, 100
        %v4602 = vpop.permute.xlu0 %4601
        %4603 = vrot.lane.b32.xlu0 %v3002, 100
        %v4604 = vpop.permute.xlu0 %4603
        %v4606 = vsel %vm911, %v4602, 0
        %v4609 = vsel %vm911, %v4604, 0
        %4611 = vmatprep.subr.bf16.mxu0 0
        %4612 = vmatpush1.bf16.xpose.msra.mxu0 %v4609
        %4613 = vmatprep.subr.bf16.mxu0 0
        %4614 = vmatpush1.bf16.xpose.msra.mxu0 0
        %4615 = vmatprep.subr.bf16.mxu0 0
        %4616 = vmatpush1.bf16.xpose.msra.mxu0 0
        %4617 = vmatprep.subr.bf16.mxu0 0
        %4618 = vmatpush1.bf16.xpose.msra.mxu0 0
        %4619 = vmatprep.subr.bf16.mxu0 0
        %4620 = vmatpush1.bf16.xpose.msra.mxu0 0
        %4621 = vmatprep.subr.bf16.mxu0 0
        %4622 = vmatpush1.bf16.xpose.msra.mxu0 0
        %4623 = vmatprep.subr.bf16.mxu0 0
        %4624 = vmatpush1.bf16.xpose.msra.mxu0 0
        %4625 = vmatprep.subr.bf16.mxu0 0
        %4626 = vmatpush1.bf16.xpose.msra.mxu0 0
        %4627 = vmatprep.subr.bf16.mxu0 0
        %4628 = vmatpush1.bf16.xpose.msra.mxu0 0
        %4629 = vmatprep.subr.bf16.mxu0 0
        %4630 = vmatpush1.bf16.xpose.msra.mxu0 0
        %4631 = vmatprep.subr.bf16.mxu0 0
        %4632 = vmatpush1.bf16.xpose.msra.mxu0 0
        %4633 = vmatprep.subr.bf16.mxu0 0
        %4634 = vmatpush1.bf16.xpose.msra.mxu0 0
        %4635 = vmatprep.subr.bf16.mxu0 0
        %4636 = vmatpush1.bf16.xpose.msra.mxu0 0
        %4637 = vmatprep.subr.bf16.mxu0 0
        %4638 = vmatpush1.bf16.xpose.msra.mxu0 0
        %4639 = vmatprep.subr.bf16.mxu0 0
        %4640 = vmatpush1.bf16.xpose.msra.mxu0 0
        %4641 = vmatprep.subr.bf16.mxu0 0
        %4642 = vmatpush1.bf16.xpose.msra.mxu0 0
        %4643 = vmatprep.mubr.bf16.mxu0 0
        %4644 = vmatmul.mubr.bf16.gmra.mrb[0].mxu0 %v4606
        %v4645 = vpop.f32.mrb[0].mxu0
        %v4646 = vadd.f32 %v3012, %v4645
        %v4647 = vpop.f32.mrb[0].mxu0
        %v4648 = vpop.f32.mrb[0].mxu0
        %v4649 = vpop.f32.mrb[0].mxu0
        %4650 = vdwg.mxu0
        %v4651 = vsel %vm1007, %v4596, -inf
        %4652 = vmax.xlane.f32.xlu0 %v4651
        %v4653 = vpop.xlane.xlu0 %4652
        %v4654 = vsel %vm1007, %v4646, -inf
        %4655 = vmax.xlane.f32.xlu0 %v4654
        %v4656 = vpop.xlane.xlu0 %4655
        %v4657 = vsub.f32 %v4596, %v4653
        %v4658 = vsub.f32 %v4646, %v4656
        %v4659 = vmul.f32 %v4657, 1.442695
        %v4660 = vpow.pop %v4659
        %v4661 = vmul.f32 %v4658, 1.442695
        %v4662 = vpow.pop %v4661
        %v4663 = vsel %vm1007, %v4660, 0.0
        %4664 = vadd.xlane.f32.xlu0 %v4663
        %v4665 = vpop.xlane.xlu0 %4664
        %v4666 = vsel %vm1007, %v4662, 0.0
        %4667 = vadd.xlane.f32.xlu0 %v4666
        %v4668 = vpop.xlane.xlu0 %4667
        %v4669 = vrcp.pop %v4665
        %v4670 = vrcp.pop %v4668
        %v4671 = vmul.f32 %v4660, %v4669
        %v4672 = vmul.f32 %v4662, %v4670
        %v4673 = vpack.c.bf16 %v4671, %v4671
        %v4674 = vpack.c.bf16 %v4672, %v4672
        %4675 = vrot.lane.b32.xlu0 %v3001, 68
        %v4676 = vpop.permute.xlu0 %4675
        %v4678 = vsel %vm1007, %v4673, 0
        %v4681 = vsel %vm1037, %v4676, 0
        %4683 = vmatprep.subr.bf16.mxu0 0
        %4684 = vmatpush1.bf16.msra.mxu0 %v4681
        %4685 = vmatprep.subr.bf16.mxu0 0
        %4686 = vmatpush1.bf16.msra.mxu0 0
        %4687 = vmatprep.subr.bf16.mxu0 0
        %4688 = vmatpush1.bf16.msra.mxu0 0
        %4689 = vmatprep.subr.bf16.mxu0 0
        %4690 = vmatpush1.bf16.msra.mxu0 0
        %4691 = vmatprep.subr.bf16.mxu0 0
        %4692 = vmatpush1.bf16.msra.mxu0 0
        %4693 = vmatprep.subr.bf16.mxu0 0
        %4694 = vmatpush1.bf16.msra.mxu0 0
        %4695 = vmatprep.subr.bf16.mxu0 0
        %4696 = vmatpush1.bf16.msra.mxu0 0
        %4697 = vmatprep.subr.bf16.mxu0 0
        %4698 = vmatpush1.bf16.msra.mxu0 0
        %4699 = vmatprep.subr.bf16.mxu0 0
        %4700 = vmatpush1.bf16.msra.mxu0 0
        %4701 = vmatprep.subr.bf16.mxu0 0
        %4702 = vmatpush1.bf16.msra.mxu0 0
        %4703 = vmatprep.subr.bf16.mxu0 0
        %4704 = vmatpush1.bf16.msra.mxu0 0
        %4705 = vmatprep.subr.bf16.mxu0 0
        %4706 = vmatpush1.bf16.msra.mxu0 0
        %4707 = vmatprep.subr.bf16.mxu0 0
        %4708 = vmatpush1.bf16.msra.mxu0 0
        %4709 = vmatprep.subr.bf16.mxu0 0
        %4710 = vmatpush1.bf16.msra.mxu0 0
        %4711 = vmatprep.subr.bf16.mxu0 0
        %4712 = vmatpush1.bf16.msra.mxu0 0
        %4713 = vmatprep.subr.bf16.mxu0 0
        %4714 = vmatpush1.bf16.msra.mxu0 0
        %4715 = vmatprep.mubr.bf16.mxu0 0
        %4716 = vmatmul.mubr.bf16.gmra.mrb[0].mxu0 %v4678
        %v4717 = vpop.f32.mrb[0].mxu0
        %v4718 = vadd.f32 0.0, %v4717
        %v4719 = vpop.f32.mrb[0].mxu0
        %v4720 = vpop.f32.mrb[0].mxu0
        %v4721 = vpop.f32.mrb[0].mxu0
        %4722 = vdwg.mxu0
        %4723 = vrot.lane.b32.xlu0 %v3002, 68
        %v4724 = vpop.permute.xlu0 %4723
        %v4726 = vsel %vm1007, %v4674, 0
        %v4729 = vsel %vm1037, %v4724, 0
        %4731 = vmatprep.subr.bf16.mxu0 0
        %4732 = vmatpush1.bf16.msra.mxu0 %v4729
        %4733 = vmatprep.subr.bf16.mxu0 0
        %4734 = vmatpush1.bf16.msra.mxu0 0
        %4735 = vmatprep.subr.bf16.mxu0 0
        %4736 = vmatpush1.bf16.msra.mxu0 0
        %4737 = vmatprep.subr.bf16.mxu0 0
        %4738 = vmatpush1.bf16.msra.mxu0 0
        %4739 = vmatprep.subr.bf16.mxu0 0
        %4740 = vmatpush1.bf16.msra.mxu0 0
        %4741 = vmatprep.subr.bf16.mxu0 0
        %4742 = vmatpush1.bf16.msra.mxu0 0
        %4743 = vmatprep.subr.bf16.mxu0 0
        %4744 = vmatpush1.bf16.msra.mxu0 0
        %4745 = vmatprep.subr.bf16.mxu0 0
        %4746 = vmatpush1.bf16.msra.mxu0 0
        %4747 = vmatprep.subr.bf16.mxu0 0
        %4748 = vmatpush1.bf16.msra.mxu0 0
        %4749 = vmatprep.subr.bf16.mxu0 0
        %4750 = vmatpush1.bf16.msra.mxu0 0
        %4751 = vmatprep.subr.bf16.mxu0 0
        %4752 = vmatpush1.bf16.msra.mxu0 0
        %4753 = vmatprep.subr.bf16.mxu0 0
        %4754 = vmatpush1.bf16.msra.mxu0 0
        %4755 = vmatprep.subr.bf16.mxu0 0
        %4756 = vmatpush1.bf16.msra.mxu0 0
        %4757 = vmatprep.subr.bf16.mxu0 0
        %4758 = vmatpush1.bf16.msra.mxu0 0
        %4759 = vmatprep.subr.bf16.mxu0 0
        %4760 = vmatpush1.bf16.msra.mxu0 0
        %4761 = vmatprep.subr.bf16.mxu0 0
        %4762 = vmatpush1.bf16.msra.mxu0 0
        %4763 = vmatprep.mubr.bf16.mxu0 0
        %4764 = vmatmul.mubr.bf16.gmra.mrb[0].mxu0 %v4726
        %v4765 = vpop.f32.mrb[0].mxu0
        %v4766 = vadd.f32 0.0, %v4765
        %v4767 = vpop.f32.mrb[0].mxu0
        %v4768 = vpop.f32.mrb[0].mxu0
        %v4769 = vpop.f32.mrb[0].mxu0
        %4770 = vdwg.mxu0
        %4773 = vrot.lane.b32.xlu0 %v3398, 4
        %v4774 = vpop.permute.xlu0 %4773
        %4775 = vrot.lane.b32.xlu0 %v3446, 4
        %v4776 = vpop.permute.xlu0 %4775
        %4781 = vrot.lane.b32.xlu0 %v3618, 8
        %v4782 = vpop.permute.xlu0 %4781
        %4783 = vrot.lane.b32.xlu0 %v3666, 8
        %v4784 = vpop.permute.xlu0 %4783
        %4789 = vrot.lane.b32.xlu0 %v3838, 12
        %v4790 = vpop.permute.xlu0 %4789
        %4791 = vrot.lane.b32.xlu0 %v3886, 12
        %v4792 = vpop.permute.xlu0 %4791
        %4797 = vrot.lane.b32.xlu0 %v4058, 16
        %v4798 = vpop.permute.xlu0 %4797
        %4799 = vrot.lane.b32.xlu0 %v4106, 16
        %v4800 = vpop.permute.xlu0 %4799
        %4805 = vrot.lane.b32.xlu0 %v4278, 20
        %v4806 = vpop.permute.xlu0 %4805
        %4807 = vrot.lane.b32.xlu0 %v4326, 20
        %v4808 = vpop.permute.xlu0 %4807
        %4813 = vrot.lane.b32.xlu0 %v4498, 24
        %v4814 = vpop.permute.xlu0 %4813
        %4815 = vrot.lane.b32.xlu0 %v4546, 24
        %v4816 = vpop.permute.xlu0 %4815
        %4821 = vrot.lane.b32.xlu0 %v4718, 28
        %v4822 = vpop.permute.xlu0 %4821
        %4823 = vrot.lane.b32.xlu0 %v4766, 28
        %v4824 = vpop.permute.xlu0 %4823
        %v4827 = vsel %vm911, %v3175, %v4774
        %v4828 = vsel %vm911, %v3224, %v4776
        %v4829 = vsel %vm1007, %v4827, %v4782
        %v4830 = vsel %vm1007, %v4828, %v4784
        %v4831 = vsel %vm2731, %v4829, %v4790
        %v4832 = vsel %vm2731, %v4830, %v4792
        %v4833 = vsel %vm2734, %v4831, %v4798
        %v4834 = vsel %vm2734, %v4832, %v4800
        %v4835 = vsel %vm2737, %v4833, %v4806
        %v4836 = vsel %vm2737, %v4834, %v4808
        %v4837 = vsel %vm2740, %v4835, %v4814
        %v4838 = vsel %vm2740, %v4836, %v4816
        %v4839 = vsel %vm2743, %v4837, %v4822
        %v4840 = vsel %vm2743, %v4838, %v4824
        %v4841 = vpack.c.bf16 %v4840, %v4839
        %v4843 = vlaneseq
        %v4844 = vshrl.u32 %v4843, 7
        %v4845 = vsub.s32 0, %v4844
        %v4846 = vrot.slane %v2996, %v4845
        %v4852 = vunpack.c.l.b16 %v2992
        %v4853 = vunpack.c.l.b16 %v2993
        %v4854 = vunpack.c.l.b16 %v2994
        %v4855 = vunpack.c.l.b16 %v2995
        %v4856 = vpack.c.b16 %v4853, %v4852
        %v4857 = vpack.c.b16 %v4855, %v4854
        %v4861 = vsel %vm840, %v4841, 0
        %4863 = vmatprep.subr.bf16.mxu0 0
        %4864 = vmatpush1.bf16.msra.mxu0 %v4856
        %4865 = vmatprep.subr.bf16.mxu0 0
        %4866 = vmatpush1.bf16.msra.mxu0 %v4857
        %4867 = vmatprep.subr.bf16.mxu0 0
        %4868 = vmatpush1.bf16.msra.mxu0 0
        %4869 = vmatprep.subr.bf16.mxu0 0
        %4870 = vmatpush1.bf16.msra.mxu0 0
        %4871 = vmatprep.subr.bf16.mxu0 0
        %4872 = vmatpush1.bf16.msra.mxu0 0
        %4873 = vmatprep.subr.bf16.mxu0 0
        %4874 = vmatpush1.bf16.msra.mxu0 0
        %4875 = vmatprep.subr.bf16.mxu0 0
        %4876 = vmatpush1.bf16.msra.mxu0 0
        %4877 = vmatprep.subr.bf16.mxu0 0
        %4878 = vmatpush1.bf16.msra.mxu0 0
        %4879 = vmatprep.subr.bf16.mxu0 0
        %4880 = vmatpush1.bf16.msra.mxu0 0
        %4881 = vmatprep.subr.bf16.mxu0 0
        %4882 = vmatpush1.bf16.msra.mxu0 0
        %4883 = vmatprep.subr.bf16.mxu0 0
        %4884 = vmatpush1.bf16.msra.mxu0 0
        %4885 = vmatprep.subr.bf16.mxu0 0
        %4886 = vmatpush1.bf16.msra.mxu0 0
        %4887 = vmatprep.subr.bf16.mxu0 0
        %4888 = vmatpush1.bf16.msra.mxu0 0
        %4889 = vmatprep.subr.bf16.mxu0 0
        %4890 = vmatpush1.bf16.msra.mxu0 0
        %4891 = vmatprep.subr.bf16.mxu0 0
        %4892 = vmatpush1.bf16.msra.mxu0 0
        %4893 = vmatprep.subr.bf16.mxu0 0
        %4894 = vmatpush1.bf16.msra.mxu0 0
        %4895 = vmatprep.mubr.bf16.mxu0 0
        %4896 = vmatmul.mubr.bf16.gmra.mrb[0].mxu0 %v4861
        %v4897 = vpop.f32.mrb[0].mxu0
        %v4898 = vadd.f32 %v4846, %v4897
        %v4899 = vpop.f32.mrb[0].mxu0
        %v4900 = vpop.f32.mrb[0].mxu0
        %v4901 = vadd.f32 %v4846, %v4900
        %v4902 = vpop.f32.mrb[0].mxu0
        %4903 = vdwg.mxu0
        %v4904 = vadd.f32 %v2854, %v4898
        %v4905 = vadd.f32 %v2855, %v4901
        %v4906 = vld [vmem:[%s20] sm:$0x1]
        %v4907 = vld [vmem:[%s21] sm:$0x1]
        %v4908 = vsel %vm840, %v4904, 0.0
        %4909 = vadd.xlane.f32.xlu0 %v4908
        %v4910 = vpop.xlane.xlu0 %4909
        %v4911 = vsel %vm840, %v4905, 0.0
        %4912 = vadd.xlane.f32.xlu0 %v4911
        %v4913 = vpop.xlane.xlu0 %4912
        %v4914 = vmul.f32 %v4910, %v2819
        %v4915 = vmul.f32 %v4913, %v2819
        %v4916 = vsub.f32 %v4904, %v4914
        %v4917 = vsub.f32 %v4905, %v4915
        %v4918 = vmul.f32 %v4916, %v4916
        %v4919 = vmul.f32 %v4917, %v4917
        %v4920 = vsel %vm840, %v4918, 0.0
        %4921 = vadd.xlane.f32.xlu0 %v4920
        %v4922 = vpop.xlane.xlu0 %4921
        %v4923 = vsel %vm840, %v4919, 0.0
        %4924 = vadd.xlane.f32.xlu0 %v4923
        %v4925 = vpop.xlane.xlu0 %4924
        %v4926 = vmul.f32 %v4922, %v2819
        %v4927 = vmul.f32 %v4925, %v2819
        %v4928 = vadd.f32 %v4926, 1e-05
        %v4929 = vadd.f32 %v4927, 1e-05
        %v4930 = vrsqrt.pop %v4928
        %v4931 = vrsqrt.pop %v4929
        %v4932 = vmul.f32 %v4916, %v4930
        %v4933 = vmul.f32 %v4917, %v4931
        %v4935 = vlaneseq
        %v4936 = vshrl.u32 %v4935, 7
        %v4937 = vsub.s32 0, %v4936
        %v4938 = vrot.slane %v4906, %v4937
        %v4940 = vmul.f32 %v4932, %v4938
        %v4941 = vmul.f32 %v4933, %v4938
        %v4943 = vlaneseq
        %v4944 = vshrl.u32 %v4943, 7
        %v4945 = vsub.s32 0, %v4944
        %v4946 = vrot.slane %v4907, %v4945
        %v4948 = vadd.f32 %v4940, %v4946
        %v4949 = vadd.f32 %v4941, %v4946
        %v4950 = vpack.c.bf16 %v4949, %v4948
        %v4951 = vld [vmem:[%s14] sm:$0xff]
        %v4952 = vld [vmem:[%s14 + $0x8] sm:$0xff]
        %v4953 = vld [vmem:[%s14 + $0x10] sm:$0xff]
        %v4954 = vld [vmem:[%s14 + $0x18] sm:$0xff]
        %v4955 = vld [vmem:[%s14 + $0x20] sm:$0xff]
        %v4956 = vld [vmem:[%s14 + $0x28] sm:$0xff]
        %v4957 = vld [vmem:[%s14 + $0x30] sm:$0xff]
        %v4958 = vld [vmem:[%s14 + $0x38] sm:$0xff]
        %v4959 = vld [vmem:[%s14 + $0x40] sm:$0xff]
        %v4960 = vld [vmem:[%s14 + $0x48] sm:$0xff]
        %v4961 = vld [vmem:[%s14 + $0x50] sm:$0xff]
        %v4962 = vld [vmem:[%s14 + $0x58] sm:$0xff]
        %v4963 = vld [vmem:[%s14 + $0x60] sm:$0xff]
        %v4964 = vld [vmem:[%s14 + $0x68] sm:$0xff]
        %v4965 = vld [vmem:[%s14 + $0x70] sm:$0xff]
        %v4966 = vld [vmem:[%s14 + $0x78] sm:$0xff]
        %v4967 = vld [vmem:[%s14 + $0x80] sm:$0xff]
        %v4968 = vld [vmem:[%s14 + $0x88] sm:$0xff]
        %v4969 = vld [vmem:[%s14 + $0x90] sm:$0xff]
        %v4970 = vld [vmem:[%s14 + $0x98] sm:$0xff]
        %v4971 = vld [vmem:[%s14 + $0xa0] sm:$0xff]
        %v4972 = vld [vmem:[%s14 + $0xa8] sm:$0xff]
        %v4973 = vld [vmem:[%s14 + $0xb0] sm:$0xff]
        %v4974 = vld [vmem:[%s14 + $0xb8] sm:$0xff]
        %v4975 = vld [vmem:[%s14 + $0xc0] sm:$0xff]
        %v4976 = vld [vmem:[%s14 + $0xc8] sm:$0xff]
        %v4977 = vld [vmem:[%s14 + $0xd0] sm:$0xff]
        %v4978 = vld [vmem:[%s14 + $0xd8] sm:$0xff]
        %v4979 = vld [vmem:[%s14 + $0xe0] sm:$0xff]
        %v4980 = vld [vmem:[%s14 + $0xe8] sm:$0xff]
        %v4981 = vld [vmem:[%s14 + $0xf0] sm:$0xff]
        %v4982 = vld [vmem:[%s14 + $0xf8] sm:$0xff]
        %v4983 = vld [vmem:[%s15] sm:$0xff]
        %v4984 = vld [vmem:[%s15 + $0x8] sm:$0xff]
        %v4987 = vlaneseq
        %v4988 = vshrl.u32 %v4987, 7
        %v4989 = vsub.s32 0, %v4988
        %v4990 = vrot.slane %v4983, %v4989
        %v4991 = vlaneseq
        %v4992 = vshrl.u32 %v4991, 7
        %v4993 = vsub.s32 1, %v4992
        %v4994 = vrot.slane %v4983, %v4993
        %v4995 = vlaneseq
        %v4996 = vshrl.u32 %v4995, 7
        %v4997 = vsub.s32 2, %v4996
        %v4998 = vrot.slane %v4983, %v4997
        %v4999 = vlaneseq
        %v5000 = vshrl.u32 %v4999, 7
        %v5001 = vsub.s32 3, %v5000
        %v5002 = vrot.slane %v4983, %v5001
        %v5003 = vlaneseq
        %v5004 = vshrl.u32 %v5003, 7
        %v5005 = vsub.s32 4, %v5004
        %v5006 = vrot.slane %v4983, %v5005
        %v5007 = vlaneseq
        %v5008 = vshrl.u32 %v5007, 7
        %v5009 = vsub.s32 5, %v5008
        %v5010 = vrot.slane %v4983, %v5009
        %v5011 = vlaneseq
        %v5012 = vshrl.u32 %v5011, 7
        %v5013 = vsub.s32 6, %v5012
        %v5014 = vrot.slane %v4983, %v5013
        %v5015 = vlaneseq
        %v5016 = vshrl.u32 %v5015, 7
        %v5017 = vsub.s32 7, %v5016
        %v5018 = vrot.slane %v4983, %v5017
        %v5019 = vlaneseq
        %v5020 = vshrl.u32 %v5019, 7
        %v5021 = vsub.s32 0, %v5020
        %v5022 = vrot.slane %v4984, %v5021
        %v5023 = vlaneseq
        %v5024 = vshrl.u32 %v5023, 7
        %v5025 = vsub.s32 1, %v5024
        %v5026 = vrot.slane %v4984, %v5025
        %v5027 = vlaneseq
        %v5028 = vshrl.u32 %v5027, 7
        %v5029 = vsub.s32 2, %v5028
        %v5030 = vrot.slane %v4984, %v5029
        %v5031 = vlaneseq
        %v5032 = vshrl.u32 %v5031, 7
        %v5033 = vsub.s32 3, %v5032
        %v5034 = vrot.slane %v4984, %v5033
        %v5035 = vlaneseq
        %v5036 = vshrl.u32 %v5035, 7
        %v5037 = vsub.s32 4, %v5036
        %v5038 = vrot.slane %v4984, %v5037
        %v5039 = vlaneseq
        %v5040 = vshrl.u32 %v5039, 7
        %v5041 = vsub.s32 5, %v5040
        %v5042 = vrot.slane %v4984, %v5041
        %v5043 = vlaneseq
        %v5044 = vshrl.u32 %v5043, 7
        %v5045 = vsub.s32 6, %v5044
        %v5046 = vrot.slane %v4984, %v5045
        %v5047 = vlaneseq
        %v5048 = vshrl.u32 %v5047, 7
        %v5049 = vsub.s32 7, %v5048
        %v5050 = vrot.slane %v4984, %v5049
        %v5099 = vunpack.c.l.b16 %v4951
        %v5100 = vunpack.c.h.b16 %v4951
        %v5101 = vunpack.c.l.b16 %v4952
        %v5102 = vunpack.c.h.b16 %v4952
        %v5103 = vunpack.c.l.b16 %v4953
        %v5104 = vunpack.c.h.b16 %v4953
        %v5105 = vunpack.c.l.b16 %v4954
        %v5106 = vunpack.c.h.b16 %v4954
        %v5107 = vunpack.c.l.b16 %v4955
        %v5108 = vunpack.c.h.b16 %v4955
        %v5109 = vunpack.c.l.b16 %v4956
        %v5110 = vunpack.c.h.b16 %v4956
        %v5111 = vunpack.c.l.b16 %v4957
        %v5112 = vunpack.c.h.b16 %v4957
        %v5113 = vunpack.c.l.b16 %v4958
        %v5114 = vunpack.c.h.b16 %v4958
        %v5115 = vunpack.c.l.b16 %v4959
        %v5116 = vunpack.c.h.b16 %v4959
        %v5117 = vunpack.c.l.b16 %v4960
        %v5118 = vunpack.c.h.b16 %v4960
        %v5119 = vunpack.c.l.b16 %v4961
        %v5120 = vunpack.c.h.b16 %v4961
        %v5121 = vunpack.c.l.b16 %v4962
        %v5122 = vunpack.c.h.b16 %v4962
        %v5123 = vunpack.c.l.b16 %v4963
        %v5124 = vunpack.c.h.b16 %v4963
        %v5125 = vunpack.c.l.b16 %v4964
        %v5126 = vunpack.c.h.b16 %v4964
        %v5127 = vunpack.c.l.b16 %v4965
        %v5128 = vunpack.c.h.b16 %v4965
        %v5129 = vunpack.c.l.b16 %v4966
        %v5130 = vunpack.c.h.b16 %v4966
        %v5131 = vunpack.c.l.b16 %v4967
        %v5132 = vunpack.c.h.b16 %v4967
        %v5133 = vunpack.c.l.b16 %v4968
        %v5134 = vunpack.c.h.b16 %v4968
        %v5135 = vunpack.c.l.b16 %v4969
        %v5136 = vunpack.c.h.b16 %v4969
        %v5137 = vunpack.c.l.b16 %v4970
        %v5138 = vunpack.c.h.b16 %v4970
        %v5139 = vunpack.c.l.b16 %v4971
        %v5140 = vunpack.c.h.b16 %v4971
        %v5141 = vunpack.c.l.b16 %v4972
        %v5142 = vunpack.c.h.b16 %v4972
        %v5143 = vunpack.c.l.b16 %v4973
        %v5144 = vunpack.c.h.b16 %v4973
        %v5145 = vunpack.c.l.b16 %v4974
        %v5146 = vunpack.c.h.b16 %v4974
        %v5147 = vunpack.c.l.b16 %v4975
        %v5148 = vunpack.c.h.b16 %v4975
        %v5149 = vunpack.c.l.b16 %v4976
        %v5150 = vunpack.c.h.b16 %v4976
        %v5151 = vunpack.c.l.b16 %v4977
        %v5152 = vunpack.c.h.b16 %v4977
        %v5153 = vunpack.c.l.b16 %v4978
        %v5154 = vunpack.c.h.b16 %v4978
        %v5155 = vunpack.c.l.b16 %v4979
        %v5156 = vunpack.c.h.b16 %v4979
        %v5157 = vunpack.c.l.b16 %v4980
        %v5158 = vunpack.c.h.b16 %v4980
        %v5159 = vunpack.c.l.b16 %v4981
        %v5160 = vunpack.c.h.b16 %v4981
        %v5161 = vunpack.c.l.b16 %v4982
        %v5162 = vunpack.c.h.b16 %v4982
        %v5163 = vpack.c.b16 %v5115, %v5099
        %v5164 = vpack.c.b16 %v5116, %v5100
        %v5165 = vpack.c.b16 %v5117, %v5101
        %v5166 = vpack.c.b16 %v5118, %v5102
        %v5167 = vpack.c.b16 %v5119, %v5103
        %v5168 = vpack.c.b16 %v5120, %v5104
        %v5169 = vpack.c.b16 %v5121, %v5105
        %v5170 = vpack.c.b16 %v5122, %v5106
        %v5171 = vpack.c.b16 %v5123, %v5107
        %v5172 = vpack.c.b16 %v5124, %v5108
        %v5173 = vpack.c.b16 %v5125, %v5109
        %v5174 = vpack.c.b16 %v5126, %v5110
        %v5175 = vpack.c.b16 %v5127, %v5111
        %v5176 = vpack.c.b16 %v5128, %v5112
        %v5177 = vpack.c.b16 %v5129, %v5113
        %v5178 = vpack.c.b16 %v5130, %v5114
        %v5179 = vpack.c.b16 %v5147, %v5131
        %v5180 = vpack.c.b16 %v5148, %v5132
        %v5181 = vpack.c.b16 %v5149, %v5133
        %v5182 = vpack.c.b16 %v5150, %v5134
        %v5183 = vpack.c.b16 %v5151, %v5135
        %v5184 = vpack.c.b16 %v5152, %v5136
        %v5185 = vpack.c.b16 %v5153, %v5137
        %v5186 = vpack.c.b16 %v5154, %v5138
        %v5187 = vpack.c.b16 %v5155, %v5139
        %v5188 = vpack.c.b16 %v5156, %v5140
        %v5189 = vpack.c.b16 %v5157, %v5141
        %v5190 = vpack.c.b16 %v5158, %v5142
        %v5191 = vpack.c.b16 %v5159, %v5143
        %v5192 = vpack.c.b16 %v5160, %v5144
        %v5193 = vpack.c.b16 %v5161, %v5145
        %v5194 = vpack.c.b16 %v5162, %v5146
        %v5228 = vsel %vm840, %v4950, 0
        %5230 = vmatprep.subr.bf16.mxu0 %v5164
        %5231 = vmatpush1.bf16.msra.mxu0 %v5163
        %5232 = vmatprep.subr.bf16.mxu0 %v5180
        %5233 = vmatpush1.bf16.msra.mxu0 %v5179
        %5234 = vmatprep.subr.bf16.mxu0 0
        %5235 = vmatpush1.bf16.msra.mxu0 0
        %5236 = vmatprep.subr.bf16.mxu0 0
        %5237 = vmatpush1.bf16.msra.mxu0 0
        %5238 = vmatprep.subr.bf16.mxu0 0
        %5239 = vmatpush1.bf16.msra.mxu0 0
        %5240 = vmatprep.subr.bf16.mxu0 0
        %5241 = vmatpush1.bf16.msra.mxu0 0
        %5242 = vmatprep.subr.bf16.mxu0 0
        %5243 = vmatpush1.bf16.msra.mxu0 0
        %5244 = vmatprep.subr.bf16.mxu0 0
        %5245 = vmatpush1.bf16.msra.mxu0 0
        %5246 = vmatprep.subr.bf16.mxu0 0
        %5247 = vmatpush1.bf16.msra.mxu0 0
        %5248 = vmatprep.subr.bf16.mxu0 0
        %5249 = vmatpush1.bf16.msra.mxu0 0
        %5250 = vmatprep.subr.bf16.mxu0 0
        %5251 = vmatpush1.bf16.msra.mxu0 0
        %5252 = vmatprep.subr.bf16.mxu0 0
        %5253 = vmatpush1.bf16.msra.mxu0 0
        %5254 = vmatprep.subr.bf16.mxu0 0
        %5255 = vmatpush1.bf16.msra.mxu0 0
        %5256 = vmatprep.subr.bf16.mxu0 0
        %5257 = vmatpush1.bf16.msra.mxu0 0
        %5258 = vmatprep.subr.bf16.mxu0 0
        %5259 = vmatpush1.bf16.msra.mxu0 0
        %5260 = vmatprep.subr.bf16.mxu0 0
        %5261 = vmatpush1.bf16.msra.mxu0 0
        %5262 = vmatprep.mubr.bf16.mxu0 0
        %5263 = vmatmul.mubr.bf16.gmra.mrb[0].mxu0 %v5228
        %v5264 = vpop.f32.mrb[0].mxu0
        %v5265 = vadd.f32 %v4990, %v5264
        %v5266 = vpop.f32.mrb[0].mxu0
        %v5267 = vadd.f32 %v4994, %v5266
        %v5268 = vpop.f32.mrb[0].mxu0
        %v5269 = vadd.f32 %v4990, %v5268
        %v5270 = vpop.f32.mrb[0].mxu0
        %v5271 = vadd.f32 %v4994, %v5270
        %5272 = vdwg.mxu0
        %5273 = vmatprep.subr.bf16.mxu0 %v5166
        %5274 = vmatpush1.bf16.msra.mxu0 %v5165
        %5275 = vmatprep.subr.bf16.mxu0 %v5182
        %5276 = vmatpush1.bf16.msra.mxu0 %v5181
        %5277 = vmatprep.subr.bf16.mxu0 0
        %5278 = vmatpush1.bf16.msra.mxu0 0
        %5279 = vmatprep.subr.bf16.mxu0 0
        %5280 = vmatpush1.bf16.msra.mxu0 0
        %5281 = vmatprep.subr.bf16.mxu0 0
        %5282 = vmatpush1.bf16.msra.mxu0 0
        %5283 = vmatprep.subr.bf16.mxu0 0
        %5284 = vmatpush1.bf16.msra.mxu0 0
        %5285 = vmatprep.subr.bf16.mxu0 0
        %5286 = vmatpush1.bf16.msra.mxu0 0
        %5287 = vmatprep.subr.bf16.mxu0 0
        %5288 = vmatpush1.bf16.msra.mxu0 0
        %5289 = vmatprep.subr.bf16.mxu0 0
        %5290 = vmatpush1.bf16.msra.mxu0 0
        %5291 = vmatprep.subr.bf16.mxu0 0
        %5292 = vmatpush1.bf16.msra.mxu0 0
        %5293 = vmatprep.subr.bf16.mxu0 0
        %5294 = vmatpush1.bf16.msra.mxu0 0
        %5295 = vmatprep.subr.bf16.mxu0 0
        %5296 = vmatpush1.bf16.msra.mxu0 0
        %5297 = vmatprep.subr.bf16.mxu0 0
        %5298 = vmatpush1.bf16.msra.mxu0 0
        %5299 = vmatprep.subr.bf16.mxu0 0
        %5300 = vmatpush1.bf16.msra.mxu0 0
        %5301 = vmatprep.subr.bf16.mxu0 0
        %5302 = vmatpush1.bf16.msra.mxu0 0
        %5303 = vmatprep.subr.bf16.mxu0 0
        %5304 = vmatpush1.bf16.msra.mxu0 0
        %5305 = vmatprep.mubr.bf16.mxu0 0
        %5306 = vmatmul.mubr.bf16.gmra.mrb[0].mxu0 %v5228
        %v5307 = vpop.f32.mrb[0].mxu0
        %v5308 = vadd.f32 %v4998, %v5307
        %v5309 = vpop.f32.mrb[0].mxu0
        %v5310 = vadd.f32 %v5002, %v5309
        %v5311 = vpop.f32.mrb[0].mxu0
        %v5312 = vadd.f32 %v4998, %v5311
        %v5313 = vpop.f32.mrb[0].mxu0
        %v5314 = vadd.f32 %v5002, %v5313
        %5315 = vdwg.mxu0
        %5316 = vmatprep.subr.bf16.mxu0 %v5168
        %5317 = vmatpush1.bf16.msra.mxu0 %v5167
        %5318 = vmatprep.subr.bf16.mxu0 %v5184
        %5319 = vmatpush1.bf16.msra.mxu0 %v5183
        %5320 = vmatprep.subr.bf16.mxu0 0
        %5321 = vmatpush1.bf16.msra.mxu0 0
        %5322 = vmatprep.subr.bf16.mxu0 0
        %5323 = vmatpush1.bf16.msra.mxu0 0
        %5324 = vmatprep.subr.bf16.mxu0 0
        %5325 = vmatpush1.bf16.msra.mxu0 0
        %5326 = vmatprep.subr.bf16.mxu0 0
        %5327 = vmatpush1.bf16.msra.mxu0 0
        %5328 = vmatprep.subr.bf16.mxu0 0
        %5329 = vmatpush1.bf16.msra.mxu0 0
        %5330 = vmatprep.subr.bf16.mxu0 0
        %5331 = vmatpush1.bf16.msra.mxu0 0
        %5332 = vmatprep.subr.bf16.mxu0 0
        %5333 = vmatpush1.bf16.msra.mxu0 0
        %5334 = vmatprep.subr.bf16.mxu0 0
        %5335 = vmatpush1.bf16.msra.mxu0 0
        %5336 = vmatprep.subr.bf16.mxu0 0
        %5337 = vmatpush1.bf16.msra.mxu0 0
        %5338 = vmatprep.subr.bf16.mxu0 0
        %5339 = vmatpush1.bf16.msra.mxu0 0
        %5340 = vmatprep.subr.bf16.mxu0 0
        %5341 = vmatpush1.bf16.msra.mxu0 0
        %5342 = vmatprep.subr.bf16.mxu0 0
        %5343 = vmatpush1.bf16.msra.mxu0 0
        %5344 = vmatprep.subr.bf16.mxu0 0
        %5345 = vmatpush1.bf16.msra.mxu0 0
        %5346 = vmatprep.subr.bf16.mxu0 0
        %5347 = vmatpush1.bf16.msra.mxu0 0
        %5348 = vmatprep.mubr.bf16.mxu0 0
        %5349 = vmatmul.mubr.bf16.gmra.mrb[0].mxu0 %v5228
        %v5350 = vpop.f32.mrb[0].mxu0
        %v5351 = vadd.f32 %v5006, %v5350
        %v5352 = vpop.f32.mrb[0].mxu0
        %v5353 = vadd.f32 %v5010, %v5352
        %v5354 = vpop.f32.mrb[0].mxu0
        %v5355 = vadd.f32 %v5006, %v5354
        %v5356 = vpop.f32.mrb[0].mxu0
        %v5357 = vadd.f32 %v5010, %v5356
        %5358 = vdwg.mxu0
        %5359 = vmatprep.subr.bf16.mxu0 %v5170
        %5360 = vmatpush1.bf16.msra.mxu0 %v5169
        %5361 = vmatprep.subr.bf16.mxu0 %v5186
        %5362 = vmatpush1.bf16.msra.mxu0 %v5185
        %5363 = vmatprep.subr.bf16.mxu0 0
        %5364 = vmatpush1.bf16.msra.mxu0 0
        %5365 = vmatprep.subr.bf16.mxu0 0
        %5366 = vmatpush1.bf16.msra.mxu0 0
        %5367 = vmatprep.subr.bf16.mxu0 0
        %5368 = vmatpush1.bf16.msra.mxu0 0
        %5369 = vmatprep.subr.bf16.mxu0 0
        %5370 = vmatpush1.bf16.msra.mxu0 0
        %5371 = vmatprep.subr.bf16.mxu0 0
        %5372 = vmatpush1.bf16.msra.mxu0 0
        %5373 = vmatprep.subr.bf16.mxu0 0
        %5374 = vmatpush1.bf16.msra.mxu0 0
        %5375 = vmatprep.subr.bf16.mxu0 0
        %5376 = vmatpush1.bf16.msra.mxu0 0
        %5377 = vmatprep.subr.bf16.mxu0 0
        %5378 = vmatpush1.bf16.msra.mxu0 0
        %5379 = vmatprep.subr.bf16.mxu0 0
        %5380 = vmatpush1.bf16.msra.mxu0 0
        %5381 = vmatprep.subr.bf16.mxu0 0
        %5382 = vmatpush1.bf16.msra.mxu0 0
        %5383 = vmatprep.subr.bf16.mxu0 0
        %5384 = vmatpush1.bf16.msra.mxu0 0
        %5385 = vmatprep.subr.bf16.mxu0 0
        %5386 = vmatpush1.bf16.msra.mxu0 0
        %5387 = vmatprep.subr.bf16.mxu0 0
        %5388 = vmatpush1.bf16.msra.mxu0 0
        %5389 = vmatprep.subr.bf16.mxu0 0
        %5390 = vmatpush1.bf16.msra.mxu0 0
        %5391 = vmatprep.mubr.bf16.mxu0 0
        %5392 = vmatmul.mubr.bf16.gmra.mrb[0].mxu0 %v5228
        %v5393 = vpop.f32.mrb[0].mxu0
        %v5394 = vadd.f32 %v5014, %v5393
        %v5395 = vpop.f32.mrb[0].mxu0
        %v5396 = vadd.f32 %v5018, %v5395
        %v5397 = vpop.f32.mrb[0].mxu0
        %v5398 = vadd.f32 %v5014, %v5397
        %v5399 = vpop.f32.mrb[0].mxu0
        %v5400 = vadd.f32 %v5018, %v5399
        %5401 = vdwg.mxu0
        %5402 = vmatprep.subr.bf16.mxu0 %v5172
        %5403 = vmatpush1.bf16.msra.mxu0 %v5171
        %5404 = vmatprep.subr.bf16.mxu0 %v5188
        %5405 = vmatpush1.bf16.msra.mxu0 %v5187
        %5406 = vmatprep.subr.bf16.mxu0 0
        %5407 = vmatpush1.bf16.msra.mxu0 0
        %5408 = vmatprep.subr.bf16.mxu0 0
        %5409 = vmatpush1.bf16.msra.mxu0 0
        %5410 = vmatprep.subr.bf16.mxu0 0
        %5411 = vmatpush1.bf16.msra.mxu0 0
        %5412 = vmatprep.subr.bf16.mxu0 0
        %5413 = vmatpush1.bf16.msra.mxu0 0
        %5414 = vmatprep.subr.bf16.mxu0 0
        %5415 = vmatpush1.bf16.msra.mxu0 0
        %5416 = vmatprep.subr.bf16.mxu0 0
        %5417 = vmatpush1.bf16.msra.mxu0 0
        %5418 = vmatprep.subr.bf16.mxu0 0
        %5419 = vmatpush1.bf16.msra.mxu0 0
        %5420 = vmatprep.subr.bf16.mxu0 0
        %5421 = vmatpush1.bf16.msra.mxu0 0
        %5422 = vmatprep.subr.bf16.mxu0 0
        %5423 = vmatpush1.bf16.msra.mxu0 0
        %5424 = vmatprep.subr.bf16.mxu0 0
        %5425 = vmatpush1.bf16.msra.mxu0 0
        %5426 = vmatprep.subr.bf16.mxu0 0
        %5427 = vmatpush1.bf16.msra.mxu0 0
        %5428 = vmatprep.subr.bf16.mxu0 0
        %5429 = vmatpush1.bf16.msra.mxu0 0
        %5430 = vmatprep.subr.bf16.mxu0 0
        %5431 = vmatpush1.bf16.msra.mxu0 0
        %5432 = vmatprep.subr.bf16.mxu0 0
        %5433 = vmatpush1.bf16.msra.mxu0 0
        %5434 = vmatprep.mubr.bf16.mxu0 0
        %5435 = vmatmul.mubr.bf16.gmra.mrb[0].mxu0 %v5228
        %v5436 = vpop.f32.mrb[0].mxu0
        %v5437 = vadd.f32 %v5022, %v5436
        %v5438 = vpop.f32.mrb[0].mxu0
        %v5439 = vadd.f32 %v5026, %v5438
        %v5440 = vpop.f32.mrb[0].mxu0
        %v5441 = vadd.f32 %v5022, %v5440
        %v5442 = vpop.f32.mrb[0].mxu0
        %v5443 = vadd.f32 %v5026, %v5442
        %5444 = vdwg.mxu0
        %5445 = vmatprep.subr.bf16.mxu0 %v5174
        %5446 = vmatpush1.bf16.msra.mxu0 %v5173
        %5447 = vmatprep.subr.bf16.mxu0 %v5190
        %5448 = vmatpush1.bf16.msra.mxu0 %v5189
        %5449 = vmatprep.subr.bf16.mxu0 0
        %5450 = vmatpush1.bf16.msra.mxu0 0
        %5451 = vmatprep.subr.bf16.mxu0 0
        %5452 = vmatpush1.bf16.msra.mxu0 0
        %5453 = vmatprep.subr.bf16.mxu0 0
        %5454 = vmatpush1.bf16.msra.mxu0 0
        %5455 = vmatprep.subr.bf16.mxu0 0
        %5456 = vmatpush1.bf16.msra.mxu0 0
        %5457 = vmatprep.subr.bf16.mxu0 0
        %5458 = vmatpush1.bf16.msra.mxu0 0
        %5459 = vmatprep.subr.bf16.mxu0 0
        %5460 = vmatpush1.bf16.msra.mxu0 0
        %5461 = vmatprep.subr.bf16.mxu0 0
        %5462 = vmatpush1.bf16.msra.mxu0 0
        %5463 = vmatprep.subr.bf16.mxu0 0
        %5464 = vmatpush1.bf16.msra.mxu0 0
        %5465 = vmatprep.subr.bf16.mxu0 0
        %5466 = vmatpush1.bf16.msra.mxu0 0
        %5467 = vmatprep.subr.bf16.mxu0 0
        %5468 = vmatpush1.bf16.msra.mxu0 0
        %5469 = vmatprep.subr.bf16.mxu0 0
        %5470 = vmatpush1.bf16.msra.mxu0 0
        %5471 = vmatprep.subr.bf16.mxu0 0
        %5472 = vmatpush1.bf16.msra.mxu0 0
        %5473 = vmatprep.subr.bf16.mxu0 0
        %5474 = vmatpush1.bf16.msra.mxu0 0
        %5475 = vmatprep.subr.bf16.mxu0 0
        %5476 = vmatpush1.bf16.msra.mxu0 0
        %5477 = vmatprep.mubr.bf16.mxu0 0
        %5478 = vmatmul.mubr.bf16.gmra.mrb[0].mxu0 %v5228
        %v5479 = vpop.f32.mrb[0].mxu0
        %v5480 = vadd.f32 %v5030, %v5479
        %v5481 = vpop.f32.mrb[0].mxu0
        %v5482 = vadd.f32 %v5034, %v5481
        %v5483 = vpop.f32.mrb[0].mxu0
        %v5484 = vadd.f32 %v5030, %v5483
        %v5485 = vpop.f32.mrb[0].mxu0
        %v5486 = vadd.f32 %v5034, %v5485
        %5487 = vdwg.mxu0
        %5488 = vmatprep.subr.bf16.mxu0 %v5176
        %5489 = vmatpush1.bf16.msra.mxu0 %v5175
        %5490 = vmatprep.subr.bf16.mxu0 %v5192
        %5491 = vmatpush1.bf16.msra.mxu0 %v5191
        %5492 = vmatprep.subr.bf16.mxu0 0
        %5493 = vmatpush1.bf16.msra.mxu0 0
        %5494 = vmatprep.subr.bf16.mxu0 0
        %5495 = vmatpush1.bf16.msra.mxu0 0
        %5496 = vmatprep.subr.bf16.mxu0 0
        %5497 = vmatpush1.bf16.msra.mxu0 0
        %5498 = vmatprep.subr.bf16.mxu0 0
        %5499 = vmatpush1.bf16.msra.mxu0 0
        %5500 = vmatprep.subr.bf16.mxu0 0
        %5501 = vmatpush1.bf16.msra.mxu0 0
        %5502 = vmatprep.subr.bf16.mxu0 0
        %5503 = vmatpush1.bf16.msra.mxu0 0
        %5504 = vmatprep.subr.bf16.mxu0 0
        %5505 = vmatpush1.bf16.msra.mxu0 0
        %5506 = vmatprep.subr.bf16.mxu0 0
        %5507 = vmatpush1.bf16.msra.mxu0 0
        %5508 = vmatprep.subr.bf16.mxu0 0
        %5509 = vmatpush1.bf16.msra.mxu0 0
        %5510 = vmatprep.subr.bf16.mxu0 0
        %5511 = vmatpush1.bf16.msra.mxu0 0
        %5512 = vmatprep.subr.bf16.mxu0 0
        %5513 = vmatpush1.bf16.msra.mxu0 0
        %5514 = vmatprep.subr.bf16.mxu0 0
        %5515 = vmatpush1.bf16.msra.mxu0 0
        %5516 = vmatprep.subr.bf16.mxu0 0
        %5517 = vmatpush1.bf16.msra.mxu0 0
        %5518 = vmatprep.subr.bf16.mxu0 0
        %5519 = vmatpush1.bf16.msra.mxu0 0
        %5520 = vmatprep.mubr.bf16.mxu0 0
        %5521 = vmatmul.mubr.bf16.gmra.mrb[0].mxu0 %v5228
        %v5522 = vpop.f32.mrb[0].mxu0
        %v5523 = vadd.f32 %v5038, %v5522
        %v5524 = vpop.f32.mrb[0].mxu0
        %v5525 = vadd.f32 %v5042, %v5524
        %v5526 = vpop.f32.mrb[0].mxu0
        %v5527 = vadd.f32 %v5038, %v5526
        %v5528 = vpop.f32.mrb[0].mxu0
        %v5529 = vadd.f32 %v5042, %v5528
        %5530 = vdwg.mxu0
        %5531 = vmatprep.subr.bf16.mxu0 %v5178
        %5532 = vmatpush1.bf16.msra.mxu0 %v5177
        %5533 = vmatprep.subr.bf16.mxu0 %v5194
        %5534 = vmatpush1.bf16.msra.mxu0 %v5193
        %5535 = vmatprep.subr.bf16.mxu0 0
        %5536 = vmatpush1.bf16.msra.mxu0 0
        %5537 = vmatprep.subr.bf16.mxu0 0
        %5538 = vmatpush1.bf16.msra.mxu0 0
        %5539 = vmatprep.subr.bf16.mxu0 0
        %5540 = vmatpush1.bf16.msra.mxu0 0
        %5541 = vmatprep.subr.bf16.mxu0 0
        %5542 = vmatpush1.bf16.msra.mxu0 0
        %5543 = vmatprep.subr.bf16.mxu0 0
        %5544 = vmatpush1.bf16.msra.mxu0 0
        %5545 = vmatprep.subr.bf16.mxu0 0
        %5546 = vmatpush1.bf16.msra.mxu0 0
        %5547 = vmatprep.subr.bf16.mxu0 0
        %5548 = vmatpush1.bf16.msra.mxu0 0
        %5549 = vmatprep.subr.bf16.mxu0 0
        %5550 = vmatpush1.bf16.msra.mxu0 0
        %5551 = vmatprep.subr.bf16.mxu0 0
        %5552 = vmatpush1.bf16.msra.mxu0 0
        %5553 = vmatprep.subr.bf16.mxu0 0
        %5554 = vmatpush1.bf16.msra.mxu0 0
        %5555 = vmatprep.subr.bf16.mxu0 0
        %5556 = vmatpush1.bf16.msra.mxu0 0
        %5557 = vmatprep.subr.bf16.mxu0 0
        %5558 = vmatpush1.bf16.msra.mxu0 0
        %5559 = vmatprep.subr.bf16.mxu0 0
        %5560 = vmatpush1.bf16.msra.mxu0 0
        %5561 = vmatprep.subr.bf16.mxu0 0
        %5562 = vmatpush1.bf16.msra.mxu0 0
        %5563 = vmatprep.mubr.bf16.mxu0 0
        %5564 = vmatmul.mubr.bf16.gmra.mrb[0].mxu0 %v5228
        %v5565 = vpop.f32.mrb[0].mxu0
        %v5566 = vadd.f32 %v5046, %v5565
        %v5567 = vpop.f32.mrb[0].mxu0
        %v5568 = vadd.f32 %v5050, %v5567
        %v5569 = vpop.f32.mrb[0].mxu0
        %v5570 = vadd.f32 %v5046, %v5569
        %v5571 = vpop.f32.mrb[0].mxu0
        %v5572 = vadd.f32 %v5050, %v5571
        %5573 = vdwg.mxu0
        %v5574 = vmax.f32 %v5265, 0.0
        %v5575 = vmax.f32 %v5267, 0.0
        %v5576 = vmax.f32 %v5308, 0.0
        %v5577 = vmax.f32 %v5310, 0.0
        %v5578 = vmax.f32 %v5351, 0.0
        %v5579 = vmax.f32 %v5353, 0.0
        %v5580 = vmax.f32 %v5394, 0.0
        %v5581 = vmax.f32 %v5396, 0.0
        %v5582 = vmax.f32 %v5437, 0.0
        %v5583 = vmax.f32 %v5439, 0.0
        %v5584 = vmax.f32 %v5480, 0.0
        %v5585 = vmax.f32 %v5482, 0.0
        %v5586 = vmax.f32 %v5523, 0.0
        %v5587 = vmax.f32 %v5525, 0.0
        %v5588 = vmax.f32 %v5566, 0.0
        %v5589 = vmax.f32 %v5568, 0.0
        %v5590 = vmax.f32 %v5269, 0.0
        %v5591 = vmax.f32 %v5271, 0.0
        %v5592 = vmax.f32 %v5312, 0.0
        %v5593 = vmax.f32 %v5314, 0.0
        %v5594 = vmax.f32 %v5355, 0.0
        %v5595 = vmax.f32 %v5357, 0.0
        %v5596 = vmax.f32 %v5398, 0.0
        %v5597 = vmax.f32 %v5400, 0.0
        %v5598 = vmax.f32 %v5441, 0.0
        %v5599 = vmax.f32 %v5443, 0.0
        %v5600 = vmax.f32 %v5484, 0.0
        %v5601 = vmax.f32 %v5486, 0.0
        %v5602 = vmax.f32 %v5527, 0.0
        %v5603 = vmax.f32 %v5529, 0.0
        %v5604 = vmax.f32 %v5570, 0.0
        %v5605 = vmax.f32 %v5572, 0.0
        %v5606 = vpack.c.bf16 %v5590, %v5574
        %v5607 = vpack.c.bf16 %v5591, %v5575
        %v5608 = vpack.c.bf16 %v5592, %v5576
        %v5609 = vpack.c.bf16 %v5593, %v5577
        %v5610 = vpack.c.bf16 %v5594, %v5578
        %v5611 = vpack.c.bf16 %v5595, %v5579
        %v5612 = vpack.c.bf16 %v5596, %v5580
        %v5613 = vpack.c.bf16 %v5597, %v5581
        %v5614 = vpack.c.bf16 %v5598, %v5582
        %v5615 = vpack.c.bf16 %v5599, %v5583
        %v5616 = vpack.c.bf16 %v5600, %v5584
        %v5617 = vpack.c.bf16 %v5601, %v5585
        %v5618 = vpack.c.bf16 %v5602, %v5586
        %v5619 = vpack.c.bf16 %v5603, %v5587
        %v5620 = vpack.c.bf16 %v5604, %v5588
        %v5621 = vpack.c.bf16 %v5605, %v5589
        %v5622 = vld [vmem:[%s16] sm:$0xf]
        %v5623 = vld [vmem:[%s16 + $0x4] sm:$0xf]
        %v5624 = vld [vmem:[%s16 + $0x8] sm:$0xf]
        %v5625 = vld [vmem:[%s16 + $0xc] sm:$0xf]
        %v5626 = vld [vmem:[%s16 + $0x10] sm:$0xf]
        %v5627 = vld [vmem:[%s16 + $0x14] sm:$0xf]
        %v5628 = vld [vmem:[%s16 + $0x18] sm:$0xf]
        %v5629 = vld [vmem:[%s16 + $0x1c] sm:$0xf]
        %v5630 = vld [vmem:[%s16 + $0x20] sm:$0xf]
        %v5631 = vld [vmem:[%s16 + $0x24] sm:$0xf]
        %v5632 = vld [vmem:[%s16 + $0x28] sm:$0xf]
        %v5633 = vld [vmem:[%s16 + $0x2c] sm:$0xf]
        %v5634 = vld [vmem:[%s16 + $0x30] sm:$0xf]
        %v5635 = vld [vmem:[%s16 + $0x34] sm:$0xf]
        %v5636 = vld [vmem:[%s16 + $0x38] sm:$0xf]
        %v5637 = vld [vmem:[%s16 + $0x3c] sm:$0xf]
        %v5638 = vld [vmem:[%s16 + $0x40] sm:$0xf]
        %v5639 = vld [vmem:[%s16 + $0x44] sm:$0xf]
        %v5640 = vld [vmem:[%s16 + $0x48] sm:$0xf]
        %v5641 = vld [vmem:[%s16 + $0x4c] sm:$0xf]
        %v5642 = vld [vmem:[%s16 + $0x50] sm:$0xf]
        %v5643 = vld [vmem:[%s16 + $0x54] sm:$0xf]
        %v5644 = vld [vmem:[%s16 + $0x58] sm:$0xf]
        %v5645 = vld [vmem:[%s16 + $0x5c] sm:$0xf]
        %v5646 = vld [vmem:[%s16 + $0x60] sm:$0xf]
        %v5647 = vld [vmem:[%s16 + $0x64] sm:$0xf]
        %v5648 = vld [vmem:[%s16 + $0x68] sm:$0xf]
        %v5649 = vld [vmem:[%s16 + $0x6c] sm:$0xf]
        %v5650 = vld [vmem:[%s16 + $0x70] sm:$0xf]
        %v5651 = vld [vmem:[%s16 + $0x74] sm:$0xf]
        %v5652 = vld [vmem:[%s16 + $0x78] sm:$0xf]
        %v5653 = vld [vmem:[%s16 + $0x7c] sm:$0xf]
        %v5654 = vld [vmem:[%s16 + $0x80] sm:$0xf]
        %v5655 = vld [vmem:[%s16 + $0x84] sm:$0xf]
        %v5656 = vld [vmem:[%s16 + $0x88] sm:$0xf]
        %v5657 = vld [vmem:[%s16 + $0x8c] sm:$0xf]
        %v5658 = vld [vmem:[%s16 + $0x90] sm:$0xf]
        %v5659 = vld [vmem:[%s16 + $0x94] sm:$0xf]
        %v5660 = vld [vmem:[%s16 + $0x98] sm:$0xf]
        %v5661 = vld [vmem:[%s16 + $0x9c] sm:$0xf]
        %v5662 = vld [vmem:[%s16 + $0xa0] sm:$0xf]
        %v5663 = vld [vmem:[%s16 + $0xa4] sm:$0xf]
        %v5664 = vld [vmem:[%s16 + $0xa8] sm:$0xf]
        %v5665 = vld [vmem:[%s16 + $0xac] sm:$0xf]
        %v5666 = vld [vmem:[%s16 + $0xb0] sm:$0xf]
        %v5667 = vld [vmem:[%s16 + $0xb4] sm:$0xf]
        %v5668 = vld [vmem:[%s16 + $0xb8] sm:$0xf]
        %v5669 = vld [vmem:[%s16 + $0xbc] sm:$0xf]
        %v5670 = vld [vmem:[%s16 + $0xc0] sm:$0xf]
        %v5671 = vld [vmem:[%s16 + $0xc4] sm:$0xf]
        %v5672 = vld [vmem:[%s16 + $0xc8] sm:$0xf]
        %v5673 = vld [vmem:[%s16 + $0xcc] sm:$0xf]
        %v5674 = vld [vmem:[%s16 + $0xd0] sm:$0xf]
        %v5675 = vld [vmem:[%s16 + $0xd4] sm:$0xf]
        %v5676 = vld [vmem:[%s16 + $0xd8] sm:$0xf]
        %v5677 = vld [vmem:[%s16 + $0xdc] sm:$0xf]
        %v5678 = vld [vmem:[%s16 + $0xe0] sm:$0xf]
        %v5679 = vld [vmem:[%s16 + $0xe4] sm:$0xf]
        %v5680 = vld [vmem:[%s16 + $0xe8] sm:$0xf]
        %v5681 = vld [vmem:[%s16 + $0xec] sm:$0xf]
        %v5682 = vld [vmem:[%s16 + $0xf0] sm:$0xf]
        %v5683 = vld [vmem:[%s16 + $0xf4] sm:$0xf]
        %v5684 = vld [vmem:[%s16 + $0xf8] sm:$0xf]
        %v5685 = vld [vmem:[%s16 + $0xfc] sm:$0xf]
        %v5686 = vld [vmem:[%s16 + $0x100] sm:$0xf]
        %v5687 = vld [vmem:[%s16 + $0x104] sm:$0xf]
        %v5688 = vld [vmem:[%s16 + $0x108] sm:$0xf]
        %v5689 = vld [vmem:[%s16 + $0x10c] sm:$0xf]
        %v5690 = vld [vmem:[%s16 + $0x110] sm:$0xf]
        %v5691 = vld [vmem:[%s16 + $0x114] sm:$0xf]
        %v5692 = vld [vmem:[%s16 + $0x118] sm:$0xf]
        %v5693 = vld [vmem:[%s16 + $0x11c] sm:$0xf]
        %v5694 = vld [vmem:[%s16 + $0x120] sm:$0xf]
        %v5695 = vld [vmem:[%s16 + $0x124] sm:$0xf]
        %v5696 = vld [vmem:[%s16 + $0x128] sm:$0xf]
        %v5697 = vld [vmem:[%s16 + $0x12c] sm:$0xf]
        %v5698 = vld [vmem:[%s16 + $0x130] sm:$0xf]
        %v5699 = vld [vmem:[%s16 + $0x134] sm:$0xf]
        %v5700 = vld [vmem:[%s16 + $0x138] sm:$0xf]
        %v5701 = vld [vmem:[%s16 + $0x13c] sm:$0xf]
        %v5702 = vld [vmem:[%s16 + $0x140] sm:$0xf]
        %v5703 = vld [vmem:[%s16 + $0x144] sm:$0xf]
        %v5704 = vld [vmem:[%s16 + $0x148] sm:$0xf]
        %v5705 = vld [vmem:[%s16 + $0x14c] sm:$0xf]
        %v5706 = vld [vmem:[%s16 + $0x150] sm:$0xf]
        %v5707 = vld [vmem:[%s16 + $0x154] sm:$0xf]
        %v5708 = vld [vmem:[%s16 + $0x158] sm:$0xf]
        %v5709 = vld [vmem:[%s16 + $0x15c] sm:$0xf]
        %v5710 = vld [vmem:[%s16 + $0x160] sm:$0xf]
        %v5711 = vld [vmem:[%s16 + $0x164] sm:$0xf]
        %v5712 = vld [vmem:[%s16 + $0x168] sm:$0xf]
        %v5713 = vld [vmem:[%s16 + $0x16c] sm:$0xf]
        %v5714 = vld [vmem:[%s16 + $0x170] sm:$0xf]
        %v5715 = vld [vmem:[%s16 + $0x174] sm:$0xf]
        %v5716 = vld [vmem:[%s16 + $0x178] sm:$0xf]
        %v5717 = vld [vmem:[%s16 + $0x17c] sm:$0xf]
        %v5718 = vld [vmem:[%s16 + $0x180] sm:$0xf]
        %v5719 = vld [vmem:[%s16 + $0x184] sm:$0xf]
        %v5720 = vld [vmem:[%s16 + $0x188] sm:$0xf]
        %v5721 = vld [vmem:[%s16 + $0x18c] sm:$0xf]
        %v5722 = vld [vmem:[%s16 + $0x190] sm:$0xf]
        %v5723 = vld [vmem:[%s16 + $0x194] sm:$0xf]
        %v5724 = vld [vmem:[%s16 + $0x198] sm:$0xf]
        %v5725 = vld [vmem:[%s16 + $0x19c] sm:$0xf]
        %v5726 = vld [vmem:[%s16 + $0x1a0] sm:$0xf]
        %v5727 = vld [vmem:[%s16 + $0x1a4] sm:$0xf]
        %v5728 = vld [vmem:[%s16 + $0x1a8] sm:$0xf]
        %v5729 = vld [vmem:[%s16 + $0x1ac] sm:$0xf]
        %v5730 = vld [vmem:[%s16 + $0x1b0] sm:$0xf]
        %v5731 = vld [vmem:[%s16 + $0x1b4] sm:$0xf]
        %v5732 = vld [vmem:[%s16 + $0x1b8] sm:$0xf]
        %v5733 = vld [vmem:[%s16 + $0x1bc] sm:$0xf]
        %v5734 = vld [vmem:[%s16 + $0x1c0] sm:$0xf]
        %v5735 = vld [vmem:[%s16 + $0x1c4] sm:$0xf]
        %v5736 = vld [vmem:[%s16 + $0x1c8] sm:$0xf]
        %v5737 = vld [vmem:[%s16 + $0x1cc] sm:$0xf]
        %v5738 = vld [vmem:[%s16 + $0x1d0] sm:$0xf]
        %v5739 = vld [vmem:[%s16 + $0x1d4] sm:$0xf]
        %v5740 = vld [vmem:[%s16 + $0x1d8] sm:$0xf]
        %v5741 = vld [vmem:[%s16 + $0x1dc] sm:$0xf]
        %v5742 = vld [vmem:[%s16 + $0x1e0] sm:$0xf]
        %v5743 = vld [vmem:[%s16 + $0x1e4] sm:$0xf]
        %v5744 = vld [vmem:[%s16 + $0x1e8] sm:$0xf]
        %v5745 = vld [vmem:[%s16 + $0x1ec] sm:$0xf]
        %v5746 = vld [vmem:[%s16 + $0x1f0] sm:$0xf]
        %v5747 = vld [vmem:[%s16 + $0x1f4] sm:$0xf]
        %v5748 = vld [vmem:[%s16 + $0x1f8] sm:$0xf]
        %v5749 = vld [vmem:[%s16 + $0x1fc] sm:$0xf]
        %v5750 = vld [vmem:[%s16 + $0x200] sm:$0xf]
        %v5751 = vld [vmem:[%s16 + $0x204] sm:$0xf]
        %v5752 = vld [vmem:[%s16 + $0x208] sm:$0xf]
        %v5753 = vld [vmem:[%s16 + $0x20c] sm:$0xf]
        %v5754 = vld [vmem:[%s16 + $0x210] sm:$0xf]
        %v5755 = vld [vmem:[%s16 + $0x214] sm:$0xf]
        %v5756 = vld [vmem:[%s16 + $0x218] sm:$0xf]
        %v5757 = vld [vmem:[%s16 + $0x21c] sm:$0xf]
        %v5758 = vld [vmem:[%s16 + $0x220] sm:$0xf]
        %v5759 = vld [vmem:[%s16 + $0x224] sm:$0xf]
        %v5760 = vld [vmem:[%s16 + $0x228] sm:$0xf]
        %v5761 = vld [vmem:[%s16 + $0x22c] sm:$0xf]
        %v5762 = vld [vmem:[%s16 + $0x230] sm:$0xf]
        %v5763 = vld [vmem:[%s16 + $0x234] sm:$0xf]
        %v5764 = vld [vmem:[%s16 + $0x238] sm:$0xf]
        %v5765 = vld [vmem:[%s16 + $0x23c] sm:$0xf]
        %v5766 = vld [vmem:[%s16 + $0x240] sm:$0xf]
        %v5767 = vld [vmem:[%s16 + $0x244] sm:$0xf]
        %v5768 = vld [vmem:[%s16 + $0x248] sm:$0xf]
        %v5769 = vld [vmem:[%s16 + $0x24c] sm:$0xf]
        %v5770 = vld [vmem:[%s16 + $0x250] sm:$0xf]
        %v5771 = vld [vmem:[%s16 + $0x254] sm:$0xf]
        %v5772 = vld [vmem:[%s16 + $0x258] sm:$0xf]
        %v5773 = vld [vmem:[%s16 + $0x25c] sm:$0xf]
        %v5774 = vld [vmem:[%s16 + $0x260] sm:$0xf]
        %v5775 = vld [vmem:[%s16 + $0x264] sm:$0xf]
        %v5776 = vld [vmem:[%s16 + $0x268] sm:$0xf]
        %v5777 = vld [vmem:[%s16 + $0x26c] sm:$0xf]
        %v5778 = vld [vmem:[%s16 + $0x270] sm:$0xf]
        %v5779 = vld [vmem:[%s16 + $0x274] sm:$0xf]
        %v5780 = vld [vmem:[%s16 + $0x278] sm:$0xf]
        %v5781 = vld [vmem:[%s16 + $0x27c] sm:$0xf]
        %v5782 = vld [vmem:[%s16 + $0x280] sm:$0xf]
        %v5783 = vld [vmem:[%s16 + $0x284] sm:$0xf]
        %v5784 = vld [vmem:[%s16 + $0x288] sm:$0xf]
        %v5785 = vld [vmem:[%s16 + $0x28c] sm:$0xf]
        %v5786 = vld [vmem:[%s16 + $0x290] sm:$0xf]
        %v5787 = vld [vmem:[%s16 + $0x294] sm:$0xf]
        %v5788 = vld [vmem:[%s16 + $0x298] sm:$0xf]
        %v5789 = vld [vmem:[%s16 + $0x29c] sm:$0xf]
        %v5790 = vld [vmem:[%s16 + $0x2a0] sm:$0xf]
        %v5791 = vld [vmem:[%s16 + $0x2a4] sm:$0xf]
        %v5792 = vld [vmem:[%s16 + $0x2a8] sm:$0xf]
        %v5793 = vld [vmem:[%s16 + $0x2ac] sm:$0xf]
        %v5794 = vld [vmem:[%s16 + $0x2b0] sm:$0xf]
        %v5795 = vld [vmem:[%s16 + $0x2b4] sm:$0xf]
        %v5796 = vld [vmem:[%s16 + $0x2b8] sm:$0xf]
        %v5797 = vld [vmem:[%s16 + $0x2bc] sm:$0xf]
        %v5798 = vld [vmem:[%s16 + $0x2c0] sm:$0xf]
        %v5799 = vld [vmem:[%s16 + $0x2c4] sm:$0xf]
        %v5800 = vld [vmem:[%s16 + $0x2c8] sm:$0xf]
        %v5801 = vld [vmem:[%s16 + $0x2cc] sm:$0xf]
        %v5802 = vld [vmem:[%s16 + $0x2d0] sm:$0xf]
        %v5803 = vld [vmem:[%s16 + $0x2d4] sm:$0xf]
        %v5804 = vld [vmem:[%s16 + $0x2d8] sm:$0xf]
        %v5805 = vld [vmem:[%s16 + $0x2dc] sm:$0xf]
        %v5806 = vld [vmem:[%s16 + $0x2e0] sm:$0xf]
        %v5807 = vld [vmem:[%s16 + $0x2e4] sm:$0xf]
        %v5808 = vld [vmem:[%s16 + $0x2e8] sm:$0xf]
        %v5809 = vld [vmem:[%s16 + $0x2ec] sm:$0xf]
        %v5810 = vld [vmem:[%s16 + $0x2f0] sm:$0xf]
        %v5811 = vld [vmem:[%s16 + $0x2f4] sm:$0xf]
        %v5812 = vld [vmem:[%s16 + $0x2f8] sm:$0xf]
        %v5813 = vld [vmem:[%s16 + $0x2fc] sm:$0xf]
        %v5814 = vld [vmem:[%s16 + $0x300] sm:$0xf]
        %v5815 = vld [vmem:[%s16 + $0x304] sm:$0xf]
        %v5816 = vld [vmem:[%s16 + $0x308] sm:$0xf]
        %v5817 = vld [vmem:[%s16 + $0x30c] sm:$0xf]
        %v5818 = vld [vmem:[%s16 + $0x310] sm:$0xf]
        %v5819 = vld [vmem:[%s16 + $0x314] sm:$0xf]
        %v5820 = vld [vmem:[%s16 + $0x318] sm:$0xf]
        %v5821 = vld [vmem:[%s16 + $0x31c] sm:$0xf]
        %v5822 = vld [vmem:[%s16 + $0x320] sm:$0xf]
        %v5823 = vld [vmem:[%s16 + $0x324] sm:$0xf]
        %v5824 = vld [vmem:[%s16 + $0x328] sm:$0xf]
        %v5825 = vld [vmem:[%s16 + $0x32c] sm:$0xf]
        %v5826 = vld [vmem:[%s16 + $0x330] sm:$0xf]
        %v5827 = vld [vmem:[%s16 + $0x334] sm:$0xf]
        %v5828 = vld [vmem:[%s16 + $0x338] sm:$0xf]
        %v5829 = vld [vmem:[%s16 + $0x33c] sm:$0xf]
        %v5830 = vld [vmem:[%s16 + $0x340] sm:$0xf]
        %v5831 = vld [vmem:[%s16 + $0x344] sm:$0xf]
        %v5832 = vld [vmem:[%s16 + $0x348] sm:$0xf]
        %v5833 = vld [vmem:[%s16 + $0x34c] sm:$0xf]
        %v5834 = vld [vmem:[%s16 + $0x350] sm:$0xf]
        %v5835 = vld [vmem:[%s16 + $0x354] sm:$0xf]
        %v5836 = vld [vmem:[%s16 + $0x358] sm:$0xf]
        %v5837 = vld [vmem:[%s16 + $0x35c] sm:$0xf]
        %v5838 = vld [vmem:[%s16 + $0x360] sm:$0xf]
        %v5839 = vld [vmem:[%s16 + $0x364] sm:$0xf]
        %v5840 = vld [vmem:[%s16 + $0x368] sm:$0xf]
        %v5841 = vld [vmem:[%s16 + $0x36c] sm:$0xf]
        %v5842 = vld [vmem:[%s16 + $0x370] sm:$0xf]
        %v5843 = vld [vmem:[%s16 + $0x374] sm:$0xf]
        %v5844 = vld [vmem:[%s16 + $0x378] sm:$0xf]
        %v5845 = vld [vmem:[%s16 + $0x37c] sm:$0xf]
        %v5846 = vld [vmem:[%s16 + $0x380] sm:$0xf]
        %v5847 = vld [vmem:[%s16 + $0x384] sm:$0xf]
        %v5848 = vld [vmem:[%s16 + $0x388] sm:$0xf]
        %v5849 = vld [vmem:[%s16 + $0x38c] sm:$0xf]
        %v5850 = vld [vmem:[%s16 + $0x390] sm:$0xf]
        %v5851 = vld [vmem:[%s16 + $0x394] sm:$0xf]
        %v5852 = vld [vmem:[%s16 + $0x398] sm:$0xf]
        %v5853 = vld [vmem:[%s16 + $0x39c] sm:$0xf]
        %v5854 = vld [vmem:[%s16 + $0x3a0] sm:$0xf]
        %v5855 = vld [vmem:[%s16 + $0x3a4] sm:$0xf]
        %v5856 = vld [vmem:[%s16 + $0x3a8] sm:$0xf]
        %v5857 = vld [vmem:[%s16 + $0x3ac] sm:$0xf]
        %v5858 = vld [vmem:[%s16 + $0x3b0] sm:$0xf]
        %v5859 = vld [vmem:[%s16 + $0x3b4] sm:$0xf]
        %v5860 = vld [vmem:[%s16 + $0x3b8] sm:$0xf]
        %v5861 = vld [vmem:[%s16 + $0x3bc] sm:$0xf]
        %v5862 = vld [vmem:[%s16 + $0x3c0] sm:$0xf]
        %v5863 = vld [vmem:[%s16 + $0x3c4] sm:$0xf]
        %v5864 = vld [vmem:[%s16 + $0x3c8] sm:$0xf]
        %v5865 = vld [vmem:[%s16 + $0x3cc] sm:$0xf]
        %v5866 = vld [vmem:[%s16 + $0x3d0] sm:$0xf]
        %v5867 = vld [vmem:[%s16 + $0x3d4] sm:$0xf]
        %v5868 = vld [vmem:[%s16 + $0x3d8] sm:$0xf]
        %v5869 = vld [vmem:[%s16 + $0x3dc] sm:$0xf]
        %v5870 = vld [vmem:[%s16 + $0x3e0] sm:$0xf]
        %v5871 = vld [vmem:[%s16 + $0x3e4] sm:$0xf]
        %v5872 = vld [vmem:[%s16 + $0x3e8] sm:$0xf]
        %v5873 = vld [vmem:[%s16 + $0x3ec] sm:$0xf]
        %v5874 = vld [vmem:[%s16 + $0x3f0] sm:$0xf]
        %v5875 = vld [vmem:[%s16 + $0x3f4] sm:$0xf]
        %v5876 = vld [vmem:[%s16 + $0x3f8] sm:$0xf]
        %v5877 = vld [vmem:[%s16 + $0x3fc] sm:$0xf]
        %v5878 = vld [vmem:[%s17] sm:$0x1]
        %v5880 = vlaneseq
        %v5881 = vshrl.u32 %v5880, 7
        %v5882 = vsub.s32 0, %v5881
        %v5883 = vrot.slane %v5878, %v5882
        %v6141 = vunpack.c.l.b16 %v5622
        %v6142 = vunpack.c.l.b16 %v5623
        %v6143 = vunpack.c.l.b16 %v5624
        %v6144 = vunpack.c.l.b16 %v5625
        %v6145 = vunpack.c.l.b16 %v5626
        %v6146 = vunpack.c.l.b16 %v5627
        %v6147 = vunpack.c.l.b16 %v5628
        %v6148 = vunpack.c.l.b16 %v5629
        %v6149 = vunpack.c.l.b16 %v5630
        %v6150 = vunpack.c.l.b16 %v5631
        %v6151 = vunpack.c.l.b16 %v5632
        %v6152 = vunpack.c.l.b16 %v5633
        %v6153 = vunpack.c.l.b16 %v5634
        %v6154 = vunpack.c.l.b16 %v5635
        %v6155 = vunpack.c.l.b16 %v5636
        %v6156 = vunpack.c.l.b16 %v5637
        %v6157 = vunpack.c.l.b16 %v5638
        %v6158 = vunpack.c.l.b16 %v5639
        %v6159 = vunpack.c.l.b16 %v5640
        %v6160 = vunpack.c.l.b16 %v5641
        %v6161 = vunpack.c.l.b16 %v5642
        %v6162 = vunpack.c.l.b16 %v5643
        %v6163 = vunpack.c.l.b16 %v5644
        %v6164 = vunpack.c.l.b16 %v5645
        %v6165 = vunpack.c.l.b16 %v5646
        %v6166 = vunpack.c.l.b16 %v5647
        %v6167 = vunpack.c.l.b16 %v5648
        %v6168 = vunpack.c.l.b16 %v5649
        %v6169 = vunpack.c.l.b16 %v5650
        %v6170 = vunpack.c.l.b16 %v5651
        %v6171 = vunpack.c.l.b16 %v5652
        %v6172 = vunpack.c.l.b16 %v5653
        %v6173 = vunpack.c.l.b16 %v5654
        %v6174 = vunpack.c.l.b16 %v5655
        %v6175 = vunpack.c.l.b16 %v5656
        %v6176 = vunpack.c.l.b16 %v5657
        %v6177 = vunpack.c.l.b16 %v5658
        %v6178 = vunpack.c.l.b16 %v5659
        %v6179 = vunpack.c.l.b16 %v5660
        %v6180 = vunpack.c.l.b16 %v5661
        %v6181 = vunpack.c.l.b16 %v5662
        %v6182 = vunpack.c.l.b16 %v5663
        %v6183 = vunpack.c.l.b16 %v5664
        %v6184 = vunpack.c.l.b16 %v5665
        %v6185 = vunpack.c.l.b16 %v5666
        %v6186 = vunpack.c.l.b16 %v5667
        %v6187 = vunpack.c.l.b16 %v5668
        %v6188 = vunpack.c.l.b16 %v5669
        %v6189 = vunpack.c.l.b16 %v5670
        %v6190 = vunpack.c.l.b16 %v5671
        %v6191 = vunpack.c.l.b16 %v5672
        %v6192 = vunpack.c.l.b16 %v5673
        %v6193 = vunpack.c.l.b16 %v5674
        %v6194 = vunpack.c.l.b16 %v5675
        %v6195 = vunpack.c.l.b16 %v5676
        %v6196 = vunpack.c.l.b16 %v5677
        %v6197 = vunpack.c.l.b16 %v5678
        %v6198 = vunpack.c.l.b16 %v5679
        %v6199 = vunpack.c.l.b16 %v5680
        %v6200 = vunpack.c.l.b16 %v5681
        %v6201 = vunpack.c.l.b16 %v5682
        %v6202 = vunpack.c.l.b16 %v5683
        %v6203 = vunpack.c.l.b16 %v5684
        %v6204 = vunpack.c.l.b16 %v5685
        %v6205 = vunpack.c.l.b16 %v5686
        %v6206 = vunpack.c.l.b16 %v5687
        %v6207 = vunpack.c.l.b16 %v5688
        %v6208 = vunpack.c.l.b16 %v5689
        %v6209 = vunpack.c.l.b16 %v5690
        %v6210 = vunpack.c.l.b16 %v5691
        %v6211 = vunpack.c.l.b16 %v5692
        %v6212 = vunpack.c.l.b16 %v5693
        %v6213 = vunpack.c.l.b16 %v5694
        %v6214 = vunpack.c.l.b16 %v5695
        %v6215 = vunpack.c.l.b16 %v5696
        %v6216 = vunpack.c.l.b16 %v5697
        %v6217 = vunpack.c.l.b16 %v5698
        %v6218 = vunpack.c.l.b16 %v5699
        %v6219 = vunpack.c.l.b16 %v5700
        %v6220 = vunpack.c.l.b16 %v5701
        %v6221 = vunpack.c.l.b16 %v5702
        %v6222 = vunpack.c.l.b16 %v5703
        %v6223 = vunpack.c.l.b16 %v5704
        %v6224 = vunpack.c.l.b16 %v5705
        %v6225 = vunpack.c.l.b16 %v5706
        %v6226 = vunpack.c.l.b16 %v5707
        %v6227 = vunpack.c.l.b16 %v5708
        %v6228 = vunpack.c.l.b16 %v5709
        %v6229 = vunpack.c.l.b16 %v5710
        %v6230 = vunpack.c.l.b16 %v5711
        %v6231 = vunpack.c.l.b16 %v5712
        %v6232 = vunpack.c.l.b16 %v5713
        %v6233 = vunpack.c.l.b16 %v5714
        %v6234 = vunpack.c.l.b16 %v5715
        %v6235 = vunpack.c.l.b16 %v5716
        %v6236 = vunpack.c.l.b16 %v5717
        %v6237 = vunpack.c.l.b16 %v5718
        %v6238 = vunpack.c.l.b16 %v5719
        %v6239 = vunpack.c.l.b16 %v5720
        %v6240 = vunpack.c.l.b16 %v5721
        %v6241 = vunpack.c.l.b16 %v5722
        %v6242 = vunpack.c.l.b16 %v5723
        %v6243 = vunpack.c.l.b16 %v5724
        %v6244 = vunpack.c.l.b16 %v5725
        %v6245 = vunpack.c.l.b16 %v5726
        %v6246 = vunpack.c.l.b16 %v5727
        %v6247 = vunpack.c.l.b16 %v5728
        %v6248 = vunpack.c.l.b16 %v5729
        %v6249 = vunpack.c.l.b16 %v5730
        %v6250 = vunpack.c.l.b16 %v5731
        %v6251 = vunpack.c.l.b16 %v5732
        %v6252 = vunpack.c.l.b16 %v5733
        %v6253 = vunpack.c.l.b16 %v5734
        %v6254 = vunpack.c.l.b16 %v5735
        %v6255 = vunpack.c.l.b16 %v5736
        %v6256 = vunpack.c.l.b16 %v5737
        %v6257 = vunpack.c.l.b16 %v5738
        %v6258 = vunpack.c.l.b16 %v5739
        %v6259 = vunpack.c.l.b16 %v5740
        %v6260 = vunpack.c.l.b16 %v5741
        %v6261 = vunpack.c.l.b16 %v5742
        %v6262 = vunpack.c.l.b16 %v5743
        %v6263 = vunpack.c.l.b16 %v5744
        %v6264 = vunpack.c.l.b16 %v5745
        %v6265 = vunpack.c.l.b16 %v5746
        %v6266 = vunpack.c.l.b16 %v5747
        %v6267 = vunpack.c.l.b16 %v5748
        %v6268 = vunpack.c.l.b16 %v5749
        %v6269 = vunpack.c.l.b16 %v5750
        %v6270 = vunpack.c.l.b16 %v5751
        %v6271 = vunpack.c.l.b16 %v5752
        %v6272 = vunpack.c.l.b16 %v5753
        %v6273 = vunpack.c.l.b16 %v5754
        %v6274 = vunpack.c.l.b16 %v5755
        %v6275 = vunpack.c.l.b16 %v5756
        %v6276 = vunpack.c.l.b16 %v5757
        %v6277 = vunpack.c.l.b16 %v5758
        %v6278 = vunpack.c.l.b16 %v5759
        %v6279 = vunpack.c.l.b16 %v5760
        %v6280 = vunpack.c.l.b16 %v5761
        %v6281 = vunpack.c.l.b16 %v5762
        %v6282 = vunpack.c.l.b16 %v5763
        %v6283 = vunpack.c.l.b16 %v5764
        %v6284 = vunpack.c.l.b16 %v5765
        %v6285 = vunpack.c.l.b16 %v5766
        %v6286 = vunpack.c.l.b16 %v5767
        %v6287 = vunpack.c.l.b16 %v5768
        %v6288 = vunpack.c.l.b16 %v5769
        %v6289 = vunpack.c.l.b16 %v5770
        %v6290 = vunpack.c.l.b16 %v5771
        %v6291 = vunpack.c.l.b16 %v5772
        %v6292 = vunpack.c.l.b16 %v5773
        %v6293 = vunpack.c.l.b16 %v5774
        %v6294 = vunpack.c.l.b16 %v5775
        %v6295 = vunpack.c.l.b16 %v5776
        %v6296 = vunpack.c.l.b16 %v5777
        %v6297 = vunpack.c.l.b16 %v5778
        %v6298 = vunpack.c.l.b16 %v5779
        %v6299 = vunpack.c.l.b16 %v5780
        %v6300 = vunpack.c.l.b16 %v5781
        %v6301 = vunpack.c.l.b16 %v5782
        %v6302 = vunpack.c.l.b16 %v5783
        %v6303 = vunpack.c.l.b16 %v5784
        %v6304 = vunpack.c.l.b16 %v5785
        %v6305 = vunpack.c.l.b16 %v5786
        %v6306 = vunpack.c.l.b16 %v5787
        %v6307 = vunpack.c.l.b16 %v5788
        %v6308 = vunpack.c.l.b16 %v5789
        %v6309 = vunpack.c.l.b16 %v5790
        %v6310 = vunpack.c.l.b16 %v5791
        %v6311 = vunpack.c.l.b16 %v5792
        %v6312 = vunpack.c.l.b16 %v5793
        %v6313 = vunpack.c.l.b16 %v5794
        %v6314 = vunpack.c.l.b16 %v5795
        %v6315 = vunpack.c.l.b16 %v5796
        %v6316 = vunpack.c.l.b16 %v5797
        %v6317 = vunpack.c.l.b16 %v5798
        %v6318 = vunpack.c.l.b16 %v5799
        %v6319 = vunpack.c.l.b16 %v5800
        %v6320 = vunpack.c.l.b16 %v5801
        %v6321 = vunpack.c.l.b16 %v5802
        %v6322 = vunpack.c.l.b16 %v5803
        %v6323 = vunpack.c.l.b16 %v5804
        %v6324 = vunpack.c.l.b16 %v5805
        %v6325 = vunpack.c.l.b16 %v5806
        %v6326 = vunpack.c.l.b16 %v5807
        %v6327 = vunpack.c.l.b16 %v5808
        %v6328 = vunpack.c.l.b16 %v5809
        %v6329 = vunpack.c.l.b16 %v5810
        %v6330 = vunpack.c.l.b16 %v5811
        %v6331 = vunpack.c.l.b16 %v5812
        %v6332 = vunpack.c.l.b16 %v5813
        %v6333 = vunpack.c.l.b16 %v5814
        %v6334 = vunpack.c.l.b16 %v5815
        %v6335 = vunpack.c.l.b16 %v5816
        %v6336 = vunpack.c.l.b16 %v5817
        %v6337 = vunpack.c.l.b16 %v5818
        %v6338 = vunpack.c.l.b16 %v5819
        %v6339 = vunpack.c.l.b16 %v5820
        %v6340 = vunpack.c.l.b16 %v5821
        %v6341 = vunpack.c.l.b16 %v5822
        %v6342 = vunpack.c.l.b16 %v5823
        %v6343 = vunpack.c.l.b16 %v5824
        %v6344 = vunpack.c.l.b16 %v5825
        %v6345 = vunpack.c.l.b16 %v5826
        %v6346 = vunpack.c.l.b16 %v5827
        %v6347 = vunpack.c.l.b16 %v5828
        %v6348 = vunpack.c.l.b16 %v5829
        %v6349 = vunpack.c.l.b16 %v5830
        %v6350 = vunpack.c.l.b16 %v5831
        %v6351 = vunpack.c.l.b16 %v5832
        %v6352 = vunpack.c.l.b16 %v5833
        %v6353 = vunpack.c.l.b16 %v5834
        %v6354 = vunpack.c.l.b16 %v5835
        %v6355 = vunpack.c.l.b16 %v5836
        %v6356 = vunpack.c.l.b16 %v5837
        %v6357 = vunpack.c.l.b16 %v5838
        %v6358 = vunpack.c.l.b16 %v5839
        %v6359 = vunpack.c.l.b16 %v5840
        %v6360 = vunpack.c.l.b16 %v5841
        %v6361 = vunpack.c.l.b16 %v5842
        %v6362 = vunpack.c.l.b16 %v5843
        %v6363 = vunpack.c.l.b16 %v5844
        %v6364 = vunpack.c.l.b16 %v5845
        %v6365 = vunpack.c.l.b16 %v5846
        %v6366 = vunpack.c.l.b16 %v5847
        %v6367 = vunpack.c.l.b16 %v5848
        %v6368 = vunpack.c.l.b16 %v5849
        %v6369 = vunpack.c.l.b16 %v5850
        %v6370 = vunpack.c.l.b16 %v5851
        %v6371 = vunpack.c.l.b16 %v5852
        %v6372 = vunpack.c.l.b16 %v5853
        %v6373 = vunpack.c.l.b16 %v5854
        %v6374 = vunpack.c.l.b16 %v5855
        %v6375 = vunpack.c.l.b16 %v5856
        %v6376 = vunpack.c.l.b16 %v5857
        %v6377 = vunpack.c.l.b16 %v5858
        %v6378 = vunpack.c.l.b16 %v5859
        %v6379 = vunpack.c.l.b16 %v5860
        %v6380 = vunpack.c.l.b16 %v5861
        %v6381 = vunpack.c.l.b16 %v5862
        %v6382 = vunpack.c.l.b16 %v5863
        %v6383 = vunpack.c.l.b16 %v5864
        %v6384 = vunpack.c.l.b16 %v5865
        %v6385 = vunpack.c.l.b16 %v5866
        %v6386 = vunpack.c.l.b16 %v5867
        %v6387 = vunpack.c.l.b16 %v5868
        %v6388 = vunpack.c.l.b16 %v5869
        %v6389 = vunpack.c.l.b16 %v5870
        %v6390 = vunpack.c.l.b16 %v5871
        %v6391 = vunpack.c.l.b16 %v5872
        %v6392 = vunpack.c.l.b16 %v5873
        %v6393 = vunpack.c.l.b16 %v5874
        %v6394 = vunpack.c.l.b16 %v5875
        %v6395 = vunpack.c.l.b16 %v5876
        %v6396 = vunpack.c.l.b16 %v5877
        %v6397 = vpack.c.b16 %v6142, %v6141
        %v6398 = vpack.c.b16 %v6144, %v6143
        %v6399 = vpack.c.b16 %v6146, %v6145
        %v6400 = vpack.c.b16 %v6148, %v6147
        %v6401 = vpack.c.b16 %v6150, %v6149
        %v6402 = vpack.c.b16 %v6152, %v6151
        %v6403 = vpack.c.b16 %v6154, %v6153
        %v6404 = vpack.c.b16 %v6156, %v6155
        %v6405 = vpack.c.b16 %v6158, %v6157
        %v6406 = vpack.c.b16 %v6160, %v6159
        %v6407 = vpack.c.b16 %v6162, %v6161
        %v6408 = vpack.c.b16 %v6164, %v6163
        %v6409 = vpack.c.b16 %v6166, %v6165
        %v6410 = vpack.c.b16 %v6168, %v6167
        %v6411 = vpack.c.b16 %v6170, %v6169
        %v6412 = vpack.c.b16 %v6172, %v6171
        %v6413 = vpack.c.b16 %v6174, %v6173
        %v6414 = vpack.c.b16 %v6176, %v6175
        %v6415 = vpack.c.b16 %v6178, %v6177
        %v6416 = vpack.c.b16 %v6180, %v6179
        %v6417 = vpack.c.b16 %v6182, %v6181
        %v6418 = vpack.c.b16 %v6184, %v6183
        %v6419 = vpack.c.b16 %v6186, %v6185
        %v6420 = vpack.c.b16 %v6188, %v6187
        %v6421 = vpack.c.b16 %v6190, %v6189
        %v6422 = vpack.c.b16 %v6192, %v6191
        %v6423 = vpack.c.b16 %v6194, %v6193
        %v6424 = vpack.c.b16 %v6196, %v6195
        %v6425 = vpack.c.b16 %v6198, %v6197
        %v6426 = vpack.c.b16 %v6200, %v6199
        %v6427 = vpack.c.b16 %v6202, %v6201
        %v6428 = vpack.c.b16 %v6204, %v6203
        %v6429 = vpack.c.b16 %v6206, %v6205
        %v6430 = vpack.c.b16 %v6208, %v6207
        %v6431 = vpack.c.b16 %v6210, %v6209
        %v6432 = vpack.c.b16 %v6212, %v6211
        %v6433 = vpack.c.b16 %v6214, %v6213
        %v6434 = vpack.c.b16 %v6216, %v6215
        %v6435 = vpack.c.b16 %v6218, %v6217
        %v6436 = vpack.c.b16 %v6220, %v6219
        %v6437 = vpack.c.b16 %v6222, %v6221
        %v6438 = vpack.c.b16 %v6224, %v6223
        %v6439 = vpack.c.b16 %v6226, %v6225
        %v6440 = vpack.c.b16 %v6228, %v6227
        %v6441 = vpack.c.b16 %v6230, %v6229
        %v6442 = vpack.c.b16 %v6232, %v6231
        %v6443 = vpack.c.b16 %v6234, %v6233
        %v6444 = vpack.c.b16 %v6236, %v6235
        %v6445 = vpack.c.b16 %v6238, %v6237
        %v6446 = vpack.c.b16 %v6240, %v6239
        %v6447 = vpack.c.b16 %v6242, %v6241
        %v6448 = vpack.c.b16 %v6244, %v6243
        %v6449 = vpack.c.b16 %v6246, %v6245
        %v6450 = vpack.c.b16 %v6248, %v6247
        %v6451 = vpack.c.b16 %v6250, %v6249
        %v6452 = vpack.c.b16 %v6252, %v6251
        %v6453 = vpack.c.b16 %v6254, %v6253
        %v6454 = vpack.c.b16 %v6256, %v6255
        %v6455 = vpack.c.b16 %v6258, %v6257
        %v6456 = vpack.c.b16 %v6260, %v6259
        %v6457 = vpack.c.b16 %v6262, %v6261
        %v6458 = vpack.c.b16 %v6264, %v6263
        %v6459 = vpack.c.b16 %v6266, %v6265
        %v6460 = vpack.c.b16 %v6268, %v6267
        %v6461 = vpack.c.b16 %v6270, %v6269
        %v6462 = vpack.c.b16 %v6272, %v6271
        %v6463 = vpack.c.b16 %v6274, %v6273
        %v6464 = vpack.c.b16 %v6276, %v6275
        %v6465 = vpack.c.b16 %v6278, %v6277
        %v6466 = vpack.c.b16 %v6280, %v6279
        %v6467 = vpack.c.b16 %v6282, %v6281
        %v6468 = vpack.c.b16 %v6284, %v6283
        %v6469 = vpack.c.b16 %v6286, %v6285
        %v6470 = vpack.c.b16 %v6288, %v6287
        %v6471 = vpack.c.b16 %v6290, %v6289
        %v6472 = vpack.c.b16 %v6292, %v6291
        %v6473 = vpack.c.b16 %v6294, %v6293
        %v6474 = vpack.c.b16 %v6296, %v6295
        %v6475 = vpack.c.b16 %v6298, %v6297
        %v6476 = vpack.c.b16 %v6300, %v6299
        %v6477 = vpack.c.b16 %v6302, %v6301
        %v6478 = vpack.c.b16 %v6304, %v6303
        %v6479 = vpack.c.b16 %v6306, %v6305
        %v6480 = vpack.c.b16 %v6308, %v6307
        %v6481 = vpack.c.b16 %v6310, %v6309
        %v6482 = vpack.c.b16 %v6312, %v6311
        %v6483 = vpack.c.b16 %v6314, %v6313
        %v6484 = vpack.c.b16 %v6316, %v6315
        %v6485 = vpack.c.b16 %v6318, %v6317
        %v6486 = vpack.c.b16 %v6320, %v6319
        %v6487 = vpack.c.b16 %v6322, %v6321
        %v6488 = vpack.c.b16 %v6324, %v6323
        %v6489 = vpack.c.b16 %v6326, %v6325
        %v6490 = vpack.c.b16 %v6328, %v6327
        %v6491 = vpack.c.b16 %v6330, %v6329
        %v6492 = vpack.c.b16 %v6332, %v6331
        %v6493 = vpack.c.b16 %v6334, %v6333
        %v6494 = vpack.c.b16 %v6336, %v6335
        %v6495 = vpack.c.b16 %v6338, %v6337
        %v6496 = vpack.c.b16 %v6340, %v6339
        %v6497 = vpack.c.b16 %v6342, %v6341
        %v6498 = vpack.c.b16 %v6344, %v6343
        %v6499 = vpack.c.b16 %v6346, %v6345
        %v6500 = vpack.c.b16 %v6348, %v6347
        %v6501 = vpack.c.b16 %v6350, %v6349
        %v6502 = vpack.c.b16 %v6352, %v6351
        %v6503 = vpack.c.b16 %v6354, %v6353
        %v6504 = vpack.c.b16 %v6356, %v6355
        %v6505 = vpack.c.b16 %v6358, %v6357
        %v6506 = vpack.c.b16 %v6360, %v6359
        %v6507 = vpack.c.b16 %v6362, %v6361
        %v6508 = vpack.c.b16 %v6364, %v6363
        %v6509 = vpack.c.b16 %v6366, %v6365
        %v6510 = vpack.c.b16 %v6368, %v6367
        %v6511 = vpack.c.b16 %v6370, %v6369
        %v6512 = vpack.c.b16 %v6372, %v6371
        %v6513 = vpack.c.b16 %v6374, %v6373
        %v6514 = vpack.c.b16 %v6376, %v6375
        %v6515 = vpack.c.b16 %v6378, %v6377
        %v6516 = vpack.c.b16 %v6380, %v6379
        %v6517 = vpack.c.b16 %v6382, %v6381
        %v6518 = vpack.c.b16 %v6384, %v6383
        %v6519 = vpack.c.b16 %v6386, %v6385
        %v6520 = vpack.c.b16 %v6388, %v6387
        %v6521 = vpack.c.b16 %v6390, %v6389
        %v6522 = vpack.c.b16 %v6392, %v6391
        %v6523 = vpack.c.b16 %v6394, %v6393
        %v6524 = vpack.c.b16 %v6396, %v6395
        %6653 = vmatprep.subr.bf16.mxu0 0
        %6654 = vmatpush1.bf16.msra.mxu0 %v6397
        %6655 = vmatprep.subr.bf16.mxu0 0
        %6656 = vmatpush1.bf16.msra.mxu0 %v6398
        %6657 = vmatprep.subr.bf16.mxu0 0
        %6658 = vmatpush1.bf16.msra.mxu0 %v6399
        %6659 = vmatprep.subr.bf16.mxu0 0
        %6660 = vmatpush1.bf16.msra.mxu0 %v6400
        %6661 = vmatprep.subr.bf16.mxu0 0
        %6662 = vmatpush1.bf16.msra.mxu0 %v6401
        %6663 = vmatprep.subr.bf16.mxu0 0
        %6664 = vmatpush1.bf16.msra.mxu0 %v6402
        %6665 = vmatprep.subr.bf16.mxu0 0
        %6666 = vmatpush1.bf16.msra.mxu0 %v6403
        %6667 = vmatprep.subr.bf16.mxu0 0
        %6668 = vmatpush1.bf16.msra.mxu0 %v6404
        %6669 = vmatprep.subr.bf16.mxu0 0
        %6670 = vmatpush1.bf16.msra.mxu0 %v6405
        %6671 = vmatprep.subr.bf16.mxu0 0
        %6672 = vmatpush1.bf16.msra.mxu0 %v6406
        %6673 = vmatprep.subr.bf16.mxu0 0
        %6674 = vmatpush1.bf16.msra.mxu0 %v6407
        %6675 = vmatprep.subr.bf16.mxu0 0
        %6676 = vmatpush1.bf16.msra.mxu0 %v6408
        %6677 = vmatprep.subr.bf16.mxu0 0
        %6678 = vmatpush1.bf16.msra.mxu0 %v6409
        %6679 = vmatprep.subr.bf16.mxu0 0
        %6680 = vmatpush1.bf16.msra.mxu0 %v6410
        %6681 = vmatprep.subr.bf16.mxu0 0
        %6682 = vmatpush1.bf16.msra.mxu0 %v6411
        %6683 = vmatprep.subr.bf16.mxu0 0
        %6684 = vmatpush1.bf16.msra.mxu0 %v6412
        %6685 = vmatprep.mubr.bf16.mxu0 %v5607
        %6686 = vmatmul.mubr.bf16.gmra.mrb[0].mxu0 %v5606
        %v6687 = vpop.f32.mrb[0].mxu0
        %v6688 = vadd.f32 %v5883, %v6687
        %v6689 = vpop.f32.mrb[0].mxu0
        %v6690 = vpop.f32.mrb[0].mxu0
        %v6691 = vadd.f32 %v5883, %v6690
        %v6692 = vpop.f32.mrb[0].mxu0
        %6693 = vdwg.mxu0
        %6694 = vmatprep.subr.bf16.mxu0 0
        %6695 = vmatpush1.bf16.msra.mxu0 %v6413
        %6696 = vmatprep.subr.bf16.mxu0 0
        %6697 = vmatpush1.bf16.msra.mxu0 %v6414
        %6698 = vmatprep.subr.bf16.mxu0 0
        %6699 = vmatpush1.bf16.msra.mxu0 %v6415
        %6700 = vmatprep.subr.bf16.mxu0 0
        %6701 = vmatpush1.bf16.msra.mxu0 %v6416
        %6702 = vmatprep.subr.bf16.mxu0 0
        %6703 = vmatpush1.bf16.msra.mxu0 %v6417
        %6704 = vmatprep.subr.bf16.mxu0 0
        %6705 = vmatpush1.bf16.msra.mxu0 %v6418
        %6706 = vmatprep.subr.bf16.mxu0 0
        %6707 = vmatpush1.bf16.msra.mxu0 %v6419
        %6708 = vmatprep.subr.bf16.mxu0 0
        %6709 = vmatpush1.bf16.msra.mxu0 %v6420
        %6710 = vmatprep.subr.bf16.mxu0 0
        %6711 = vmatpush1.bf16.msra.mxu0 %v6421
        %6712 = vmatprep.subr.bf16.mxu0 0
        %6713 = vmatpush1.bf16.msra.mxu0 %v6422
        %6714 = vmatprep.subr.bf16.mxu0 0
        %6715 = vmatpush1.bf16.msra.mxu0 %v6423
        %6716 = vmatprep.subr.bf16.mxu0 0
        %6717 = vmatpush1.bf16.msra.mxu0 %v6424
        %6718 = vmatprep.subr.bf16.mxu0 0
        %6719 = vmatpush1.bf16.msra.mxu0 %v6425
        %6720 = vmatprep.subr.bf16.mxu0 0
        %6721 = vmatpush1.bf16.msra.mxu0 %v6426
        %6722 = vmatprep.subr.bf16.mxu0 0
        %6723 = vmatpush1.bf16.msra.mxu0 %v6427
        %6724 = vmatprep.subr.bf16.mxu0 0
        %6725 = vmatpush1.bf16.msra.mxu0 %v6428
        %6726 = vmatprep.mubr.bf16.mxu0 %v5609
        %6727 = vmatmul.mubr.bf16.gmra.mrb[0].mxu0 %v5608
        %v6728 = vpop.f32.mrb[0].mxu0
        %v6729 = vadd.f32 %v6688, %v6728
        %v6730 = vpop.f32.mrb[0].mxu0
        %v6731 = vpop.f32.mrb[0].mxu0
        %v6732 = vadd.f32 %v6691, %v6731
        %v6733 = vpop.f32.mrb[0].mxu0
        %6734 = vdwg.mxu0
        %6735 = vmatprep.subr.bf16.mxu0 0
        %6736 = vmatpush1.bf16.msra.mxu0 %v6429
        %6737 = vmatprep.subr.bf16.mxu0 0
        %6738 = vmatpush1.bf16.msra.mxu0 %v6430
        %6739 = vmatprep.subr.bf16.mxu0 0
        %6740 = vmatpush1.bf16.msra.mxu0 %v6431
        %6741 = vmatprep.subr.bf16.mxu0 0
        %6742 = vmatpush1.bf16.msra.mxu0 %v6432
        %6743 = vmatprep.subr.bf16.mxu0 0
        %6744 = vmatpush1.bf16.msra.mxu0 %v6433
        %6745 = vmatprep.subr.bf16.mxu0 0
        %6746 = vmatpush1.bf16.msra.mxu0 %v6434
        %6747 = vmatprep.subr.bf16.mxu0 0
        %6748 = vmatpush1.bf16.msra.mxu0 %v6435
        %6749 = vmatprep.subr.bf16.mxu0 0
        %6750 = vmatpush1.bf16.msra.mxu0 %v6436
        %6751 = vmatprep.subr.bf16.mxu0 0
        %6752 = vmatpush1.bf16.msra.mxu0 %v6437
        %6753 = vmatprep.subr.bf16.mxu0 0
        %6754 = vmatpush1.bf16.msra.mxu0 %v6438
        %6755 = vmatprep.subr.bf16.mxu0 0
        %6756 = vmatpush1.bf16.msra.mxu0 %v6439
        %6757 = vmatprep.subr.bf16.mxu0 0
        %6758 = vmatpush1.bf16.msra.mxu0 %v6440
        %6759 = vmatprep.subr.bf16.mxu0 0
        %6760 = vmatpush1.bf16.msra.mxu0 %v6441
        %6761 = vmatprep.subr.bf16.mxu0 0
        %6762 = vmatpush1.bf16.msra.mxu0 %v6442
        %6763 = vmatprep.subr.bf16.mxu0 0
        %6764 = vmatpush1.bf16.msra.mxu0 %v6443
        %6765 = vmatprep.subr.bf16.mxu0 0
        %6766 = vmatpush1.bf16.msra.mxu0 %v6444
        %6767 = vmatprep.mubr.bf16.mxu0 %v5611
        %6768 = vmatmul.mubr.bf16.gmra.mrb[0].mxu0 %v5610
        %v6769 = vpop.f32.mrb[0].mxu0
        %v6770 = vadd.f32 %v6729, %v6769
        %v6771 = vpop.f32.mrb[0].mxu0
        %v6772 = vpop.f32.mrb[0].mxu0
        %v6773 = vadd.f32 %v6732, %v6772
        %v6774 = vpop.f32.mrb[0].mxu0
        %6775 = vdwg.mxu0
        %6776 = vmatprep.subr.bf16.mxu0 0
        %6777 = vmatpush1.bf16.msra.mxu0 %v6445
        %6778 = vmatprep.subr.bf16.mxu0 0
        %6779 = vmatpush1.bf16.msra.mxu0 %v6446
        %6780 = vmatprep.subr.bf16.mxu0 0
        %6781 = vmatpush1.bf16.msra.mxu0 %v6447
        %6782 = vmatprep.subr.bf16.mxu0 0
        %6783 = vmatpush1.bf16.msra.mxu0 %v6448
        %6784 = vmatprep.subr.bf16.mxu0 0
        %6785 = vmatpush1.bf16.msra.mxu0 %v6449
        %6786 = vmatprep.subr.bf16.mxu0 0
        %6787 = vmatpush1.bf16.msra.mxu0 %v6450
        %6788 = vmatprep.subr.bf16.mxu0 0
        %6789 = vmatpush1.bf16.msra.mxu0 %v6451
        %6790 = vmatprep.subr.bf16.mxu0 0
        %6791 = vmatpush1.bf16.msra.mxu0 %v6452
        %6792 = vmatprep.subr.bf16.mxu0 0
        %6793 = vmatpush1.bf16.msra.mxu0 %v6453
        %6794 = vmatprep.subr.bf16.mxu0 0
        %6795 = vmatpush1.bf16.msra.mxu0 %v6454
        %6796 = vmatprep.subr.bf16.mxu0 0
        %6797 = vmatpush1.bf16.msra.mxu0 %v6455
        %6798 = vmatprep.subr.bf16.mxu0 0
        %6799 = vmatpush1.bf16.msra.mxu0 %v6456
        %6800 = vmatprep.subr.bf16.mxu0 0
        %6801 = vmatpush1.bf16.msra.mxu0 %v6457
        %6802 = vmatprep.subr.bf16.mxu0 0
        %6803 = vmatpush1.bf16.msra.mxu0 %v6458
        %6804 = vmatprep.subr.bf16.mxu0 0
        %6805 = vmatpush1.bf16.msra.mxu0 %v6459
        %6806 = vmatprep.subr.bf16.mxu0 0
        %6807 = vmatpush1.bf16.msra.mxu0 %v6460
        %6808 = vmatprep.mubr.bf16.mxu0 %v5613
        %6809 = vmatmul.mubr.bf16.gmra.mrb[0].mxu0 %v5612
        %v6810 = vpop.f32.mrb[0].mxu0
        %v6811 = vadd.f32 %v6770, %v6810
        %v6812 = vpop.f32.mrb[0].mxu0
        %v6813 = vpop.f32.mrb[0].mxu0
        %v6814 = vadd.f32 %v6773, %v6813
        %v6815 = vpop.f32.mrb[0].mxu0
        %6816 = vdwg.mxu0
        %6817 = vmatprep.subr.bf16.mxu0 0
        %6818 = vmatpush1.bf16.msra.mxu0 %v6461
        %6819 = vmatprep.subr.bf16.mxu0 0
        %6820 = vmatpush1.bf16.msra.mxu0 %v6462
        %6821 = vmatprep.subr.bf16.mxu0 0
        %6822 = vmatpush1.bf16.msra.mxu0 %v6463
        %6823 = vmatprep.subr.bf16.mxu0 0
        %6824 = vmatpush1.bf16.msra.mxu0 %v6464
        %6825 = vmatprep.subr.bf16.mxu0 0
        %6826 = vmatpush1.bf16.msra.mxu0 %v6465
        %6827 = vmatprep.subr.bf16.mxu0 0
        %6828 = vmatpush1.bf16.msra.mxu0 %v6466
        %6829 = vmatprep.subr.bf16.mxu0 0
        %6830 = vmatpush1.bf16.msra.mxu0 %v6467
        %6831 = vmatprep.subr.bf16.mxu0 0
        %6832 = vmatpush1.bf16.msra.mxu0 %v6468
        %6833 = vmatprep.subr.bf16.mxu0 0
        %6834 = vmatpush1.bf16.msra.mxu0 %v6469
        %6835 = vmatprep.subr.bf16.mxu0 0
        %6836 = vmatpush1.bf16.msra.mxu0 %v6470
        %6837 = vmatprep.subr.bf16.mxu0 0
        %6838 = vmatpush1.bf16.msra.mxu0 %v6471
        %6839 = vmatprep.subr.bf16.mxu0 0
        %6840 = vmatpush1.bf16.msra.mxu0 %v6472
        %6841 = vmatprep.subr.bf16.mxu0 0
        %6842 = vmatpush1.bf16.msra.mxu0 %v6473
        %6843 = vmatprep.subr.bf16.mxu0 0
        %6844 = vmatpush1.bf16.msra.mxu0 %v6474
        %6845 = vmatprep.subr.bf16.mxu0 0
        %6846 = vmatpush1.bf16.msra.mxu0 %v6475
        %6847 = vmatprep.subr.bf16.mxu0 0
        %6848 = vmatpush1.bf16.msra.mxu0 %v6476
        %6849 = vmatprep.mubr.bf16.mxu0 %v5615
        %6850 = vmatmul.mubr.bf16.gmra.mrb[0].mxu0 %v5614
        %v6851 = vpop.f32.mrb[0].mxu0
        %v6852 = vadd.f32 %v6811, %v6851
        %v6853 = vpop.f32.mrb[0].mxu0
        %v6854 = vpop.f32.mrb[0].mxu0
        %v6855 = vadd.f32 %v6814, %v6854
        %v6856 = vpop.f32.mrb[0].mxu0
        %6857 = vdwg.mxu0
        %6858 = vmatprep.subr.bf16.mxu0 0
        %6859 = vmatpush1.bf16.msra.mxu0 %v6477
        %6860 = vmatprep.subr.bf16.mxu0 0
        %6861 = vmatpush1.bf16.msra.mxu0 %v6478
        %6862 = vmatprep.subr.bf16.mxu0 0
        %6863 = vmatpush1.bf16.msra.mxu0 %v6479
        %6864 = vmatprep.subr.bf16.mxu0 0
        %6865 = vmatpush1.bf16.msra.mxu0 %v6480
        %6866 = vmatprep.subr.bf16.mxu0 0
        %6867 = vmatpush1.bf16.msra.mxu0 %v6481
        %6868 = vmatprep.subr.bf16.mxu0 0
        %6869 = vmatpush1.bf16.msra.mxu0 %v6482
        %6870 = vmatprep.subr.bf16.mxu0 0
        %6871 = vmatpush1.bf16.msra.mxu0 %v6483
        %6872 = vmatprep.subr.bf16.mxu0 0
        %6873 = vmatpush1.bf16.msra.mxu0 %v6484
        %6874 = vmatprep.subr.bf16.mxu0 0
        %6875 = vmatpush1.bf16.msra.mxu0 %v6485
        %6876 = vmatprep.subr.bf16.mxu0 0
        %6877 = vmatpush1.bf16.msra.mxu0 %v6486
        %6878 = vmatprep.subr.bf16.mxu0 0
        %6879 = vmatpush1.bf16.msra.mxu0 %v6487
        %6880 = vmatprep.subr.bf16.mxu0 0
        %6881 = vmatpush1.bf16.msra.mxu0 %v6488
        %6882 = vmatprep.subr.bf16.mxu0 0
        %6883 = vmatpush1.bf16.msra.mxu0 %v6489
        %6884 = vmatprep.subr.bf16.mxu0 0
        %6885 = vmatpush1.bf16.msra.mxu0 %v6490
        %6886 = vmatprep.subr.bf16.mxu0 0
        %6887 = vmatpush1.bf16.msra.mxu0 %v6491
        %6888 = vmatprep.subr.bf16.mxu0 0
        %6889 = vmatpush1.bf16.msra.mxu0 %v6492
        %6890 = vmatprep.mubr.bf16.mxu0 %v5617
        %6891 = vmatmul.mubr.bf16.gmra.mrb[0].mxu0 %v5616
        %v6892 = vpop.f32.mrb[0].mxu0
        %v6893 = vadd.f32 %v6852, %v6892
        %v6894 = vpop.f32.mrb[0].mxu0
        %v6895 = vpop.f32.mrb[0].mxu0
        %v6896 = vadd.f32 %v6855, %v6895
        %v6897 = vpop.f32.mrb[0].mxu0
        %6898 = vdwg.mxu0
        %6899 = vmatprep.subr.bf16.mxu0 0
        %6900 = vmatpush1.bf16.msra.mxu0 %v6493
        %6901 = vmatprep.subr.bf16.mxu0 0
        %6902 = vmatpush1.bf16.msra.mxu0 %v6494
        %6903 = vmatprep.subr.bf16.mxu0 0
        %6904 = vmatpush1.bf16.msra.mxu0 %v6495
        %6905 = vmatprep.subr.bf16.mxu0 0
        %6906 = vmatpush1.bf16.msra.mxu0 %v6496
        %6907 = vmatprep.subr.bf16.mxu0 0
        %6908 = vmatpush1.bf16.msra.mxu0 %v6497
        %6909 = vmatprep.subr.bf16.mxu0 0
        %6910 = vmatpush1.bf16.msra.mxu0 %v6498
        %6911 = vmatprep.subr.bf16.mxu0 0
        %6912 = vmatpush1.bf16.msra.mxu0 %v6499
        %6913 = vmatprep.subr.bf16.mxu0 0
        %6914 = vmatpush1.bf16.msra.mxu0 %v6500
        %6915 = vmatprep.subr.bf16.mxu0 0
        %6916 = vmatpush1.bf16.msra.mxu0 %v6501
        %6917 = vmatprep.subr.bf16.mxu0 0
        %6918 = vmatpush1.bf16.msra.mxu0 %v6502
        %6919 = vmatprep.subr.bf16.mxu0 0
        %6920 = vmatpush1.bf16.msra.mxu0 %v6503
        %6921 = vmatprep.subr.bf16.mxu0 0
        %6922 = vmatpush1.bf16.msra.mxu0 %v6504
        %6923 = vmatprep.subr.bf16.mxu0 0
        %6924 = vmatpush1.bf16.msra.mxu0 %v6505
        %6925 = vmatprep.subr.bf16.mxu0 0
        %6926 = vmatpush1.bf16.msra.mxu0 %v6506
        %6927 = vmatprep.subr.bf16.mxu0 0
        %6928 = vmatpush1.bf16.msra.mxu0 %v6507
        %6929 = vmatprep.subr.bf16.mxu0 0
        %6930 = vmatpush1.bf16.msra.mxu0 %v6508
        %6931 = vmatprep.mubr.bf16.mxu0 %v5619
        %6932 = vmatmul.mubr.bf16.gmra.mrb[0].mxu0 %v5618
        %v6933 = vpop.f32.mrb[0].mxu0
        %v6934 = vadd.f32 %v6893, %v6933
        %v6935 = vpop.f32.mrb[0].mxu0
        %v6936 = vpop.f32.mrb[0].mxu0
        %v6937 = vadd.f32 %v6896, %v6936
        %v6938 = vpop.f32.mrb[0].mxu0
        %6939 = vdwg.mxu0
        %6940 = vmatprep.subr.bf16.mxu0 0
        %6941 = vmatpush1.bf16.msra.mxu0 %v6509
        %6942 = vmatprep.subr.bf16.mxu0 0
        %6943 = vmatpush1.bf16.msra.mxu0 %v6510
        %6944 = vmatprep.subr.bf16.mxu0 0
        %6945 = vmatpush1.bf16.msra.mxu0 %v6511
        %6946 = vmatprep.subr.bf16.mxu0 0
        %6947 = vmatpush1.bf16.msra.mxu0 %v6512
        %6948 = vmatprep.subr.bf16.mxu0 0
        %6949 = vmatpush1.bf16.msra.mxu0 %v6513
        %6950 = vmatprep.subr.bf16.mxu0 0
        %6951 = vmatpush1.bf16.msra.mxu0 %v6514
        %6952 = vmatprep.subr.bf16.mxu0 0
        %6953 = vmatpush1.bf16.msra.mxu0 %v6515
        %6954 = vmatprep.subr.bf16.mxu0 0
        %6955 = vmatpush1.bf16.msra.mxu0 %v6516
        %6956 = vmatprep.subr.bf16.mxu0 0
        %6957 = vmatpush1.bf16.msra.mxu0 %v6517
        %6958 = vmatprep.subr.bf16.mxu0 0
        %6959 = vmatpush1.bf16.msra.mxu0 %v6518
        %6960 = vmatprep.subr.bf16.mxu0 0
        %6961 = vmatpush1.bf16.msra.mxu0 %v6519
        %6962 = vmatprep.subr.bf16.mxu0 0
        %6963 = vmatpush1.bf16.msra.mxu0 %v6520
        %6964 = vmatprep.subr.bf16.mxu0 0
        %6965 = vmatpush1.bf16.msra.mxu0 %v6521
        %6966 = vmatprep.subr.bf16.mxu0 0
        %6967 = vmatpush1.bf16.msra.mxu0 %v6522
        %6968 = vmatprep.subr.bf16.mxu0 0
        %6969 = vmatpush1.bf16.msra.mxu0 %v6523
        %6970 = vmatprep.subr.bf16.mxu0 0
        %6971 = vmatpush1.bf16.msra.mxu0 %v6524
        %6972 = vmatprep.mubr.bf16.mxu0 %v5621
        %6973 = vmatmul.mubr.bf16.gmra.mrb[0].mxu0 %v5620
        %v6974 = vpop.f32.mrb[0].mxu0
        %v6975 = vadd.f32 %v6934, %v6974
        %v6976 = vpop.f32.mrb[0].mxu0
        %v6977 = vpop.f32.mrb[0].mxu0
        %v6978 = vadd.f32 %v6937, %v6977
        %v6979 = vpop.f32.mrb[0].mxu0
        %6980 = vdwg.mxu0
        %v6981 = vadd.f32 %v4948, %v6975
        %v6982 = vadd.f32 %v4949, %v6978
        %v6983 = vld [vmem:[%s22] sm:$0x1]
        %v6984 = vld [vmem:[%s23] sm:$0x1]
        %v6985 = vsel %vm840, %v6981, 0.0
        %6986 = vadd.xlane.f32.xlu0 %v6985
        %v6987 = vpop.xlane.xlu0 %6986
        %v6988 = vsel %vm840, %v6982, 0.0
        %6989 = vadd.xlane.f32.xlu0 %v6988
        %v6990 = vpop.xlane.xlu0 %6989
        %v6991 = vmul.f32 %v6987, %v2819
        %v6992 = vmul.f32 %v6990, %v2819
        %v6993 = vsub.f32 %v6981, %v6991
        %v6994 = vsub.f32 %v6982, %v6992
        %v6995 = vmul.f32 %v6993, %v6993
        %v6996 = vmul.f32 %v6994, %v6994
        %v6997 = vsel %vm840, %v6995, 0.0
        %6998 = vadd.xlane.f32.xlu0 %v6997
        %v6999 = vpop.xlane.xlu0 %6998
        %v7000 = vsel %vm840, %v6996, 0.0
        %7001 = vadd.xlane.f32.xlu0 %v7000
        %v7002 = vpop.xlane.xlu0 %7001
        %v7003 = vmul.f32 %v6999, %v2819
        %v7004 = vmul.f32 %v7002, %v2819
        %v7005 = vadd.f32 %v7003, 1e-05
        %v7006 = vadd.f32 %v7004, 1e-05
        %v7007 = vrsqrt.pop %v7005
        %v7008 = vrsqrt.pop %v7006
        %v7009 = vmul.f32 %v6993, %v7007
        %v7010 = vmul.f32 %v6994, %v7008
        %v7012 = vlaneseq
        %v7013 = vshrl.u32 %v7012, 7
        %v7014 = vsub.s32 0, %v7013
        %v7015 = vrot.slane %v6983, %v7014
        %v7017 = vmul.f32 %v7009, %v7015
        %v7018 = vmul.f32 %v7010, %v7015
        %v7020 = vlaneseq
        %v7021 = vshrl.u32 %v7020, 7
        %v7022 = vsub.s32 0, %v7021
        %v7023 = vrot.slane %v6984, %v7022
        %v7025 = vadd.f32 %v7017, %v7023
        %v7026 = vadd.f32 %v7018, %v7023
        %7027 = vst.msk [vmem:[%s775] sm:$0xff] %vm840, %v7025
        %7028 = vst.msk [vmem:[%s775 + $0x8] sm:$0xff] %vm840, %v7026
        %s7029 = sand.u32 %s570, 1
        %s7030 = scalar_lea.sflag [#allocation3], %s7029
        %s7031 = sand.u32 %s570, 1
        %s7032 = smul.addr %s7031, 16
        %s7033 = scalar_lea.vmem [#allocation2], %s7032
        // Predicated region
        $region117: #{tpu_custom_call.1} parent=115 // pred_check
          %p7034 = pneg %p580
        $region118: #{tpu_custom_call.1} parent=115 // pred_check_branch
          %7036 = sbr.rel (%p7034) target = $region120
        $region119: #{tpu_custom_call.1} parent=115 // pred_region
          %s7037 = smul.u32 2, %s38
          %s7039 = ssub.s32 256, 256
          %7040 = vsyncadd %s7030, %s7039
          %s7041 = smul.addr %s7037, 128
          %s7042 = scalar_lea.hbm %s24, %s7041
          %s7043 = sshll.u32 %s7033, 4
          %s7044 = int_to_ptr.vmem [resolvable:$true] %s7043
          %7049 = dma.vmem_to_hbm [thread:$0]  %s7044, 256, %s7042, %s7030, 128, 128, 8
        $region120: #{tpu_custom_call.1} parent=115 // pred_fallthru
          _
      $region116: #{tpu_custom_call.1} parent=5 // pred_fallthru
        _
      %p7050 = scmp.le.s32.totalorder 2, %s33
      // Predicated region
      $region121: #{tpu_custom_call.1} parent=5 // pred_check
        %p7051 = pneg %p7050
      $region122: #{tpu_custom_call.1} parent=5 // pred_check_branch
        %7053 = sbr.rel (%p7051) target = $region124
      $region123: #{tpu_custom_call.1} parent=5 // pred_region
        %s7054 = ssub.s32 %s33, 2
        // Predicated region
        $region125: #{tpu_custom_call.1} parent=123 // pred_check
          %p7055 = pneg %p586
        $region126: #{tpu_custom_call.1} parent=123 // pred_check_branch
          %7057 = sbr.rel (%p7055) target = $region128
        $region127: #{tpu_custom_call.1} parent=123 // pred_region
          %s7058 = sand.u32 %s571, 1
          %s7059 = scalar_lea.sflag [#allocation3], %s7058
          %s7060 = sand.u32 %s571, 1
          %s7061 = smul.addr %s7060, 16
          %s7062 = scalar_lea.vmem [#allocation2], %s7061
          %7063 = dma.done %s7059, 256
        $region128: #{tpu_custom_call.1} parent=123 // pred_fallthru
          _
      $region124: #{tpu_custom_call.1} parent=5 // pred_fallthru
        _
    $region6: #{tpu_custom_call.1} parent=1 // loop_footer
      %s37 = sadd.s32 1, %s33
    $region7: #{tpu_custom_call.1} parent=1 // loop_footer_branch
      %32 = sbr.rel target = $region3
    $region8: #{tpu_custom_call.1} parent=1 // loop_exit
      _
    %7064 = vsyncpa [#allocation3], 1
    %s7065 = scalar_lea.sflag [#allocation3], 1
    %7066 = vsyncpa %s7065, 1

</llo_original>
